<compile_context>
chip_gen: v5e
topology: v5e:2x2
jax: 0.10.0
libtpu: 0.0.40
codegen_flags: <defaults>
</compile_context>

<pallas_src>
import functools

import jax
import jax.numpy as jnp
from jax.experimental import pallas as pl
from jax.experimental.pallas import tpu as pltpu


HEAD_PAD = 128  # lane-dense head width: cols [0:6]=doa(tanh), [6:8]=activity(sigmoid), rest 0


# ----------------------------------------------------------------------------
# Fused kernel: conv3x3+ReLU -> conv3x3+ReLU -> mean over F -> fused heads
# ----------------------------------------------------------------------------
def _fused_seld_kernel(x_ref, mask_ref, w1_ref, b1_ref, w2_ref, b2_ref,
                       wh_ref, bh_ref, ha_ref, hb_ref, o_ref, *, Bt, T, F):
    """One grid step processes Bt batch elements stacked along the row axis."""
    rows = Bt * T * F
    c_in = x_ref.shape[-1]
    x = x_ref[...].reshape(rows, c_in)          # (rows, c_pad) bf16
    mask = mask_ref[...]                        # (rows, 9) bf16, hoisted to wrapper

    def im2col(v):
        # Build (rows, 9*C) slab: tap k = 3*(dt+1)+(df+1). Zero halo comes from
        # the pad rows; t/f edge validity (and cross-batch-element taps for the
        # stacked Bt rows) comes from the precomputed mask columns.
        c = v.shape[-1]
        pad = jnp.zeros((F + 1, c), v.dtype)
        vp = jnp.concatenate([pad, v, pad], axis=0)
        blocks = []
        for k in range(9):
            dt, df = k // 3 - 1, k % 3 - 1
            off = (F + 1) + dt * F + df                     # always >= 0 (static)
            blk = vp[off:off + rows, :]
            if k != 4:                                      # centre tap: no mask
                blk = blk * mask[:, k:k + 1]
            blocks.append(blk)
        return jnp.concatenate(blocks, axis=-1)             # (rows, 9*C) bf16

    # conv1 (feature extractor): single MXU dot, K = 9*c_pad
    feat = jnp.dot(im2col(x), w1_ref[...], preferred_element_type=jnp.float32)
    feat = jnp.maximum(feat + b1_ref[...], 0.0).astype(jnp.bfloat16)

    # conv2 (backbone): single MXU dot, K = 9*c_feat
    h = jnp.dot(im2col(feat), w2_ref[...], preferred_element_type=jnp.float32)
    h = jnp.maximum(h + b2_ref[...], 0.0)                   # (rows, c_model) f32

    # frequency mean-pool: reshape + reduce (no pooling matmul, no HBM round trip)
    c_model = h.shape[-1]
    pooled = jnp.mean(h.reshape(Bt * T, F, c_model), axis=1)  # (Bt*T, c_model) f32

    # fused heads, lane-dense logits; single tanh + per-lane affine epilogue
    logits = jnp.dot(pooled.astype(jnp.bfloat16), wh_ref[...],
                     preferred_element_type=jnp.float32) + bh_ref[...]
    out = ha_ref[...] * jnp.tanh(logits) + hb_ref[...]        # (Bt*T, HEAD_PAD)
    o_ref[...] = out.reshape(Bt, T, HEAD_PAD).astype(o_ref.dtype)


# ----------------------------------------------------------------------------
# Per-chip sizing helpers
# ----------------------------------------------------------------------------
def _vmem_budget_bytes():
    try:
        cap = pltpu.get_tpu_info().vmem_capacity_bytes
    except Exception:
        cap = 64 * 1024 * 1024            # conservative (v7x-sized) fallback
    return min(int(cap * 3 // 4), 96 * 1024 * 1024)


def _per_elem_bytes(T, F, c_pad, c_feat, c_model):
    rows = T * F
    return (2 * rows * c_pad * 2          # double-buffered bf16 input block
            + rows * 9 * c_pad * 2        # im2col slab 1 (bf16)
            + rows * c_feat * (4 + 2)     # conv1 f32 acc + bf16 feat
            + rows * 9 * c_feat * 2       # im2col slab 2 (bf16)
            + rows * c_model * 4          # conv2 f32 output
            + 3 * T * HEAD_PAD * 4)       # logits + double-buffered f32 out block


def _choose_bt(B, per_elem, budget):
    # Largest batch block that divides B, keeps the grid length >= 2 (so both
    # v7x TensorCores get work) and keeps ~2x the transient footprint in budget.
    best = 1
    for bt in range(1, B + 1):
        if B % bt:
            continue
        if B >= 2 and B // bt < 2:
            continue
        if 2 * bt * per_elem > budget:
            continue
        best = bt
    return best


# ----------------------------------------------------------------------------
# Parameters (deterministic init; shapes implied by the stand-in architecture)
# ----------------------------------------------------------------------------
def init_params(key, c_in=4, c_feat=16, c_model=32, n_doa=6, n_act=2):
    ks = jax.random.split(key, 4)

    def dense(k, fan_in, shape):
        return jax.random.normal(k, shape, jnp.float32) / jnp.sqrt(fan_in)

    return {
        # feature extractor conv (3x3, c_in -> c_feat), tap-major layout (9, c_in, c_feat)
        "w_fe": dense(ks[0], 9 * c_in, (9, c_in, c_feat)),
        "b_fe": jnp.zeros((c_feat,), jnp.float32),
        # model backbone conv (3x3, c_feat -> c_model)
        "w_conv": dense(ks[1], 9 * c_feat, (9, c_feat, c_model)),
        "b_conv": jnp.zeros((c_model,), jnp.float32),
        # DOA head (x,y,z for 2 tracks, tanh) and activity head (2 tracks, sigmoid)
        "w_doa": dense(ks[2], c_model, (c_model, n_doa)),
        "b_doa": jnp.zeros((n_doa,), jnp.float32),
        "w_act": dense(ks[3], c_model, (c_model, n_act)),
        "b_act": jnp.zeros((n_act,), jnp.float32),
    }


# ----------------------------------------------------------------------------
# Forward pass (mirrors TauNigensTrainer.forward)
# ----------------------------------------------------------------------------
def tau_nigens_forward(x_nchw, params):
    # PyTorch NCHW (B, mics, T, F) -> NHWC rows (t-major / f-minor), bf16 A-stream
    x = jnp.transpose(x_nchw, (0, 2, 3, 1))                   # (B, T, F, C)
    B, T, F, C = x.shape
    c_pad = max(8, ((C + 7) // 8) * 8)
    x = jnp.pad(x, ((0, 0), (0, 0), (0, 0), (0, c_pad - C)))
    x = x.reshape(B, T * F, c_pad).astype(jnp.bfloat16)

    c_feat = params["w_fe"].shape[2]
    c_model = params["w_conv"].shape[2]
    n_doa = params["w_doa"].shape[1]
    n_act = params["w_act"].shape[1]
    n_head = n_doa + n_act

    budget = _vmem_budget_bytes()
    Bt = _choose_bt(B, _per_elem_bytes(T, F, c_pad, c_feat, c_model), budget)

    # conv weights flattened tap-major -> (9*Cin, Cout) so each conv is ONE MXU dot
    w1 = jnp.pad(params["w_fe"], ((0, 0), (0, c_pad - C), (0, 0)))
    w1 = w1.reshape(9 * c_pad, c_feat).astype(jnp.bfloat16)
    b1 = params["b_fe"].reshape(1, c_feat).astype(jnp.float32)
    w2 = params["w_conv"].reshape(9 * c_feat, c_model).astype(jnp.bfloat16)
    b2 = params["b_conv"].reshape(1, c_model).astype(jnp.float32)

    # fused heads, lane-dense. Activity columns pre-scaled by 0.5 so the kernel
    # epilogue is a single tanh + per-lane affine: sigmoid(z) = 0.5*tanh(0.5 z) + 0.5
    wh = jnp.concatenate([params["w_doa"], 0.5 * params["w_act"]], axis=1)
    bh = jnp.concatenate([params["b_doa"], 0.5 * params["b_act"]], axis=0)
    wh = jnp.pad(wh, ((0, 0), (0, HEAD_PAD - n_head))).astype(jnp.bfloat16)
    bh = jnp.pad(bh, (0, HEAD_PAD - n_head)).reshape(1, HEAD_PAD).astype(jnp.float32)
    lane = jnp.arange(HEAD_PAD)
    ha = jnp.where(lane < n_doa, 1.0, jnp.where(lane < n_head, 0.5, 0.0))
    hb = jnp.where(lane < n_doa, 0.0, jnp.where(lane < n_head, 0.5, 0.0))
    ha = ha.reshape(1, HEAD_PAD).astype(jnp.float32)   # a=b=0 on padding lanes ->
    hb = hb.reshape(1, HEAD_PAD).astype(jnp.float32)   # padded output columns stay 0

    # hoisted per-tap validity masks (t/f edges; also kill cross-batch-element taps
    # when Bt elements are stacked along the row axis)
    t_idx = jnp.arange(T * F) // F
    f_idx = jnp.arange(T * F) % F
    cols = []
    for k in range(9):
        dt, df = k // 3 - 1, k % 3 - 1
        cols.append((t_idx + dt >= 0) & (t_idx + dt < T)
                    & (f_idx + df >= 0) & (f_idx + df < F))
    mask = jnp.stack(cols, axis=1).astype(jnp.bfloat16)       # (T*F, 9)
    mask = jnp.tile(mask, (Bt, 1))                            # (Bt*T*F, 9)

    kernel = functools.partial(_fused_seld_kernel, Bt=Bt, T=T, F=F)
    out = pl.pallas_call(
        kernel,
        out_shape=jax.ShapeDtypeStruct((B, T, HEAD_PAD), jnp.float32),
        grid=(B // Bt,),
        in_specs=[
            pl.BlockSpec((Bt, T * F, c_pad), lambda b: (b, 0, 0)),     # activations
            pl.BlockSpec((Bt * T * F, 9), lambda b: (0, 0)),           # tap masks
            pl.BlockSpec((9 * c_pad, c_feat), lambda b: (0, 0)),       # weights stay
            pl.BlockSpec((1, c_feat), lambda b: (0, 0)),               # VMEM-resident
            pl.BlockSpec((9 * c_feat, c_model), lambda b: (0, 0)),
            pl.BlockSpec((1, c_model), lambda b: (0, 0)),
            pl.BlockSpec((c_model, HEAD_PAD), lambda b: (0, 0)),
            pl.BlockSpec((1, HEAD_PAD), lambda b: (0, 0)),
            pl.BlockSpec((1, HEAD_PAD), lambda b: (0, 0)),
            pl.BlockSpec((1, HEAD_PAD), lambda b: (0, 0)),
        ],
        out_specs=pl.BlockSpec((Bt, T, HEAD_PAD), lambda b: (b, 0, 0)),  # lane-dense
        compiler_params=pltpu.CompilerParams(
            dimension_semantics=("parallel",),      # megacore sharding on v7x
            vmem_limit_bytes=budget,                # per-generation VMEM budget
        ),
    )(x, mask, w1, b1, w2, b2, wh, bh, ha, hb)

    return {
        "doa_cart": out[:, :, :n_doa],                   # (B, T, 6) in [-1, 1]
        "activity": out[:, :, n_doa:n_doa + n_act],      # (B, T, 2) in (0, 1)
    }


# ----------------------------------------------------------------------------
# Pure-JAX f32 reference of the same stand-in architecture (for verification)
# ----------------------------------------------------------------------------
def _reference_forward(x_nchw, params):
    x = jnp.transpose(x_nchw, (0, 2, 3, 1)).astype(jnp.float32)          # (B, T, F, C)

    def conv3x3(inp, w, b):
        B, T, F, _ = inp.shape
        xp = jnp.pad(inp, ((0, 0), (1, 1), (1, 1), (0, 0)))
        acc = 0.0
        for k in range(9):
            dt, df = k // 3, k % 3
            acc = acc + jnp.einsum("btfc,cd->btfd",
                                   xp[:, dt:dt + T, df:df + F, :], w[k])
        return jnp.maximum(acc + b, 0.0)

    feat = conv3x3(x, params["w_fe"], params["b_fe"])
    h = conv3x3(feat, params["w_conv"], params["b_conv"])
    pooled = h.mean(axis=2)
    doa = jnp.tanh(pooled @ params["w_doa"] + params["b_doa"])
    act = jax.nn.sigmoid(pooled @ params["w_act"] + params["b_act"])
    return {"doa_cart": doa, "activity": act}


# ----------------------------------------------------------------------------
if __name__ == "__main__":
    key = jax.random.PRNGKey(0)
    k_param, k_x = jax.random.split(key)

    params = init_params(k_param, c_in=4)

    # Small multichannel "spectrogram" input: (batch=2, mics=4, T=16, F=16), NCHW.
    x = jax.random.normal(k_x, (2, 4, 16, 16), jnp.float32)

    out = jax.jit(tau_nigens_forward)(x, params)
    out = jax.block_until_ready(out)

    assert out["doa_cart"].shape == (2, 16, 6)
    assert out["activity"].shape == (2, 16, 2)
    assert bool(jnp.all(jnp.isfinite(out["doa_cart"])))
    assert bool(jnp.all(jnp.isfinite(out["activity"])))

    # Compare against the f32 reference (tolerance accounts for bf16 MXU operands).
    ref = _reference_forward(x, params)
    assert float(jnp.max(jnp.abs(out["doa_cart"] - ref["doa_cart"]))) < 1e-1
    assert float(jnp.max(jnp.abs(out["activity"] - ref["activity"]))) < 1e-1

    print("KERNEL_OK")
</pallas_src>

<mosaic_0001>
module attributes {stable_mosaic.version = 11 : i64} {
  func.func @_fused_seld_kernel(%arg0: i32, %arg1: memref<1x256x8xbf16, #tpu.memory_space<vmem>>, %arg2: memref<256x9xbf16, #tpu.memory_space<vmem>>, %arg3: memref<72x16xbf16, #tpu.memory_space<vmem>>, %arg4: memref<1x16xf32, #tpu.memory_space<vmem>>, %arg5: memref<144x32xbf16, #tpu.memory_space<vmem>>, %arg6: memref<1x32xf32, #tpu.memory_space<vmem>>, %arg7: memref<32x128xbf16, #tpu.memory_space<vmem>>, %arg8: memref<1x128xf32, #tpu.memory_space<vmem>>, %arg9: memref<1x128xf32, #tpu.memory_space<vmem>>, %arg10: memref<1x128xf32, #tpu.memory_space<vmem>>, %arg11: memref<1x16x128xf32, #tpu.memory_space<vmem>>) attributes {dimension_semantics = [#tpu.dimension_semantics<parallel>], iteration_bounds = array<i64: 2>, scalar_prefetch = 0 : i64, scratch_operands = 0 : i64, tpu.core_type = #tpu.core_type<tc>, window_params = [{transform_indices = @transform_0, window_bounds = array<i64: 1, 256, 8>}, {pipeline_mode = #tpu.pipeline_mode<synchronous>, transform_indices = @transform_1, window_bounds = array<i64: 256, 9>}, {pipeline_mode = #tpu.pipeline_mode<synchronous>, transform_indices = @transform_2, window_bounds = array<i64: 72, 16>}, {pipeline_mode = #tpu.pipeline_mode<synchronous>, transform_indices = @transform_3, window_bounds = array<i64: 1, 16>}, {pipeline_mode = #tpu.pipeline_mode<synchronous>, transform_indices = @transform_4, window_bounds = array<i64: 144, 32>}, {pipeline_mode = #tpu.pipeline_mode<synchronous>, transform_indices = @transform_5, window_bounds = array<i64: 1, 32>}, {pipeline_mode = #tpu.pipeline_mode<synchronous>, transform_indices = @transform_6, window_bounds = array<i64: 32, 128>}, {pipeline_mode = #tpu.pipeline_mode<synchronous>, transform_indices = @transform_7, window_bounds = array<i64: 1, 128>}, {pipeline_mode = #tpu.pipeline_mode<synchronous>, transform_indices = @transform_8, window_bounds = array<i64: 1, 128>}, {pipeline_mode = #tpu.pipeline_mode<synchronous>, transform_indices = @transform_9, window_bounds = array<i64: 1, 128>}, {transform_indices = @transform_10, window_bounds = array<i64: 1, 16, 128>}]} {
    %c0 = arith.constant 0 : index
    %c0_0 = arith.constant 0 : index
    %c0_1 = arith.constant 0 : index
    %0 = vector.load %arg1[%c0, %c0_0, %c0_1] : memref<1x256x8xbf16, #tpu.memory_space<vmem>>, vector<1x256x8xbf16>
    %1 = vector.shape_cast %0 : vector<1x256x8xbf16> to vector<256x8xbf16>
    %c0_2 = arith.constant 0 : index
    %c0_3 = arith.constant 0 : index
    %2 = vector.load %arg2[%c0_2, %c0_3] : memref<256x9xbf16, #tpu.memory_space<vmem>>, vector<256x9xbf16>
    %cst = arith.constant 0.000000e+00 : bf16
    %3 = vector.broadcast %cst : bf16 to vector<17x8xbf16>
    %4 = tpu.concatenate %3, %1, %3 in 0 : vector<17x8xbf16>, vector<256x8xbf16>, vector<17x8xbf16> -> vector<290x8xbf16>
    %5 = vector.extract_strided_slice %4 {offsets = [0, 0], sizes = [256, 8], strides = [1, 1]} : vector<290x8xbf16> to vector<256x8xbf16>
    %6 = vector.extract_strided_slice %2 {offsets = [0, 0], sizes = [256, 1], strides = [1, 1]} : vector<256x9xbf16> to vector<256x1xbf16>
    %7 = vector.broadcast %6 : vector<256x1xbf16> to vector<256x8xbf16>
    %8 = arith.mulf %5, %7 : vector<256x8xbf16>
    %9 = vector.extract_strided_slice %4 {offsets = [1, 0], sizes = [256, 8], strides = [1, 1]} : vector<290x8xbf16> to vector<256x8xbf16>
    %10 = vector.extract_strided_slice %2 {offsets = [0, 1], sizes = [256, 1], strides = [1, 1]} : vector<256x9xbf16> to vector<256x1xbf16>
    %11 = vector.broadcast %10 : vector<256x1xbf16> to vector<256x8xbf16>
    %12 = arith.mulf %9, %11 : vector<256x8xbf16>
    %13 = vector.extract_strided_slice %4 {offsets = [2, 0], sizes = [256, 8], strides = [1, 1]} : vector<290x8xbf16> to vector<256x8xbf16>
    %14 = vector.extract_strided_slice %2 {offsets = [0, 2], sizes = [256, 1], strides = [1, 1]} : vector<256x9xbf16> to vector<256x1xbf16>
    %15 = vector.broadcast %14 : vector<256x1xbf16> to vector<256x8xbf16>
    %16 = arith.mulf %13, %15 : vector<256x8xbf16>
    %17 = vector.extract_strided_slice %4 {offsets = [16, 0], sizes = [256, 8], strides = [1, 1]} : vector<290x8xbf16> to vector<256x8xbf16>
    %18 = vector.extract_strided_slice %2 {offsets = [0, 3], sizes = [256, 1], strides = [1, 1]} : vector<256x9xbf16> to vector<256x1xbf16>
    %19 = vector.broadcast %18 : vector<256x1xbf16> to vector<256x8xbf16>
    %20 = arith.mulf %17, %19 : vector<256x8xbf16>
    %21 = vector.extract_strided_slice %4 {offsets = [17, 0], sizes = [256, 8], strides = [1, 1]} : vector<290x8xbf16> to vector<256x8xbf16>
    %22 = vector.extract_strided_slice %4 {offsets = [18, 0], sizes = [256, 8], strides = [1, 1]} : vector<290x8xbf16> to vector<256x8xbf16>
    %23 = vector.extract_strided_slice %2 {offsets = [0, 5], sizes = [256, 1], strides = [1, 1]} : vector<256x9xbf16> to vector<256x1xbf16>
    %24 = vector.broadcast %23 : vector<256x1xbf16> to vector<256x8xbf16>
    %25 = arith.mulf %22, %24 : vector<256x8xbf16>
    %26 = vector.extract_strided_slice %4 {offsets = [32, 0], sizes = [256, 8], strides = [1, 1]} : vector<290x8xbf16> to vector<256x8xbf16>
    %27 = vector.extract_strided_slice %2 {offsets = [0, 6], sizes = [256, 1], strides = [1, 1]} : vector<256x9xbf16> to vector<256x1xbf16>
    %28 = vector.broadcast %27 : vector<256x1xbf16> to vector<256x8xbf16>
    %29 = arith.mulf %26, %28 : vector<256x8xbf16>
    %30 = vector.extract_strided_slice %4 {offsets = [33, 0], sizes = [256, 8], strides = [1, 1]} : vector<290x8xbf16> to vector<256x8xbf16>
    %31 = vector.extract_strided_slice %2 {offsets = [0, 7], sizes = [256, 1], strides = [1, 1]} : vector<256x9xbf16> to vector<256x1xbf16>
    %32 = vector.broadcast %31 : vector<256x1xbf16> to vector<256x8xbf16>
    %33 = arith.mulf %30, %32 : vector<256x8xbf16>
    %34 = vector.extract_strided_slice %4 {offsets = [34, 0], sizes = [256, 8], strides = [1, 1]} : vector<290x8xbf16> to vector<256x8xbf16>
    %35 = vector.extract_strided_slice %2 {offsets = [0, 8], sizes = [256, 1], strides = [1, 1]} : vector<256x9xbf16> to vector<256x1xbf16>
    %36 = vector.broadcast %35 : vector<256x1xbf16> to vector<256x8xbf16>
    %37 = arith.mulf %34, %36 : vector<256x8xbf16>
    %38 = tpu.concatenate %8, %12, %16, %20, %21, %25, %29, %33, %37 in 1 : vector<256x8xbf16>, vector<256x8xbf16>, vector<256x8xbf16>, vector<256x8xbf16>, vector<256x8xbf16>, vector<256x8xbf16>, vector<256x8xbf16>, vector<256x8xbf16>, vector<256x8xbf16> -> vector<256x72xbf16>
    %c0_4 = arith.constant 0 : index
    %c0_5 = arith.constant 0 : index
    %39 = vector.load %arg3[%c0_4, %c0_5] : memref<72x16xbf16, #tpu.memory_space<vmem>>, vector<72x16xbf16>
    %cst_6 = arith.constant dense<0.000000e+00> : vector<256x16xf32>
    %40 = tpu.matmul %38, %39, %cst_6 {dimension_numbers = #tpu.dot_dimension_numbers<[1], [0], [0], [1], [0, 0, 1, 1], [], []>} : vector<256x72xbf16>, vector<72x16xbf16>, vector<256x16xf32> -> vector<256x16xf32>
    %c0_7 = arith.constant 0 : index
    %c0_8 = arith.constant 0 : index
    %41 = vector.load %arg4[%c0_7, %c0_8] : memref<1x16xf32, #tpu.memory_space<vmem>>, vector<1x16xf32>
    %42 = vector.broadcast %41 : vector<1x16xf32> to vector<256x16xf32>
    %43 = arith.addf %40, %42 : vector<256x16xf32>
    %cst_9 = arith.constant 0.000000e+00 : f32
    %44 = vector.broadcast %cst_9 : f32 to vector<256x16xf32>
    %45 = arith.maximumf %43, %44 : vector<256x16xf32>
    %46 = arith.truncf %45 : vector<256x16xf32> to vector<256x16xbf16>
    %cst_10 = arith.constant 0.000000e+00 : bf16
    %47 = vector.broadcast %cst_10 : bf16 to vector<17x16xbf16>
    %48 = tpu.concatenate %47, %46, %47 in 0 : vector<17x16xbf16>, vector<256x16xbf16>, vector<17x16xbf16> -> vector<290x16xbf16>
    %49 = vector.extract_strided_slice %48 {offsets = [0, 0], sizes = [256, 16], strides = [1, 1]} : vector<290x16xbf16> to vector<256x16xbf16>
    %50 = vector.extract_strided_slice %2 {offsets = [0, 0], sizes = [256, 1], strides = [1, 1]} : vector<256x9xbf16> to vector<256x1xbf16>
    %51 = vector.broadcast %50 : vector<256x1xbf16> to vector<256x16xbf16>
    %52 = arith.mulf %49, %51 : vector<256x16xbf16>
    %53 = vector.extract_strided_slice %48 {offsets = [1, 0], sizes = [256, 16], strides = [1, 1]} : vector<290x16xbf16> to vector<256x16xbf16>
    %54 = vector.extract_strided_slice %2 {offsets = [0, 1], sizes = [256, 1], strides = [1, 1]} : vector<256x9xbf16> to vector<256x1xbf16>
    %55 = vector.broadcast %54 : vector<256x1xbf16> to vector<256x16xbf16>
    %56 = arith.mulf %53, %55 : vector<256x16xbf16>
    %57 = vector.extract_strided_slice %48 {offsets = [2, 0], sizes = [256, 16], strides = [1, 1]} : vector<290x16xbf16> to vector<256x16xbf16>
    %58 = vector.extract_strided_slice %2 {offsets = [0, 2], sizes = [256, 1], strides = [1, 1]} : vector<256x9xbf16> to vector<256x1xbf16>
    %59 = vector.broadcast %58 : vector<256x1xbf16> to vector<256x16xbf16>
    %60 = arith.mulf %57, %59 : vector<256x16xbf16>
    %61 = vector.extract_strided_slice %48 {offsets = [16, 0], sizes = [256, 16], strides = [1, 1]} : vector<290x16xbf16> to vector<256x16xbf16>
    %62 = vector.extract_strided_slice %2 {offsets = [0, 3], sizes = [256, 1], strides = [1, 1]} : vector<256x9xbf16> to vector<256x1xbf16>
    %63 = vector.broadcast %62 : vector<256x1xbf16> to vector<256x16xbf16>
    %64 = arith.mulf %61, %63 : vector<256x16xbf16>
    %65 = vector.extract_strided_slice %48 {offsets = [17, 0], sizes = [256, 16], strides = [1, 1]} : vector<290x16xbf16> to vector<256x16xbf16>
    %66 = vector.extract_strided_slice %48 {offsets = [18, 0], sizes = [256, 16], strides = [1, 1]} : vector<290x16xbf16> to vector<256x16xbf16>
    %67 = vector.extract_strided_slice %2 {offsets = [0, 5], sizes = [256, 1], strides = [1, 1]} : vector<256x9xbf16> to vector<256x1xbf16>
    %68 = vector.broadcast %67 : vector<256x1xbf16> to vector<256x16xbf16>
    %69 = arith.mulf %66, %68 : vector<256x16xbf16>
    %70 = vector.extract_strided_slice %48 {offsets = [32, 0], sizes = [256, 16], strides = [1, 1]} : vector<290x16xbf16> to vector<256x16xbf16>
    %71 = vector.extract_strided_slice %2 {offsets = [0, 6], sizes = [256, 1], strides = [1, 1]} : vector<256x9xbf16> to vector<256x1xbf16>
    %72 = vector.broadcast %71 : vector<256x1xbf16> to vector<256x16xbf16>
    %73 = arith.mulf %70, %72 : vector<256x16xbf16>
    %74 = vector.extract_strided_slice %48 {offsets = [33, 0], sizes = [256, 16], strides = [1, 1]} : vector<290x16xbf16> to vector<256x16xbf16>
    %75 = vector.extract_strided_slice %2 {offsets = [0, 7], sizes = [256, 1], strides = [1, 1]} : vector<256x9xbf16> to vector<256x1xbf16>
    %76 = vector.broadcast %75 : vector<256x1xbf16> to vector<256x16xbf16>
    %77 = arith.mulf %74, %76 : vector<256x16xbf16>
    %78 = vector.extract_strided_slice %48 {offsets = [34, 0], sizes = [256, 16], strides = [1, 1]} : vector<290x16xbf16> to vector<256x16xbf16>
    %79 = vector.extract_strided_slice %2 {offsets = [0, 8], sizes = [256, 1], strides = [1, 1]} : vector<256x9xbf16> to vector<256x1xbf16>
    %80 = vector.broadcast %79 : vector<256x1xbf16> to vector<256x16xbf16>
    %81 = arith.mulf %78, %80 : vector<256x16xbf16>
    %82 = tpu.concatenate %52, %56, %60, %64, %65, %69, %73, %77, %81 in 1 : vector<256x16xbf16>, vector<256x16xbf16>, vector<256x16xbf16>, vector<256x16xbf16>, vector<256x16xbf16>, vector<256x16xbf16>, vector<256x16xbf16>, vector<256x16xbf16>, vector<256x16xbf16> -> vector<256x144xbf16>
    %c0_11 = arith.constant 0 : index
    %c0_12 = arith.constant 0 : index
    %83 = vector.load %arg5[%c0_11, %c0_12] : memref<144x32xbf16, #tpu.memory_space<vmem>>, vector<144x32xbf16>
    %cst_13 = arith.constant dense<0.000000e+00> : vector<256x32xf32>
    %84 = tpu.matmul %82, %83, %cst_13 {dimension_numbers = #tpu.dot_dimension_numbers<[1], [0], [0], [1], [0, 0, 1, 1], [], []>} : vector<256x144xbf16>, vector<144x32xbf16>, vector<256x32xf32> -> vector<256x32xf32>
    %c0_14 = arith.constant 0 : index
    %c0_15 = arith.constant 0 : index
    %85 = vector.load %arg6[%c0_14, %c0_15] : memref<1x32xf32, #tpu.memory_space<vmem>>, vector<1x32xf32>
    %86 = vector.broadcast %85 : vector<1x32xf32> to vector<256x32xf32>
    %87 = arith.addf %84, %86 : vector<256x32xf32>
    %cst_16 = arith.constant 0.000000e+00 : f32
    %88 = vector.broadcast %cst_16 : f32 to vector<256x32xf32>
    %89 = arith.maximumf %87, %88 : vector<256x32xf32>
    %90 = vector.shape_cast %89 : vector<256x32xf32> to vector<16x16x32xf32>
    %cst_17 = arith.constant dense<0.000000e+00> : vector<16x32xf32>
    %91 = vector.multi_reduction <add>, %90, %cst_17 [1] : vector<16x16x32xf32> to vector<16x32xf32>
    %cst_18 = arith.constant 1.600000e+01 : f32
    %92 = vector.broadcast %cst_18 : f32 to vector<16x32xf32>
    %93 = arith.divf %91, %92 : vector<16x32xf32>
    %94 = arith.truncf %93 : vector<16x32xf32> to vector<16x32xbf16>
    %c0_19 = arith.constant 0 : index
    %c0_20 = arith.constant 0 : index
    %95 = vector.load %arg7[%c0_19, %c0_20] : memref<32x128xbf16, #tpu.memory_space<vmem>>, vector<32x128xbf16>
    %cst_21 = arith.constant dense<0.000000e+00> : vector<16x128xf32>
    %96 = tpu.matmul %94, %95, %cst_21 {dimension_numbers = #tpu.dot_dimension_numbers<[1], [0], [0], [1], [0, 0, 1, 1], [], []>} : vector<16x32xbf16>, vector<32x128xbf16>, vector<16x128xf32> -> vector<16x128xf32>
    %c0_22 = arith.constant 0 : index
    %c0_23 = arith.constant 0 : index
    %97 = vector.load %arg8[%c0_22, %c0_23] : memref<1x128xf32, #tpu.memory_space<vmem>>, vector<1x128xf32>
    %98 = vector.broadcast %97 : vector<1x128xf32> to vector<16x128xf32>
    %99 = arith.addf %96, %98 : vector<16x128xf32>
    %c0_24 = arith.constant 0 : index
    %c0_25 = arith.constant 0 : index
    %100 = vector.load %arg9[%c0_24, %c0_25] : memref<1x128xf32, #tpu.memory_space<vmem>>, vector<1x128xf32>
    %101 = math.tanh %99 : vector<16x128xf32>
    %102 = vector.broadcast %100 : vector<1x128xf32> to vector<16x128xf32>
    %103 = arith.mulf %102, %101 : vector<16x128xf32>
    %c0_26 = arith.constant 0 : index
    %c0_27 = arith.constant 0 : index
    %104 = vector.load %arg10[%c0_26, %c0_27] : memref<1x128xf32, #tpu.memory_space<vmem>>, vector<1x128xf32>
    %105 = vector.broadcast %104 : vector<1x128xf32> to vector<16x128xf32>
    %106 = arith.addf %103, %105 : vector<16x128xf32>
    %107 = vector.shape_cast %106 : vector<16x128xf32> to vector<1x16x128xf32>
    %c0_28 = arith.constant 0 : index
    %c0_29 = arith.constant 0 : index
    %c0_30 = arith.constant 0 : index
    %108 = vector.load %arg11[%c0_28, %c0_29, %c0_30] : memref<1x16x128xf32, #tpu.memory_space<vmem>>, vector<1x16x128xf32>
    tpu.vector_store %arg11[%c0_28, %c0_29, %c0_30], %107 {strides = array<i32>} : memref<1x16x128xf32, #tpu.memory_space<vmem>>, vector<1x16x128xf32>,
    return
  }
  func.func @transform_0(%arg0: i32) -> (i32, i32, i32) {
    %c0_i32 = arith.constant 0 : i32
    %c0_i32_0 = arith.constant 0 : i32
    %c0_i32_1 = arith.constant 0 : i32
    return %arg0, %c0_i32, %c0_i32_0 : i32, i32, i32
  }
  func.func @transform_1(%arg0: i32) -> (i32, i32) {
    %c0_i32 = arith.constant 0 : i32
    %c0_i32_0 = arith.constant 0 : i32
    %c0_i32_1 = arith.constant 0 : i32
    return %c0_i32, %c0_i32_0 : i32, i32
  }
  func.func @transform_2(%arg0: i32) -> (i32, i32) {
    %c0_i32 = arith.constant 0 : i32
    %c0_i32_0 = arith.constant 0 : i32
    %c0_i32_1 = arith.constant 0 : i32
    return %c0_i32, %c0_i32_0 : i32, i32
  }
  func.func @transform_3(%arg0: i32) -> (i32, i32) {
    %c0_i32 = arith.constant 0 : i32
    %c0_i32_0 = arith.constant 0 : i32
    %c0_i32_1 = arith.constant 0 : i32
    return %c0_i32, %c0_i32_0 : i32, i32
  }
  func.func @transform_4(%arg0: i32) -> (i32, i32) {
    %c0_i32 = arith.constant 0 : i32
    %c0_i32_0 = arith.constant 0 : i32
    %c0_i32_1 = arith.constant 0 : i32
    return %c0_i32, %c0_i32_0 : i32, i32
  }
  func.func @transform_5(%arg0: i32) -> (i32, i32) {
    %c0_i32 = arith.constant 0 : i32
    %c0_i32_0 = arith.constant 0 : i32
    %c0_i32_1 = arith.constant 0 : i32
    return %c0_i32, %c0_i32_0 : i32, i32
  }
  func.func @transform_6(%arg0: i32) -> (i32, i32) {
    %c0_i32 = arith.constant 0 : i32
    %c0_i32_0 = arith.constant 0 : i32
    %c0_i32_1 = arith.constant 0 : i32
    return %c0_i32, %c0_i32_0 : i32, i32
  }
  func.func @transform_7(%arg0: i32) -> (i32, i32) {
    %c0_i32 = arith.constant 0 : i32
    %c0_i32_0 = arith.constant 0 : i32
    %c0_i32_1 = arith.constant 0 : i32
    return %c0_i32, %c0_i32_0 : i32, i32
  }
  func.func @transform_8(%arg0: i32) -> (i32, i32) {
    %c0_i32 = arith.constant 0 : i32
    %c0_i32_0 = arith.constant 0 : i32
    %c0_i32_1 = arith.constant 0 : i32
    return %c0_i32, %c0_i32_0 : i32, i32
  }
  func.func @transform_9(%arg0: i32) -> (i32, i32) {
    %c0_i32 = arith.constant 0 : i32
    %c0_i32_0 = arith.constant 0 : i32
    %c0_i32_1 = arith.constant 0 : i32
    return %c0_i32, %c0_i32_0 : i32, i32
  }
  func.func @transform_10(%arg0: i32) -> (i32, i32, i32) {
    %c0_i32 = arith.constant 0 : i32
    %c0_i32_0 = arith.constant 0 : i32
    %c0_i32_1 = arith.constant 0 : i32
    return %arg0, %c0_i32, %c0_i32_0 : i32, i32, i32
  }
}

</mosaic_0001>

<llo_original>
// kernel: tau_nigens_forward.1
$region0: #{tau_nigens_forward.1}
  #allocation0 [shape = 'u32[]', space=smem, size = 0x4, offset = 0x4, fixed_abs, tag = 'smem constant byte address 0x4 - core index']
  #allocation1 [shape = 'u32[72,128]{1,0:T(1,128)}', space=vmem, size = 0x9000, scoped, tag = 'internal scratch']
  %s0 = inlined_call_operand.vmem [shape: bf16[2,256,8], index: 0, kind: input, shape index: {}]
  %s1 = inlined_call_operand.vmem [shape: bf16[256,9], index: 1, kind: input, shape index: {}]
  %s2 = inlined_call_operand.vmem [shape: bf16[72,16], index: 2, kind: input, shape index: {}]
  %s3 = inlined_call_operand.vmem [shape: f32[1,16], index: 3, kind: input, shape index: {}]
  %s4 = inlined_call_operand.vmem [shape: bf16[144,32], index: 4, kind: input, shape index: {}]
  %s5 = inlined_call_operand.vmem [shape: f32[1,32], index: 5, kind: input, shape index: {}]
  %s6 = inlined_call_operand.vmem [shape: bf16[32,128], index: 6, kind: input, shape index: {}]
  %s7 = inlined_call_operand.vmem [shape: f32[1,128], index: 7, kind: input, shape index: {}]
  %s8 = inlined_call_operand.vmem [shape: f32[1,128], index: 8, kind: input, shape index: {}]
  %s9 = inlined_call_operand.vmem [shape: f32[1,128], index: 9, kind: input, shape index: {}]
  %s10 = inlined_call_operand.vmem [shape: f32[2,16,128], index: 10, kind: output, shape index: {}]
  %s11 = sld [smem:[#allocation0]]
  $region73: #{tau_nigens_forward.1} parent=0
    _
  %s13 = ssub.s32 1, %s11
  %s14 = scalar_select 0, %s13, %s11
  loop: start=0, step=1, limit=4
  $region2: #{tau_nigens_forward.1} parent=0 // loop_pre_header
    _
  $region3: #{tau_nigens_forward.1} parent=0 // loop_header
    %s16 = sphi 0, %s20
    %p17 = scmp.ge.s32.totalorder %s16, 4
    %s26 = sphi 0, %s28
    %s29 = sphi 0, %s26
    %s30 = sphi 0, %s29
    %s46 = sphi 0, %s30
    %s50 = sphi 0, %s50
    %s52 = sphi 0, %s50
    %s53 = sphi 0, %s52
    %s67 = sphi 0, %s53
    %s71 = sphi 0, %s71
    %s73 = sphi 0, %s71
    %s74 = sphi 0, %s73
    %s88 = sphi 0, %s74
    %s92 = sphi 0, %s92
    %s94 = sphi 0, %s92
    %s95 = sphi 0, %s94
    %s109 = sphi 0, %s95
    %s113 = sphi 0, %s113
    %s115 = sphi 0, %s113
    %s116 = sphi 0, %s115
    %s130 = sphi 0, %s116
    %s134 = sphi 0, %s134
    %s136 = sphi 0, %s134
    %s137 = sphi 0, %s136
    %s151 = sphi 0, %s137
    %s155 = sphi 0, %s155
    %s157 = sphi 0, %s155
    %s158 = sphi 0, %s157
    %s172 = sphi 0, %s158
    %s176 = sphi 0, %s176
    %s178 = sphi 0, %s176
    %s179 = sphi 0, %s178
    %s193 = sphi 0, %s179
    %s197 = sphi 0, %s197
    %s199 = sphi 0, %s197
    %s200 = sphi 0, %s199
    %s214 = sphi 0, %s200
    %s218 = sphi 0, %s218
    %s220 = sphi 0, %s218
    %s221 = sphi 0, %s220
    %s235 = sphi 0, %s221
    %s241 = sphi 0, %s243
    %s244 = sphi 0, %s241
    %s245 = sphi 0, %s244
    %s261 = sphi 0, %s245
  $region4: #{tau_nigens_forward.1} parent=0 // loop_header_branch
    %19 = sbr.rel (%p17) target = $region8
  $region5: #{tau_nigens_forward.1} parent=0 // loop_body
    %s21 = ssub.s32 %s16, 1
    %s22 = ssub.s32 %s16, 2
    %s23 = sadd.s32 %s16, 1
    %s24 = ssub.s32 %s16, %s23
    %p25 = scmp.eq.s32.totalorder %s24, 0
    %s27 = sadd.s32 %s26, 1
    %s28 = scalar_select %p25, %s26, %s27
    %p31 = pneg %p25
    %p32 = scmp.eq.s32.totalorder %s16, 1
    %p33 = por %p31, %p32
    %p34 = scmp.ne.s32.totalorder %s26, %s29
    %p35 = scmp.eq.s32.totalorder %s16, 0
    %p36 = por %p34, %p35
    %p37 = scmp.ne.s32.totalorder %s26, %s29
    %p38 = scmp.eq.s32.totalorder %s21, 1
    %p39 = por %p37, %p38
    %p40 = scmp.ne.s32.totalorder %s29, %s30
    %p41 = scmp.eq.s32.totalorder %s21, 0
    %p42 = por %p40, %p41
    %p43 = scmp.ne.s32.totalorder %s29, %s30
    %p44 = scmp.eq.s32.totalorder %s22, 1
    %p45 = por %p43, %p44
    %p47 = scmp.ne.s32.totalorder %s30, %s46
    %p48 = scmp.eq.s32.totalorder %s22, 0
    %p49 = por %p47, %p48
    %s51 = sadd.s32 %s50, 1
    %p54 = scmp.eq.s32.totalorder %s16, 1
    %p55 = scmp.ne.s32.totalorder %s50, %s52
    %p56 = scmp.eq.s32.totalorder %s16, 0
    %p57 = por %p55, %p56
    %p58 = scmp.ne.s32.totalorder %s50, %s52
    %p59 = scmp.eq.s32.totalorder %s21, 1
    %p60 = por %p58, %p59
    %p61 = scmp.ne.s32.totalorder %s52, %s53
    %p62 = scmp.eq.s32.totalorder %s21, 0
    %p63 = por %p61, %p62
    %p64 = scmp.ne.s32.totalorder %s52, %s53
    %p65 = scmp.eq.s32.totalorder %s22, 1
    %p66 = por %p64, %p65
    %p68 = scmp.ne.s32.totalorder %s53, %s67
    %p69 = scmp.eq.s32.totalorder %s22, 0
    %p70 = por %p68, %p69
    %s72 = sadd.s32 %s71, 1
    %p75 = scmp.eq.s32.totalorder %s16, 1
    %p76 = scmp.ne.s32.totalorder %s71, %s73
    %p77 = scmp.eq.s32.totalorder %s16, 0
    %p78 = por %p76, %p77
    %p79 = scmp.ne.s32.totalorder %s71, %s73
    %p80 = scmp.eq.s32.totalorder %s21, 1
    %p81 = por %p79, %p80
    %p82 = scmp.ne.s32.totalorder %s73, %s74
    %p83 = scmp.eq.s32.totalorder %s21, 0
    %p84 = por %p82, %p83
    %p85 = scmp.ne.s32.totalorder %s73, %s74
    %p86 = scmp.eq.s32.totalorder %s22, 1
    %p87 = por %p85, %p86
    %p89 = scmp.ne.s32.totalorder %s74, %s88
    %p90 = scmp.eq.s32.totalorder %s22, 0
    %p91 = por %p89, %p90
    %s93 = sadd.s32 %s92, 1
    %p96 = scmp.eq.s32.totalorder %s16, 1
    %p97 = scmp.ne.s32.totalorder %s92, %s94
    %p98 = scmp.eq.s32.totalorder %s16, 0
    %p99 = por %p97, %p98
    %p100 = scmp.ne.s32.totalorder %s92, %s94
    %p101 = scmp.eq.s32.totalorder %s21, 1
    %p102 = por %p100, %p101
    %p103 = scmp.ne.s32.totalorder %s94, %s95
    %p104 = scmp.eq.s32.totalorder %s21, 0
    %p105 = por %p103, %p104
    %p106 = scmp.ne.s32.totalorder %s94, %s95
    %p107 = scmp.eq.s32.totalorder %s22, 1
    %p108 = por %p106, %p107
    %p110 = scmp.ne.s32.totalorder %s95, %s109
    %p111 = scmp.eq.s32.totalorder %s22, 0
    %p112 = por %p110, %p111
    %s114 = sadd.s32 %s113, 1
    %p117 = scmp.eq.s32.totalorder %s16, 1
    %p118 = scmp.ne.s32.totalorder %s113, %s115
    %p119 = scmp.eq.s32.totalorder %s16, 0
    %p120 = por %p118, %p119
    %p121 = scmp.ne.s32.totalorder %s113, %s115
    %p122 = scmp.eq.s32.totalorder %s21, 1
    %p123 = por %p121, %p122
    %p124 = scmp.ne.s32.totalorder %s115, %s116
    %p125 = scmp.eq.s32.totalorder %s21, 0
    %p126 = por %p124, %p125
    %p127 = scmp.ne.s32.totalorder %s115, %s116
    %p128 = scmp.eq.s32.totalorder %s22, 1
    %p129 = por %p127, %p128
    %p131 = scmp.ne.s32.totalorder %s116, %s130
    %p132 = scmp.eq.s32.totalorder %s22, 0
    %p133 = por %p131, %p132
    %s135 = sadd.s32 %s134, 1
    %p138 = scmp.eq.s32.totalorder %s16, 1
    %p139 = scmp.ne.s32.totalorder %s134, %s136
    %p140 = scmp.eq.s32.totalorder %s16, 0
    %p141 = por %p139, %p140
    %p142 = scmp.ne.s32.totalorder %s134, %s136
    %p143 = scmp.eq.s32.totalorder %s21, 1
    %p144 = por %p142, %p143
    %p145 = scmp.ne.s32.totalorder %s136, %s137
    %p146 = scmp.eq.s32.totalorder %s21, 0
    %p147 = por %p145, %p146
    %p148 = scmp.ne.s32.totalorder %s136, %s137
    %p149 = scmp.eq.s32.totalorder %s22, 1
    %p150 = por %p148, %p149
    %p152 = scmp.ne.s32.totalorder %s137, %s151
    %p153 = scmp.eq.s32.totalorder %s22, 0
    %p154 = por %p152, %p153
    %s156 = sadd.s32 %s155, 1
    %p159 = scmp.eq.s32.totalorder %s16, 1
    %p160 = scmp.ne.s32.totalorder %s155, %s157
    %p161 = scmp.eq.s32.totalorder %s16, 0
    %p162 = por %p160, %p161
    %p163 = scmp.ne.s32.totalorder %s155, %s157
    %p164 = scmp.eq.s32.totalorder %s21, 1
    %p165 = por %p163, %p164
    %p166 = scmp.ne.s32.totalorder %s157, %s158
    %p167 = scmp.eq.s32.totalorder %s21, 0
    %p168 = por %p166, %p167
    %p169 = scmp.ne.s32.totalorder %s157, %s158
    %p170 = scmp.eq.s32.totalorder %s22, 1
    %p171 = por %p169, %p170
    %p173 = scmp.ne.s32.totalorder %s158, %s172
    %p174 = scmp.eq.s32.totalorder %s22, 0
    %p175 = por %p173, %p174
    %s177 = sadd.s32 %s176, 1
    %p180 = scmp.eq.s32.totalorder %s16, 1
    %p181 = scmp.ne.s32.totalorder %s176, %s178
    %p182 = scmp.eq.s32.totalorder %s16, 0
    %p183 = por %p181, %p182
    %p184 = scmp.ne.s32.totalorder %s176, %s178
    %p185 = scmp.eq.s32.totalorder %s21, 1
    %p186 = por %p184, %p185
    %p187 = scmp.ne.s32.totalorder %s178, %s179
    %p188 = scmp.eq.s32.totalorder %s21, 0
    %p189 = por %p187, %p188
    %p190 = scmp.ne.s32.totalorder %s178, %s179
    %p191 = scmp.eq.s32.totalorder %s22, 1
    %p192 = por %p190, %p191
    %p194 = scmp.ne.s32.totalorder %s179, %s193
    %p195 = scmp.eq.s32.totalorder %s22, 0
    %p196 = por %p194, %p195
    %s198 = sadd.s32 %s197, 1
    %p201 = scmp.eq.s32.totalorder %s16, 1
    %p202 = scmp.ne.s32.totalorder %s197, %s199
    %p203 = scmp.eq.s32.totalorder %s16, 0
    %p204 = por %p202, %p203
    %p205 = scmp.ne.s32.totalorder %s197, %s199
    %p206 = scmp.eq.s32.totalorder %s21, 1
    %p207 = por %p205, %p206
    %p208 = scmp.ne.s32.totalorder %s199, %s200
    %p209 = scmp.eq.s32.totalorder %s21, 0
    %p210 = por %p208, %p209
    %p211 = scmp.ne.s32.totalorder %s199, %s200
    %p212 = scmp.eq.s32.totalorder %s22, 1
    %p213 = por %p211, %p212
    %p215 = scmp.ne.s32.totalorder %s200, %s214
    %p216 = scmp.eq.s32.totalorder %s22, 0
    %p217 = por %p215, %p216
    %s219 = sadd.s32 %s218, 1
    %p222 = scmp.eq.s32.totalorder %s16, 1
    %p223 = scmp.ne.s32.totalorder %s218, %s220
    %p224 = scmp.eq.s32.totalorder %s16, 0
    %p225 = por %p223, %p224
    %p226 = scmp.ne.s32.totalorder %s218, %s220
    %p227 = scmp.eq.s32.totalorder %s21, 1
    %p228 = por %p226, %p227
    %p229 = scmp.ne.s32.totalorder %s220, %s221
    %p230 = scmp.eq.s32.totalorder %s21, 0
    %p231 = por %p229, %p230
    %p232 = scmp.ne.s32.totalorder %s220, %s221
    %p233 = scmp.eq.s32.totalorder %s22, 1
    %p234 = por %p232, %p233
    %p236 = scmp.ne.s32.totalorder %s221, %s235
    %p237 = scmp.eq.s32.totalorder %s22, 0
    %p238 = por %p236, %p237
    %s239 = ssub.s32 %s16, %s23
    %p240 = scmp.eq.s32.totalorder %s239, 0
    %s242 = sadd.s32 %s241, 1
    %s243 = scalar_select %p240, %s241, %s242
    %p246 = pneg %p240
    %p247 = scmp.eq.s32.totalorder %s16, 1
    %p248 = por %p246, %p247
    %p249 = scmp.ne.s32.totalorder %s241, %s244
    %p250 = scmp.eq.s32.totalorder %s16, 0
    %p251 = por %p249, %p250
    %p252 = scmp.ne.s32.totalorder %s241, %s244
    %p253 = scmp.eq.s32.totalorder %s21, 1
    %p254 = por %p252, %p253
    %p255 = scmp.ne.s32.totalorder %s244, %s245
    %p256 = scmp.eq.s32.totalorder %s21, 0
    %p257 = por %p255, %p256
    %p258 = scmp.ne.s32.totalorder %s244, %s245
    %p259 = scmp.eq.s32.totalorder %s22, 1
    %p260 = por %p258, %p259
    %p262 = scmp.ne.s32.totalorder %s245, %s261
    %p263 = scmp.eq.s32.totalorder %s22, 0
    %p264 = por %p262, %p263
    %p265 = scmp.le.s32.totalorder 1, %s16
    %p266 = scmp.lt.s32.totalorder %s16, 3
    %p267 = pnand %p265, %p266
    %p268 = pneg %p267
    // Predicated region
    $region9: #{tau_nigens_forward.1} parent=5 // pred_check
      _
    $region10: #{tau_nigens_forward.1} parent=5 // pred_check_branch
      %270 = sbr.rel (%p267) target = $region12
    $region11: #{tau_nigens_forward.1} parent=5 // pred_region
      %s271 = ssub.s32 %s16, 1
      // Predicated region
      $region13: #{tau_nigens_forward.1} parent=11 // pred_check
        %p272 = pneg %p63
      $region14: #{tau_nigens_forward.1} parent=11 // pred_check_branch
        %274 = sbr.rel (%p272) target = $region16
      $region15: #{tau_nigens_forward.1} parent=11 // pred_region
        _
      $region16: #{tau_nigens_forward.1} parent=11 // pred_fallthru
        _
      // Predicated region
      $region17: #{tau_nigens_forward.1} parent=11 // pred_check
        %p275 = pneg %p84
      $region18: #{tau_nigens_forward.1} parent=11 // pred_check_branch
        %277 = sbr.rel (%p275) target = $region20
      $region19: #{tau_nigens_forward.1} parent=11 // pred_region
        _
      $region20: #{tau_nigens_forward.1} parent=11 // pred_fallthru
        _
      // Predicated region
      $region21: #{tau_nigens_forward.1} parent=11 // pred_check
        %p278 = pneg %p105
      $region22: #{tau_nigens_forward.1} parent=11 // pred_check_branch
        %280 = sbr.rel (%p278) target = $region24
      $region23: #{tau_nigens_forward.1} parent=11 // pred_region
        _
      $region24: #{tau_nigens_forward.1} parent=11 // pred_fallthru
        _
      // Predicated region
      $region25: #{tau_nigens_forward.1} parent=11 // pred_check
        %p281 = pneg %p126
      $region26: #{tau_nigens_forward.1} parent=11 // pred_check_branch
        %283 = sbr.rel (%p281) target = $region28
      $region27: #{tau_nigens_forward.1} parent=11 // pred_region
        _
      $region28: #{tau_nigens_forward.1} parent=11 // pred_fallthru
        _
      // Predicated region
      $region29: #{tau_nigens_forward.1} parent=11 // pred_check
        %p284 = pneg %p147
      $region30: #{tau_nigens_forward.1} parent=11 // pred_check_branch
        %286 = sbr.rel (%p284) target = $region32
      $region31: #{tau_nigens_forward.1} parent=11 // pred_region
        _
      $region32: #{tau_nigens_forward.1} parent=11 // pred_fallthru
        _
      // Predicated region
      $region33: #{tau_nigens_forward.1} parent=11 // pred_check
        %p287 = pneg %p168
      $region34: #{tau_nigens_forward.1} parent=11 // pred_check_branch
        %289 = sbr.rel (%p287) target = $region36
      $region35: #{tau_nigens_forward.1} parent=11 // pred_region
        _
      $region36: #{tau_nigens_forward.1} parent=11 // pred_fallthru
        _
      // Predicated region
      $region37: #{tau_nigens_forward.1} parent=11 // pred_check
        %p290 = pneg %p189
      $region38: #{tau_nigens_forward.1} parent=11 // pred_check_branch
        %292 = sbr.rel (%p290) target = $region40
      $region39: #{tau_nigens_forward.1} parent=11 // pred_region
        _
      $region40: #{tau_nigens_forward.1} parent=11 // pred_fallthru
        _
      // Predicated region
      $region41: #{tau_nigens_forward.1} parent=11 // pred_check
        %p293 = pneg %p210
      $region42: #{tau_nigens_forward.1} parent=11 // pred_check_branch
        %295 = sbr.rel (%p293) target = $region44
      $region43: #{tau_nigens_forward.1} parent=11 // pred_region
        _
      $region44: #{tau_nigens_forward.1} parent=11 // pred_fallthru
        _
      // Predicated region
      $region45: #{tau_nigens_forward.1} parent=11 // pred_check
        %p296 = pneg %p231
      $region46: #{tau_nigens_forward.1} parent=11 // pred_check_branch
        %298 = sbr.rel (%p296) target = $region48
      $region47: #{tau_nigens_forward.1} parent=11 // pred_region
        _
      $region48: #{tau_nigens_forward.1} parent=11 // pred_fallthru
        _
    $region12: #{tau_nigens_forward.1} parent=5 // pred_fallthru
      _
    %p299 = scmp.lt.s32.totalorder %s16, 2
    // Predicated region
    $region49: #{tau_nigens_forward.1} parent=5 // pred_check
      %p300 = pneg %p299
    $region50: #{tau_nigens_forward.1} parent=5 // pred_check_branch
      %302 = sbr.rel (%p300) target = $region52
    $region51: #{tau_nigens_forward.1} parent=5 // pred_region
      // Predicated region
      $region53: #{tau_nigens_forward.1} parent=51 // pred_check
        %p303 = pneg %p36
      $region54: #{tau_nigens_forward.1} parent=51 // pred_check_branch
        %305 = sbr.rel (%p303) target = $region56
      $region55: #{tau_nigens_forward.1} parent=51 // pred_region
        %p306 = scmp.lt.s32.totalorder %s16, 1
        %s307 = scalar_select %p306, %s16, 1
        %s308 = smul.addr %s307, 32
        %s309 = smul.addr %s308, 4
        %s310 = scalar_lea.vmem %s0, %s309
      $region56: #{tau_nigens_forward.1} parent=51 // pred_fallthru
        _
    $region52: #{tau_nigens_forward.1} parent=5 // pred_fallthru
      _
    %p311 = scmp.le.s32.totalorder 1, %s16
    %p312 = scmp.lt.s32.totalorder %s16, 3
    %p313 = pnand %p311, %p312
    %p314 = pneg %p313
    // Predicated region
    $region57: #{tau_nigens_forward.1} parent=5 // pred_check
      _
    $region58: #{tau_nigens_forward.1} parent=5 // pred_check_branch
      %316 = sbr.rel (%p313) target = $region60
    $region59: #{tau_nigens_forward.1} parent=5 // pred_region
      %s317 = ssub.s32 %s16, 1
      %p318 = scmp.lt.s32.totalorder %s21, 1
      %s319 = scalar_select %p318, %s21, 1
      %s320 = smul.addr %s319, 32
      %s321 = smul.addr %s320, 4
      %s322 = scalar_lea.vmem %s0, %s321
      %p323 = pneg %p42
      %p324 = pneg %p39
      %p325 = pneg %p63
      %p326 = pneg %p60
      %p327 = pneg %p84
      %p328 = pneg %p81
      %p329 = pneg %p105
      %p330 = pneg %p102
      %p331 = pneg %p126
      %p332 = pneg %p123
      %p333 = pneg %p147
      %p334 = pneg %p144
      %p335 = pneg %p168
      %p336 = pneg %p165
      %p337 = pneg %p189
      %p338 = pneg %p186
      %p339 = pneg %p210
      %p340 = pneg %p207
      %p341 = pneg %p231
      %p342 = pneg %p228
      %p343 = pneg %p257
      %p344 = pneg %p254
      %p345 = scmp.lt.s32.totalorder %s21, 1
      %s346 = scalar_select %p345, %s21, 1
      %s347 = smul.addr %s346, 2
      %s348 = smul.addr %s347, 8
      %s349 = scalar_lea.vmem %s10, %s348
      %p350 = scmp.lt.s32.totalorder %s21, 1
      %s351 = scalar_select %p350, %s21, 1
      %s352 = smul.addr %s351, 32
      %s353 = smul.addr %s352, 4
      %s354 = scalar_lea.vmem %s0, %s353
      %p355 = scmp.lt.s32.totalorder %s21, 1
      %s356 = scalar_select %p355, %s21, 1
      %s357 = smul.addr %s356, 2
      %s358 = smul.addr %s357, 8
      %s359 = scalar_lea.vmem %s10, %s358
      %v361 = vld [vmem:[%s354] sm:$0xf]
      %v362 = vld [vmem:[%s354 + $0x4] sm:$0xf]
      %v363 = vld [vmem:[%s354 + $0x8] sm:$0xf]
      %v364 = vld [vmem:[%s354 + $0xc] sm:$0xf]
      %v365 = vld [vmem:[%s354 + $0x10] sm:$0xf]
      %v366 = vld [vmem:[%s354 + $0x14] sm:$0xf]
      %v367 = vld [vmem:[%s354 + $0x18] sm:$0xf]
      %v368 = vld [vmem:[%s354 + $0x1c] sm:$0xf]
      %v369 = vld [vmem:[%s354 + $0x20] sm:$0xf]
      %v370 = vld [vmem:[%s354 + $0x24] sm:$0xf]
      %v371 = vld [vmem:[%s354 + $0x28] sm:$0xf]
      %v372 = vld [vmem:[%s354 + $0x2c] sm:$0xf]
      %v373 = vld [vmem:[%s354 + $0x30] sm:$0xf]
      %v374 = vld [vmem:[%s354 + $0x34] sm:$0xf]
      %v375 = vld [vmem:[%s354 + $0x38] sm:$0xf]
      %v376 = vld [vmem:[%s354 + $0x3c] sm:$0xf]
      %v377 = vld [vmem:[%s354 + $0x40] sm:$0xf]
      %v378 = vld [vmem:[%s354 + $0x44] sm:$0xf]
      %v379 = vld [vmem:[%s354 + $0x48] sm:$0xf]
      %v380 = vld [vmem:[%s354 + $0x4c] sm:$0xf]
      %v381 = vld [vmem:[%s354 + $0x50] sm:$0xf]
      %v382 = vld [vmem:[%s354 + $0x54] sm:$0xf]
      %v383 = vld [vmem:[%s354 + $0x58] sm:$0xf]
      %v384 = vld [vmem:[%s354 + $0x5c] sm:$0xf]
      %v385 = vld [vmem:[%s354 + $0x60] sm:$0xf]
      %v386 = vld [vmem:[%s354 + $0x64] sm:$0xf]
      %v387 = vld [vmem:[%s354 + $0x68] sm:$0xf]
      %v388 = vld [vmem:[%s354 + $0x6c] sm:$0xf]
      %v389 = vld [vmem:[%s354 + $0x70] sm:$0xf]
      %v390 = vld [vmem:[%s354 + $0x74] sm:$0xf]
      %v391 = vld [vmem:[%s354 + $0x78] sm:$0xf]
      %v392 = vld [vmem:[%s354 + $0x7c] sm:$0xf]
      %v393 = vld [vmem:[%s1] sm:$0xf]
      %v394 = vld [vmem:[%s1 + $0x4] sm:$0xf]
      %v395 = vld [vmem:[%s1 + $0x8] sm:$0xf]
      %v396 = vld [vmem:[%s1 + $0xc] sm:$0xf]
      %v397 = vld [vmem:[%s1 + $0x10] sm:$0xf]
      %v398 = vld [vmem:[%s1 + $0x14] sm:$0xf]
      %v399 = vld [vmem:[%s1 + $0x18] sm:$0xf]
      %v400 = vld [vmem:[%s1 + $0x1c] sm:$0xf]
      %v401 = vld [vmem:[%s1 + $0x20] sm:$0xf]
      %v402 = vld [vmem:[%s1 + $0x24] sm:$0xf]
      %v403 = vld [vmem:[%s1 + $0x28] sm:$0xf]
      %v404 = vld [vmem:[%s1 + $0x2c] sm:$0xf]
      %v405 = vld [vmem:[%s1 + $0x30] sm:$0xf]
      %v406 = vld [vmem:[%s1 + $0x34] sm:$0xf]
      %v407 = vld [vmem:[%s1 + $0x38] sm:$0xf]
      %v408 = vld [vmem:[%s1 + $0x3c] sm:$0xf]
      %v409 = vld [vmem:[%s1 + $0x40] sm:$0xf]
      %v410 = vld [vmem:[%s1 + $0x44] sm:$0xf]
      %v411 = vld [vmem:[%s1 + $0x48] sm:$0xf]
      %v412 = vld [vmem:[%s1 + $0x4c] sm:$0xf]
      %v413 = vld [vmem:[%s1 + $0x50] sm:$0xf]
      %v414 = vld [vmem:[%s1 + $0x54] sm:$0xf]
      %v415 = vld [vmem:[%s1 + $0x58] sm:$0xf]
      %v416 = vld [vmem:[%s1 + $0x5c] sm:$0xf]
      %v417 = vld [vmem:[%s1 + $0x60] sm:$0xf]
      %v418 = vld [vmem:[%s1 + $0x64] sm:$0xf]
      %v419 = vld [vmem:[%s1 + $0x68] sm:$0xf]
      %v420 = vld [vmem:[%s1 + $0x6c] sm:$0xf]
      %v421 = vld [vmem:[%s1 + $0x70] sm:$0xf]
      %v422 = vld [vmem:[%s1 + $0x74] sm:$0xf]
      %v423 = vld [vmem:[%s1 + $0x78] sm:$0xf]
      %v424 = vld [vmem:[%s1 + $0x7c] sm:$0xf]
      %v457 = vunpack.c.l.b16 %v361
      %v458 = vunpack.c.l.b16 %v362
      %v459 = vunpack.c.l.b16 %v363
      %v460 = vunpack.c.l.b16 %v364
      %v461 = vunpack.c.l.b16 %v365
      %v462 = vunpack.c.l.b16 %v366
      %v463 = vunpack.c.l.b16 %v367
      %v464 = vunpack.c.l.b16 %v368
      %v465 = vunpack.c.l.b16 %v369
      %v466 = vunpack.c.l.b16 %v370
      %v467 = vunpack.c.l.b16 %v371
      %v468 = vunpack.c.l.b16 %v372
      %v469 = vunpack.c.l.b16 %v373
      %v470 = vunpack.c.l.b16 %v374
      %v471 = vunpack.c.l.b16 %v375
      %v472 = vunpack.c.l.b16 %v376
      %v473 = vunpack.c.l.b16 %v377
      %v474 = vunpack.c.l.b16 %v378
      %v475 = vunpack.c.l.b16 %v379
      %v476 = vunpack.c.l.b16 %v380
      %v477 = vunpack.c.l.b16 %v381
      %v478 = vunpack.c.l.b16 %v382
      %v479 = vunpack.c.l.b16 %v383
      %v480 = vunpack.c.l.b16 %v384
      %v481 = vunpack.c.l.b16 %v385
      %v482 = vunpack.c.l.b16 %v386
      %v483 = vunpack.c.l.b16 %v387
      %v484 = vunpack.c.l.b16 %v388
      %v485 = vunpack.c.l.b16 %v389
      %v486 = vunpack.c.l.b16 %v390
      %v487 = vunpack.c.l.b16 %v391
      %v488 = vunpack.c.l.b16 %v392
      %v489 = vpack.c.b16 %v458, %v457
      %v490 = vpack.c.b16 %v460, %v459
      %v491 = vpack.c.b16 %v462, %v461
      %v492 = vpack.c.b16 %v464, %v463
      %v493 = vpack.c.b16 %v466, %v465
      %v494 = vpack.c.b16 %v468, %v467
      %v495 = vpack.c.b16 %v470, %v469
      %v496 = vpack.c.b16 %v472, %v471
      %v497 = vpack.c.b16 %v474, %v473
      %v498 = vpack.c.b16 %v476, %v475
      %v499 = vpack.c.b16 %v478, %v477
      %v500 = vpack.c.b16 %v480, %v479
      %v501 = vpack.c.b16 %v482, %v481
      %v502 = vpack.c.b16 %v484, %v483
      %v503 = vpack.c.b16 %v486, %v485
      %v504 = vpack.c.b16 %v488, %v487
      %vm505 = vsmask.f32 256
      %v507 = vshrl.u32 %v489, 16
      %v509 = vrot.slane %v507, 7
      %v510 = vshll.u32 %v489, 16
      %v512 = vor.u32 %v509, %v510
      %v514 = vshrl.u32 %v490, 16
      %v516 = vrot.slane %v514, 7
      %v517 = vshll.u32 %v490, 16
      %v519 = vor.u32 %v516, %v517
      %v520 = vsel %vm505, %v509, %v519
      %v522 = vshrl.u32 %v491, 16
      %v524 = vrot.slane %v522, 7
      %v525 = vshll.u32 %v491, 16
      %v527 = vor.u32 %v524, %v525
      %v528 = vsel %vm505, %v516, %v527
      %v530 = vshrl.u32 %v492, 16
      %v532 = vrot.slane %v530, 7
      %v533 = vshll.u32 %v492, 16
      %v535 = vor.u32 %v532, %v533
      %v536 = vsel %vm505, %v524, %v535
      %v538 = vshrl.u32 %v493, 16
      %v540 = vrot.slane %v538, 7
      %v541 = vshll.u32 %v493, 16
      %v543 = vor.u32 %v540, %v541
      %v544 = vsel %vm505, %v532, %v543
      %v546 = vshrl.u32 %v494, 16
      %v548 = vrot.slane %v546, 7
      %v549 = vshll.u32 %v494, 16
      %v551 = vor.u32 %v548, %v549
      %v552 = vsel %vm505, %v540, %v551
      %v554 = vshrl.u32 %v495, 16
      %v556 = vrot.slane %v554, 7
      %v557 = vshll.u32 %v495, 16
      %v559 = vor.u32 %v556, %v557
      %v560 = vsel %vm505, %v548, %v559
      %v562 = vshrl.u32 %v496, 16
      %v564 = vrot.slane %v562, 7
      %v565 = vshll.u32 %v496, 16
      %v567 = vor.u32 %v564, %v565
      %v568 = vsel %vm505, %v556, %v567
      %v570 = vshrl.u32 %v497, 16
      %v572 = vrot.slane %v570, 7
      %v573 = vshll.u32 %v497, 16
      %v575 = vor.u32 %v572, %v573
      %v576 = vsel %vm505, %v564, %v575
      %v578 = vshrl.u32 %v498, 16
      %v580 = vrot.slane %v578, 7
      %v581 = vshll.u32 %v498, 16
      %v583 = vor.u32 %v580, %v581
      %v584 = vsel %vm505, %v572, %v583
      %v586 = vshrl.u32 %v499, 16
      %v588 = vrot.slane %v586, 7
      %v589 = vshll.u32 %v499, 16
      %v591 = vor.u32 %v588, %v589
      %v592 = vsel %vm505, %v580, %v591
      %v594 = vshrl.u32 %v500, 16
      %v596 = vrot.slane %v594, 7
      %v597 = vshll.u32 %v500, 16
      %v599 = vor.u32 %v596, %v597
      %v600 = vsel %vm505, %v588, %v599
      %v602 = vshrl.u32 %v501, 16
      %v604 = vrot.slane %v602, 7
      %v605 = vshll.u32 %v501, 16
      %v607 = vor.u32 %v604, %v605
      %v608 = vsel %vm505, %v596, %v607
      %v610 = vshrl.u32 %v502, 16
      %v612 = vrot.slane %v610, 7
      %v613 = vshll.u32 %v502, 16
      %v615 = vor.u32 %v612, %v613
      %v616 = vsel %vm505, %v604, %v615
      %v618 = vshrl.u32 %v503, 16
      %v620 = vrot.slane %v618, 7
      %v621 = vshll.u32 %v503, 16
      %v623 = vor.u32 %v620, %v621
      %v624 = vsel %vm505, %v612, %v623
      %v626 = vshrl.u32 %v504, 16
      %v628 = vrot.slane %v626, 7
      %v629 = vshll.u32 %v504, 16
      %v631 = vor.u32 %v628, %v629
      %v632 = vsel %vm505, %v620, %v631
      %vm650 = vcmask 1040384
      %vm651 = vmand %vm650, %vm505
      %v652 = vsel %vm651, 0, %v512
      %v653 = vsel %vm651, %v628, 0
      %655 = vset.pattern.permute.xlu0 0
      %656 = vperm.xlu0 %655, %v393
      %v657 = vpop.permute.xlu0 %656
      %v660 = vunpack.c.l.s4 839922192
      %v661 = vunpack.c.0.s8 %v660
      %v662 = vperm.slane %v657, %v661
      %664 = vset.pattern.permute.xlu0 0
      %665 = vperm.xlu0 %664, %v394
      %v666 = vpop.permute.xlu0 %665
      %v669 = vunpack.c.l.s4 839922192
      %v670 = vunpack.c.0.s8 %v669
      %v671 = vperm.slane %v666, %v670
      %673 = vset.pattern.permute.xlu0 0
      %674 = vperm.xlu0 %673, %v395
      %v675 = vpop.permute.xlu0 %674
      %v678 = vunpack.c.l.s4 839922192
      %v679 = vunpack.c.0.s8 %v678
      %v680 = vperm.slane %v675, %v679
      %682 = vset.pattern.permute.xlu0 0
      %683 = vperm.xlu0 %682, %v396
      %v684 = vpop.permute.xlu0 %683
      %v687 = vunpack.c.l.s4 839922192
      %v688 = vunpack.c.0.s8 %v687
      %v689 = vperm.slane %v684, %v688
      %691 = vset.pattern.permute.xlu0 0
      %692 = vperm.xlu0 %691, %v397
      %v693 = vpop.permute.xlu0 %692
      %v696 = vunpack.c.l.s4 839922192
      %v697 = vunpack.c.0.s8 %v696
      %v698 = vperm.slane %v693, %v697
      %700 = vset.pattern.permute.xlu0 0
      %701 = vperm.xlu0 %700, %v398
      %v702 = vpop.permute.xlu0 %701
      %v705 = vunpack.c.l.s4 839922192
      %v706 = vunpack.c.0.s8 %v705
      %v707 = vperm.slane %v702, %v706
      %709 = vset.pattern.permute.xlu0 0
      %710 = vperm.xlu0 %709, %v399
      %v711 = vpop.permute.xlu0 %710
      %v714 = vunpack.c.l.s4 839922192
      %v715 = vunpack.c.0.s8 %v714
      %v716 = vperm.slane %v711, %v715
      %718 = vset.pattern.permute.xlu0 0
      %719 = vperm.xlu0 %718, %v400
      %v720 = vpop.permute.xlu0 %719
      %v723 = vunpack.c.l.s4 839922192
      %v724 = vunpack.c.0.s8 %v723
      %v725 = vperm.slane %v720, %v724
      %727 = vset.pattern.permute.xlu0 0
      %728 = vperm.xlu0 %727, %v401
      %v729 = vpop.permute.xlu0 %728
      %v732 = vunpack.c.l.s4 839922192
      %v733 = vunpack.c.0.s8 %v732
      %v734 = vperm.slane %v729, %v733
      %736 = vset.pattern.permute.xlu0 0
      %737 = vperm.xlu0 %736, %v402
      %v738 = vpop.permute.xlu0 %737
      %v741 = vunpack.c.l.s4 839922192
      %v742 = vunpack.c.0.s8 %v741
      %v743 = vperm.slane %v738, %v742
      %745 = vset.pattern.permute.xlu0 0
      %746 = vperm.xlu0 %745, %v403
      %v747 = vpop.permute.xlu0 %746
      %v750 = vunpack.c.l.s4 839922192
      %v751 = vunpack.c.0.s8 %v750
      %v752 = vperm.slane %v747, %v751
      %754 = vset.pattern.permute.xlu0 0
      %755 = vperm.xlu0 %754, %v404
      %v756 = vpop.permute.xlu0 %755
      %v759 = vunpack.c.l.s4 839922192
      %v760 = vunpack.c.0.s8 %v759
      %v761 = vperm.slane %v756, %v760
      %763 = vset.pattern.permute.xlu0 0
      %764 = vperm.xlu0 %763, %v405
      %v765 = vpop.permute.xlu0 %764
      %v768 = vunpack.c.l.s4 839922192
      %v769 = vunpack.c.0.s8 %v768
      %v770 = vperm.slane %v765, %v769
      %772 = vset.pattern.permute.xlu0 0
      %773 = vperm.xlu0 %772, %v406
      %v774 = vpop.permute.xlu0 %773
      %v777 = vunpack.c.l.s4 839922192
      %v778 = vunpack.c.0.s8 %v777
      %v779 = vperm.slane %v774, %v778
      %781 = vset.pattern.permute.xlu0 0
      %782 = vperm.xlu0 %781, %v407
      %v783 = vpop.permute.xlu0 %782
      %v786 = vunpack.c.l.s4 839922192
      %v787 = vunpack.c.0.s8 %v786
      %v788 = vperm.slane %v783, %v787
      %790 = vset.pattern.permute.xlu0 0
      %791 = vperm.xlu0 %790, %v408
      %v792 = vpop.permute.xlu0 %791
      %v795 = vunpack.c.l.s4 839922192
      %v796 = vunpack.c.0.s8 %v795
      %v797 = vperm.slane %v792, %v796
      %799 = vset.pattern.permute.xlu0 0
      %800 = vperm.xlu0 %799, %v409
      %v801 = vpop.permute.xlu0 %800
      %v804 = vunpack.c.l.s4 839922192
      %v805 = vunpack.c.0.s8 %v804
      %v806 = vperm.slane %v801, %v805
      %808 = vset.pattern.permute.xlu0 0
      %809 = vperm.xlu0 %808, %v410
      %v810 = vpop.permute.xlu0 %809
      %v813 = vunpack.c.l.s4 839922192
      %v814 = vunpack.c.0.s8 %v813
      %v815 = vperm.slane %v810, %v814
      %817 = vset.pattern.permute.xlu0 0
      %818 = vperm.xlu0 %817, %v411
      %v819 = vpop.permute.xlu0 %818
      %v822 = vunpack.c.l.s4 839922192
      %v823 = vunpack.c.0.s8 %v822
      %v824 = vperm.slane %v819, %v823
      %826 = vset.pattern.permute.xlu0 0
      %827 = vperm.xlu0 %826, %v412
      %v828 = vpop.permute.xlu0 %827
      %v831 = vunpack.c.l.s4 839922192
      %v832 = vunpack.c.0.s8 %v831
      %v833 = vperm.slane %v828, %v832
      %835 = vset.pattern.permute.xlu0 0
      %836 = vperm.xlu0 %835, %v413
      %v837 = vpop.permute.xlu0 %836
      %v840 = vunpack.c.l.s4 839922192
      %v841 = vunpack.c.0.s8 %v840
      %v842 = vperm.slane %v837, %v841
      %844 = vset.pattern.permute.xlu0 0
      %845 = vperm.xlu0 %844, %v414
      %v846 = vpop.permute.xlu0 %845
      %v849 = vunpack.c.l.s4 839922192
      %v850 = vunpack.c.0.s8 %v849
      %v851 = vperm.slane %v846, %v850
      %853 = vset.pattern.permute.xlu0 0
      %854 = vperm.xlu0 %853, %v415
      %v855 = vpop.permute.xlu0 %854
      %v858 = vunpack.c.l.s4 839922192
      %v859 = vunpack.c.0.s8 %v858
      %v860 = vperm.slane %v855, %v859
      %862 = vset.pattern.permute.xlu0 0
      %863 = vperm.xlu0 %862, %v416
      %v864 = vpop.permute.xlu0 %863
      %v867 = vunpack.c.l.s4 839922192
      %v868 = vunpack.c.0.s8 %v867
      %v869 = vperm.slane %v864, %v868
      %871 = vset.pattern.permute.xlu0 0
      %872 = vperm.xlu0 %871, %v417
      %v873 = vpop.permute.xlu0 %872
      %v876 = vunpack.c.l.s4 839922192
      %v877 = vunpack.c.0.s8 %v876
      %v878 = vperm.slane %v873, %v877
      %880 = vset.pattern.permute.xlu0 0
      %881 = vperm.xlu0 %880, %v418
      %v882 = vpop.permute.xlu0 %881
      %v885 = vunpack.c.l.s4 839922192
      %v886 = vunpack.c.0.s8 %v885
      %v887 = vperm.slane %v882, %v886
      %889 = vset.pattern.permute.xlu0 0
      %890 = vperm.xlu0 %889, %v419
      %v891 = vpop.permute.xlu0 %890
      %v894 = vunpack.c.l.s4 839922192
      %v895 = vunpack.c.0.s8 %v894
      %v896 = vperm.slane %v891, %v895
      %898 = vset.pattern.permute.xlu0 0
      %899 = vperm.xlu0 %898, %v420
      %v900 = vpop.permute.xlu0 %899
      %v903 = vunpack.c.l.s4 839922192
      %v904 = vunpack.c.0.s8 %v903
      %v905 = vperm.slane %v900, %v904
      %907 = vset.pattern.permute.xlu0 0
      %908 = vperm.xlu0 %907, %v421
      %v909 = vpop.permute.xlu0 %908
      %v912 = vunpack.c.l.s4 839922192
      %v913 = vunpack.c.0.s8 %v912
      %v914 = vperm.slane %v909, %v913
      %916 = vset.pattern.permute.xlu0 0
      %917 = vperm.xlu0 %916, %v422
      %v918 = vpop.permute.xlu0 %917
      %v921 = vunpack.c.l.s4 839922192
      %v922 = vunpack.c.0.s8 %v921
      %v923 = vperm.slane %v918, %v922
      %925 = vset.pattern.permute.xlu0 0
      %926 = vperm.xlu0 %925, %v423
      %v927 = vpop.permute.xlu0 %926
      %v930 = vunpack.c.l.s4 839922192
      %v931 = vunpack.c.0.s8 %v930
      %v932 = vperm.slane %v927, %v931
      %934 = vset.pattern.permute.xlu0 0
      %935 = vperm.xlu0 %934, %v424
      %v936 = vpop.permute.xlu0 %935
      %v939 = vunpack.c.l.s4 839922192
      %v940 = vunpack.c.0.s8 %v939
      %v941 = vperm.slane %v936, %v940
      %v942 = vunpack.c.l.bf16 0
      %v943 = vunpack.c.h.bf16 0
      %v944 = vunpack.c.l.bf16 %v652
      %v945 = vunpack.c.h.bf16 %v652
      %v946 = vunpack.c.l.bf16 %v520
      %v947 = vunpack.c.h.bf16 %v520
      %v948 = vunpack.c.l.bf16 %v528
      %v949 = vunpack.c.h.bf16 %v528
      %v950 = vunpack.c.l.bf16 %v536
      %v951 = vunpack.c.h.bf16 %v536
      %v952 = vunpack.c.l.bf16 %v544
      %v953 = vunpack.c.h.bf16 %v544
      %v954 = vunpack.c.l.bf16 %v552
      %v955 = vunpack.c.h.bf16 %v552
      %v956 = vunpack.c.l.bf16 %v560
      %v957 = vunpack.c.h.bf16 %v560
      %v958 = vunpack.c.l.bf16 %v568
      %v959 = vunpack.c.h.bf16 %v568
      %v960 = vunpack.c.l.bf16 %v576
      %v961 = vunpack.c.h.bf16 %v576
      %v962 = vunpack.c.l.bf16 %v584
      %v963 = vunpack.c.h.bf16 %v584
      %v964 = vunpack.c.l.bf16 %v592
      %v965 = vunpack.c.h.bf16 %v592
      %v966 = vunpack.c.l.bf16 %v600
      %v967 = vunpack.c.h.bf16 %v600
      %v968 = vunpack.c.l.bf16 %v608
      %v969 = vunpack.c.h.bf16 %v608
      %v970 = vunpack.c.l.bf16 %v616
      %v971 = vunpack.c.h.bf16 %v616
      %v972 = vunpack.c.l.bf16 %v624
      %v973 = vunpack.c.h.bf16 %v624
      %v974 = vunpack.c.l.bf16 %v662
      %v975 = vunpack.c.l.bf16 %v671
      %v976 = vunpack.c.l.bf16 %v680
      %v977 = vunpack.c.l.bf16 %v689
      %v978 = vunpack.c.l.bf16 %v698
      %v979 = vunpack.c.l.bf16 %v707
      %v980 = vunpack.c.l.bf16 %v716
      %v981 = vunpack.c.l.bf16 %v725
      %v982 = vunpack.c.l.bf16 %v734
      %v983 = vunpack.c.l.bf16 %v743
      %v984 = vunpack.c.l.bf16 %v752
      %v985 = vunpack.c.l.bf16 %v761
      %v986 = vunpack.c.l.bf16 %v770
      %v987 = vunpack.c.l.bf16 %v779
      %v988 = vunpack.c.l.bf16 %v788
      %v989 = vunpack.c.l.bf16 %v797
      %v990 = vunpack.c.l.bf16 %v806
      %v991 = vunpack.c.l.bf16 %v815
      %v992 = vunpack.c.l.bf16 %v824
      %v993 = vunpack.c.l.bf16 %v833
      %v994 = vunpack.c.l.bf16 %v842
      %v995 = vunpack.c.l.bf16 %v851
      %v996 = vunpack.c.l.bf16 %v860
      %v997 = vunpack.c.l.bf16 %v869
      %v998 = vunpack.c.l.bf16 %v878
      %v999 = vunpack.c.l.bf16 %v887
      %v1000 = vunpack.c.l.bf16 %v896
      %v1001 = vunpack.c.l.bf16 %v905
      %v1002 = vunpack.c.l.bf16 %v914
      %v1003 = vunpack.c.l.bf16 %v923
      %v1004 = vunpack.c.l.bf16 %v932
      %v1005 = vunpack.c.l.bf16 %v941
      %v1006 = vmul.f32 %v942, %v974
      %v1007 = vmul.f32 %v943, %v975
      %v1008 = vmul.f32 %v944, %v976
      %v1009 = vmul.f32 %v945, %v977
      %v1010 = vmul.f32 %v946, %v978
      %v1011 = vmul.f32 %v947, %v979
      %v1012 = vmul.f32 %v948, %v980
      %v1013 = vmul.f32 %v949, %v981
      %v1014 = vmul.f32 %v950, %v982
      %v1015 = vmul.f32 %v951, %v983
      %v1016 = vmul.f32 %v952, %v984
      %v1017 = vmul.f32 %v953, %v985
      %v1018 = vmul.f32 %v954, %v986
      %v1019 = vmul.f32 %v955, %v987
      %v1020 = vmul.f32 %v956, %v988
      %v1021 = vmul.f32 %v957, %v989
      %v1022 = vmul.f32 %v958, %v990
      %v1023 = vmul.f32 %v959, %v991
      %v1024 = vmul.f32 %v960, %v992
      %v1025 = vmul.f32 %v961, %v993
      %v1026 = vmul.f32 %v962, %v994
      %v1027 = vmul.f32 %v963, %v995
      %v1028 = vmul.f32 %v964, %v996
      %v1029 = vmul.f32 %v965, %v997
      %v1030 = vmul.f32 %v966, %v998
      %v1031 = vmul.f32 %v967, %v999
      %v1032 = vmul.f32 %v968, %v1000
      %v1033 = vmul.f32 %v969, %v1001
      %v1034 = vmul.f32 %v970, %v1002
      %v1035 = vmul.f32 %v971, %v1003
      %v1036 = vmul.f32 %v972, %v1004
      %v1037 = vmul.f32 %v973, %v1005
      %v1038 = vpack.c.bf16 %v1006, %v1006
      %v1039 = vpack.c.bf16 %v1007, %v1007
      %v1040 = vpack.c.bf16 %v1008, %v1008
      %v1041 = vpack.c.bf16 %v1009, %v1009
      %v1042 = vpack.c.bf16 %v1010, %v1010
      %v1043 = vpack.c.bf16 %v1011, %v1011
      %v1044 = vpack.c.bf16 %v1012, %v1012
      %v1045 = vpack.c.bf16 %v1013, %v1013
      %v1046 = vpack.c.bf16 %v1014, %v1014
      %v1047 = vpack.c.bf16 %v1015, %v1015
      %v1048 = vpack.c.bf16 %v1016, %v1016
      %v1049 = vpack.c.bf16 %v1017, %v1017
      %v1050 = vpack.c.bf16 %v1018, %v1018
      %v1051 = vpack.c.bf16 %v1019, %v1019
      %v1052 = vpack.c.bf16 %v1020, %v1020
      %v1053 = vpack.c.bf16 %v1021, %v1021
      %v1054 = vpack.c.bf16 %v1022, %v1022
      %v1055 = vpack.c.bf16 %v1023, %v1023
      %v1056 = vpack.c.bf16 %v1024, %v1024
      %v1057 = vpack.c.bf16 %v1025, %v1025
      %v1058 = vpack.c.bf16 %v1026, %v1026
      %v1059 = vpack.c.bf16 %v1027, %v1027
      %v1060 = vpack.c.bf16 %v1028, %v1028
      %v1061 = vpack.c.bf16 %v1029, %v1029
      %v1062 = vpack.c.bf16 %v1030, %v1030
      %v1063 = vpack.c.bf16 %v1031, %v1031
      %v1064 = vpack.c.bf16 %v1032, %v1032
      %v1065 = vpack.c.bf16 %v1033, %v1033
      %v1066 = vpack.c.bf16 %v1034, %v1034
      %v1067 = vpack.c.bf16 %v1035, %v1035
      %v1068 = vpack.c.bf16 %v1036, %v1036
      %v1069 = vpack.c.bf16 %v1037, %v1037
      %1070 = vset.pattern.permute.xlu0 1
      %1071 = vperm.xlu0 %1070, %v393
      %v1072 = vpop.permute.xlu0 %1071
      %v1075 = vunpack.c.l.s4 839922192
      %v1076 = vunpack.c.0.s8 %v1075
      %v1077 = vperm.slane %v1072, %v1076
      %1078 = vset.pattern.permute.xlu0 1
      %1079 = vperm.xlu0 %1078, %v394
      %v1080 = vpop.permute.xlu0 %1079
      %v1083 = vunpack.c.l.s4 839922192
      %v1084 = vunpack.c.0.s8 %v1083
      %v1085 = vperm.slane %v1080, %v1084
      %1086 = vset.pattern.permute.xlu0 1
      %1087 = vperm.xlu0 %1086, %v395
      %v1088 = vpop.permute.xlu0 %1087
      %v1091 = vunpack.c.l.s4 839922192
      %v1092 = vunpack.c.0.s8 %v1091
      %v1093 = vperm.slane %v1088, %v1092
      %1094 = vset.pattern.permute.xlu0 1
      %1095 = vperm.xlu0 %1094, %v396
      %v1096 = vpop.permute.xlu0 %1095
      %v1099 = vunpack.c.l.s4 839922192
      %v1100 = vunpack.c.0.s8 %v1099
      %v1101 = vperm.slane %v1096, %v1100
      %1102 = vset.pattern.permute.xlu0 1
      %1103 = vperm.xlu0 %1102, %v397
      %v1104 = vpop.permute.xlu0 %1103
      %v1107 = vunpack.c.l.s4 839922192
      %v1108 = vunpack.c.0.s8 %v1107
      %v1109 = vperm.slane %v1104, %v1108
      %1110 = vset.pattern.permute.xlu0 1
      %1111 = vperm.xlu0 %1110, %v398
      %v1112 = vpop.permute.xlu0 %1111
      %v1115 = vunpack.c.l.s4 839922192
      %v1116 = vunpack.c.0.s8 %v1115
      %v1117 = vperm.slane %v1112, %v1116
      %1118 = vset.pattern.permute.xlu0 1
      %1119 = vperm.xlu0 %1118, %v399
      %v1120 = vpop.permute.xlu0 %1119
      %v1123 = vunpack.c.l.s4 839922192
      %v1124 = vunpack.c.0.s8 %v1123
      %v1125 = vperm.slane %v1120, %v1124
      %1126 = vset.pattern.permute.xlu0 1
      %1127 = vperm.xlu0 %1126, %v400
      %v1128 = vpop.permute.xlu0 %1127
      %v1131 = vunpack.c.l.s4 839922192
      %v1132 = vunpack.c.0.s8 %v1131
      %v1133 = vperm.slane %v1128, %v1132
      %1134 = vset.pattern.permute.xlu0 1
      %1135 = vperm.xlu0 %1134, %v401
      %v1136 = vpop.permute.xlu0 %1135
      %v1139 = vunpack.c.l.s4 839922192
      %v1140 = vunpack.c.0.s8 %v1139
      %v1141 = vperm.slane %v1136, %v1140
      %1142 = vset.pattern.permute.xlu0 1
      %1143 = vperm.xlu0 %1142, %v402
      %v1144 = vpop.permute.xlu0 %1143
      %v1147 = vunpack.c.l.s4 839922192
      %v1148 = vunpack.c.0.s8 %v1147
      %v1149 = vperm.slane %v1144, %v1148
      %1150 = vset.pattern.permute.xlu0 1
      %1151 = vperm.xlu0 %1150, %v403
      %v1152 = vpop.permute.xlu0 %1151
      %v1155 = vunpack.c.l.s4 839922192
      %v1156 = vunpack.c.0.s8 %v1155
      %v1157 = vperm.slane %v1152, %v1156
      %1158 = vset.pattern.permute.xlu0 1
      %1159 = vperm.xlu0 %1158, %v404
      %v1160 = vpop.permute.xlu0 %1159
      %v1163 = vunpack.c.l.s4 839922192
      %v1164 = vunpack.c.0.s8 %v1163
      %v1165 = vperm.slane %v1160, %v1164
      %1166 = vset.pattern.permute.xlu0 1
      %1167 = vperm.xlu0 %1166, %v405
      %v1168 = vpop.permute.xlu0 %1167
      %v1171 = vunpack.c.l.s4 839922192
      %v1172 = vunpack.c.0.s8 %v1171
      %v1173 = vperm.slane %v1168, %v1172
      %1174 = vset.pattern.permute.xlu0 1
      %1175 = vperm.xlu0 %1174, %v406
      %v1176 = vpop.permute.xlu0 %1175
      %v1179 = vunpack.c.l.s4 839922192
      %v1180 = vunpack.c.0.s8 %v1179
      %v1181 = vperm.slane %v1176, %v1180
      %1182 = vset.pattern.permute.xlu0 1
      %1183 = vperm.xlu0 %1182, %v407
      %v1184 = vpop.permute.xlu0 %1183
      %v1187 = vunpack.c.l.s4 839922192
      %v1188 = vunpack.c.0.s8 %v1187
      %v1189 = vperm.slane %v1184, %v1188
      %1190 = vset.pattern.permute.xlu0 1
      %1191 = vperm.xlu0 %1190, %v408
      %v1192 = vpop.permute.xlu0 %1191
      %v1195 = vunpack.c.l.s4 839922192
      %v1196 = vunpack.c.0.s8 %v1195
      %v1197 = vperm.slane %v1192, %v1196
      %1198 = vset.pattern.permute.xlu0 1
      %1199 = vperm.xlu0 %1198, %v409
      %v1200 = vpop.permute.xlu0 %1199
      %v1203 = vunpack.c.l.s4 839922192
      %v1204 = vunpack.c.0.s8 %v1203
      %v1205 = vperm.slane %v1200, %v1204
      %1206 = vset.pattern.permute.xlu0 1
      %1207 = vperm.xlu0 %1206, %v410
      %v1208 = vpop.permute.xlu0 %1207
      %v1211 = vunpack.c.l.s4 839922192
      %v1212 = vunpack.c.0.s8 %v1211
      %v1213 = vperm.slane %v1208, %v1212
      %1214 = vset.pattern.permute.xlu0 1
      %1215 = vperm.xlu0 %1214, %v411
      %v1216 = vpop.permute.xlu0 %1215
      %v1219 = vunpack.c.l.s4 839922192
      %v1220 = vunpack.c.0.s8 %v1219
      %v1221 = vperm.slane %v1216, %v1220
      %1222 = vset.pattern.permute.xlu0 1
      %1223 = vperm.xlu0 %1222, %v412
      %v1224 = vpop.permute.xlu0 %1223
      %v1227 = vunpack.c.l.s4 839922192
      %v1228 = vunpack.c.0.s8 %v1227
      %v1229 = vperm.slane %v1224, %v1228
      %1230 = vset.pattern.permute.xlu0 1
      %1231 = vperm.xlu0 %1230, %v413
      %v1232 = vpop.permute.xlu0 %1231
      %v1235 = vunpack.c.l.s4 839922192
      %v1236 = vunpack.c.0.s8 %v1235
      %v1237 = vperm.slane %v1232, %v1236
      %1238 = vset.pattern.permute.xlu0 1
      %1239 = vperm.xlu0 %1238, %v414
      %v1240 = vpop.permute.xlu0 %1239
      %v1243 = vunpack.c.l.s4 839922192
      %v1244 = vunpack.c.0.s8 %v1243
      %v1245 = vperm.slane %v1240, %v1244
      %1246 = vset.pattern.permute.xlu0 1
      %1247 = vperm.xlu0 %1246, %v415
      %v1248 = vpop.permute.xlu0 %1247
      %v1251 = vunpack.c.l.s4 839922192
      %v1252 = vunpack.c.0.s8 %v1251
      %v1253 = vperm.slane %v1248, %v1252
      %1254 = vset.pattern.permute.xlu0 1
      %1255 = vperm.xlu0 %1254, %v416
      %v1256 = vpop.permute.xlu0 %1255
      %v1259 = vunpack.c.l.s4 839922192
      %v1260 = vunpack.c.0.s8 %v1259
      %v1261 = vperm.slane %v1256, %v1260
      %1262 = vset.pattern.permute.xlu0 1
      %1263 = vperm.xlu0 %1262, %v417
      %v1264 = vpop.permute.xlu0 %1263
      %v1267 = vunpack.c.l.s4 839922192
      %v1268 = vunpack.c.0.s8 %v1267
      %v1269 = vperm.slane %v1264, %v1268
      %1270 = vset.pattern.permute.xlu0 1
      %1271 = vperm.xlu0 %1270, %v418
      %v1272 = vpop.permute.xlu0 %1271
      %v1275 = vunpack.c.l.s4 839922192
      %v1276 = vunpack.c.0.s8 %v1275
      %v1277 = vperm.slane %v1272, %v1276
      %1278 = vset.pattern.permute.xlu0 1
      %1279 = vperm.xlu0 %1278, %v419
      %v1280 = vpop.permute.xlu0 %1279
      %v1283 = vunpack.c.l.s4 839922192
      %v1284 = vunpack.c.0.s8 %v1283
      %v1285 = vperm.slane %v1280, %v1284
      %1286 = vset.pattern.permute.xlu0 1
      %1287 = vperm.xlu0 %1286, %v420
      %v1288 = vpop.permute.xlu0 %1287
      %v1291 = vunpack.c.l.s4 839922192
      %v1292 = vunpack.c.0.s8 %v1291
      %v1293 = vperm.slane %v1288, %v1292
      %1294 = vset.pattern.permute.xlu0 1
      %1295 = vperm.xlu0 %1294, %v421
      %v1296 = vpop.permute.xlu0 %1295
      %v1299 = vunpack.c.l.s4 839922192
      %v1300 = vunpack.c.0.s8 %v1299
      %v1301 = vperm.slane %v1296, %v1300
      %1302 = vset.pattern.permute.xlu0 1
      %1303 = vperm.xlu0 %1302, %v422
      %v1304 = vpop.permute.xlu0 %1303
      %v1307 = vunpack.c.l.s4 839922192
      %v1308 = vunpack.c.0.s8 %v1307
      %v1309 = vperm.slane %v1304, %v1308
      %1310 = vset.pattern.permute.xlu0 1
      %1311 = vperm.xlu0 %1310, %v423
      %v1312 = vpop.permute.xlu0 %1311
      %v1315 = vunpack.c.l.s4 839922192
      %v1316 = vunpack.c.0.s8 %v1315
      %v1317 = vperm.slane %v1312, %v1316
      %1318 = vset.pattern.permute.xlu0 1
      %1319 = vperm.xlu0 %1318, %v424
      %v1320 = vpop.permute.xlu0 %1319
      %v1323 = vunpack.c.l.s4 839922192
      %v1324 = vunpack.c.0.s8 %v1323
      %v1325 = vperm.slane %v1320, %v1324
      %v1326 = vunpack.c.l.bf16 %v632
      %v1327 = vunpack.c.l.bf16 %v1077
      %v1328 = vunpack.c.l.bf16 %v1085
      %v1329 = vunpack.c.l.bf16 %v1093
      %v1330 = vunpack.c.l.bf16 %v1101
      %v1331 = vunpack.c.l.bf16 %v1109
      %v1332 = vunpack.c.l.bf16 %v1117
      %v1333 = vunpack.c.l.bf16 %v1125
      %v1334 = vunpack.c.l.bf16 %v1133
      %v1335 = vunpack.c.l.bf16 %v1141
      %v1336 = vunpack.c.l.bf16 %v1149
      %v1337 = vunpack.c.l.bf16 %v1157
      %v1338 = vunpack.c.l.bf16 %v1165
      %v1339 = vunpack.c.l.bf16 %v1173
      %v1340 = vunpack.c.l.bf16 %v1181
      %v1341 = vunpack.c.l.bf16 %v1189
      %v1342 = vunpack.c.l.bf16 %v1197
      %v1343 = vunpack.c.l.bf16 %v1205
      %v1344 = vunpack.c.l.bf16 %v1213
      %v1345 = vunpack.c.l.bf16 %v1221
      %v1346 = vunpack.c.l.bf16 %v1229
      %v1347 = vunpack.c.l.bf16 %v1237
      %v1348 = vunpack.c.l.bf16 %v1245
      %v1349 = vunpack.c.l.bf16 %v1253
      %v1350 = vunpack.c.l.bf16 %v1261
      %v1351 = vunpack.c.l.bf16 %v1269
      %v1352 = vunpack.c.l.bf16 %v1277
      %v1353 = vunpack.c.l.bf16 %v1285
      %v1354 = vunpack.c.l.bf16 %v1293
      %v1355 = vunpack.c.l.bf16 %v1301
      %v1356 = vunpack.c.l.bf16 %v1309
      %v1357 = vunpack.c.l.bf16 %v1317
      %v1358 = vunpack.c.l.bf16 %v1325
      %vm1391 = vcmask 1040384
      %v1392 = vrot.slane %v1327, 7
      %v1393 = vrot.slane %v1328, 7
      %v1394 = vsel %vm1391, %v1392, %v1393
      %v1395 = vrot.slane %v1329, 7
      %v1396 = vsel %vm1391, %v1393, %v1395
      %v1397 = vrot.slane %v1330, 7
      %v1398 = vsel %vm1391, %v1395, %v1397
      %v1399 = vrot.slane %v1331, 7
      %v1400 = vsel %vm1391, %v1397, %v1399
      %v1401 = vrot.slane %v1332, 7
      %v1402 = vsel %vm1391, %v1399, %v1401
      %v1403 = vrot.slane %v1333, 7
      %v1404 = vsel %vm1391, %v1401, %v1403
      %v1405 = vrot.slane %v1334, 7
      %v1406 = vsel %vm1391, %v1403, %v1405
      %v1407 = vrot.slane %v1335, 7
      %v1408 = vsel %vm1391, %v1405, %v1407
      %v1409 = vrot.slane %v1336, 7
      %v1410 = vsel %vm1391, %v1407, %v1409
      %v1411 = vrot.slane %v1337, 7
      %v1412 = vsel %vm1391, %v1409, %v1411
      %v1413 = vrot.slane %v1338, 7
      %v1414 = vsel %vm1391, %v1411, %v1413
      %v1415 = vrot.slane %v1339, 7
      %v1416 = vsel %vm1391, %v1413, %v1415
      %v1417 = vrot.slane %v1340, 7
      %v1418 = vsel %vm1391, %v1415, %v1417
      %v1419 = vrot.slane %v1341, 7
      %v1420 = vsel %vm1391, %v1417, %v1419
      %v1421 = vrot.slane %v1342, 7
      %v1422 = vsel %vm1391, %v1419, %v1421
      %v1423 = vrot.slane %v1343, 7
      %v1424 = vsel %vm1391, %v1421, %v1423
      %v1425 = vrot.slane %v1344, 7
      %v1426 = vsel %vm1391, %v1423, %v1425
      %v1427 = vrot.slane %v1345, 7
      %v1428 = vsel %vm1391, %v1425, %v1427
      %v1429 = vrot.slane %v1346, 7
      %v1430 = vsel %vm1391, %v1427, %v1429
      %v1431 = vrot.slane %v1347, 7
      %v1432 = vsel %vm1391, %v1429, %v1431
      %v1433 = vrot.slane %v1348, 7
      %v1434 = vsel %vm1391, %v1431, %v1433
      %v1435 = vrot.slane %v1349, 7
      %v1436 = vsel %vm1391, %v1433, %v1435
      %v1437 = vrot.slane %v1350, 7
      %v1438 = vsel %vm1391, %v1435, %v1437
      %v1439 = vrot.slane %v1351, 7
      %v1440 = vsel %vm1391, %v1437, %v1439
      %v1441 = vrot.slane %v1352, 7
      %v1442 = vsel %vm1391, %v1439, %v1441
      %v1443 = vrot.slane %v1353, 7
      %v1444 = vsel %vm1391, %v1441, %v1443
      %v1445 = vrot.slane %v1354, 7
      %v1446 = vsel %vm1391, %v1443, %v1445
      %v1447 = vrot.slane %v1355, 7
      %v1448 = vsel %vm1391, %v1445, %v1447
      %v1449 = vrot.slane %v1356, 7
      %v1450 = vsel %vm1391, %v1447, %v1449
      %v1451 = vrot.slane %v1357, 7
      %v1452 = vsel %vm1391, %v1449, %v1451
      %v1453 = vrot.slane %v1358, 7
      %v1454 = vsel %vm1391, %v1451, %v1453
      %v1488 = vmul.f32 %v942, %v1392
      %v1489 = vmul.f32 %v943, %v1394
      %v1490 = vmul.f32 %v944, %v1396
      %v1491 = vmul.f32 %v945, %v1398
      %v1492 = vmul.f32 %v946, %v1400
      %v1493 = vmul.f32 %v947, %v1402
      %v1494 = vmul.f32 %v948, %v1404
      %v1495 = vmul.f32 %v949, %v1406
      %v1496 = vmul.f32 %v950, %v1408
      %v1497 = vmul.f32 %v951, %v1410
      %v1498 = vmul.f32 %v952, %v1412
      %v1499 = vmul.f32 %v953, %v1414
      %v1500 = vmul.f32 %v954, %v1416
      %v1501 = vmul.f32 %v955, %v1418
      %v1502 = vmul.f32 %v956, %v1420
      %v1503 = vmul.f32 %v957, %v1422
      %v1504 = vmul.f32 %v958, %v1424
      %v1505 = vmul.f32 %v959, %v1426
      %v1506 = vmul.f32 %v960, %v1428
      %v1507 = vmul.f32 %v961, %v1430
      %v1508 = vmul.f32 %v962, %v1432
      %v1509 = vmul.f32 %v963, %v1434
      %v1510 = vmul.f32 %v964, %v1436
      %v1511 = vmul.f32 %v965, %v1438
      %v1512 = vmul.f32 %v966, %v1440
      %v1513 = vmul.f32 %v967, %v1442
      %v1514 = vmul.f32 %v968, %v1444
      %v1515 = vmul.f32 %v969, %v1446
      %v1516 = vmul.f32 %v970, %v1448
      %v1517 = vmul.f32 %v971, %v1450
      %v1518 = vmul.f32 %v972, %v1452
      %v1519 = vmul.f32 %v973, %v1454
      %v1520 = vmul.f32 %v1326, %v1453
      %v1521 = vpack.c.bf16 %v1488, %v1488
      %v1522 = vpack.c.bf16 %v1489, %v1489
      %v1523 = vpack.c.bf16 %v1490, %v1490
      %v1524 = vpack.c.bf16 %v1491, %v1491
      %v1525 = vpack.c.bf16 %v1492, %v1492
      %v1526 = vpack.c.bf16 %v1493, %v1493
      %v1527 = vpack.c.bf16 %v1494, %v1494
      %v1528 = vpack.c.bf16 %v1495, %v1495
      %v1529 = vpack.c.bf16 %v1496, %v1496
      %v1530 = vpack.c.bf16 %v1497, %v1497
      %v1531 = vpack.c.bf16 %v1498, %v1498
      %v1532 = vpack.c.bf16 %v1499, %v1499
      %v1533 = vpack.c.bf16 %v1500, %v1500
      %v1534 = vpack.c.bf16 %v1501, %v1501
      %v1535 = vpack.c.bf16 %v1502, %v1502
      %v1536 = vpack.c.bf16 %v1503, %v1503
      %v1537 = vpack.c.bf16 %v1504, %v1504
      %v1538 = vpack.c.bf16 %v1505, %v1505
      %v1539 = vpack.c.bf16 %v1506, %v1506
      %v1540 = vpack.c.bf16 %v1507, %v1507
      %v1541 = vpack.c.bf16 %v1508, %v1508
      %v1542 = vpack.c.bf16 %v1509, %v1509
      %v1543 = vpack.c.bf16 %v1510, %v1510
      %v1544 = vpack.c.bf16 %v1511, %v1511
      %v1545 = vpack.c.bf16 %v1512, %v1512
      %v1546 = vpack.c.bf16 %v1513, %v1513
      %v1547 = vpack.c.bf16 %v1514, %v1514
      %v1548 = vpack.c.bf16 %v1515, %v1515
      %v1549 = vpack.c.bf16 %v1516, %v1516
      %v1550 = vpack.c.bf16 %v1517, %v1517
      %v1551 = vpack.c.bf16 %v1518, %v1518
      %v1552 = vpack.c.bf16 %v1519, %v1519
      %v1553 = vpack.c.bf16 %v1520, %v1520
      %1554 = vset.pattern.permute.xlu0 2
      %1555 = vperm.xlu0 %1554, %v393
      %v1556 = vpop.permute.xlu0 %1555
      %v1559 = vunpack.c.l.s4 839922192
      %v1560 = vunpack.c.0.s8 %v1559
      %v1561 = vperm.slane %v1556, %v1560
      %1562 = vset.pattern.permute.xlu0 2
      %1563 = vperm.xlu0 %1562, %v394
      %v1564 = vpop.permute.xlu0 %1563
      %v1567 = vunpack.c.l.s4 839922192
      %v1568 = vunpack.c.0.s8 %v1567
      %v1569 = vperm.slane %v1564, %v1568
      %1570 = vset.pattern.permute.xlu0 2
      %1571 = vperm.xlu0 %1570, %v395
      %v1572 = vpop.permute.xlu0 %1571
      %v1575 = vunpack.c.l.s4 839922192
      %v1576 = vunpack.c.0.s8 %v1575
      %v1577 = vperm.slane %v1572, %v1576
      %1578 = vset.pattern.permute.xlu0 2
      %1579 = vperm.xlu0 %1578, %v396
      %v1580 = vpop.permute.xlu0 %1579
      %v1583 = vunpack.c.l.s4 839922192
      %v1584 = vunpack.c.0.s8 %v1583
      %v1585 = vperm.slane %v1580, %v1584
      %1586 = vset.pattern.permute.xlu0 2
      %1587 = vperm.xlu0 %1586, %v397
      %v1588 = vpop.permute.xlu0 %1587
      %v1591 = vunpack.c.l.s4 839922192
      %v1592 = vunpack.c.0.s8 %v1591
      %v1593 = vperm.slane %v1588, %v1592
      %1594 = vset.pattern.permute.xlu0 2
      %1595 = vperm.xlu0 %1594, %v398
      %v1596 = vpop.permute.xlu0 %1595
      %v1599 = vunpack.c.l.s4 839922192
      %v1600 = vunpack.c.0.s8 %v1599
      %v1601 = vperm.slane %v1596, %v1600
      %1602 = vset.pattern.permute.xlu0 2
      %1603 = vperm.xlu0 %1602, %v399
      %v1604 = vpop.permute.xlu0 %1603
      %v1607 = vunpack.c.l.s4 839922192
      %v1608 = vunpack.c.0.s8 %v1607
      %v1609 = vperm.slane %v1604, %v1608
      %1610 = vset.pattern.permute.xlu0 2
      %1611 = vperm.xlu0 %1610, %v400
      %v1612 = vpop.permute.xlu0 %1611
      %v1615 = vunpack.c.l.s4 839922192
      %v1616 = vunpack.c.0.s8 %v1615
      %v1617 = vperm.slane %v1612, %v1616
      %1618 = vset.pattern.permute.xlu0 2
      %1619 = vperm.xlu0 %1618, %v401
      %v1620 = vpop.permute.xlu0 %1619
      %v1623 = vunpack.c.l.s4 839922192
      %v1624 = vunpack.c.0.s8 %v1623
      %v1625 = vperm.slane %v1620, %v1624
      %1626 = vset.pattern.permute.xlu0 2
      %1627 = vperm.xlu0 %1626, %v402
      %v1628 = vpop.permute.xlu0 %1627
      %v1631 = vunpack.c.l.s4 839922192
      %v1632 = vunpack.c.0.s8 %v1631
      %v1633 = vperm.slane %v1628, %v1632
      %1634 = vset.pattern.permute.xlu0 2
      %1635 = vperm.xlu0 %1634, %v403
      %v1636 = vpop.permute.xlu0 %1635
      %v1639 = vunpack.c.l.s4 839922192
      %v1640 = vunpack.c.0.s8 %v1639
      %v1641 = vperm.slane %v1636, %v1640
      %1642 = vset.pattern.permute.xlu0 2
      %1643 = vperm.xlu0 %1642, %v404
      %v1644 = vpop.permute.xlu0 %1643
      %v1647 = vunpack.c.l.s4 839922192
      %v1648 = vunpack.c.0.s8 %v1647
      %v1649 = vperm.slane %v1644, %v1648
      %1650 = vset.pattern.permute.xlu0 2
      %1651 = vperm.xlu0 %1650, %v405
      %v1652 = vpop.permute.xlu0 %1651
      %v1655 = vunpack.c.l.s4 839922192
      %v1656 = vunpack.c.0.s8 %v1655
      %v1657 = vperm.slane %v1652, %v1656
      %1658 = vset.pattern.permute.xlu0 2
      %1659 = vperm.xlu0 %1658, %v406
      %v1660 = vpop.permute.xlu0 %1659
      %v1663 = vunpack.c.l.s4 839922192
      %v1664 = vunpack.c.0.s8 %v1663
      %v1665 = vperm.slane %v1660, %v1664
      %1666 = vset.pattern.permute.xlu0 2
      %1667 = vperm.xlu0 %1666, %v407
      %v1668 = vpop.permute.xlu0 %1667
      %v1671 = vunpack.c.l.s4 839922192
      %v1672 = vunpack.c.0.s8 %v1671
      %v1673 = vperm.slane %v1668, %v1672
      %1674 = vset.pattern.permute.xlu0 2
      %1675 = vperm.xlu0 %1674, %v408
      %v1676 = vpop.permute.xlu0 %1675
      %v1679 = vunpack.c.l.s4 839922192
      %v1680 = vunpack.c.0.s8 %v1679
      %v1681 = vperm.slane %v1676, %v1680
      %1682 = vset.pattern.permute.xlu0 2
      %1683 = vperm.xlu0 %1682, %v409
      %v1684 = vpop.permute.xlu0 %1683
      %v1687 = vunpack.c.l.s4 839922192
      %v1688 = vunpack.c.0.s8 %v1687
      %v1689 = vperm.slane %v1684, %v1688
      %1690 = vset.pattern.permute.xlu0 2
      %1691 = vperm.xlu0 %1690, %v410
      %v1692 = vpop.permute.xlu0 %1691
      %v1695 = vunpack.c.l.s4 839922192
      %v1696 = vunpack.c.0.s8 %v1695
      %v1697 = vperm.slane %v1692, %v1696
      %1698 = vset.pattern.permute.xlu0 2
      %1699 = vperm.xlu0 %1698, %v411
      %v1700 = vpop.permute.xlu0 %1699
      %v1703 = vunpack.c.l.s4 839922192
      %v1704 = vunpack.c.0.s8 %v1703
      %v1705 = vperm.slane %v1700, %v1704
      %1706 = vset.pattern.permute.xlu0 2
      %1707 = vperm.xlu0 %1706, %v412
      %v1708 = vpop.permute.xlu0 %1707
      %v1711 = vunpack.c.l.s4 839922192
      %v1712 = vunpack.c.0.s8 %v1711
      %v1713 = vperm.slane %v1708, %v1712
      %1714 = vset.pattern.permute.xlu0 2
      %1715 = vperm.xlu0 %1714, %v413
      %v1716 = vpop.permute.xlu0 %1715
      %v1719 = vunpack.c.l.s4 839922192
      %v1720 = vunpack.c.0.s8 %v1719
      %v1721 = vperm.slane %v1716, %v1720
      %1722 = vset.pattern.permute.xlu0 2
      %1723 = vperm.xlu0 %1722, %v414
      %v1724 = vpop.permute.xlu0 %1723
      %v1727 = vunpack.c.l.s4 839922192
      %v1728 = vunpack.c.0.s8 %v1727
      %v1729 = vperm.slane %v1724, %v1728
      %1730 = vset.pattern.permute.xlu0 2
      %1731 = vperm.xlu0 %1730, %v415
      %v1732 = vpop.permute.xlu0 %1731
      %v1735 = vunpack.c.l.s4 839922192
      %v1736 = vunpack.c.0.s8 %v1735
      %v1737 = vperm.slane %v1732, %v1736
      %1738 = vset.pattern.permute.xlu0 2
      %1739 = vperm.xlu0 %1738, %v416
      %v1740 = vpop.permute.xlu0 %1739
      %v1743 = vunpack.c.l.s4 839922192
      %v1744 = vunpack.c.0.s8 %v1743
      %v1745 = vperm.slane %v1740, %v1744
      %1746 = vset.pattern.permute.xlu0 2
      %1747 = vperm.xlu0 %1746, %v417
      %v1748 = vpop.permute.xlu0 %1747
      %v1751 = vunpack.c.l.s4 839922192
      %v1752 = vunpack.c.0.s8 %v1751
      %v1753 = vperm.slane %v1748, %v1752
      %1754 = vset.pattern.permute.xlu0 2
      %1755 = vperm.xlu0 %1754, %v418
      %v1756 = vpop.permute.xlu0 %1755
      %v1759 = vunpack.c.l.s4 839922192
      %v1760 = vunpack.c.0.s8 %v1759
      %v1761 = vperm.slane %v1756, %v1760
      %1762 = vset.pattern.permute.xlu0 2
      %1763 = vperm.xlu0 %1762, %v419
      %v1764 = vpop.permute.xlu0 %1763
      %v1767 = vunpack.c.l.s4 839922192
      %v1768 = vunpack.c.0.s8 %v1767
      %v1769 = vperm.slane %v1764, %v1768
      %1770 = vset.pattern.permute.xlu0 2
      %1771 = vperm.xlu0 %1770, %v420
      %v1772 = vpop.permute.xlu0 %1771
      %v1775 = vunpack.c.l.s4 839922192
      %v1776 = vunpack.c.0.s8 %v1775
      %v1777 = vperm.slane %v1772, %v1776
      %1778 = vset.pattern.permute.xlu0 2
      %1779 = vperm.xlu0 %1778, %v421
      %v1780 = vpop.permute.xlu0 %1779
      %v1783 = vunpack.c.l.s4 839922192
      %v1784 = vunpack.c.0.s8 %v1783
      %v1785 = vperm.slane %v1780, %v1784
      %1786 = vset.pattern.permute.xlu0 2
      %1787 = vperm.xlu0 %1786, %v422
      %v1788 = vpop.permute.xlu0 %1787
      %v1791 = vunpack.c.l.s4 839922192
      %v1792 = vunpack.c.0.s8 %v1791
      %v1793 = vperm.slane %v1788, %v1792
      %1794 = vset.pattern.permute.xlu0 2
      %1795 = vperm.xlu0 %1794, %v423
      %v1796 = vpop.permute.xlu0 %1795
      %v1799 = vunpack.c.l.s4 839922192
      %v1800 = vunpack.c.0.s8 %v1799
      %v1801 = vperm.slane %v1796, %v1800
      %1802 = vset.pattern.permute.xlu0 2
      %1803 = vperm.xlu0 %1802, %v424
      %v1804 = vpop.permute.xlu0 %1803
      %v1807 = vunpack.c.l.s4 839922192
      %v1808 = vunpack.c.0.s8 %v1807
      %v1809 = vperm.slane %v1804, %v1808
      %v1810 = vunpack.c.l.bf16 %v1561
      %v1811 = vunpack.c.l.bf16 %v1569
      %v1812 = vunpack.c.l.bf16 %v1577
      %v1813 = vunpack.c.l.bf16 %v1585
      %v1814 = vunpack.c.l.bf16 %v1593
      %v1815 = vunpack.c.l.bf16 %v1601
      %v1816 = vunpack.c.l.bf16 %v1609
      %v1817 = vunpack.c.l.bf16 %v1617
      %v1818 = vunpack.c.l.bf16 %v1625
      %v1819 = vunpack.c.l.bf16 %v1633
      %v1820 = vunpack.c.l.bf16 %v1641
      %v1821 = vunpack.c.l.bf16 %v1649
      %v1822 = vunpack.c.l.bf16 %v1657
      %v1823 = vunpack.c.l.bf16 %v1665
      %v1824 = vunpack.c.l.bf16 %v1673
      %v1825 = vunpack.c.l.bf16 %v1681
      %v1826 = vunpack.c.l.bf16 %v1689
      %v1827 = vunpack.c.l.bf16 %v1697
      %v1828 = vunpack.c.l.bf16 %v1705
      %v1829 = vunpack.c.l.bf16 %v1713
      %v1830 = vunpack.c.l.bf16 %v1721
      %v1831 = vunpack.c.l.bf16 %v1729
      %v1832 = vunpack.c.l.bf16 %v1737
      %v1833 = vunpack.c.l.bf16 %v1745
      %v1834 = vunpack.c.l.bf16 %v1753
      %v1835 = vunpack.c.l.bf16 %v1761
      %v1836 = vunpack.c.l.bf16 %v1769
      %v1837 = vunpack.c.l.bf16 %v1777
      %v1838 = vunpack.c.l.bf16 %v1785
      %v1839 = vunpack.c.l.bf16 %v1793
      %v1840 = vunpack.c.l.bf16 %v1801
      %v1841 = vunpack.c.l.bf16 %v1809
      %vm1874 = vcmask 1041408
      %v1875 = vrot.slane %v1810, 6
      %v1876 = vrot.slane %v1811, 6
      %v1877 = vsel %vm1874, %v1875, %v1876
      %v1878 = vrot.slane %v1812, 6
      %v1879 = vsel %vm1874, %v1876, %v1878
      %v1880 = vrot.slane %v1813, 6
      %v1881 = vsel %vm1874, %v1878, %v1880
      %v1882 = vrot.slane %v1814, 6
      %v1883 = vsel %vm1874, %v1880, %v1882
      %v1884 = vrot.slane %v1815, 6
      %v1885 = vsel %vm1874, %v1882, %v1884
      %v1886 = vrot.slane %v1816, 6
      %v1887 = vsel %vm1874, %v1884, %v1886
      %v1888 = vrot.slane %v1817, 6
      %v1889 = vsel %vm1874, %v1886, %v1888
      %v1890 = vrot.slane %v1818, 6
      %v1891 = vsel %vm1874, %v1888, %v1890
      %v1892 = vrot.slane %v1819, 6
      %v1893 = vsel %vm1874, %v1890, %v1892
      %v1894 = vrot.slane %v1820, 6
      %v1895 = vsel %vm1874, %v1892, %v1894
      %v1896 = vrot.slane %v1821, 6
      %v1897 = vsel %vm1874, %v1894, %v1896
      %v1898 = vrot.slane %v1822, 6
      %v1899 = vsel %vm1874, %v1896, %v1898
      %v1900 = vrot.slane %v1823, 6
      %v1901 = vsel %vm1874, %v1898, %v1900
      %v1902 = vrot.slane %v1824, 6
      %v1903 = vsel %vm1874, %v1900, %v1902
      %v1904 = vrot.slane %v1825, 6
      %v1905 = vsel %vm1874, %v1902, %v1904
      %v1906 = vrot.slane %v1826, 6
      %v1907 = vsel %vm1874, %v1904, %v1906
      %v1908 = vrot.slane %v1827, 6
      %v1909 = vsel %vm1874, %v1906, %v1908
      %v1910 = vrot.slane %v1828, 6
      %v1911 = vsel %vm1874, %v1908, %v1910
      %v1912 = vrot.slane %v1829, 6
      %v1913 = vsel %vm1874, %v1910, %v1912
      %v1914 = vrot.slane %v1830, 6
      %v1915 = vsel %vm1874, %v1912, %v1914
      %v1916 = vrot.slane %v1831, 6
      %v1917 = vsel %vm1874, %v1914, %v1916
      %v1918 = vrot.slane %v1832, 6
      %v1919 = vsel %vm1874, %v1916, %v1918
      %v1920 = vrot.slane %v1833, 6
      %v1921 = vsel %vm1874, %v1918, %v1920
      %v1922 = vrot.slane %v1834, 6
      %v1923 = vsel %vm1874, %v1920, %v1922
      %v1924 = vrot.slane %v1835, 6
      %v1925 = vsel %vm1874, %v1922, %v1924
      %v1926 = vrot.slane %v1836, 6
      %v1927 = vsel %vm1874, %v1924, %v1926
      %v1928 = vrot.slane %v1837, 6
      %v1929 = vsel %vm1874, %v1926, %v1928
      %v1930 = vrot.slane %v1838, 6
      %v1931 = vsel %vm1874, %v1928, %v1930
      %v1932 = vrot.slane %v1839, 6
      %v1933 = vsel %vm1874, %v1930, %v1932
      %v1934 = vrot.slane %v1840, 6
      %v1935 = vsel %vm1874, %v1932, %v1934
      %v1936 = vrot.slane %v1841, 6
      %v1937 = vsel %vm1874, %v1934, %v1936
      %v1971 = vmul.f32 %v942, %v1875
      %v1972 = vmul.f32 %v943, %v1877
      %v1973 = vmul.f32 %v944, %v1879
      %v1974 = vmul.f32 %v945, %v1881
      %v1975 = vmul.f32 %v946, %v1883
      %v1976 = vmul.f32 %v947, %v1885
      %v1977 = vmul.f32 %v948, %v1887
      %v1978 = vmul.f32 %v949, %v1889
      %v1979 = vmul.f32 %v950, %v1891
      %v1980 = vmul.f32 %v951, %v1893
      %v1981 = vmul.f32 %v952, %v1895
      %v1982 = vmul.f32 %v953, %v1897
      %v1983 = vmul.f32 %v954, %v1899
      %v1984 = vmul.f32 %v955, %v1901
      %v1985 = vmul.f32 %v956, %v1903
      %v1986 = vmul.f32 %v957, %v1905
      %v1987 = vmul.f32 %v958, %v1907
      %v1988 = vmul.f32 %v959, %v1909
      %v1989 = vmul.f32 %v960, %v1911
      %v1990 = vmul.f32 %v961, %v1913
      %v1991 = vmul.f32 %v962, %v1915
      %v1992 = vmul.f32 %v963, %v1917
      %v1993 = vmul.f32 %v964, %v1919
      %v1994 = vmul.f32 %v965, %v1921
      %v1995 = vmul.f32 %v966, %v1923
      %v1996 = vmul.f32 %v967, %v1925
      %v1997 = vmul.f32 %v968, %v1927
      %v1998 = vmul.f32 %v969, %v1929
      %v1999 = vmul.f32 %v970, %v1931
      %v2000 = vmul.f32 %v971, %v1933
      %v2001 = vmul.f32 %v972, %v1935
      %v2002 = vmul.f32 %v973, %v1937
      %v2003 = vmul.f32 %v1326, %v1936
      %v2004 = vpack.c.bf16 %v1971, %v1971
      %v2005 = vpack.c.bf16 %v1972, %v1972
      %v2006 = vpack.c.bf16 %v1973, %v1973
      %v2007 = vpack.c.bf16 %v1974, %v1974
      %v2008 = vpack.c.bf16 %v1975, %v1975
      %v2009 = vpack.c.bf16 %v1976, %v1976
      %v2010 = vpack.c.bf16 %v1977, %v1977
      %v2011 = vpack.c.bf16 %v1978, %v1978
      %v2012 = vpack.c.bf16 %v1979, %v1979
      %v2013 = vpack.c.bf16 %v1980, %v1980
      %v2014 = vpack.c.bf16 %v1981, %v1981
      %v2015 = vpack.c.bf16 %v1982, %v1982
      %v2016 = vpack.c.bf16 %v1983, %v1983
      %v2017 = vpack.c.bf16 %v1984, %v1984
      %v2018 = vpack.c.bf16 %v1985, %v1985
      %v2019 = vpack.c.bf16 %v1986, %v1986
      %v2020 = vpack.c.bf16 %v1987, %v1987
      %v2021 = vpack.c.bf16 %v1988, %v1988
      %v2022 = vpack.c.bf16 %v1989, %v1989
      %v2023 = vpack.c.bf16 %v1990, %v1990
      %v2024 = vpack.c.bf16 %v1991, %v1991
      %v2025 = vpack.c.bf16 %v1992, %v1992
      %v2026 = vpack.c.bf16 %v1993, %v1993
      %v2027 = vpack.c.bf16 %v1994, %v1994
      %v2028 = vpack.c.bf16 %v1995, %v1995
      %v2029 = vpack.c.bf16 %v1996, %v1996
      %v2030 = vpack.c.bf16 %v1997, %v1997
      %v2031 = vpack.c.bf16 %v1998, %v1998
      %v2032 = vpack.c.bf16 %v1999, %v1999
      %v2033 = vpack.c.bf16 %v2000, %v2000
      %v2034 = vpack.c.bf16 %v2001, %v2001
      %v2035 = vpack.c.bf16 %v2002, %v2002
      %v2036 = vpack.c.bf16 %v2003, %v2003
      %2037 = vset.pattern.permute.xlu0 3
      %2038 = vperm.xlu0 %2037, %v393
      %v2039 = vpop.permute.xlu0 %2038
      %v2042 = vunpack.c.l.s4 839922192
      %v2043 = vunpack.c.0.s8 %v2042
      %v2044 = vperm.slane %v2039, %v2043
      %2045 = vset.pattern.permute.xlu0 3
      %2046 = vperm.xlu0 %2045, %v394
      %v2047 = vpop.permute.xlu0 %2046
      %v2050 = vunpack.c.l.s4 839922192
      %v2051 = vunpack.c.0.s8 %v2050
      %v2052 = vperm.slane %v2047, %v2051
      %2053 = vset.pattern.permute.xlu0 3
      %2054 = vperm.xlu0 %2053, %v395
      %v2055 = vpop.permute.xlu0 %2054
      %v2058 = vunpack.c.l.s4 839922192
      %v2059 = vunpack.c.0.s8 %v2058
      %v2060 = vperm.slane %v2055, %v2059
      %2061 = vset.pattern.permute.xlu0 3
      %2062 = vperm.xlu0 %2061, %v396
      %v2063 = vpop.permute.xlu0 %2062
      %v2066 = vunpack.c.l.s4 839922192
      %v2067 = vunpack.c.0.s8 %v2066
      %v2068 = vperm.slane %v2063, %v2067
      %2069 = vset.pattern.permute.xlu0 3
      %2070 = vperm.xlu0 %2069, %v397
      %v2071 = vpop.permute.xlu0 %2070
      %v2074 = vunpack.c.l.s4 839922192
      %v2075 = vunpack.c.0.s8 %v2074
      %v2076 = vperm.slane %v2071, %v2075
      %2077 = vset.pattern.permute.xlu0 3
      %2078 = vperm.xlu0 %2077, %v398
      %v2079 = vpop.permute.xlu0 %2078
      %v2082 = vunpack.c.l.s4 839922192
      %v2083 = vunpack.c.0.s8 %v2082
      %v2084 = vperm.slane %v2079, %v2083
      %2085 = vset.pattern.permute.xlu0 3
      %2086 = vperm.xlu0 %2085, %v399
      %v2087 = vpop.permute.xlu0 %2086
      %v2090 = vunpack.c.l.s4 839922192
      %v2091 = vunpack.c.0.s8 %v2090
      %v2092 = vperm.slane %v2087, %v2091
      %2093 = vset.pattern.permute.xlu0 3
      %2094 = vperm.xlu0 %2093, %v400
      %v2095 = vpop.permute.xlu0 %2094
      %v2098 = vunpack.c.l.s4 839922192
      %v2099 = vunpack.c.0.s8 %v2098
      %v2100 = vperm.slane %v2095, %v2099
      %2101 = vset.pattern.permute.xlu0 3
      %2102 = vperm.xlu0 %2101, %v401
      %v2103 = vpop.permute.xlu0 %2102
      %v2106 = vunpack.c.l.s4 839922192
      %v2107 = vunpack.c.0.s8 %v2106
      %v2108 = vperm.slane %v2103, %v2107
      %2109 = vset.pattern.permute.xlu0 3
      %2110 = vperm.xlu0 %2109, %v402
      %v2111 = vpop.permute.xlu0 %2110
      %v2114 = vunpack.c.l.s4 839922192
      %v2115 = vunpack.c.0.s8 %v2114
      %v2116 = vperm.slane %v2111, %v2115
      %2117 = vset.pattern.permute.xlu0 3
      %2118 = vperm.xlu0 %2117, %v403
      %v2119 = vpop.permute.xlu0 %2118
      %v2122 = vunpack.c.l.s4 839922192
      %v2123 = vunpack.c.0.s8 %v2122
      %v2124 = vperm.slane %v2119, %v2123
      %2125 = vset.pattern.permute.xlu0 3
      %2126 = vperm.xlu0 %2125, %v404
      %v2127 = vpop.permute.xlu0 %2126
      %v2130 = vunpack.c.l.s4 839922192
      %v2131 = vunpack.c.0.s8 %v2130
      %v2132 = vperm.slane %v2127, %v2131
      %2133 = vset.pattern.permute.xlu0 3
      %2134 = vperm.xlu0 %2133, %v405
      %v2135 = vpop.permute.xlu0 %2134
      %v2138 = vunpack.c.l.s4 839922192
      %v2139 = vunpack.c.0.s8 %v2138
      %v2140 = vperm.slane %v2135, %v2139
      %2141 = vset.pattern.permute.xlu0 3
      %2142 = vperm.xlu0 %2141, %v406
      %v2143 = vpop.permute.xlu0 %2142
      %v2146 = vunpack.c.l.s4 839922192
      %v2147 = vunpack.c.0.s8 %v2146
      %v2148 = vperm.slane %v2143, %v2147
      %2149 = vset.pattern.permute.xlu0 3
      %2150 = vperm.xlu0 %2149, %v407
      %v2151 = vpop.permute.xlu0 %2150
      %v2154 = vunpack.c.l.s4 839922192
      %v2155 = vunpack.c.0.s8 %v2154
      %v2156 = vperm.slane %v2151, %v2155
      %2157 = vset.pattern.permute.xlu0 3
      %2158 = vperm.xlu0 %2157, %v408
      %v2159 = vpop.permute.xlu0 %2158
      %v2162 = vunpack.c.l.s4 839922192
      %v2163 = vunpack.c.0.s8 %v2162
      %v2164 = vperm.slane %v2159, %v2163
      %2165 = vset.pattern.permute.xlu0 3
      %2166 = vperm.xlu0 %2165, %v409
      %v2167 = vpop.permute.xlu0 %2166
      %v2170 = vunpack.c.l.s4 839922192
      %v2171 = vunpack.c.0.s8 %v2170
      %v2172 = vperm.slane %v2167, %v2171
      %2173 = vset.pattern.permute.xlu0 3
      %2174 = vperm.xlu0 %2173, %v410
      %v2175 = vpop.permute.xlu0 %2174
      %v2178 = vunpack.c.l.s4 839922192
      %v2179 = vunpack.c.0.s8 %v2178
      %v2180 = vperm.slane %v2175, %v2179
      %2181 = vset.pattern.permute.xlu0 3
      %2182 = vperm.xlu0 %2181, %v411
      %v2183 = vpop.permute.xlu0 %2182
      %v2186 = vunpack.c.l.s4 839922192
      %v2187 = vunpack.c.0.s8 %v2186
      %v2188 = vperm.slane %v2183, %v2187
      %2189 = vset.pattern.permute.xlu0 3
      %2190 = vperm.xlu0 %2189, %v412
      %v2191 = vpop.permute.xlu0 %2190
      %v2194 = vunpack.c.l.s4 839922192
      %v2195 = vunpack.c.0.s8 %v2194
      %v2196 = vperm.slane %v2191, %v2195
      %2197 = vset.pattern.permute.xlu0 3
      %2198 = vperm.xlu0 %2197, %v413
      %v2199 = vpop.permute.xlu0 %2198
      %v2202 = vunpack.c.l.s4 839922192
      %v2203 = vunpack.c.0.s8 %v2202
      %v2204 = vperm.slane %v2199, %v2203
      %2205 = vset.pattern.permute.xlu0 3
      %2206 = vperm.xlu0 %2205, %v414
      %v2207 = vpop.permute.xlu0 %2206
      %v2210 = vunpack.c.l.s4 839922192
      %v2211 = vunpack.c.0.s8 %v2210
      %v2212 = vperm.slane %v2207, %v2211
      %2213 = vset.pattern.permute.xlu0 3
      %2214 = vperm.xlu0 %2213, %v415
      %v2215 = vpop.permute.xlu0 %2214
      %v2218 = vunpack.c.l.s4 839922192
      %v2219 = vunpack.c.0.s8 %v2218
      %v2220 = vperm.slane %v2215, %v2219
      %2221 = vset.pattern.permute.xlu0 3
      %2222 = vperm.xlu0 %2221, %v416
      %v2223 = vpop.permute.xlu0 %2222
      %v2226 = vunpack.c.l.s4 839922192
      %v2227 = vunpack.c.0.s8 %v2226
      %v2228 = vperm.slane %v2223, %v2227
      %2229 = vset.pattern.permute.xlu0 3
      %2230 = vperm.xlu0 %2229, %v417
      %v2231 = vpop.permute.xlu0 %2230
      %v2234 = vunpack.c.l.s4 839922192
      %v2235 = vunpack.c.0.s8 %v2234
      %v2236 = vperm.slane %v2231, %v2235
      %2237 = vset.pattern.permute.xlu0 3
      %2238 = vperm.xlu0 %2237, %v418
      %v2239 = vpop.permute.xlu0 %2238
      %v2242 = vunpack.c.l.s4 839922192
      %v2243 = vunpack.c.0.s8 %v2242
      %v2244 = vperm.slane %v2239, %v2243
      %2245 = vset.pattern.permute.xlu0 3
      %2246 = vperm.xlu0 %2245, %v419
      %v2247 = vpop.permute.xlu0 %2246
      %v2250 = vunpack.c.l.s4 839922192
      %v2251 = vunpack.c.0.s8 %v2250
      %v2252 = vperm.slane %v2247, %v2251
      %2253 = vset.pattern.permute.xlu0 3
      %2254 = vperm.xlu0 %2253, %v420
      %v2255 = vpop.permute.xlu0 %2254
      %v2258 = vunpack.c.l.s4 839922192
      %v2259 = vunpack.c.0.s8 %v2258
      %v2260 = vperm.slane %v2255, %v2259
      %2261 = vset.pattern.permute.xlu0 3
      %2262 = vperm.xlu0 %2261, %v421
      %v2263 = vpop.permute.xlu0 %2262
      %v2266 = vunpack.c.l.s4 839922192
      %v2267 = vunpack.c.0.s8 %v2266
      %v2268 = vperm.slane %v2263, %v2267
      %2269 = vset.pattern.permute.xlu0 3
      %2270 = vperm.xlu0 %2269, %v422
      %v2271 = vpop.permute.xlu0 %2270
      %v2274 = vunpack.c.l.s4 839922192
      %v2275 = vunpack.c.0.s8 %v2274
      %v2276 = vperm.slane %v2271, %v2275
      %2277 = vset.pattern.permute.xlu0 3
      %2278 = vperm.xlu0 %2277, %v423
      %v2279 = vpop.permute.xlu0 %2278
      %v2282 = vunpack.c.l.s4 839922192
      %v2283 = vunpack.c.0.s8 %v2282
      %v2284 = vperm.slane %v2279, %v2283
      %2285 = vset.pattern.permute.xlu0 3
      %2286 = vperm.xlu0 %2285, %v424
      %v2287 = vpop.permute.xlu0 %2286
      %v2290 = vunpack.c.l.s4 839922192
      %v2291 = vunpack.c.0.s8 %v2290
      %v2292 = vperm.slane %v2287, %v2291
      %v2293 = vunpack.c.h.bf16 %v632
      %v2294 = vunpack.c.l.bf16 %v2044
      %v2295 = vunpack.c.l.bf16 %v2052
      %v2296 = vunpack.c.l.bf16 %v2060
      %v2297 = vunpack.c.l.bf16 %v2068
      %v2298 = vunpack.c.l.bf16 %v2076
      %v2299 = vunpack.c.l.bf16 %v2084
      %v2300 = vunpack.c.l.bf16 %v2092
      %v2301 = vunpack.c.l.bf16 %v2100
      %v2302 = vunpack.c.l.bf16 %v2108
      %v2303 = vunpack.c.l.bf16 %v2116
      %v2304 = vunpack.c.l.bf16 %v2124
      %v2305 = vunpack.c.l.bf16 %v2132
      %v2306 = vunpack.c.l.bf16 %v2140
      %v2307 = vunpack.c.l.bf16 %v2148
      %v2308 = vunpack.c.l.bf16 %v2156
      %v2309 = vunpack.c.l.bf16 %v2164
      %v2310 = vunpack.c.l.bf16 %v2172
      %v2311 = vunpack.c.l.bf16 %v2180
      %v2312 = vunpack.c.l.bf16 %v2188
      %v2313 = vunpack.c.l.bf16 %v2196
      %v2314 = vunpack.c.l.bf16 %v2204
      %v2315 = vunpack.c.l.bf16 %v2212
      %v2316 = vunpack.c.l.bf16 %v2220
      %v2317 = vunpack.c.l.bf16 %v2228
      %v2318 = vunpack.c.l.bf16 %v2236
      %v2319 = vunpack.c.l.bf16 %v2244
      %v2320 = vunpack.c.l.bf16 %v2252
      %v2321 = vunpack.c.l.bf16 %v2260
      %v2322 = vunpack.c.l.bf16 %v2268
      %v2323 = vunpack.c.l.bf16 %v2276
      %v2324 = vunpack.c.l.bf16 %v2284
      %v2325 = vunpack.c.l.bf16 %v2292
      %v2326 = vmul.f32 %v944, %v2294
      %v2327 = vmul.f32 %v945, %v2295
      %v2328 = vmul.f32 %v946, %v2296
      %v2329 = vmul.f32 %v947, %v2297
      %v2330 = vmul.f32 %v948, %v2298
      %v2331 = vmul.f32 %v949, %v2299
      %v2332 = vmul.f32 %v950, %v2300
      %v2333 = vmul.f32 %v951, %v2301
      %v2334 = vmul.f32 %v952, %v2302
      %v2335 = vmul.f32 %v953, %v2303
      %v2336 = vmul.f32 %v954, %v2304
      %v2337 = vmul.f32 %v955, %v2305
      %v2338 = vmul.f32 %v956, %v2306
      %v2339 = vmul.f32 %v957, %v2307
      %v2340 = vmul.f32 %v958, %v2308
      %v2341 = vmul.f32 %v959, %v2309
      %v2342 = vmul.f32 %v960, %v2310
      %v2343 = vmul.f32 %v961, %v2311
      %v2344 = vmul.f32 %v962, %v2312
      %v2345 = vmul.f32 %v963, %v2313
      %v2346 = vmul.f32 %v964, %v2314
      %v2347 = vmul.f32 %v965, %v2315
      %v2348 = vmul.f32 %v966, %v2316
      %v2349 = vmul.f32 %v967, %v2317
      %v2350 = vmul.f32 %v968, %v2318
      %v2351 = vmul.f32 %v969, %v2319
      %v2352 = vmul.f32 %v970, %v2320
      %v2353 = vmul.f32 %v971, %v2321
      %v2354 = vmul.f32 %v972, %v2322
      %v2355 = vmul.f32 %v973, %v2323
      %v2356 = vmul.f32 %v1326, %v2324
      %v2357 = vmul.f32 %v2293, %v2325
      %v2358 = vpack.c.bf16 %v2326, %v2326
      %v2359 = vpack.c.bf16 %v2327, %v2327
      %v2360 = vpack.c.bf16 %v2328, %v2328
      %v2361 = vpack.c.bf16 %v2329, %v2329
      %v2362 = vpack.c.bf16 %v2330, %v2330
      %v2363 = vpack.c.bf16 %v2331, %v2331
      %v2364 = vpack.c.bf16 %v2332, %v2332
      %v2365 = vpack.c.bf16 %v2333, %v2333
      %v2366 = vpack.c.bf16 %v2334, %v2334
      %v2367 = vpack.c.bf16 %v2335, %v2335
      %v2368 = vpack.c.bf16 %v2336, %v2336
      %v2369 = vpack.c.bf16 %v2337, %v2337
      %v2370 = vpack.c.bf16 %v2338, %v2338
      %v2371 = vpack.c.bf16 %v2339, %v2339
      %v2372 = vpack.c.bf16 %v2340, %v2340
      %v2373 = vpack.c.bf16 %v2341, %v2341
      %v2374 = vpack.c.bf16 %v2342, %v2342
      %v2375 = vpack.c.bf16 %v2343, %v2343
      %v2376 = vpack.c.bf16 %v2344, %v2344
      %v2377 = vpack.c.bf16 %v2345, %v2345
      %v2378 = vpack.c.bf16 %v2346, %v2346
      %v2379 = vpack.c.bf16 %v2347, %v2347
      %v2380 = vpack.c.bf16 %v2348, %v2348
      %v2381 = vpack.c.bf16 %v2349, %v2349
      %v2382 = vpack.c.bf16 %v2350, %v2350
      %v2383 = vpack.c.bf16 %v2351, %v2351
      %v2384 = vpack.c.bf16 %v2352, %v2352
      %v2385 = vpack.c.bf16 %v2353, %v2353
      %v2386 = vpack.c.bf16 %v2354, %v2354
      %v2387 = vpack.c.bf16 %v2355, %v2355
      %v2388 = vpack.c.bf16 %v2356, %v2356
      %v2389 = vpack.c.bf16 %v2357, %v2357
      %2390 = vset.pattern.permute.xlu0 5
      %2391 = vperm.xlu0 %2390, %v393
      %v2392 = vpop.permute.xlu0 %2391
      %v2395 = vunpack.c.l.s4 839922192
      %v2396 = vunpack.c.0.s8 %v2395
      %v2397 = vperm.slane %v2392, %v2396
      %2398 = vset.pattern.permute.xlu0 5
      %2399 = vperm.xlu0 %2398, %v394
      %v2400 = vpop.permute.xlu0 %2399
      %v2403 = vunpack.c.l.s4 839922192
      %v2404 = vunpack.c.0.s8 %v2403
      %v2405 = vperm.slane %v2400, %v2404
      %2406 = vset.pattern.permute.xlu0 5
      %2407 = vperm.xlu0 %2406, %v395
      %v2408 = vpop.permute.xlu0 %2407
      %v2411 = vunpack.c.l.s4 839922192
      %v2412 = vunpack.c.0.s8 %v2411
      %v2413 = vperm.slane %v2408, %v2412
      %2414 = vset.pattern.permute.xlu0 5
      %2415 = vperm.xlu0 %2414, %v396
      %v2416 = vpop.permute.xlu0 %2415
      %v2419 = vunpack.c.l.s4 839922192
      %v2420 = vunpack.c.0.s8 %v2419
      %v2421 = vperm.slane %v2416, %v2420
      %2422 = vset.pattern.permute.xlu0 5
      %2423 = vperm.xlu0 %2422, %v397
      %v2424 = vpop.permute.xlu0 %2423
      %v2427 = vunpack.c.l.s4 839922192
      %v2428 = vunpack.c.0.s8 %v2427
      %v2429 = vperm.slane %v2424, %v2428
      %2430 = vset.pattern.permute.xlu0 5
      %2431 = vperm.xlu0 %2430, %v398
      %v2432 = vpop.permute.xlu0 %2431
      %v2435 = vunpack.c.l.s4 839922192
      %v2436 = vunpack.c.0.s8 %v2435
      %v2437 = vperm.slane %v2432, %v2436
      %2438 = vset.pattern.permute.xlu0 5
      %2439 = vperm.xlu0 %2438, %v399
      %v2440 = vpop.permute.xlu0 %2439
      %v2443 = vunpack.c.l.s4 839922192
      %v2444 = vunpack.c.0.s8 %v2443
      %v2445 = vperm.slane %v2440, %v2444
      %2446 = vset.pattern.permute.xlu0 5
      %2447 = vperm.xlu0 %2446, %v400
      %v2448 = vpop.permute.xlu0 %2447
      %v2451 = vunpack.c.l.s4 839922192
      %v2452 = vunpack.c.0.s8 %v2451
      %v2453 = vperm.slane %v2448, %v2452
      %2454 = vset.pattern.permute.xlu0 5
      %2455 = vperm.xlu0 %2454, %v401
      %v2456 = vpop.permute.xlu0 %2455
      %v2459 = vunpack.c.l.s4 839922192
      %v2460 = vunpack.c.0.s8 %v2459
      %v2461 = vperm.slane %v2456, %v2460
      %2462 = vset.pattern.permute.xlu0 5
      %2463 = vperm.xlu0 %2462, %v402
      %v2464 = vpop.permute.xlu0 %2463
      %v2467 = vunpack.c.l.s4 839922192
      %v2468 = vunpack.c.0.s8 %v2467
      %v2469 = vperm.slane %v2464, %v2468
      %2470 = vset.pattern.permute.xlu0 5
      %2471 = vperm.xlu0 %2470, %v403
      %v2472 = vpop.permute.xlu0 %2471
      %v2475 = vunpack.c.l.s4 839922192
      %v2476 = vunpack.c.0.s8 %v2475
      %v2477 = vperm.slane %v2472, %v2476
      %2478 = vset.pattern.permute.xlu0 5
      %2479 = vperm.xlu0 %2478, %v404
      %v2480 = vpop.permute.xlu0 %2479
      %v2483 = vunpack.c.l.s4 839922192
      %v2484 = vunpack.c.0.s8 %v2483
      %v2485 = vperm.slane %v2480, %v2484
      %2486 = vset.pattern.permute.xlu0 5
      %2487 = vperm.xlu0 %2486, %v405
      %v2488 = vpop.permute.xlu0 %2487
      %v2491 = vunpack.c.l.s4 839922192
      %v2492 = vunpack.c.0.s8 %v2491
      %v2493 = vperm.slane %v2488, %v2492
      %2494 = vset.pattern.permute.xlu0 5
      %2495 = vperm.xlu0 %2494, %v406
      %v2496 = vpop.permute.xlu0 %2495
      %v2499 = vunpack.c.l.s4 839922192
      %v2500 = vunpack.c.0.s8 %v2499
      %v2501 = vperm.slane %v2496, %v2500
      %2502 = vset.pattern.permute.xlu0 5
      %2503 = vperm.xlu0 %2502, %v407
      %v2504 = vpop.permute.xlu0 %2503
      %v2507 = vunpack.c.l.s4 839922192
      %v2508 = vunpack.c.0.s8 %v2507
      %v2509 = vperm.slane %v2504, %v2508
      %2510 = vset.pattern.permute.xlu0 5
      %2511 = vperm.xlu0 %2510, %v408
      %v2512 = vpop.permute.xlu0 %2511
      %v2515 = vunpack.c.l.s4 839922192
      %v2516 = vunpack.c.0.s8 %v2515
      %v2517 = vperm.slane %v2512, %v2516
      %2518 = vset.pattern.permute.xlu0 5
      %2519 = vperm.xlu0 %2518, %v409
      %v2520 = vpop.permute.xlu0 %2519
      %v2523 = vunpack.c.l.s4 839922192
      %v2524 = vunpack.c.0.s8 %v2523
      %v2525 = vperm.slane %v2520, %v2524
      %2526 = vset.pattern.permute.xlu0 5
      %2527 = vperm.xlu0 %2526, %v410
      %v2528 = vpop.permute.xlu0 %2527
      %v2531 = vunpack.c.l.s4 839922192
      %v2532 = vunpack.c.0.s8 %v2531
      %v2533 = vperm.slane %v2528, %v2532
      %2534 = vset.pattern.permute.xlu0 5
      %2535 = vperm.xlu0 %2534, %v411
      %v2536 = vpop.permute.xlu0 %2535
      %v2539 = vunpack.c.l.s4 839922192
      %v2540 = vunpack.c.0.s8 %v2539
      %v2541 = vperm.slane %v2536, %v2540
      %2542 = vset.pattern.permute.xlu0 5
      %2543 = vperm.xlu0 %2542, %v412
      %v2544 = vpop.permute.xlu0 %2543
      %v2547 = vunpack.c.l.s4 839922192
      %v2548 = vunpack.c.0.s8 %v2547
      %v2549 = vperm.slane %v2544, %v2548
      %2550 = vset.pattern.permute.xlu0 5
      %2551 = vperm.xlu0 %2550, %v413
      %v2552 = vpop.permute.xlu0 %2551
      %v2555 = vunpack.c.l.s4 839922192
      %v2556 = vunpack.c.0.s8 %v2555
      %v2557 = vperm.slane %v2552, %v2556
      %2558 = vset.pattern.permute.xlu0 5
      %2559 = vperm.xlu0 %2558, %v414
      %v2560 = vpop.permute.xlu0 %2559
      %v2563 = vunpack.c.l.s4 839922192
      %v2564 = vunpack.c.0.s8 %v2563
      %v2565 = vperm.slane %v2560, %v2564
      %2566 = vset.pattern.permute.xlu0 5
      %2567 = vperm.xlu0 %2566, %v415
      %v2568 = vpop.permute.xlu0 %2567
      %v2571 = vunpack.c.l.s4 839922192
      %v2572 = vunpack.c.0.s8 %v2571
      %v2573 = vperm.slane %v2568, %v2572
      %2574 = vset.pattern.permute.xlu0 5
      %2575 = vperm.xlu0 %2574, %v416
      %v2576 = vpop.permute.xlu0 %2575
      %v2579 = vunpack.c.l.s4 839922192
      %v2580 = vunpack.c.0.s8 %v2579
      %v2581 = vperm.slane %v2576, %v2580
      %2582 = vset.pattern.permute.xlu0 5
      %2583 = vperm.xlu0 %2582, %v417
      %v2584 = vpop.permute.xlu0 %2583
      %v2587 = vunpack.c.l.s4 839922192
      %v2588 = vunpack.c.0.s8 %v2587
      %v2589 = vperm.slane %v2584, %v2588
      %2590 = vset.pattern.permute.xlu0 5
      %2591 = vperm.xlu0 %2590, %v418
      %v2592 = vpop.permute.xlu0 %2591
      %v2595 = vunpack.c.l.s4 839922192
      %v2596 = vunpack.c.0.s8 %v2595
      %v2597 = vperm.slane %v2592, %v2596
      %2598 = vset.pattern.permute.xlu0 5
      %2599 = vperm.xlu0 %2598, %v419
      %v2600 = vpop.permute.xlu0 %2599
      %v2603 = vunpack.c.l.s4 839922192
      %v2604 = vunpack.c.0.s8 %v2603
      %v2605 = vperm.slane %v2600, %v2604
      %2606 = vset.pattern.permute.xlu0 5
      %2607 = vperm.xlu0 %2606, %v420
      %v2608 = vpop.permute.xlu0 %2607
      %v2611 = vunpack.c.l.s4 839922192
      %v2612 = vunpack.c.0.s8 %v2611
      %v2613 = vperm.slane %v2608, %v2612
      %2614 = vset.pattern.permute.xlu0 5
      %2615 = vperm.xlu0 %2614, %v421
      %v2616 = vpop.permute.xlu0 %2615
      %v2619 = vunpack.c.l.s4 839922192
      %v2620 = vunpack.c.0.s8 %v2619
      %v2621 = vperm.slane %v2616, %v2620
      %2622 = vset.pattern.permute.xlu0 5
      %2623 = vperm.xlu0 %2622, %v422
      %v2624 = vpop.permute.xlu0 %2623
      %v2627 = vunpack.c.l.s4 839922192
      %v2628 = vunpack.c.0.s8 %v2627
      %v2629 = vperm.slane %v2624, %v2628
      %2630 = vset.pattern.permute.xlu0 5
      %2631 = vperm.xlu0 %2630, %v423
      %v2632 = vpop.permute.xlu0 %2631
      %v2635 = vunpack.c.l.s4 839922192
      %v2636 = vunpack.c.0.s8 %v2635
      %v2637 = vperm.slane %v2632, %v2636
      %2638 = vset.pattern.permute.xlu0 5
      %2639 = vperm.xlu0 %2638, %v424
      %v2640 = vpop.permute.xlu0 %2639
      %v2643 = vunpack.c.l.s4 839922192
      %v2644 = vunpack.c.0.s8 %v2643
      %v2645 = vperm.slane %v2640, %v2644
      %v2646 = vunpack.c.l.bf16 %v653
      %v2647 = vunpack.c.l.bf16 %v2397
      %v2648 = vunpack.c.l.bf16 %v2405
      %v2649 = vunpack.c.l.bf16 %v2413
      %v2650 = vunpack.c.l.bf16 %v2421
      %v2651 = vunpack.c.l.bf16 %v2429
      %v2652 = vunpack.c.l.bf16 %v2437
      %v2653 = vunpack.c.l.bf16 %v2445
      %v2654 = vunpack.c.l.bf16 %v2453
      %v2655 = vunpack.c.l.bf16 %v2461
      %v2656 = vunpack.c.l.bf16 %v2469
      %v2657 = vunpack.c.l.bf16 %v2477
      %v2658 = vunpack.c.l.bf16 %v2485
      %v2659 = vunpack.c.l.bf16 %v2493
      %v2660 = vunpack.c.l.bf16 %v2501
      %v2661 = vunpack.c.l.bf16 %v2509
      %v2662 = vunpack.c.l.bf16 %v2517
      %v2663 = vunpack.c.l.bf16 %v2525
      %v2664 = vunpack.c.l.bf16 %v2533
      %v2665 = vunpack.c.l.bf16 %v2541
      %v2666 = vunpack.c.l.bf16 %v2549
      %v2667 = vunpack.c.l.bf16 %v2557
      %v2668 = vunpack.c.l.bf16 %v2565
      %v2669 = vunpack.c.l.bf16 %v2573
      %v2670 = vunpack.c.l.bf16 %v2581
      %v2671 = vunpack.c.l.bf16 %v2589
      %v2672 = vunpack.c.l.bf16 %v2597
      %v2673 = vunpack.c.l.bf16 %v2605
      %v2674 = vunpack.c.l.bf16 %v2613
      %v2675 = vunpack.c.l.bf16 %v2621
      %v2676 = vunpack.c.l.bf16 %v2629
      %v2677 = vunpack.c.l.bf16 %v2637
      %v2678 = vunpack.c.l.bf16 %v2645
      %v2711 = vrot.slane %v2647, 6
      %v2712 = vrot.slane %v2648, 6
      %v2713 = vsel %vm1874, %v2711, %v2712
      %v2714 = vrot.slane %v2649, 6
      %v2715 = vsel %vm1874, %v2712, %v2714
      %v2716 = vrot.slane %v2650, 6
      %v2717 = vsel %vm1874, %v2714, %v2716
      %v2718 = vrot.slane %v2651, 6
      %v2719 = vsel %vm1874, %v2716, %v2718
      %v2720 = vrot.slane %v2652, 6
      %v2721 = vsel %vm1874, %v2718, %v2720
      %v2722 = vrot.slane %v2653, 6
      %v2723 = vsel %vm1874, %v2720, %v2722
      %v2724 = vrot.slane %v2654, 6
      %v2725 = vsel %vm1874, %v2722, %v2724
      %v2726 = vrot.slane %v2655, 6
      %v2727 = vsel %vm1874, %v2724, %v2726
      %v2728 = vrot.slane %v2656, 6
      %v2729 = vsel %vm1874, %v2726, %v2728
      %v2730 = vrot.slane %v2657, 6
      %v2731 = vsel %vm1874, %v2728, %v2730
      %v2732 = vrot.slane %v2658, 6
      %v2733 = vsel %vm1874, %v2730, %v2732
      %v2734 = vrot.slane %v2659, 6
      %v2735 = vsel %vm1874, %v2732, %v2734
      %v2736 = vrot.slane %v2660, 6
      %v2737 = vsel %vm1874, %v2734, %v2736
      %v2738 = vrot.slane %v2661, 6
      %v2739 = vsel %vm1874, %v2736, %v2738
      %v2740 = vrot.slane %v2662, 6
      %v2741 = vsel %vm1874, %v2738, %v2740
      %v2742 = vrot.slane %v2663, 6
      %v2743 = vsel %vm1874, %v2740, %v2742
      %v2744 = vrot.slane %v2664, 6
      %v2745 = vsel %vm1874, %v2742, %v2744
      %v2746 = vrot.slane %v2665, 6
      %v2747 = vsel %vm1874, %v2744, %v2746
      %v2748 = vrot.slane %v2666, 6
      %v2749 = vsel %vm1874, %v2746, %v2748
      %v2750 = vrot.slane %v2667, 6
      %v2751 = vsel %vm1874, %v2748, %v2750
      %v2752 = vrot.slane %v2668, 6
      %v2753 = vsel %vm1874, %v2750, %v2752
      %v2754 = vrot.slane %v2669, 6
      %v2755 = vsel %vm1874, %v2752, %v2754
      %v2756 = vrot.slane %v2670, 6
      %v2757 = vsel %vm1874, %v2754, %v2756
      %v2758 = vrot.slane %v2671, 6
      %v2759 = vsel %vm1874, %v2756, %v2758
      %v2760 = vrot.slane %v2672, 6
      %v2761 = vsel %vm1874, %v2758, %v2760
      %v2762 = vrot.slane %v2673, 6
      %v2763 = vsel %vm1874, %v2760, %v2762
      %v2764 = vrot.slane %v2674, 6
      %v2765 = vsel %vm1874, %v2762, %v2764
      %v2766 = vrot.slane %v2675, 6
      %v2767 = vsel %vm1874, %v2764, %v2766
      %v2768 = vrot.slane %v2676, 6
      %v2769 = vsel %vm1874, %v2766, %v2768
      %v2770 = vrot.slane %v2677, 6
      %v2771 = vsel %vm1874, %v2768, %v2770
      %v2772 = vrot.slane %v2678, 6
      %v2773 = vsel %vm1874, %v2770, %v2772
      %v2807 = vmul.f32 %v944, %v2711
      %v2808 = vmul.f32 %v945, %v2713
      %v2809 = vmul.f32 %v946, %v2715
      %v2810 = vmul.f32 %v947, %v2717
      %v2811 = vmul.f32 %v948, %v2719
      %v2812 = vmul.f32 %v949, %v2721
      %v2813 = vmul.f32 %v950, %v2723
      %v2814 = vmul.f32 %v951, %v2725
      %v2815 = vmul.f32 %v952, %v2727
      %v2816 = vmul.f32 %v953, %v2729
      %v2817 = vmul.f32 %v954, %v2731
      %v2818 = vmul.f32 %v955, %v2733
      %v2819 = vmul.f32 %v956, %v2735
      %v2820 = vmul.f32 %v957, %v2737
      %v2821 = vmul.f32 %v958, %v2739
      %v2822 = vmul.f32 %v959, %v2741
      %v2823 = vmul.f32 %v960, %v2743
      %v2824 = vmul.f32 %v961, %v2745
      %v2825 = vmul.f32 %v962, %v2747
      %v2826 = vmul.f32 %v963, %v2749
      %v2827 = vmul.f32 %v964, %v2751
      %v2828 = vmul.f32 %v965, %v2753
      %v2829 = vmul.f32 %v966, %v2755
      %v2830 = vmul.f32 %v967, %v2757
      %v2831 = vmul.f32 %v968, %v2759
      %v2832 = vmul.f32 %v969, %v2761
      %v2833 = vmul.f32 %v970, %v2763
      %v2834 = vmul.f32 %v971, %v2765
      %v2835 = vmul.f32 %v972, %v2767
      %v2836 = vmul.f32 %v973, %v2769
      %v2837 = vmul.f32 %v1326, %v2771
      %v2838 = vmul.f32 %v2293, %v2773
      %v2839 = vmul.f32 %v2646, %v2772
      %v2840 = vpack.c.bf16 %v2807, %v2807
      %v2841 = vpack.c.bf16 %v2808, %v2808
      %v2842 = vpack.c.bf16 %v2809, %v2809
      %v2843 = vpack.c.bf16 %v2810, %v2810
      %v2844 = vpack.c.bf16 %v2811, %v2811
      %v2845 = vpack.c.bf16 %v2812, %v2812
      %v2846 = vpack.c.bf16 %v2813, %v2813
      %v2847 = vpack.c.bf16 %v2814, %v2814
      %v2848 = vpack.c.bf16 %v2815, %v2815
      %v2849 = vpack.c.bf16 %v2816, %v2816
      %v2850 = vpack.c.bf16 %v2817, %v2817
      %v2851 = vpack.c.bf16 %v2818, %v2818
      %v2852 = vpack.c.bf16 %v2819, %v2819
      %v2853 = vpack.c.bf16 %v2820, %v2820
      %v2854 = vpack.c.bf16 %v2821, %v2821
      %v2855 = vpack.c.bf16 %v2822, %v2822
      %v2856 = vpack.c.bf16 %v2823, %v2823
      %v2857 = vpack.c.bf16 %v2824, %v2824
      %v2858 = vpack.c.bf16 %v2825, %v2825
      %v2859 = vpack.c.bf16 %v2826, %v2826
      %v2860 = vpack.c.bf16 %v2827, %v2827
      %v2861 = vpack.c.bf16 %v2828, %v2828
      %v2862 = vpack.c.bf16 %v2829, %v2829
      %v2863 = vpack.c.bf16 %v2830, %v2830
      %v2864 = vpack.c.bf16 %v2831, %v2831
      %v2865 = vpack.c.bf16 %v2832, %v2832
      %v2866 = vpack.c.bf16 %v2833, %v2833
      %v2867 = vpack.c.bf16 %v2834, %v2834
      %v2868 = vpack.c.bf16 %v2835, %v2835
      %v2869 = vpack.c.bf16 %v2836, %v2836
      %v2870 = vpack.c.bf16 %v2837, %v2837
      %v2871 = vpack.c.bf16 %v2838, %v2838
      %v2872 = vpack.c.bf16 %v2839, %v2839
      %2873 = vset.pattern.permute.xlu0 6
      %2874 = vperm.xlu0 %2873, %v393
      %v2875 = vpop.permute.xlu0 %2874
      %v2878 = vunpack.c.l.s4 839922192
      %v2879 = vunpack.c.0.s8 %v2878
      %v2880 = vperm.slane %v2875, %v2879
      %2881 = vset.pattern.permute.xlu0 6
      %2882 = vperm.xlu0 %2881, %v394
      %v2883 = vpop.permute.xlu0 %2882
      %v2886 = vunpack.c.l.s4 839922192
      %v2887 = vunpack.c.0.s8 %v2886
      %v2888 = vperm.slane %v2883, %v2887
      %2889 = vset.pattern.permute.xlu0 6
      %2890 = vperm.xlu0 %2889, %v395
      %v2891 = vpop.permute.xlu0 %2890
      %v2894 = vunpack.c.l.s4 839922192
      %v2895 = vunpack.c.0.s8 %v2894
      %v2896 = vperm.slane %v2891, %v2895
      %2897 = vset.pattern.permute.xlu0 6
      %2898 = vperm.xlu0 %2897, %v396
      %v2899 = vpop.permute.xlu0 %2898
      %v2902 = vunpack.c.l.s4 839922192
      %v2903 = vunpack.c.0.s8 %v2902
      %v2904 = vperm.slane %v2899, %v2903
      %2905 = vset.pattern.permute.xlu0 6
      %2906 = vperm.xlu0 %2905, %v397
      %v2907 = vpop.permute.xlu0 %2906
      %v2910 = vunpack.c.l.s4 839922192
      %v2911 = vunpack.c.0.s8 %v2910
      %v2912 = vperm.slane %v2907, %v2911
      %2913 = vset.pattern.permute.xlu0 6
      %2914 = vperm.xlu0 %2913, %v398
      %v2915 = vpop.permute.xlu0 %2914
      %v2918 = vunpack.c.l.s4 839922192
      %v2919 = vunpack.c.0.s8 %v2918
      %v2920 = vperm.slane %v2915, %v2919
      %2921 = vset.pattern.permute.xlu0 6
      %2922 = vperm.xlu0 %2921, %v399
      %v2923 = vpop.permute.xlu0 %2922
      %v2926 = vunpack.c.l.s4 839922192
      %v2927 = vunpack.c.0.s8 %v2926
      %v2928 = vperm.slane %v2923, %v2927
      %2929 = vset.pattern.permute.xlu0 6
      %2930 = vperm.xlu0 %2929, %v400
      %v2931 = vpop.permute.xlu0 %2930
      %v2934 = vunpack.c.l.s4 839922192
      %v2935 = vunpack.c.0.s8 %v2934
      %v2936 = vperm.slane %v2931, %v2935
      %2937 = vset.pattern.permute.xlu0 6
      %2938 = vperm.xlu0 %2937, %v401
      %v2939 = vpop.permute.xlu0 %2938
      %v2942 = vunpack.c.l.s4 839922192
      %v2943 = vunpack.c.0.s8 %v2942
      %v2944 = vperm.slane %v2939, %v2943
      %2945 = vset.pattern.permute.xlu0 6
      %2946 = vperm.xlu0 %2945, %v402
      %v2947 = vpop.permute.xlu0 %2946
      %v2950 = vunpack.c.l.s4 839922192
      %v2951 = vunpack.c.0.s8 %v2950
      %v2952 = vperm.slane %v2947, %v2951
      %2953 = vset.pattern.permute.xlu0 6
      %2954 = vperm.xlu0 %2953, %v403
      %v2955 = vpop.permute.xlu0 %2954
      %v2958 = vunpack.c.l.s4 839922192
      %v2959 = vunpack.c.0.s8 %v2958
      %v2960 = vperm.slane %v2955, %v2959
      %2961 = vset.pattern.permute.xlu0 6
      %2962 = vperm.xlu0 %2961, %v404
      %v2963 = vpop.permute.xlu0 %2962
      %v2966 = vunpack.c.l.s4 839922192
      %v2967 = vunpack.c.0.s8 %v2966
      %v2968 = vperm.slane %v2963, %v2967
      %2969 = vset.pattern.permute.xlu0 6
      %2970 = vperm.xlu0 %2969, %v405
      %v2971 = vpop.permute.xlu0 %2970
      %v2974 = vunpack.c.l.s4 839922192
      %v2975 = vunpack.c.0.s8 %v2974
      %v2976 = vperm.slane %v2971, %v2975
      %2977 = vset.pattern.permute.xlu0 6
      %2978 = vperm.xlu0 %2977, %v406
      %v2979 = vpop.permute.xlu0 %2978
      %v2982 = vunpack.c.l.s4 839922192
      %v2983 = vunpack.c.0.s8 %v2982
      %v2984 = vperm.slane %v2979, %v2983
      %2985 = vset.pattern.permute.xlu0 6
      %2986 = vperm.xlu0 %2985, %v407
      %v2987 = vpop.permute.xlu0 %2986
      %v2990 = vunpack.c.l.s4 839922192
      %v2991 = vunpack.c.0.s8 %v2990
      %v2992 = vperm.slane %v2987, %v2991
      %2993 = vset.pattern.permute.xlu0 6
      %2994 = vperm.xlu0 %2993, %v408
      %v2995 = vpop.permute.xlu0 %2994
      %v2998 = vunpack.c.l.s4 839922192
      %v2999 = vunpack.c.0.s8 %v2998
      %v3000 = vperm.slane %v2995, %v2999
      %3001 = vset.pattern.permute.xlu0 6
      %3002 = vperm.xlu0 %3001, %v409
      %v3003 = vpop.permute.xlu0 %3002
      %v3006 = vunpack.c.l.s4 839922192
      %v3007 = vunpack.c.0.s8 %v3006
      %v3008 = vperm.slane %v3003, %v3007
      %3009 = vset.pattern.permute.xlu0 6
      %3010 = vperm.xlu0 %3009, %v410
      %v3011 = vpop.permute.xlu0 %3010
      %v3014 = vunpack.c.l.s4 839922192
      %v3015 = vunpack.c.0.s8 %v3014
      %v3016 = vperm.slane %v3011, %v3015
      %3017 = vset.pattern.permute.xlu0 6
      %3018 = vperm.xlu0 %3017, %v411
      %v3019 = vpop.permute.xlu0 %3018
      %v3022 = vunpack.c.l.s4 839922192
      %v3023 = vunpack.c.0.s8 %v3022
      %v3024 = vperm.slane %v3019, %v3023
      %3025 = vset.pattern.permute.xlu0 6
      %3026 = vperm.xlu0 %3025, %v412
      %v3027 = vpop.permute.xlu0 %3026
      %v3030 = vunpack.c.l.s4 839922192
      %v3031 = vunpack.c.0.s8 %v3030
      %v3032 = vperm.slane %v3027, %v3031
      %3033 = vset.pattern.permute.xlu0 6
      %3034 = vperm.xlu0 %3033, %v413
      %v3035 = vpop.permute.xlu0 %3034
      %v3038 = vunpack.c.l.s4 839922192
      %v3039 = vunpack.c.0.s8 %v3038
      %v3040 = vperm.slane %v3035, %v3039
      %3041 = vset.pattern.permute.xlu0 6
      %3042 = vperm.xlu0 %3041, %v414
      %v3043 = vpop.permute.xlu0 %3042
      %v3046 = vunpack.c.l.s4 839922192
      %v3047 = vunpack.c.0.s8 %v3046
      %v3048 = vperm.slane %v3043, %v3047
      %3049 = vset.pattern.permute.xlu0 6
      %3050 = vperm.xlu0 %3049, %v415
      %v3051 = vpop.permute.xlu0 %3050
      %v3054 = vunpack.c.l.s4 839922192
      %v3055 = vunpack.c.0.s8 %v3054
      %v3056 = vperm.slane %v3051, %v3055
      %3057 = vset.pattern.permute.xlu0 6
      %3058 = vperm.xlu0 %3057, %v416
      %v3059 = vpop.permute.xlu0 %3058
      %v3062 = vunpack.c.l.s4 839922192
      %v3063 = vunpack.c.0.s8 %v3062
      %v3064 = vperm.slane %v3059, %v3063
      %3065 = vset.pattern.permute.xlu0 6
      %3066 = vperm.xlu0 %3065, %v417
      %v3067 = vpop.permute.xlu0 %3066
      %v3070 = vunpack.c.l.s4 839922192
      %v3071 = vunpack.c.0.s8 %v3070
      %v3072 = vperm.slane %v3067, %v3071
      %3073 = vset.pattern.permute.xlu0 6
      %3074 = vperm.xlu0 %3073, %v418
      %v3075 = vpop.permute.xlu0 %3074
      %v3078 = vunpack.c.l.s4 839922192
      %v3079 = vunpack.c.0.s8 %v3078
      %v3080 = vperm.slane %v3075, %v3079
      %3081 = vset.pattern.permute.xlu0 6
      %3082 = vperm.xlu0 %3081, %v419
      %v3083 = vpop.permute.xlu0 %3082
      %v3086 = vunpack.c.l.s4 839922192
      %v3087 = vunpack.c.0.s8 %v3086
      %v3088 = vperm.slane %v3083, %v3087
      %3089 = vset.pattern.permute.xlu0 6
      %3090 = vperm.xlu0 %3089, %v420
      %v3091 = vpop.permute.xlu0 %3090
      %v3094 = vunpack.c.l.s4 839922192
      %v3095 = vunpack.c.0.s8 %v3094
      %v3096 = vperm.slane %v3091, %v3095
      %3097 = vset.pattern.permute.xlu0 6
      %3098 = vperm.xlu0 %3097, %v421
      %v3099 = vpop.permute.xlu0 %3098
      %v3102 = vunpack.c.l.s4 839922192
      %v3103 = vunpack.c.0.s8 %v3102
      %v3104 = vperm.slane %v3099, %v3103
      %3105 = vset.pattern.permute.xlu0 6
      %3106 = vperm.xlu0 %3105, %v422
      %v3107 = vpop.permute.xlu0 %3106
      %v3110 = vunpack.c.l.s4 839922192
      %v3111 = vunpack.c.0.s8 %v3110
      %v3112 = vperm.slane %v3107, %v3111
      %3113 = vset.pattern.permute.xlu0 6
      %3114 = vperm.xlu0 %3113, %v423
      %v3115 = vpop.permute.xlu0 %3114
      %v3118 = vunpack.c.l.s4 839922192
      %v3119 = vunpack.c.0.s8 %v3118
      %v3120 = vperm.slane %v3115, %v3119
      %3121 = vset.pattern.permute.xlu0 6
      %3122 = vperm.xlu0 %3121, %v424
      %v3123 = vpop.permute.xlu0 %3122
      %v3126 = vunpack.c.l.s4 839922192
      %v3127 = vunpack.c.0.s8 %v3126
      %v3128 = vperm.slane %v3123, %v3127
      %v3129 = vunpack.c.h.bf16 %v653
      %v3130 = vunpack.c.l.bf16 %v2880
      %v3131 = vunpack.c.l.bf16 %v2888
      %v3132 = vunpack.c.l.bf16 %v2896
      %v3133 = vunpack.c.l.bf16 %v2904
      %v3134 = vunpack.c.l.bf16 %v2912
      %v3135 = vunpack.c.l.bf16 %v2920
      %v3136 = vunpack.c.l.bf16 %v2928
      %v3137 = vunpack.c.l.bf16 %v2936
      %v3138 = vunpack.c.l.bf16 %v2944
      %v3139 = vunpack.c.l.bf16 %v2952
      %v3140 = vunpack.c.l.bf16 %v2960
      %v3141 = vunpack.c.l.bf16 %v2968
      %v3142 = vunpack.c.l.bf16 %v2976
      %v3143 = vunpack.c.l.bf16 %v2984
      %v3144 = vunpack.c.l.bf16 %v2992
      %v3145 = vunpack.c.l.bf16 %v3000
      %v3146 = vunpack.c.l.bf16 %v3008
      %v3147 = vunpack.c.l.bf16 %v3016
      %v3148 = vunpack.c.l.bf16 %v3024
      %v3149 = vunpack.c.l.bf16 %v3032
      %v3150 = vunpack.c.l.bf16 %v3040
      %v3151 = vunpack.c.l.bf16 %v3048
      %v3152 = vunpack.c.l.bf16 %v3056
      %v3153 = vunpack.c.l.bf16 %v3064
      %v3154 = vunpack.c.l.bf16 %v3072
      %v3155 = vunpack.c.l.bf16 %v3080
      %v3156 = vunpack.c.l.bf16 %v3088
      %v3157 = vunpack.c.l.bf16 %v3096
      %v3158 = vunpack.c.l.bf16 %v3104
      %v3159 = vunpack.c.l.bf16 %v3112
      %v3160 = vunpack.c.l.bf16 %v3120
      %v3161 = vunpack.c.l.bf16 %v3128
      %v3162 = vmul.f32 %v946, %v3130
      %v3163 = vmul.f32 %v947, %v3131
      %v3164 = vmul.f32 %v948, %v3132
      %v3165 = vmul.f32 %v949, %v3133
      %v3166 = vmul.f32 %v950, %v3134
      %v3167 = vmul.f32 %v951, %v3135
      %v3168 = vmul.f32 %v952, %v3136
      %v3169 = vmul.f32 %v953, %v3137
      %v3170 = vmul.f32 %v954, %v3138
      %v3171 = vmul.f32 %v955, %v3139
      %v3172 = vmul.f32 %v956, %v3140
      %v3173 = vmul.f32 %v957, %v3141
      %v3174 = vmul.f32 %v958, %v3142
      %v3175 = vmul.f32 %v959, %v3143
      %v3176 = vmul.f32 %v960, %v3144
      %v3177 = vmul.f32 %v961, %v3145
      %v3178 = vmul.f32 %v962, %v3146
      %v3179 = vmul.f32 %v963, %v3147
      %v3180 = vmul.f32 %v964, %v3148
      %v3181 = vmul.f32 %v965, %v3149
      %v3182 = vmul.f32 %v966, %v3150
      %v3183 = vmul.f32 %v967, %v3151
      %v3184 = vmul.f32 %v968, %v3152
      %v3185 = vmul.f32 %v969, %v3153
      %v3186 = vmul.f32 %v970, %v3154
      %v3187 = vmul.f32 %v971, %v3155
      %v3188 = vmul.f32 %v972, %v3156
      %v3189 = vmul.f32 %v973, %v3157
      %v3190 = vmul.f32 %v1326, %v3158
      %v3191 = vmul.f32 %v2293, %v3159
      %v3192 = vmul.f32 %v2646, %v3160
      %v3193 = vmul.f32 %v3129, %v3161
      %v3194 = vpack.c.bf16 %v3162, %v3162
      %v3195 = vpack.c.bf16 %v3163, %v3163
      %v3196 = vpack.c.bf16 %v3164, %v3164
      %v3197 = vpack.c.bf16 %v3165, %v3165
      %v3198 = vpack.c.bf16 %v3166, %v3166
      %v3199 = vpack.c.bf16 %v3167, %v3167
      %v3200 = vpack.c.bf16 %v3168, %v3168
      %v3201 = vpack.c.bf16 %v3169, %v3169
      %v3202 = vpack.c.bf16 %v3170, %v3170
      %v3203 = vpack.c.bf16 %v3171, %v3171
      %v3204 = vpack.c.bf16 %v3172, %v3172
      %v3205 = vpack.c.bf16 %v3173, %v3173
      %v3206 = vpack.c.bf16 %v3174, %v3174
      %v3207 = vpack.c.bf16 %v3175, %v3175
      %v3208 = vpack.c.bf16 %v3176, %v3176
      %v3209 = vpack.c.bf16 %v3177, %v3177
      %v3210 = vpack.c.bf16 %v3178, %v3178
      %v3211 = vpack.c.bf16 %v3179, %v3179
      %v3212 = vpack.c.bf16 %v3180, %v3180
      %v3213 = vpack.c.bf16 %v3181, %v3181
      %v3214 = vpack.c.bf16 %v3182, %v3182
      %v3215 = vpack.c.bf16 %v3183, %v3183
      %v3216 = vpack.c.bf16 %v3184, %v3184
      %v3217 = vpack.c.bf16 %v3185, %v3185
      %v3218 = vpack.c.bf16 %v3186, %v3186
      %v3219 = vpack.c.bf16 %v3187, %v3187
      %v3220 = vpack.c.bf16 %v3188, %v3188
      %v3221 = vpack.c.bf16 %v3189, %v3189
      %v3222 = vpack.c.bf16 %v3190, %v3190
      %v3223 = vpack.c.bf16 %v3191, %v3191
      %v3224 = vpack.c.bf16 %v3192, %v3192
      %v3225 = vpack.c.bf16 %v3193, %v3193
      %3226 = vset.pattern.permute.xlu0 7
      %3227 = vperm.xlu0 %3226, %v393
      %v3228 = vpop.permute.xlu0 %3227
      %v3231 = vunpack.c.l.s4 839922192
      %v3232 = vunpack.c.0.s8 %v3231
      %v3233 = vperm.slane %v3228, %v3232
      %3234 = vset.pattern.permute.xlu0 7
      %3235 = vperm.xlu0 %3234, %v394
      %v3236 = vpop.permute.xlu0 %3235
      %v3239 = vunpack.c.l.s4 839922192
      %v3240 = vunpack.c.0.s8 %v3239
      %v3241 = vperm.slane %v3236, %v3240
      %3242 = vset.pattern.permute.xlu0 7
      %3243 = vperm.xlu0 %3242, %v395
      %v3244 = vpop.permute.xlu0 %3243
      %v3247 = vunpack.c.l.s4 839922192
      %v3248 = vunpack.c.0.s8 %v3247
      %v3249 = vperm.slane %v3244, %v3248
      %3250 = vset.pattern.permute.xlu0 7
      %3251 = vperm.xlu0 %3250, %v396
      %v3252 = vpop.permute.xlu0 %3251
      %v3255 = vunpack.c.l.s4 839922192
      %v3256 = vunpack.c.0.s8 %v3255
      %v3257 = vperm.slane %v3252, %v3256
      %3258 = vset.pattern.permute.xlu0 7
      %3259 = vperm.xlu0 %3258, %v397
      %v3260 = vpop.permute.xlu0 %3259
      %v3263 = vunpack.c.l.s4 839922192
      %v3264 = vunpack.c.0.s8 %v3263
      %v3265 = vperm.slane %v3260, %v3264
      %3266 = vset.pattern.permute.xlu0 7
      %3267 = vperm.xlu0 %3266, %v398
      %v3268 = vpop.permute.xlu0 %3267
      %v3271 = vunpack.c.l.s4 839922192
      %v3272 = vunpack.c.0.s8 %v3271
      %v3273 = vperm.slane %v3268, %v3272
      %3274 = vset.pattern.permute.xlu0 7
      %3275 = vperm.xlu0 %3274, %v399
      %v3276 = vpop.permute.xlu0 %3275
      %v3279 = vunpack.c.l.s4 839922192
      %v3280 = vunpack.c.0.s8 %v3279
      %v3281 = vperm.slane %v3276, %v3280
      %3282 = vset.pattern.permute.xlu0 7
      %3283 = vperm.xlu0 %3282, %v400
      %v3284 = vpop.permute.xlu0 %3283
      %v3287 = vunpack.c.l.s4 839922192
      %v3288 = vunpack.c.0.s8 %v3287
      %v3289 = vperm.slane %v3284, %v3288
      %3290 = vset.pattern.permute.xlu0 7
      %3291 = vperm.xlu0 %3290, %v401
      %v3292 = vpop.permute.xlu0 %3291
      %v3295 = vunpack.c.l.s4 839922192
      %v3296 = vunpack.c.0.s8 %v3295
      %v3297 = vperm.slane %v3292, %v3296
      %3298 = vset.pattern.permute.xlu0 7
      %3299 = vperm.xlu0 %3298, %v402
      %v3300 = vpop.permute.xlu0 %3299
      %v3303 = vunpack.c.l.s4 839922192
      %v3304 = vunpack.c.0.s8 %v3303
      %v3305 = vperm.slane %v3300, %v3304
      %3306 = vset.pattern.permute.xlu0 7
      %3307 = vperm.xlu0 %3306, %v403
      %v3308 = vpop.permute.xlu0 %3307
      %v3311 = vunpack.c.l.s4 839922192
      %v3312 = vunpack.c.0.s8 %v3311
      %v3313 = vperm.slane %v3308, %v3312
      %3314 = vset.pattern.permute.xlu0 7
      %3315 = vperm.xlu0 %3314, %v404
      %v3316 = vpop.permute.xlu0 %3315
      %v3319 = vunpack.c.l.s4 839922192
      %v3320 = vunpack.c.0.s8 %v3319
      %v3321 = vperm.slane %v3316, %v3320
      %3322 = vset.pattern.permute.xlu0 7
      %3323 = vperm.xlu0 %3322, %v405
      %v3324 = vpop.permute.xlu0 %3323
      %v3327 = vunpack.c.l.s4 839922192
      %v3328 = vunpack.c.0.s8 %v3327
      %v3329 = vperm.slane %v3324, %v3328
      %3330 = vset.pattern.permute.xlu0 7
      %3331 = vperm.xlu0 %3330, %v406
      %v3332 = vpop.permute.xlu0 %3331
      %v3335 = vunpack.c.l.s4 839922192
      %v3336 = vunpack.c.0.s8 %v3335
      %v3337 = vperm.slane %v3332, %v3336
      %3338 = vset.pattern.permute.xlu0 7
      %3339 = vperm.xlu0 %3338, %v407
      %v3340 = vpop.permute.xlu0 %3339
      %v3343 = vunpack.c.l.s4 839922192
      %v3344 = vunpack.c.0.s8 %v3343
      %v3345 = vperm.slane %v3340, %v3344
      %3346 = vset.pattern.permute.xlu0 7
      %3347 = vperm.xlu0 %3346, %v408
      %v3348 = vpop.permute.xlu0 %3347
      %v3351 = vunpack.c.l.s4 839922192
      %v3352 = vunpack.c.0.s8 %v3351
      %v3353 = vperm.slane %v3348, %v3352
      %3354 = vset.pattern.permute.xlu0 7
      %3355 = vperm.xlu0 %3354, %v409
      %v3356 = vpop.permute.xlu0 %3355
      %v3359 = vunpack.c.l.s4 839922192
      %v3360 = vunpack.c.0.s8 %v3359
      %v3361 = vperm.slane %v3356, %v3360
      %3362 = vset.pattern.permute.xlu0 7
      %3363 = vperm.xlu0 %3362, %v410
      %v3364 = vpop.permute.xlu0 %3363
      %v3367 = vunpack.c.l.s4 839922192
      %v3368 = vunpack.c.0.s8 %v3367
      %v3369 = vperm.slane %v3364, %v3368
      %3370 = vset.pattern.permute.xlu0 7
      %3371 = vperm.xlu0 %3370, %v411
      %v3372 = vpop.permute.xlu0 %3371
      %v3375 = vunpack.c.l.s4 839922192
      %v3376 = vunpack.c.0.s8 %v3375
      %v3377 = vperm.slane %v3372, %v3376
      %3378 = vset.pattern.permute.xlu0 7
      %3379 = vperm.xlu0 %3378, %v412
      %v3380 = vpop.permute.xlu0 %3379
      %v3383 = vunpack.c.l.s4 839922192
      %v3384 = vunpack.c.0.s8 %v3383
      %v3385 = vperm.slane %v3380, %v3384
      %3386 = vset.pattern.permute.xlu0 7
      %3387 = vperm.xlu0 %3386, %v413
      %v3388 = vpop.permute.xlu0 %3387
      %v3391 = vunpack.c.l.s4 839922192
      %v3392 = vunpack.c.0.s8 %v3391
      %v3393 = vperm.slane %v3388, %v3392
      %3394 = vset.pattern.permute.xlu0 7
      %3395 = vperm.xlu0 %3394, %v414
      %v3396 = vpop.permute.xlu0 %3395
      %v3399 = vunpack.c.l.s4 839922192
      %v3400 = vunpack.c.0.s8 %v3399
      %v3401 = vperm.slane %v3396, %v3400
      %3402 = vset.pattern.permute.xlu0 7
      %3403 = vperm.xlu0 %3402, %v415
      %v3404 = vpop.permute.xlu0 %3403
      %v3407 = vunpack.c.l.s4 839922192
      %v3408 = vunpack.c.0.s8 %v3407
      %v3409 = vperm.slane %v3404, %v3408
      %3410 = vset.pattern.permute.xlu0 7
      %3411 = vperm.xlu0 %3410, %v416
      %v3412 = vpop.permute.xlu0 %3411
      %v3415 = vunpack.c.l.s4 839922192
      %v3416 = vunpack.c.0.s8 %v3415
      %v3417 = vperm.slane %v3412, %v3416
      %3418 = vset.pattern.permute.xlu0 7
      %3419 = vperm.xlu0 %3418, %v417
      %v3420 = vpop.permute.xlu0 %3419
      %v3423 = vunpack.c.l.s4 839922192
      %v3424 = vunpack.c.0.s8 %v3423
      %v3425 = vperm.slane %v3420, %v3424
      %3426 = vset.pattern.permute.xlu0 7
      %3427 = vperm.xlu0 %3426, %v418
      %v3428 = vpop.permute.xlu0 %3427
      %v3431 = vunpack.c.l.s4 839922192
      %v3432 = vunpack.c.0.s8 %v3431
      %v3433 = vperm.slane %v3428, %v3432
      %3434 = vset.pattern.permute.xlu0 7
      %3435 = vperm.xlu0 %3434, %v419
      %v3436 = vpop.permute.xlu0 %3435
      %v3439 = vunpack.c.l.s4 839922192
      %v3440 = vunpack.c.0.s8 %v3439
      %v3441 = vperm.slane %v3436, %v3440
      %3442 = vset.pattern.permute.xlu0 7
      %3443 = vperm.xlu0 %3442, %v420
      %v3444 = vpop.permute.xlu0 %3443
      %v3447 = vunpack.c.l.s4 839922192
      %v3448 = vunpack.c.0.s8 %v3447
      %v3449 = vperm.slane %v3444, %v3448
      %3450 = vset.pattern.permute.xlu0 7
      %3451 = vperm.xlu0 %3450, %v421
      %v3452 = vpop.permute.xlu0 %3451
      %v3455 = vunpack.c.l.s4 839922192
      %v3456 = vunpack.c.0.s8 %v3455
      %v3457 = vperm.slane %v3452, %v3456
      %3458 = vset.pattern.permute.xlu0 7
      %3459 = vperm.xlu0 %3458, %v422
      %v3460 = vpop.permute.xlu0 %3459
      %v3463 = vunpack.c.l.s4 839922192
      %v3464 = vunpack.c.0.s8 %v3463
      %v3465 = vperm.slane %v3460, %v3464
      %3466 = vset.pattern.permute.xlu0 7
      %3467 = vperm.xlu0 %3466, %v423
      %v3468 = vpop.permute.xlu0 %3467
      %v3471 = vunpack.c.l.s4 839922192
      %v3472 = vunpack.c.0.s8 %v3471
      %v3473 = vperm.slane %v3468, %v3472
      %3474 = vset.pattern.permute.xlu0 7
      %3475 = vperm.xlu0 %3474, %v424
      %v3476 = vpop.permute.xlu0 %3475
      %v3479 = vunpack.c.l.s4 839922192
      %v3480 = vunpack.c.0.s8 %v3479
      %v3481 = vperm.slane %v3476, %v3480
      %v3482 = vunpack.c.l.bf16 %v3233
      %v3483 = vunpack.c.l.bf16 %v3241
      %v3484 = vunpack.c.l.bf16 %v3249
      %v3485 = vunpack.c.l.bf16 %v3257
      %v3486 = vunpack.c.l.bf16 %v3265
      %v3487 = vunpack.c.l.bf16 %v3273
      %v3488 = vunpack.c.l.bf16 %v3281
      %v3489 = vunpack.c.l.bf16 %v3289
      %v3490 = vunpack.c.l.bf16 %v3297
      %v3491 = vunpack.c.l.bf16 %v3305
      %v3492 = vunpack.c.l.bf16 %v3313
      %v3493 = vunpack.c.l.bf16 %v3321
      %v3494 = vunpack.c.l.bf16 %v3329
      %v3495 = vunpack.c.l.bf16 %v3337
      %v3496 = vunpack.c.l.bf16 %v3345
      %v3497 = vunpack.c.l.bf16 %v3353
      %v3498 = vunpack.c.l.bf16 %v3361
      %v3499 = vunpack.c.l.bf16 %v3369
      %v3500 = vunpack.c.l.bf16 %v3377
      %v3501 = vunpack.c.l.bf16 %v3385
      %v3502 = vunpack.c.l.bf16 %v3393
      %v3503 = vunpack.c.l.bf16 %v3401
      %v3504 = vunpack.c.l.bf16 %v3409
      %v3505 = vunpack.c.l.bf16 %v3417
      %v3506 = vunpack.c.l.bf16 %v3425
      %v3507 = vunpack.c.l.bf16 %v3433
      %v3508 = vunpack.c.l.bf16 %v3441
      %v3509 = vunpack.c.l.bf16 %v3449
      %v3510 = vunpack.c.l.bf16 %v3457
      %v3511 = vunpack.c.l.bf16 %v3465
      %v3512 = vunpack.c.l.bf16 %v3473
      %v3513 = vunpack.c.l.bf16 %v3481
      %v3546 = vrot.slane %v3482, 7
      %v3547 = vrot.slane %v3483, 7
      %v3548 = vsel %vm1391, %v3546, %v3547
      %v3549 = vrot.slane %v3484, 7
      %v3550 = vsel %vm1391, %v3547, %v3549
      %v3551 = vrot.slane %v3485, 7
      %v3552 = vsel %vm1391, %v3549, %v3551
      %v3553 = vrot.slane %v3486, 7
      %v3554 = vsel %vm1391, %v3551, %v3553
      %v3555 = vrot.slane %v3487, 7
      %v3556 = vsel %vm1391, %v3553, %v3555
      %v3557 = vrot.slane %v3488, 7
      %v3558 = vsel %vm1391, %v3555, %v3557
      %v3559 = vrot.slane %v3489, 7
      %v3560 = vsel %vm1391, %v3557, %v3559
      %v3561 = vrot.slane %v3490, 7
      %v3562 = vsel %vm1391, %v3559, %v3561
      %v3563 = vrot.slane %v3491, 7
      %v3564 = vsel %vm1391, %v3561, %v3563
      %v3565 = vrot.slane %v3492, 7
      %v3566 = vsel %vm1391, %v3563, %v3565
      %v3567 = vrot.slane %v3493, 7
      %v3568 = vsel %vm1391, %v3565, %v3567
      %v3569 = vrot.slane %v3494, 7
      %v3570 = vsel %vm1391, %v3567, %v3569
      %v3571 = vrot.slane %v3495, 7
      %v3572 = vsel %vm1391, %v3569, %v3571
      %v3573 = vrot.slane %v3496, 7
      %v3574 = vsel %vm1391, %v3571, %v3573
      %v3575 = vrot.slane %v3497, 7
      %v3576 = vsel %vm1391, %v3573, %v3575
      %v3577 = vrot.slane %v3498, 7
      %v3578 = vsel %vm1391, %v3575, %v3577
      %v3579 = vrot.slane %v3499, 7
      %v3580 = vsel %vm1391, %v3577, %v3579
      %v3581 = vrot.slane %v3500, 7
      %v3582 = vsel %vm1391, %v3579, %v3581
      %v3583 = vrot.slane %v3501, 7
      %v3584 = vsel %vm1391, %v3581, %v3583
      %v3585 = vrot.slane %v3502, 7
      %v3586 = vsel %vm1391, %v3583, %v3585
      %v3587 = vrot.slane %v3503, 7
      %v3588 = vsel %vm1391, %v3585, %v3587
      %v3589 = vrot.slane %v3504, 7
      %v3590 = vsel %vm1391, %v3587, %v3589
      %v3591 = vrot.slane %v3505, 7
      %v3592 = vsel %vm1391, %v3589, %v3591
      %v3593 = vrot.slane %v3506, 7
      %v3594 = vsel %vm1391, %v3591, %v3593
      %v3595 = vrot.slane %v3507, 7
      %v3596 = vsel %vm1391, %v3593, %v3595
      %v3597 = vrot.slane %v3508, 7
      %v3598 = vsel %vm1391, %v3595, %v3597
      %v3599 = vrot.slane %v3509, 7
      %v3600 = vsel %vm1391, %v3597, %v3599
      %v3601 = vrot.slane %v3510, 7
      %v3602 = vsel %vm1391, %v3599, %v3601
      %v3603 = vrot.slane %v3511, 7
      %v3604 = vsel %vm1391, %v3601, %v3603
      %v3605 = vrot.slane %v3512, 7
      %v3606 = vsel %vm1391, %v3603, %v3605
      %v3607 = vrot.slane %v3513, 7
      %v3608 = vsel %vm1391, %v3605, %v3607
      %v3642 = vmul.f32 %v946, %v3546
      %v3643 = vmul.f32 %v947, %v3548
      %v3644 = vmul.f32 %v948, %v3550
      %v3645 = vmul.f32 %v949, %v3552
      %v3646 = vmul.f32 %v950, %v3554
      %v3647 = vmul.f32 %v951, %v3556
      %v3648 = vmul.f32 %v952, %v3558
      %v3649 = vmul.f32 %v953, %v3560
      %v3650 = vmul.f32 %v954, %v3562
      %v3651 = vmul.f32 %v955, %v3564
      %v3652 = vmul.f32 %v956, %v3566
      %v3653 = vmul.f32 %v957, %v3568
      %v3654 = vmul.f32 %v958, %v3570
      %v3655 = vmul.f32 %v959, %v3572
      %v3656 = vmul.f32 %v960, %v3574
      %v3657 = vmul.f32 %v961, %v3576
      %v3658 = vmul.f32 %v962, %v3578
      %v3659 = vmul.f32 %v963, %v3580
      %v3660 = vmul.f32 %v964, %v3582
      %v3661 = vmul.f32 %v965, %v3584
      %v3662 = vmul.f32 %v966, %v3586
      %v3663 = vmul.f32 %v967, %v3588
      %v3664 = vmul.f32 %v968, %v3590
      %v3665 = vmul.f32 %v969, %v3592
      %v3666 = vmul.f32 %v970, %v3594
      %v3667 = vmul.f32 %v971, %v3596
      %v3668 = vmul.f32 %v972, %v3598
      %v3669 = vmul.f32 %v973, %v3600
      %v3670 = vmul.f32 %v1326, %v3602
      %v3671 = vmul.f32 %v2293, %v3604
      %v3672 = vmul.f32 %v2646, %v3606
      %v3673 = vmul.f32 %v3129, %v3608
      %v3674 = vmul.f32 %v942, %v3607
      %v3675 = vpack.c.bf16 %v3642, %v3642
      %v3676 = vpack.c.bf16 %v3643, %v3643
      %v3677 = vpack.c.bf16 %v3644, %v3644
      %v3678 = vpack.c.bf16 %v3645, %v3645
      %v3679 = vpack.c.bf16 %v3646, %v3646
      %v3680 = vpack.c.bf16 %v3647, %v3647
      %v3681 = vpack.c.bf16 %v3648, %v3648
      %v3682 = vpack.c.bf16 %v3649, %v3649
      %v3683 = vpack.c.bf16 %v3650, %v3650
      %v3684 = vpack.c.bf16 %v3651, %v3651
      %v3685 = vpack.c.bf16 %v3652, %v3652
      %v3686 = vpack.c.bf16 %v3653, %v3653
      %v3687 = vpack.c.bf16 %v3654, %v3654
      %v3688 = vpack.c.bf16 %v3655, %v3655
      %v3689 = vpack.c.bf16 %v3656, %v3656
      %v3690 = vpack.c.bf16 %v3657, %v3657
      %v3691 = vpack.c.bf16 %v3658, %v3658
      %v3692 = vpack.c.bf16 %v3659, %v3659
      %v3693 = vpack.c.bf16 %v3660, %v3660
      %v3694 = vpack.c.bf16 %v3661, %v3661
      %v3695 = vpack.c.bf16 %v3662, %v3662
      %v3696 = vpack.c.bf16 %v3663, %v3663
      %v3697 = vpack.c.bf16 %v3664, %v3664
      %v3698 = vpack.c.bf16 %v3665, %v3665
      %v3699 = vpack.c.bf16 %v3666, %v3666
      %v3700 = vpack.c.bf16 %v3667, %v3667
      %v3701 = vpack.c.bf16 %v3668, %v3668
      %v3702 = vpack.c.bf16 %v3669, %v3669
      %v3703 = vpack.c.bf16 %v3670, %v3670
      %v3704 = vpack.c.bf16 %v3671, %v3671
      %v3705 = vpack.c.bf16 %v3672, %v3672
      %v3706 = vpack.c.bf16 %v3673, %v3673
      %v3707 = vpack.c.bf16 %v3674, %v3674
      %3708 = vset.pattern.permute.xlu0 8
      %3709 = vperm.xlu0 %3708, %v393
      %v3710 = vpop.permute.xlu0 %3709
      %v3713 = vunpack.c.l.s4 839922192
      %v3714 = vunpack.c.0.s8 %v3713
      %v3715 = vperm.slane %v3710, %v3714
      %3716 = vset.pattern.permute.xlu0 8
      %3717 = vperm.xlu0 %3716, %v394
      %v3718 = vpop.permute.xlu0 %3717
      %v3721 = vunpack.c.l.s4 839922192
      %v3722 = vunpack.c.0.s8 %v3721
      %v3723 = vperm.slane %v3718, %v3722
      %3724 = vset.pattern.permute.xlu0 8
      %3725 = vperm.xlu0 %3724, %v395
      %v3726 = vpop.permute.xlu0 %3725
      %v3729 = vunpack.c.l.s4 839922192
      %v3730 = vunpack.c.0.s8 %v3729
      %v3731 = vperm.slane %v3726, %v3730
      %3732 = vset.pattern.permute.xlu0 8
      %3733 = vperm.xlu0 %3732, %v396
      %v3734 = vpop.permute.xlu0 %3733
      %v3737 = vunpack.c.l.s4 839922192
      %v3738 = vunpack.c.0.s8 %v3737
      %v3739 = vperm.slane %v3734, %v3738
      %3740 = vset.pattern.permute.xlu0 8
      %3741 = vperm.xlu0 %3740, %v397
      %v3742 = vpop.permute.xlu0 %3741
      %v3745 = vunpack.c.l.s4 839922192
      %v3746 = vunpack.c.0.s8 %v3745
      %v3747 = vperm.slane %v3742, %v3746
      %3748 = vset.pattern.permute.xlu0 8
      %3749 = vperm.xlu0 %3748, %v398
      %v3750 = vpop.permute.xlu0 %3749
      %v3753 = vunpack.c.l.s4 839922192
      %v3754 = vunpack.c.0.s8 %v3753
      %v3755 = vperm.slane %v3750, %v3754
      %3756 = vset.pattern.permute.xlu0 8
      %3757 = vperm.xlu0 %3756, %v399
      %v3758 = vpop.permute.xlu0 %3757
      %v3761 = vunpack.c.l.s4 839922192
      %v3762 = vunpack.c.0.s8 %v3761
      %v3763 = vperm.slane %v3758, %v3762
      %3764 = vset.pattern.permute.xlu0 8
      %3765 = vperm.xlu0 %3764, %v400
      %v3766 = vpop.permute.xlu0 %3765
      %v3769 = vunpack.c.l.s4 839922192
      %v3770 = vunpack.c.0.s8 %v3769
      %v3771 = vperm.slane %v3766, %v3770
      %3772 = vset.pattern.permute.xlu0 8
      %3773 = vperm.xlu0 %3772, %v401
      %v3774 = vpop.permute.xlu0 %3773
      %v3777 = vunpack.c.l.s4 839922192
      %v3778 = vunpack.c.0.s8 %v3777
      %v3779 = vperm.slane %v3774, %v3778
      %3780 = vset.pattern.permute.xlu0 8
      %3781 = vperm.xlu0 %3780, %v402
      %v3782 = vpop.permute.xlu0 %3781
      %v3785 = vunpack.c.l.s4 839922192
      %v3786 = vunpack.c.0.s8 %v3785
      %v3787 = vperm.slane %v3782, %v3786
      %3788 = vset.pattern.permute.xlu0 8
      %3789 = vperm.xlu0 %3788, %v403
      %v3790 = vpop.permute.xlu0 %3789
      %v3793 = vunpack.c.l.s4 839922192
      %v3794 = vunpack.c.0.s8 %v3793
      %v3795 = vperm.slane %v3790, %v3794
      %3796 = vset.pattern.permute.xlu0 8
      %3797 = vperm.xlu0 %3796, %v404
      %v3798 = vpop.permute.xlu0 %3797
      %v3801 = vunpack.c.l.s4 839922192
      %v3802 = vunpack.c.0.s8 %v3801
      %v3803 = vperm.slane %v3798, %v3802
      %3804 = vset.pattern.permute.xlu0 8
      %3805 = vperm.xlu0 %3804, %v405
      %v3806 = vpop.permute.xlu0 %3805
      %v3809 = vunpack.c.l.s4 839922192
      %v3810 = vunpack.c.0.s8 %v3809
      %v3811 = vperm.slane %v3806, %v3810
      %3812 = vset.pattern.permute.xlu0 8
      %3813 = vperm.xlu0 %3812, %v406
      %v3814 = vpop.permute.xlu0 %3813
      %v3817 = vunpack.c.l.s4 839922192
      %v3818 = vunpack.c.0.s8 %v3817
      %v3819 = vperm.slane %v3814, %v3818
      %3820 = vset.pattern.permute.xlu0 8
      %3821 = vperm.xlu0 %3820, %v407
      %v3822 = vpop.permute.xlu0 %3821
      %v3825 = vunpack.c.l.s4 839922192
      %v3826 = vunpack.c.0.s8 %v3825
      %v3827 = vperm.slane %v3822, %v3826
      %3828 = vset.pattern.permute.xlu0 8
      %3829 = vperm.xlu0 %3828, %v408
      %v3830 = vpop.permute.xlu0 %3829
      %v3833 = vunpack.c.l.s4 839922192
      %v3834 = vunpack.c.0.s8 %v3833
      %v3835 = vperm.slane %v3830, %v3834
      %3836 = vset.pattern.permute.xlu0 8
      %3837 = vperm.xlu0 %3836, %v409
      %v3838 = vpop.permute.xlu0 %3837
      %v3841 = vunpack.c.l.s4 839922192
      %v3842 = vunpack.c.0.s8 %v3841
      %v3843 = vperm.slane %v3838, %v3842
      %3844 = vset.pattern.permute.xlu0 8
      %3845 = vperm.xlu0 %3844, %v410
      %v3846 = vpop.permute.xlu0 %3845
      %v3849 = vunpack.c.l.s4 839922192
      %v3850 = vunpack.c.0.s8 %v3849
      %v3851 = vperm.slane %v3846, %v3850
      %3852 = vset.pattern.permute.xlu0 8
      %3853 = vperm.xlu0 %3852, %v411
      %v3854 = vpop.permute.xlu0 %3853
      %v3857 = vunpack.c.l.s4 839922192
      %v3858 = vunpack.c.0.s8 %v3857
      %v3859 = vperm.slane %v3854, %v3858
      %3860 = vset.pattern.permute.xlu0 8
      %3861 = vperm.xlu0 %3860, %v412
      %v3862 = vpop.permute.xlu0 %3861
      %v3865 = vunpack.c.l.s4 839922192
      %v3866 = vunpack.c.0.s8 %v3865
      %v3867 = vperm.slane %v3862, %v3866
      %3868 = vset.pattern.permute.xlu0 8
      %3869 = vperm.xlu0 %3868, %v413
      %v3870 = vpop.permute.xlu0 %3869
      %v3873 = vunpack.c.l.s4 839922192
      %v3874 = vunpack.c.0.s8 %v3873
      %v3875 = vperm.slane %v3870, %v3874
      %3876 = vset.pattern.permute.xlu0 8
      %3877 = vperm.xlu0 %3876, %v414
      %v3878 = vpop.permute.xlu0 %3877
      %v3881 = vunpack.c.l.s4 839922192
      %v3882 = vunpack.c.0.s8 %v3881
      %v3883 = vperm.slane %v3878, %v3882
      %3884 = vset.pattern.permute.xlu0 8
      %3885 = vperm.xlu0 %3884, %v415
      %v3886 = vpop.permute.xlu0 %3885
      %v3889 = vunpack.c.l.s4 839922192
      %v3890 = vunpack.c.0.s8 %v3889
      %v3891 = vperm.slane %v3886, %v3890
      %3892 = vset.pattern.permute.xlu0 8
      %3893 = vperm.xlu0 %3892, %v416
      %v3894 = vpop.permute.xlu0 %3893
      %v3897 = vunpack.c.l.s4 839922192
      %v3898 = vunpack.c.0.s8 %v3897
      %v3899 = vperm.slane %v3894, %v3898
      %3900 = vset.pattern.permute.xlu0 8
      %3901 = vperm.xlu0 %3900, %v417
      %v3902 = vpop.permute.xlu0 %3901
      %v3905 = vunpack.c.l.s4 839922192
      %v3906 = vunpack.c.0.s8 %v3905
      %v3907 = vperm.slane %v3902, %v3906
      %3908 = vset.pattern.permute.xlu0 8
      %3909 = vperm.xlu0 %3908, %v418
      %v3910 = vpop.permute.xlu0 %3909
      %v3913 = vunpack.c.l.s4 839922192
      %v3914 = vunpack.c.0.s8 %v3913
      %v3915 = vperm.slane %v3910, %v3914
      %3916 = vset.pattern.permute.xlu0 8
      %3917 = vperm.xlu0 %3916, %v419
      %v3918 = vpop.permute.xlu0 %3917
      %v3921 = vunpack.c.l.s4 839922192
      %v3922 = vunpack.c.0.s8 %v3921
      %v3923 = vperm.slane %v3918, %v3922
      %3924 = vset.pattern.permute.xlu0 8
      %3925 = vperm.xlu0 %3924, %v420
      %v3926 = vpop.permute.xlu0 %3925
      %v3929 = vunpack.c.l.s4 839922192
      %v3930 = vunpack.c.0.s8 %v3929
      %v3931 = vperm.slane %v3926, %v3930
      %3932 = vset.pattern.permute.xlu0 8
      %3933 = vperm.xlu0 %3932, %v421
      %v3934 = vpop.permute.xlu0 %3933
      %v3937 = vunpack.c.l.s4 839922192
      %v3938 = vunpack.c.0.s8 %v3937
      %v3939 = vperm.slane %v3934, %v3938
      %3940 = vset.pattern.permute.xlu0 8
      %3941 = vperm.xlu0 %3940, %v422
      %v3942 = vpop.permute.xlu0 %3941
      %v3945 = vunpack.c.l.s4 839922192
      %v3946 = vunpack.c.0.s8 %v3945
      %v3947 = vperm.slane %v3942, %v3946
      %3948 = vset.pattern.permute.xlu0 8
      %3949 = vperm.xlu0 %3948, %v423
      %v3950 = vpop.permute.xlu0 %3949
      %v3953 = vunpack.c.l.s4 839922192
      %v3954 = vunpack.c.0.s8 %v3953
      %v3955 = vperm.slane %v3950, %v3954
      %3956 = vset.pattern.permute.xlu0 8
      %3957 = vperm.xlu0 %3956, %v424
      %v3958 = vpop.permute.xlu0 %3957
      %v3961 = vunpack.c.l.s4 839922192
      %v3962 = vunpack.c.0.s8 %v3961
      %v3963 = vperm.slane %v3958, %v3962
      %v3964 = vunpack.c.l.bf16 %v3715
      %v3965 = vunpack.c.l.bf16 %v3723
      %v3966 = vunpack.c.l.bf16 %v3731
      %v3967 = vunpack.c.l.bf16 %v3739
      %v3968 = vunpack.c.l.bf16 %v3747
      %v3969 = vunpack.c.l.bf16 %v3755
      %v3970 = vunpack.c.l.bf16 %v3763
      %v3971 = vunpack.c.l.bf16 %v3771
      %v3972 = vunpack.c.l.bf16 %v3779
      %v3973 = vunpack.c.l.bf16 %v3787
      %v3974 = vunpack.c.l.bf16 %v3795
      %v3975 = vunpack.c.l.bf16 %v3803
      %v3976 = vunpack.c.l.bf16 %v3811
      %v3977 = vunpack.c.l.bf16 %v3819
      %v3978 = vunpack.c.l.bf16 %v3827
      %v3979 = vunpack.c.l.bf16 %v3835
      %v3980 = vunpack.c.l.bf16 %v3843
      %v3981 = vunpack.c.l.bf16 %v3851
      %v3982 = vunpack.c.l.bf16 %v3859
      %v3983 = vunpack.c.l.bf16 %v3867
      %v3984 = vunpack.c.l.bf16 %v3875
      %v3985 = vunpack.c.l.bf16 %v3883
      %v3986 = vunpack.c.l.bf16 %v3891
      %v3987 = vunpack.c.l.bf16 %v3899
      %v3988 = vunpack.c.l.bf16 %v3907
      %v3989 = vunpack.c.l.bf16 %v3915
      %v3990 = vunpack.c.l.bf16 %v3923
      %v3991 = vunpack.c.l.bf16 %v3931
      %v3992 = vunpack.c.l.bf16 %v3939
      %v3993 = vunpack.c.l.bf16 %v3947
      %v3994 = vunpack.c.l.bf16 %v3955
      %v3995 = vunpack.c.l.bf16 %v3963
      %v4028 = vrot.slane %v3964, 6
      %v4029 = vrot.slane %v3965, 6
      %v4030 = vsel %vm1874, %v4028, %v4029
      %v4031 = vrot.slane %v3966, 6
      %v4032 = vsel %vm1874, %v4029, %v4031
      %v4033 = vrot.slane %v3967, 6
      %v4034 = vsel %vm1874, %v4031, %v4033
      %v4035 = vrot.slane %v3968, 6
      %v4036 = vsel %vm1874, %v4033, %v4035
      %v4037 = vrot.slane %v3969, 6
      %v4038 = vsel %vm1874, %v4035, %v4037
      %v4039 = vrot.slane %v3970, 6
      %v4040 = vsel %vm1874, %v4037, %v4039
      %v4041 = vrot.slane %v3971, 6
      %v4042 = vsel %vm1874, %v4039, %v4041
      %v4043 = vrot.slane %v3972, 6
      %v4044 = vsel %vm1874, %v4041, %v4043
      %v4045 = vrot.slane %v3973, 6
      %v4046 = vsel %vm1874, %v4043, %v4045
      %v4047 = vrot.slane %v3974, 6
      %v4048 = vsel %vm1874, %v4045, %v4047
      %v4049 = vrot.slane %v3975, 6
      %v4050 = vsel %vm1874, %v4047, %v4049
      %v4051 = vrot.slane %v3976, 6
      %v4052 = vsel %vm1874, %v4049, %v4051
      %v4053 = vrot.slane %v3977, 6
      %v4054 = vsel %vm1874, %v4051, %v4053
      %v4055 = vrot.slane %v3978, 6
      %v4056 = vsel %vm1874, %v4053, %v4055
      %v4057 = vrot.slane %v3979, 6
      %v4058 = vsel %vm1874, %v4055, %v4057
      %v4059 = vrot.slane %v3980, 6
      %v4060 = vsel %vm1874, %v4057, %v4059
      %v4061 = vrot.slane %v3981, 6
      %v4062 = vsel %vm1874, %v4059, %v4061
      %v4063 = vrot.slane %v3982, 6
      %v4064 = vsel %vm1874, %v4061, %v4063
      %v4065 = vrot.slane %v3983, 6
      %v4066 = vsel %vm1874, %v4063, %v4065
      %v4067 = vrot.slane %v3984, 6
      %v4068 = vsel %vm1874, %v4065, %v4067
      %v4069 = vrot.slane %v3985, 6
      %v4070 = vsel %vm1874, %v4067, %v4069
      %v4071 = vrot.slane %v3986, 6
      %v4072 = vsel %vm1874, %v4069, %v4071
      %v4073 = vrot.slane %v3987, 6
      %v4074 = vsel %vm1874, %v4071, %v4073
      %v4075 = vrot.slane %v3988, 6
      %v4076 = vsel %vm1874, %v4073, %v4075
      %v4077 = vrot.slane %v3989, 6
      %v4078 = vsel %vm1874, %v4075, %v4077
      %v4079 = vrot.slane %v3990, 6
      %v4080 = vsel %vm1874, %v4077, %v4079
      %v4081 = vrot.slane %v3991, 6
      %v4082 = vsel %vm1874, %v4079, %v4081
      %v4083 = vrot.slane %v3992, 6
      %v4084 = vsel %vm1874, %v4081, %v4083
      %v4085 = vrot.slane %v3993, 6
      %v4086 = vsel %vm1874, %v4083, %v4085
      %v4087 = vrot.slane %v3994, 6
      %v4088 = vsel %vm1874, %v4085, %v4087
      %v4089 = vrot.slane %v3995, 6
      %v4090 = vsel %vm1874, %v4087, %v4089
      %v4124 = vmul.f32 %v946, %v4028
      %v4125 = vmul.f32 %v947, %v4030
      %v4126 = vmul.f32 %v948, %v4032
      %v4127 = vmul.f32 %v949, %v4034
      %v4128 = vmul.f32 %v950, %v4036
      %v4129 = vmul.f32 %v951, %v4038
      %v4130 = vmul.f32 %v952, %v4040
      %v4131 = vmul.f32 %v953, %v4042
      %v4132 = vmul.f32 %v954, %v4044
      %v4133 = vmul.f32 %v955, %v4046
      %v4134 = vmul.f32 %v956, %v4048
      %v4135 = vmul.f32 %v957, %v4050
      %v4136 = vmul.f32 %v958, %v4052
      %v4137 = vmul.f32 %v959, %v4054
      %v4138 = vmul.f32 %v960, %v4056
      %v4139 = vmul.f32 %v961, %v4058
      %v4140 = vmul.f32 %v962, %v4060
      %v4141 = vmul.f32 %v963, %v4062
      %v4142 = vmul.f32 %v964, %v4064
      %v4143 = vmul.f32 %v965, %v4066
      %v4144 = vmul.f32 %v966, %v4068
      %v4145 = vmul.f32 %v967, %v4070
      %v4146 = vmul.f32 %v968, %v4072
      %v4147 = vmul.f32 %v969, %v4074
      %v4148 = vmul.f32 %v970, %v4076
      %v4149 = vmul.f32 %v971, %v4078
      %v4150 = vmul.f32 %v972, %v4080
      %v4151 = vmul.f32 %v973, %v4082
      %v4152 = vmul.f32 %v1326, %v4084
      %v4153 = vmul.f32 %v2293, %v4086
      %v4154 = vmul.f32 %v2646, %v4088
      %v4155 = vmul.f32 %v3129, %v4090
      %v4156 = vmul.f32 %v942, %v4089
      %v4157 = vpack.c.bf16 %v4124, %v4124
      %v4158 = vpack.c.bf16 %v4125, %v4125
      %v4159 = vpack.c.bf16 %v4126, %v4126
      %v4160 = vpack.c.bf16 %v4127, %v4127
      %v4161 = vpack.c.bf16 %v4128, %v4128
      %v4162 = vpack.c.bf16 %v4129, %v4129
      %v4163 = vpack.c.bf16 %v4130, %v4130
      %v4164 = vpack.c.bf16 %v4131, %v4131
      %v4165 = vpack.c.bf16 %v4132, %v4132
      %v4166 = vpack.c.bf16 %v4133, %v4133
      %v4167 = vpack.c.bf16 %v4134, %v4134
      %v4168 = vpack.c.bf16 %v4135, %v4135
      %v4169 = vpack.c.bf16 %v4136, %v4136
      %v4170 = vpack.c.bf16 %v4137, %v4137
      %v4171 = vpack.c.bf16 %v4138, %v4138
      %v4172 = vpack.c.bf16 %v4139, %v4139
      %v4173 = vpack.c.bf16 %v4140, %v4140
      %v4174 = vpack.c.bf16 %v4141, %v4141
      %v4175 = vpack.c.bf16 %v4142, %v4142
      %v4176 = vpack.c.bf16 %v4143, %v4143
      %v4177 = vpack.c.bf16 %v4144, %v4144
      %v4178 = vpack.c.bf16 %v4145, %v4145
      %v4179 = vpack.c.bf16 %v4146, %v4146
      %v4180 = vpack.c.bf16 %v4147, %v4147
      %v4181 = vpack.c.bf16 %v4148, %v4148
      %v4182 = vpack.c.bf16 %v4149, %v4149
      %v4183 = vpack.c.bf16 %v4150, %v4150
      %v4184 = vpack.c.bf16 %v4151, %v4151
      %v4185 = vpack.c.bf16 %v4152, %v4152
      %v4186 = vpack.c.bf16 %v4153, %v4153
      %v4187 = vpack.c.bf16 %v4154, %v4154
      %v4188 = vpack.c.bf16 %v4155, %v4155
      %v4189 = vpack.c.bf16 %v4156, %v4156
      %v4222 = vunpack.c.l.b16 %v1038
      %v4223 = vunpack.c.l.b16 %v1039
      %v4224 = vunpack.c.l.b16 %v1040
      %v4225 = vunpack.c.l.b16 %v1041
      %v4226 = vunpack.c.l.b16 %v1042
      %v4227 = vunpack.c.l.b16 %v1043
      %v4228 = vunpack.c.l.b16 %v1044
      %v4229 = vunpack.c.l.b16 %v1045
      %v4230 = vunpack.c.l.b16 %v1046
      %v4231 = vunpack.c.l.b16 %v1047
      %v4232 = vunpack.c.l.b16 %v1048
      %v4233 = vunpack.c.l.b16 %v1049
      %v4234 = vunpack.c.l.b16 %v1050
      %v4235 = vunpack.c.l.b16 %v1051
      %v4236 = vunpack.c.l.b16 %v1052
      %v4237 = vunpack.c.l.b16 %v1053
      %v4238 = vunpack.c.l.b16 %v1054
      %v4239 = vunpack.c.l.b16 %v1055
      %v4240 = vunpack.c.l.b16 %v1056
      %v4241 = vunpack.c.l.b16 %v1057
      %v4242 = vunpack.c.l.b16 %v1058
      %v4243 = vunpack.c.l.b16 %v1059
      %v4244 = vunpack.c.l.b16 %v1060
      %v4245 = vunpack.c.l.b16 %v1061
      %v4246 = vunpack.c.l.b16 %v1062
      %v4247 = vunpack.c.l.b16 %v1063
      %v4248 = vunpack.c.l.b16 %v1064
      %v4249 = vunpack.c.l.b16 %v1065
      %v4250 = vunpack.c.l.b16 %v1066
      %v4251 = vunpack.c.l.b16 %v1067
      %v4252 = vunpack.c.l.b16 %v1068
      %v4253 = vunpack.c.l.b16 %v1069
      %v4254 = vpack.c.b16 %v4223, %v4222
      %v4255 = vpack.c.b16 %v4225, %v4224
      %v4256 = vpack.c.b16 %v4227, %v4226
      %v4257 = vpack.c.b16 %v4229, %v4228
      %v4258 = vpack.c.b16 %v4231, %v4230
      %v4259 = vpack.c.b16 %v4233, %v4232
      %v4260 = vpack.c.b16 %v4235, %v4234
      %v4261 = vpack.c.b16 %v4237, %v4236
      %v4262 = vpack.c.b16 %v4239, %v4238
      %v4263 = vpack.c.b16 %v4241, %v4240
      %v4264 = vpack.c.b16 %v4243, %v4242
      %v4265 = vpack.c.b16 %v4245, %v4244
      %v4266 = vpack.c.b16 %v4247, %v4246
      %v4267 = vpack.c.b16 %v4249, %v4248
      %v4268 = vpack.c.b16 %v4251, %v4250
      %v4269 = vpack.c.b16 %v4253, %v4252
      %v4303 = vunpack.c.l.b16 %v1521
      %v4304 = vunpack.c.l.b16 %v1522
      %v4305 = vunpack.c.l.b16 %v1523
      %v4306 = vunpack.c.l.b16 %v1524
      %v4307 = vunpack.c.l.b16 %v1525
      %v4308 = vunpack.c.l.b16 %v1526
      %v4309 = vunpack.c.l.b16 %v1527
      %v4310 = vunpack.c.l.b16 %v1528
      %v4311 = vunpack.c.l.b16 %v1529
      %v4312 = vunpack.c.l.b16 %v1530
      %v4313 = vunpack.c.l.b16 %v1531
      %v4314 = vunpack.c.l.b16 %v1532
      %v4315 = vunpack.c.l.b16 %v1533
      %v4316 = vunpack.c.l.b16 %v1534
      %v4317 = vunpack.c.l.b16 %v1535
      %v4318 = vunpack.c.l.b16 %v1536
      %v4319 = vunpack.c.l.b16 %v1537
      %v4320 = vunpack.c.l.b16 %v1538
      %v4321 = vunpack.c.l.b16 %v1539
      %v4322 = vunpack.c.l.b16 %v1540
      %v4323 = vunpack.c.l.b16 %v1541
      %v4324 = vunpack.c.l.b16 %v1542
      %v4325 = vunpack.c.l.b16 %v1543
      %v4326 = vunpack.c.l.b16 %v1544
      %v4327 = vunpack.c.l.b16 %v1545
      %v4328 = vunpack.c.l.b16 %v1546
      %v4329 = vunpack.c.l.b16 %v1547
      %v4330 = vunpack.c.l.b16 %v1548
      %v4331 = vunpack.c.l.b16 %v1549
      %v4332 = vunpack.c.l.b16 %v1550
      %v4333 = vunpack.c.l.b16 %v1551
      %v4334 = vunpack.c.l.b16 %v1552
      %v4335 = vunpack.c.l.b16 %v1553
      %v4336 = vpack.c.b16 %v4304, %v4303
      %v4337 = vpack.c.b16 %v4306, %v4305
      %v4338 = vpack.c.b16 %v4308, %v4307
      %v4339 = vpack.c.b16 %v4310, %v4309
      %v4340 = vpack.c.b16 %v4312, %v4311
      %v4341 = vpack.c.b16 %v4314, %v4313
      %v4342 = vpack.c.b16 %v4316, %v4315
      %v4343 = vpack.c.b16 %v4318, %v4317
      %v4344 = vpack.c.b16 %v4320, %v4319
      %v4345 = vpack.c.b16 %v4322, %v4321
      %v4346 = vpack.c.b16 %v4324, %v4323
      %v4347 = vpack.c.b16 %v4326, %v4325
      %v4348 = vpack.c.b16 %v4328, %v4327
      %v4349 = vpack.c.b16 %v4330, %v4329
      %v4350 = vpack.c.b16 %v4332, %v4331
      %v4351 = vpack.c.b16 %v4334, %v4333
      %v4352 = vpack.c.b16 %v4335, %v4335
      %vm4353 = vsmask.f32 7424
      %v4355 = vshrl.u32 %v4336, 16
      %v4357 = vshll.u32 %v4336, 16
      %v4359 = vrot.slane %v4357, 1
      %v4360 = vor.u32 %v4355, %v4359
      %v4362 = vshll.u32 %v4337, 16
      %v4364 = vrot.slane %v4362, 1
      %v4365 = vsel %vm4353, %v4360, %v4364
      %v4366 = vshrl.u32 %v4337, 16
      %v4368 = vor.u32 %v4366, %v4364
      %v4370 = vshll.u32 %v4338, 16
      %v4372 = vrot.slane %v4370, 1
      %v4373 = vsel %vm4353, %v4368, %v4372
      %v4374 = vshrl.u32 %v4338, 16
      %v4376 = vor.u32 %v4374, %v4372
      %v4378 = vshll.u32 %v4339, 16
      %v4380 = vrot.slane %v4378, 1
      %v4381 = vsel %vm4353, %v4376, %v4380
      %v4382 = vshrl.u32 %v4339, 16
      %v4384 = vor.u32 %v4382, %v4380
      %v4386 = vshll.u32 %v4340, 16
      %v4388 = vrot.slane %v4386, 1
      %v4389 = vsel %vm4353, %v4384, %v4388
      %v4390 = vshrl.u32 %v4340, 16
      %v4392 = vor.u32 %v4390, %v4388
      %v4394 = vshll.u32 %v4341, 16
      %v4396 = vrot.slane %v4394, 1
      %v4397 = vsel %vm4353, %v4392, %v4396
      %v4398 = vshrl.u32 %v4341, 16
      %v4400 = vor.u32 %v4398, %v4396
      %v4402 = vshll.u32 %v4342, 16
      %v4404 = vrot.slane %v4402, 1
      %v4405 = vsel %vm4353, %v4400, %v4404
      %v4406 = vshrl.u32 %v4342, 16
      %v4408 = vor.u32 %v4406, %v4404
      %v4410 = vshll.u32 %v4343, 16
      %v4412 = vrot.slane %v4410, 1
      %v4413 = vsel %vm4353, %v4408, %v4412
      %v4414 = vshrl.u32 %v4343, 16
      %v4416 = vor.u32 %v4414, %v4412
      %v4418 = vshll.u32 %v4344, 16
      %v4420 = vrot.slane %v4418, 1
      %v4421 = vsel %vm4353, %v4416, %v4420
      %v4422 = vshrl.u32 %v4344, 16
      %v4424 = vor.u32 %v4422, %v4420
      %v4426 = vshll.u32 %v4345, 16
      %v4428 = vrot.slane %v4426, 1
      %v4429 = vsel %vm4353, %v4424, %v4428
      %v4430 = vshrl.u32 %v4345, 16
      %v4432 = vor.u32 %v4430, %v4428
      %v4434 = vshll.u32 %v4346, 16
      %v4436 = vrot.slane %v4434, 1
      %v4437 = vsel %vm4353, %v4432, %v4436
      %v4438 = vshrl.u32 %v4346, 16
      %v4440 = vor.u32 %v4438, %v4436
      %v4442 = vshll.u32 %v4347, 16
      %v4444 = vrot.slane %v4442, 1
      %v4445 = vsel %vm4353, %v4440, %v4444
      %v4446 = vshrl.u32 %v4347, 16
      %v4448 = vor.u32 %v4446, %v4444
      %v4450 = vshll.u32 %v4348, 16
      %v4452 = vrot.slane %v4450, 1
      %v4453 = vsel %vm4353, %v4448, %v4452
      %v4454 = vshrl.u32 %v4348, 16
      %v4456 = vor.u32 %v4454, %v4452
      %v4458 = vshll.u32 %v4349, 16
      %v4460 = vrot.slane %v4458, 1
      %v4461 = vsel %vm4353, %v4456, %v4460
      %v4462 = vshrl.u32 %v4349, 16
      %v4464 = vor.u32 %v4462, %v4460
      %v4466 = vshll.u32 %v4350, 16
      %v4468 = vrot.slane %v4466, 1
      %v4469 = vsel %vm4353, %v4464, %v4468
      %v4470 = vshrl.u32 %v4350, 16
      %v4472 = vor.u32 %v4470, %v4468
      %v4474 = vshll.u32 %v4351, 16
      %v4476 = vrot.slane %v4474, 1
      %v4477 = vsel %vm4353, %v4472, %v4476
      %v4478 = vshrl.u32 %v4351, 16
      %v4480 = vor.u32 %v4478, %v4476
      %v4482 = vshll.u32 %v4352, 16
      %v4484 = vrot.slane %v4482, 1
      %v4485 = vsel %vm4353, %v4480, %v4484
      %4486 = vrot.lane.b32.xlu0 %v4365, 8
      %v4487 = vpop.permute.xlu0 %4486
      %4488 = vrot.lane.b32.xlu0 %v4373, 8
      %v4489 = vpop.permute.xlu0 %4488
      %4490 = vrot.lane.b32.xlu0 %v4381, 8
      %v4491 = vpop.permute.xlu0 %4490
      %4492 = vrot.lane.b32.xlu0 %v4389, 8
      %v4493 = vpop.permute.xlu0 %4492
      %4494 = vrot.lane.b32.xlu0 %v4397, 8
      %v4495 = vpop.permute.xlu0 %4494
      %4496 = vrot.lane.b32.xlu0 %v4405, 8
      %v4497 = vpop.permute.xlu0 %4496
      %4498 = vrot.lane.b32.xlu0 %v4413, 8
      %v4499 = vpop.permute.xlu0 %4498
      %4500 = vrot.lane.b32.xlu0 %v4421, 8
      %v4501 = vpop.permute.xlu0 %4500
      %4502 = vrot.lane.b32.xlu0 %v4429, 8
      %v4503 = vpop.permute.xlu0 %4502
      %4504 = vrot.lane.b32.xlu0 %v4437, 8
      %v4505 = vpop.permute.xlu0 %4504
      %4506 = vrot.lane.b32.xlu0 %v4445, 8
      %v4507 = vpop.permute.xlu0 %4506
      %4508 = vrot.lane.b32.xlu0 %v4453, 8
      %v4509 = vpop.permute.xlu0 %4508
      %4510 = vrot.lane.b32.xlu0 %v4461, 8
      %v4511 = vpop.permute.xlu0 %4510
      %4512 = vrot.lane.b32.xlu0 %v4469, 8
      %v4513 = vpop.permute.xlu0 %4512
      %4514 = vrot.lane.b32.xlu0 %v4477, 8
      %v4515 = vpop.permute.xlu0 %4514
      %4516 = vrot.lane.b32.xlu0 %v4485, 8
      %v4517 = vpop.permute.xlu0 %4516
      %v4551 = vunpack.c.l.b16 %v2004
      %v4552 = vunpack.c.l.b16 %v2005
      %v4553 = vunpack.c.l.b16 %v2006
      %v4554 = vunpack.c.l.b16 %v2007
      %v4555 = vunpack.c.l.b16 %v2008
      %v4556 = vunpack.c.l.b16 %v2009
      %v4557 = vunpack.c.l.b16 %v2010
      %v4558 = vunpack.c.l.b16 %v2011
      %v4559 = vunpack.c.l.b16 %v2012
      %v4560 = vunpack.c.l.b16 %v2013
      %v4561 = vunpack.c.l.b16 %v2014
      %v4562 = vunpack.c.l.b16 %v2015
      %v4563 = vunpack.c.l.b16 %v2016
      %v4564 = vunpack.c.l.b16 %v2017
      %v4565 = vunpack.c.l.b16 %v2018
      %v4566 = vunpack.c.l.b16 %v2019
      %v4567 = vunpack.c.l.b16 %v2020
      %v4568 = vunpack.c.l.b16 %v2021
      %v4569 = vunpack.c.l.b16 %v2022
      %v4570 = vunpack.c.l.b16 %v2023
      %v4571 = vunpack.c.l.b16 %v2024
      %v4572 = vunpack.c.l.b16 %v2025
      %v4573 = vunpack.c.l.b16 %v2026
      %v4574 = vunpack.c.l.b16 %v2027
      %v4575 = vunpack.c.l.b16 %v2028
      %v4576 = vunpack.c.l.b16 %v2029
      %v4577 = vunpack.c.l.b16 %v2030
      %v4578 = vunpack.c.l.b16 %v2031
      %v4579 = vunpack.c.l.b16 %v2032
      %v4580 = vunpack.c.l.b16 %v2033
      %v4581 = vunpack.c.l.b16 %v2034
      %v4582 = vunpack.c.l.b16 %v2035
      %v4583 = vunpack.c.l.b16 %v2036
      %v4584 = vpack.c.b16 %v4552, %v4551
      %v4585 = vpack.c.b16 %v4554, %v4553
      %v4586 = vpack.c.b16 %v4556, %v4555
      %v4587 = vpack.c.b16 %v4558, %v4557
      %v4588 = vpack.c.b16 %v4560, %v4559
      %v4589 = vpack.c.b16 %v4562, %v4561
      %v4590 = vpack.c.b16 %v4564, %v4563
      %v4591 = vpack.c.b16 %v4566, %v4565
      %v4592 = vpack.c.b16 %v4568, %v4567
      %v4593 = vpack.c.b16 %v4570, %v4569
      %v4594 = vpack.c.b16 %v4572, %v4571
      %v4595 = vpack.c.b16 %v4574, %v4573
      %v4596 = vpack.c.b16 %v4576, %v4575
      %v4597 = vpack.c.b16 %v4578, %v4577
      %v4598 = vpack.c.b16 %v4580, %v4579
      %v4599 = vpack.c.b16 %v4582, %v4581
      %v4600 = vpack.c.b16 %v4583, %v4583
      %vm4601 = vcmask 1046528
      %v4602 = vrot.slane %v4584, 1
      %v4603 = vrot.slane %v4585, 1
      %v4604 = vsel %vm4601, %v4602, %v4603
      %v4605 = vrot.slane %v4586, 1
      %v4606 = vsel %vm4601, %v4603, %v4605
      %v4607 = vrot.slane %v4587, 1
      %v4608 = vsel %vm4601, %v4605, %v4607
      %v4609 = vrot.slane %v4588, 1
      %v4610 = vsel %vm4601, %v4607, %v4609
      %v4611 = vrot.slane %v4589, 1
      %v4612 = vsel %vm4601, %v4609, %v4611
      %v4613 = vrot.slane %v4590, 1
      %v4614 = vsel %vm4601, %v4611, %v4613
      %v4615 = vrot.slane %v4591, 1
      %v4616 = vsel %vm4601, %v4613, %v4615
      %v4617 = vrot.slane %v4592, 1
      %v4618 = vsel %vm4601, %v4615, %v4617
      %v4619 = vrot.slane %v4593, 1
      %v4620 = vsel %vm4601, %v4617, %v4619
      %v4621 = vrot.slane %v4594, 1
      %v4622 = vsel %vm4601, %v4619, %v4621
      %v4623 = vrot.slane %v4595, 1
      %v4624 = vsel %vm4601, %v4621, %v4623
      %v4625 = vrot.slane %v4596, 1
      %v4626 = vsel %vm4601, %v4623, %v4625
      %v4627 = vrot.slane %v4597, 1
      %v4628 = vsel %vm4601, %v4625, %v4627
      %v4629 = vrot.slane %v4598, 1
      %v4630 = vsel %vm4601, %v4627, %v4629
      %v4631 = vrot.slane %v4599, 1
      %v4632 = vsel %vm4601, %v4629, %v4631
      %v4633 = vrot.slane %v4600, 1
      %v4634 = vsel %vm4601, %v4631, %v4633
      %4635 = vrot.lane.b32.xlu0 %v4604, 16
      %v4636 = vpop.permute.xlu0 %4635
      %4637 = vrot.lane.b32.xlu0 %v4606, 16
      %v4638 = vpop.permute.xlu0 %4637
      %4639 = vrot.lane.b32.xlu0 %v4608, 16
      %v4640 = vpop.permute.xlu0 %4639
      %4641 = vrot.lane.b32.xlu0 %v4610, 16
      %v4642 = vpop.permute.xlu0 %4641
      %4643 = vrot.lane.b32.xlu0 %v4612, 16
      %v4644 = vpop.permute.xlu0 %4643
      %4645 = vrot.lane.b32.xlu0 %v4614, 16
      %v4646 = vpop.permute.xlu0 %4645
      %4647 = vrot.lane.b32.xlu0 %v4616, 16
      %v4648 = vpop.permute.xlu0 %4647
      %4649 = vrot.lane.b32.xlu0 %v4618, 16
      %v4650 = vpop.permute.xlu0 %4649
      %4651 = vrot.lane.b32.xlu0 %v4620, 16
      %v4652 = vpop.permute.xlu0 %4651
      %4653 = vrot.lane.b32.xlu0 %v4622, 16
      %v4654 = vpop.permute.xlu0 %4653
      %4655 = vrot.lane.b32.xlu0 %v4624, 16
      %v4656 = vpop.permute.xlu0 %4655
      %4657 = vrot.lane.b32.xlu0 %v4626, 16
      %v4658 = vpop.permute.xlu0 %4657
      %4659 = vrot.lane.b32.xlu0 %v4628, 16
      %v4660 = vpop.permute.xlu0 %4659
      %4661 = vrot.lane.b32.xlu0 %v4630, 16
      %v4662 = vpop.permute.xlu0 %4661
      %4663 = vrot.lane.b32.xlu0 %v4632, 16
      %v4664 = vpop.permute.xlu0 %4663
      %4665 = vrot.lane.b32.xlu0 %v4634, 16
      %v4666 = vpop.permute.xlu0 %4665
      %v4699 = vunpack.c.l.b16 %v2358
      %v4700 = vunpack.c.l.b16 %v2359
      %v4701 = vunpack.c.l.b16 %v2360
      %v4702 = vunpack.c.l.b16 %v2361
      %v4703 = vunpack.c.l.b16 %v2362
      %v4704 = vunpack.c.l.b16 %v2363
      %v4705 = vunpack.c.l.b16 %v2364
      %v4706 = vunpack.c.l.b16 %v2365
      %v4707 = vunpack.c.l.b16 %v2366
      %v4708 = vunpack.c.l.b16 %v2367
      %v4709 = vunpack.c.l.b16 %v2368
      %v4710 = vunpack.c.l.b16 %v2369
      %v4711 = vunpack.c.l.b16 %v2370
      %v4712 = vunpack.c.l.b16 %v2371
      %v4713 = vunpack.c.l.b16 %v2372
      %v4714 = vunpack.c.l.b16 %v2373
      %v4715 = vunpack.c.l.b16 %v2374
      %v4716 = vunpack.c.l.b16 %v2375
      %v4717 = vunpack.c.l.b16 %v2376
      %v4718 = vunpack.c.l.b16 %v2377
      %v4719 = vunpack.c.l.b16 %v2378
      %v4720 = vunpack.c.l.b16 %v2379
      %v4721 = vunpack.c.l.b16 %v2380
      %v4722 = vunpack.c.l.b16 %v2381
      %v4723 = vunpack.c.l.b16 %v2382
      %v4724 = vunpack.c.l.b16 %v2383
      %v4725 = vunpack.c.l.b16 %v2384
      %v4726 = vunpack.c.l.b16 %v2385
      %v4727 = vunpack.c.l.b16 %v2386
      %v4728 = vunpack.c.l.b16 %v2387
      %v4729 = vunpack.c.l.b16 %v2388
      %v4730 = vunpack.c.l.b16 %v2389
      %v4731 = vpack.c.b16 %v4700, %v4699
      %v4732 = vpack.c.b16 %v4702, %v4701
      %v4733 = vpack.c.b16 %v4704, %v4703
      %v4734 = vpack.c.b16 %v4706, %v4705
      %v4735 = vpack.c.b16 %v4708, %v4707
      %v4736 = vpack.c.b16 %v4710, %v4709
      %v4737 = vpack.c.b16 %v4712, %v4711
      %v4738 = vpack.c.b16 %v4714, %v4713
      %v4739 = vpack.c.b16 %v4716, %v4715
      %v4740 = vpack.c.b16 %v4718, %v4717
      %v4741 = vpack.c.b16 %v4720, %v4719
      %v4742 = vpack.c.b16 %v4722, %v4721
      %v4743 = vpack.c.b16 %v4724, %v4723
      %v4744 = vpack.c.b16 %v4726, %v4725
      %v4745 = vpack.c.b16 %v4728, %v4727
      %v4746 = vpack.c.b16 %v4730, %v4729
      %4747 = vrot.lane.b32.xlu0 %v4731, 24
      %v4748 = vpop.permute.xlu0 %4747
      %4749 = vrot.lane.b32.xlu0 %v4732, 24
      %v4750 = vpop.permute.xlu0 %4749
      %4751 = vrot.lane.b32.xlu0 %v4733, 24
      %v4752 = vpop.permute.xlu0 %4751
      %4753 = vrot.lane.b32.xlu0 %v4734, 24
      %v4754 = vpop.permute.xlu0 %4753
      %4755 = vrot.lane.b32.xlu0 %v4735, 24
      %v4756 = vpop.permute.xlu0 %4755
      %4757 = vrot.lane.b32.xlu0 %v4736, 24
      %v4758 = vpop.permute.xlu0 %4757
      %4759 = vrot.lane.b32.xlu0 %v4737, 24
      %v4760 = vpop.permute.xlu0 %4759
      %4761 = vrot.lane.b32.xlu0 %v4738, 24
      %v4762 = vpop.permute.xlu0 %4761
      %4763 = vrot.lane.b32.xlu0 %v4739, 24
      %v4764 = vpop.permute.xlu0 %4763
      %4765 = vrot.lane.b32.xlu0 %v4740, 24
      %v4766 = vpop.permute.xlu0 %4765
      %4767 = vrot.lane.b32.xlu0 %v4741, 24
      %v4768 = vpop.permute.xlu0 %4767
      %4769 = vrot.lane.b32.xlu0 %v4742, 24
      %v4770 = vpop.permute.xlu0 %4769
      %4771 = vrot.lane.b32.xlu0 %v4743, 24
      %v4772 = vpop.permute.xlu0 %4771
      %4773 = vrot.lane.b32.xlu0 %v4744, 24
      %v4774 = vpop.permute.xlu0 %4773
      %4775 = vrot.lane.b32.xlu0 %v4745, 24
      %v4776 = vpop.permute.xlu0 %4775
      %4777 = vrot.lane.b32.xlu0 %v4746, 24
      %v4778 = vpop.permute.xlu0 %4777
      %v4780 = vshrl.u32 %v652, 16
      %v4782 = vshll.u32 %v652, 16
      %v4784 = vrot.slane %v4782, 1
      %v4785 = vor.u32 %v4780, %v4784
      %v4787 = vshll.u32 %v520, 16
      %v4789 = vrot.slane %v4787, 1
      %v4790 = vsel %vm4353, %v4785, %v4789
      %v4791 = vshrl.u32 %v520, 16
      %v4793 = vor.u32 %v4791, %v4789
      %v4795 = vshll.u32 %v528, 16
      %v4797 = vrot.slane %v4795, 1
      %v4798 = vsel %vm4353, %v4793, %v4797
      %v4799 = vshrl.u32 %v528, 16
      %v4801 = vor.u32 %v4799, %v4797
      %v4803 = vshll.u32 %v536, 16
      %v4805 = vrot.slane %v4803, 1
      %v4806 = vsel %vm4353, %v4801, %v4805
      %v4807 = vshrl.u32 %v536, 16
      %v4809 = vor.u32 %v4807, %v4805
      %v4811 = vshll.u32 %v544, 16
      %v4813 = vrot.slane %v4811, 1
      %v4814 = vsel %vm4353, %v4809, %v4813
      %v4815 = vshrl.u32 %v544, 16
      %v4817 = vor.u32 %v4815, %v4813
      %v4819 = vshll.u32 %v552, 16
      %v4821 = vrot.slane %v4819, 1
      %v4822 = vsel %vm4353, %v4817, %v4821
      %v4823 = vshrl.u32 %v552, 16
      %v4825 = vor.u32 %v4823, %v4821
      %v4827 = vshll.u32 %v560, 16
      %v4829 = vrot.slane %v4827, 1
      %v4830 = vsel %vm4353, %v4825, %v4829
      %v4831 = vshrl.u32 %v560, 16
      %v4833 = vor.u32 %v4831, %v4829
      %v4835 = vshll.u32 %v568, 16
      %v4837 = vrot.slane %v4835, 1
      %v4838 = vsel %vm4353, %v4833, %v4837
      %v4839 = vshrl.u32 %v568, 16
      %v4841 = vor.u32 %v4839, %v4837
      %v4843 = vshll.u32 %v576, 16
      %v4845 = vrot.slane %v4843, 1
      %v4846 = vsel %vm4353, %v4841, %v4845
      %v4847 = vshrl.u32 %v576, 16
      %v4849 = vor.u32 %v4847, %v4845
      %v4851 = vshll.u32 %v584, 16
      %v4853 = vrot.slane %v4851, 1
      %v4854 = vsel %vm4353, %v4849, %v4853
      %v4855 = vshrl.u32 %v584, 16
      %v4857 = vor.u32 %v4855, %v4853
      %v4859 = vshll.u32 %v592, 16
      %v4861 = vrot.slane %v4859, 1
      %v4862 = vsel %vm4353, %v4857, %v4861
      %v4863 = vshrl.u32 %v592, 16
      %v4865 = vor.u32 %v4863, %v4861
      %v4867 = vshll.u32 %v600, 16
      %v4869 = vrot.slane %v4867, 1
      %v4870 = vsel %vm4353, %v4865, %v4869
      %v4871 = vshrl.u32 %v600, 16
      %v4873 = vor.u32 %v4871, %v4869
      %v4875 = vshll.u32 %v608, 16
      %v4877 = vrot.slane %v4875, 1
      %v4878 = vsel %vm4353, %v4873, %v4877
      %v4879 = vshrl.u32 %v608, 16
      %v4881 = vor.u32 %v4879, %v4877
      %v4883 = vshll.u32 %v616, 16
      %v4885 = vrot.slane %v4883, 1
      %v4886 = vsel %vm4353, %v4881, %v4885
      %v4887 = vshrl.u32 %v616, 16
      %v4889 = vor.u32 %v4887, %v4885
      %v4891 = vshll.u32 %v624, 16
      %v4893 = vrot.slane %v4891, 1
      %v4894 = vsel %vm4353, %v4889, %v4893
      %v4895 = vshrl.u32 %v624, 16
      %v4897 = vor.u32 %v4895, %v4893
      %v4899 = vshll.u32 %v632, 16
      %v4901 = vrot.slane %v4899, 1
      %v4902 = vsel %vm4353, %v4897, %v4901
      %v4903 = vshrl.u32 %v632, 16
      %v4905 = vor.u32 %v4903, %v4901
      %v4907 = vshll.u32 %v653, 16
      %v4909 = vrot.slane %v4907, 1
      %v4910 = vsel %vm4353, %v4905, %v4909
      %4911 = vrot.lane.b32.xlu0 %v4790, 32
      %v4912 = vpop.permute.xlu0 %4911
      %4913 = vrot.lane.b32.xlu0 %v4798, 32
      %v4914 = vpop.permute.xlu0 %4913
      %4915 = vrot.lane.b32.xlu0 %v4806, 32
      %v4916 = vpop.permute.xlu0 %4915
      %4917 = vrot.lane.b32.xlu0 %v4814, 32
      %v4918 = vpop.permute.xlu0 %4917
      %4919 = vrot.lane.b32.xlu0 %v4822, 32
      %v4920 = vpop.permute.xlu0 %4919
      %4921 = vrot.lane.b32.xlu0 %v4830, 32
      %v4922 = vpop.permute.xlu0 %4921
      %4923 = vrot.lane.b32.xlu0 %v4838, 32
      %v4924 = vpop.permute.xlu0 %4923
      %4925 = vrot.lane.b32.xlu0 %v4846, 32
      %v4926 = vpop.permute.xlu0 %4925
      %4927 = vrot.lane.b32.xlu0 %v4854, 32
      %v4928 = vpop.permute.xlu0 %4927
      %4929 = vrot.lane.b32.xlu0 %v4862, 32
      %v4930 = vpop.permute.xlu0 %4929
      %4931 = vrot.lane.b32.xlu0 %v4870, 32
      %v4932 = vpop.permute.xlu0 %4931
      %4933 = vrot.lane.b32.xlu0 %v4878, 32
      %v4934 = vpop.permute.xlu0 %4933
      %4935 = vrot.lane.b32.xlu0 %v4886, 32
      %v4936 = vpop.permute.xlu0 %4935
      %4937 = vrot.lane.b32.xlu0 %v4894, 32
      %v4938 = vpop.permute.xlu0 %4937
      %4939 = vrot.lane.b32.xlu0 %v4902, 32
      %v4940 = vpop.permute.xlu0 %4939
      %4941 = vrot.lane.b32.xlu0 %v4910, 32
      %v4942 = vpop.permute.xlu0 %4941
      %v4976 = vunpack.c.l.b16 %v2840
      %v4977 = vunpack.c.l.b16 %v2841
      %v4978 = vunpack.c.l.b16 %v2842
      %v4979 = vunpack.c.l.b16 %v2843
      %v4980 = vunpack.c.l.b16 %v2844
      %v4981 = vunpack.c.l.b16 %v2845
      %v4982 = vunpack.c.l.b16 %v2846
      %v4983 = vunpack.c.l.b16 %v2847
      %v4984 = vunpack.c.l.b16 %v2848
      %v4985 = vunpack.c.l.b16 %v2849
      %v4986 = vunpack.c.l.b16 %v2850
      %v4987 = vunpack.c.l.b16 %v2851
      %v4988 = vunpack.c.l.b16 %v2852
      %v4989 = vunpack.c.l.b16 %v2853
      %v4990 = vunpack.c.l.b16 %v2854
      %v4991 = vunpack.c.l.b16 %v2855
      %v4992 = vunpack.c.l.b16 %v2856
      %v4993 = vunpack.c.l.b16 %v2857
      %v4994 = vunpack.c.l.b16 %v2858
      %v4995 = vunpack.c.l.b16 %v2859
      %v4996 = vunpack.c.l.b16 %v2860
      %v4997 = vunpack.c.l.b16 %v2861
      %v4998 = vunpack.c.l.b16 %v2862
      %v4999 = vunpack.c.l.b16 %v2863
      %v5000 = vunpack.c.l.b16 %v2864
      %v5001 = vunpack.c.l.b16 %v2865
      %v5002 = vunpack.c.l.b16 %v2866
      %v5003 = vunpack.c.l.b16 %v2867
      %v5004 = vunpack.c.l.b16 %v2868
      %v5005 = vunpack.c.l.b16 %v2869
      %v5006 = vunpack.c.l.b16 %v2870
      %v5007 = vunpack.c.l.b16 %v2871
      %v5008 = vunpack.c.l.b16 %v2872
      %v5009 = vpack.c.b16 %v4977, %v4976
      %v5010 = vpack.c.b16 %v4979, %v4978
      %v5011 = vpack.c.b16 %v4981, %v4980
      %v5012 = vpack.c.b16 %v4983, %v4982
      %v5013 = vpack.c.b16 %v4985, %v4984
      %v5014 = vpack.c.b16 %v4987, %v4986
      %v5015 = vpack.c.b16 %v4989, %v4988
      %v5016 = vpack.c.b16 %v4991, %v4990
      %v5017 = vpack.c.b16 %v4993, %v4992
      %v5018 = vpack.c.b16 %v4995, %v4994
      %v5019 = vpack.c.b16 %v4997, %v4996
      %v5020 = vpack.c.b16 %v4999, %v4998
      %v5021 = vpack.c.b16 %v5001, %v5000
      %v5022 = vpack.c.b16 %v5003, %v5002
      %v5023 = vpack.c.b16 %v5005, %v5004
      %v5024 = vpack.c.b16 %v5007, %v5006
      %v5025 = vpack.c.b16 %v5008, %v5008
      %v5026 = vrot.slane %v5009, 1
      %v5027 = vrot.slane %v5010, 1
      %v5028 = vsel %vm4601, %v5026, %v5027
      %v5029 = vrot.slane %v5011, 1
      %v5030 = vsel %vm4601, %v5027, %v5029
      %v5031 = vrot.slane %v5012, 1
      %v5032 = vsel %vm4601, %v5029, %v5031
      %v5033 = vrot.slane %v5013, 1
      %v5034 = vsel %vm4601, %v5031, %v5033
      %v5035 = vrot.slane %v5014, 1
      %v5036 = vsel %vm4601, %v5033, %v5035
      %v5037 = vrot.slane %v5015, 1
      %v5038 = vsel %vm4601, %v5035, %v5037
      %v5039 = vrot.slane %v5016, 1
      %v5040 = vsel %vm4601, %v5037, %v5039
      %v5041 = vrot.slane %v5017, 1
      %v5042 = vsel %vm4601, %v5039, %v5041
      %v5043 = vrot.slane %v5018, 1
      %v5044 = vsel %vm4601, %v5041, %v5043
      %v5045 = vrot.slane %v5019, 1
      %v5046 = vsel %vm4601, %v5043, %v5045
      %v5047 = vrot.slane %v5020, 1
      %v5048 = vsel %vm4601, %v5045, %v5047
      %v5049 = vrot.slane %v5021, 1
      %v5050 = vsel %vm4601, %v5047, %v5049
      %v5051 = vrot.slane %v5022, 1
      %v5052 = vsel %vm4601, %v5049, %v5051
      %v5053 = vrot.slane %v5023, 1
      %v5054 = vsel %vm4601, %v5051, %v5053
      %v5055 = vrot.slane %v5024, 1
      %v5056 = vsel %vm4601, %v5053, %v5055
      %v5057 = vrot.slane %v5025, 1
      %v5058 = vsel %vm4601, %v5055, %v5057
      %5059 = vrot.lane.b32.xlu0 %v5028, 40
      %v5060 = vpop.permute.xlu0 %5059
      %5061 = vrot.lane.b32.xlu0 %v5030, 40
      %v5062 = vpop.permute.xlu0 %5061
      %5063 = vrot.lane.b32.xlu0 %v5032, 40
      %v5064 = vpop.permute.xlu0 %5063
      %5065 = vrot.lane.b32.xlu0 %v5034, 40
      %v5066 = vpop.permute.xlu0 %5065
      %5067 = vrot.lane.b32.xlu0 %v5036, 40
      %v5068 = vpop.permute.xlu0 %5067
      %5069 = vrot.lane.b32.xlu0 %v5038, 40
      %v5070 = vpop.permute.xlu0 %5069
      %5071 = vrot.lane.b32.xlu0 %v5040, 40
      %v5072 = vpop.permute.xlu0 %5071
      %5073 = vrot.lane.b32.xlu0 %v5042, 40
      %v5074 = vpop.permute.xlu0 %5073
      %5075 = vrot.lane.b32.xlu0 %v5044, 40
      %v5076 = vpop.permute.xlu0 %5075
      %5077 = vrot.lane.b32.xlu0 %v5046, 40
      %v5078 = vpop.permute.xlu0 %5077
      %5079 = vrot.lane.b32.xlu0 %v5048, 40
      %v5080 = vpop.permute.xlu0 %5079
      %5081 = vrot.lane.b32.xlu0 %v5050, 40
      %v5082 = vpop.permute.xlu0 %5081
      %5083 = vrot.lane.b32.xlu0 %v5052, 40
      %v5084 = vpop.permute.xlu0 %5083
      %5085 = vrot.lane.b32.xlu0 %v5054, 40
      %v5086 = vpop.permute.xlu0 %5085
      %5087 = vrot.lane.b32.xlu0 %v5056, 40
      %v5088 = vpop.permute.xlu0 %5087
      %5089 = vrot.lane.b32.xlu0 %v5058, 40
      %v5090 = vpop.permute.xlu0 %5089
      %v5123 = vunpack.c.l.b16 %v3194
      %v5124 = vunpack.c.l.b16 %v3195
      %v5125 = vunpack.c.l.b16 %v3196
      %v5126 = vunpack.c.l.b16 %v3197
      %v5127 = vunpack.c.l.b16 %v3198
      %v5128 = vunpack.c.l.b16 %v3199
      %v5129 = vunpack.c.l.b16 %v3200
      %v5130 = vunpack.c.l.b16 %v3201
      %v5131 = vunpack.c.l.b16 %v3202
      %v5132 = vunpack.c.l.b16 %v3203
      %v5133 = vunpack.c.l.b16 %v3204
      %v5134 = vunpack.c.l.b16 %v3205
      %v5135 = vunpack.c.l.b16 %v3206
      %v5136 = vunpack.c.l.b16 %v3207
      %v5137 = vunpack.c.l.b16 %v3208
      %v5138 = vunpack.c.l.b16 %v3209
      %v5139 = vunpack.c.l.b16 %v3210
      %v5140 = vunpack.c.l.b16 %v3211
      %v5141 = vunpack.c.l.b16 %v3212
      %v5142 = vunpack.c.l.b16 %v3213
      %v5143 = vunpack.c.l.b16 %v3214
      %v5144 = vunpack.c.l.b16 %v3215
      %v5145 = vunpack.c.l.b16 %v3216
      %v5146 = vunpack.c.l.b16 %v3217
      %v5147 = vunpack.c.l.b16 %v3218
      %v5148 = vunpack.c.l.b16 %v3219
      %v5149 = vunpack.c.l.b16 %v3220
      %v5150 = vunpack.c.l.b16 %v3221
      %v5151 = vunpack.c.l.b16 %v3222
      %v5152 = vunpack.c.l.b16 %v3223
      %v5153 = vunpack.c.l.b16 %v3224
      %v5154 = vunpack.c.l.b16 %v3225
      %v5155 = vpack.c.b16 %v5124, %v5123
      %v5156 = vpack.c.b16 %v5126, %v5125
      %v5157 = vpack.c.b16 %v5128, %v5127
      %v5158 = vpack.c.b16 %v5130, %v5129
      %v5159 = vpack.c.b16 %v5132, %v5131
      %v5160 = vpack.c.b16 %v5134, %v5133
      %v5161 = vpack.c.b16 %v5136, %v5135
      %v5162 = vpack.c.b16 %v5138, %v5137
      %v5163 = vpack.c.b16 %v5140, %v5139
      %v5164 = vpack.c.b16 %v5142, %v5141
      %v5165 = vpack.c.b16 %v5144, %v5143
      %v5166 = vpack.c.b16 %v5146, %v5145
      %v5167 = vpack.c.b16 %v5148, %v5147
      %v5168 = vpack.c.b16 %v5150, %v5149
      %v5169 = vpack.c.b16 %v5152, %v5151
      %v5170 = vpack.c.b16 %v5154, %v5153
      %5171 = vrot.lane.b32.xlu0 %v5155, 48
      %v5172 = vpop.permute.xlu0 %5171
      %5173 = vrot.lane.b32.xlu0 %v5156, 48
      %v5174 = vpop.permute.xlu0 %5173
      %5175 = vrot.lane.b32.xlu0 %v5157, 48
      %v5176 = vpop.permute.xlu0 %5175
      %5177 = vrot.lane.b32.xlu0 %v5158, 48
      %v5178 = vpop.permute.xlu0 %5177
      %5179 = vrot.lane.b32.xlu0 %v5159, 48
      %v5180 = vpop.permute.xlu0 %5179
      %5181 = vrot.lane.b32.xlu0 %v5160, 48
      %v5182 = vpop.permute.xlu0 %5181
      %5183 = vrot.lane.b32.xlu0 %v5161, 48
      %v5184 = vpop.permute.xlu0 %5183
      %5185 = vrot.lane.b32.xlu0 %v5162, 48
      %v5186 = vpop.permute.xlu0 %5185
      %5187 = vrot.lane.b32.xlu0 %v5163, 48
      %v5188 = vpop.permute.xlu0 %5187
      %5189 = vrot.lane.b32.xlu0 %v5164, 48
      %v5190 = vpop.permute.xlu0 %5189
      %5191 = vrot.lane.b32.xlu0 %v5165, 48
      %v5192 = vpop.permute.xlu0 %5191
      %5193 = vrot.lane.b32.xlu0 %v5166, 48
      %v5194 = vpop.permute.xlu0 %5193
      %5195 = vrot.lane.b32.xlu0 %v5167, 48
      %v5196 = vpop.permute.xlu0 %5195
      %5197 = vrot.lane.b32.xlu0 %v5168, 48
      %v5198 = vpop.permute.xlu0 %5197
      %5199 = vrot.lane.b32.xlu0 %v5169, 48
      %v5200 = vpop.permute.xlu0 %5199
      %5201 = vrot.lane.b32.xlu0 %v5170, 48
      %v5202 = vpop.permute.xlu0 %5201
      %v5236 = vunpack.c.l.b16 %v3675
      %v5237 = vunpack.c.l.b16 %v3676
      %v5238 = vunpack.c.l.b16 %v3677
      %v5239 = vunpack.c.l.b16 %v3678
      %v5240 = vunpack.c.l.b16 %v3679
      %v5241 = vunpack.c.l.b16 %v3680
      %v5242 = vunpack.c.l.b16 %v3681
      %v5243 = vunpack.c.l.b16 %v3682
      %v5244 = vunpack.c.l.b16 %v3683
      %v5245 = vunpack.c.l.b16 %v3684
      %v5246 = vunpack.c.l.b16 %v3685
      %v5247 = vunpack.c.l.b16 %v3686
      %v5248 = vunpack.c.l.b16 %v3687
      %v5249 = vunpack.c.l.b16 %v3688
      %v5250 = vunpack.c.l.b16 %v3689
      %v5251 = vunpack.c.l.b16 %v3690
      %v5252 = vunpack.c.l.b16 %v3691
      %v5253 = vunpack.c.l.b16 %v3692
      %v5254 = vunpack.c.l.b16 %v3693
      %v5255 = vunpack.c.l.b16 %v3694
      %v5256 = vunpack.c.l.b16 %v3695
      %v5257 = vunpack.c.l.b16 %v3696
      %v5258 = vunpack.c.l.b16 %v3697
      %v5259 = vunpack.c.l.b16 %v3698
      %v5260 = vunpack.c.l.b16 %v3699
      %v5261 = vunpack.c.l.b16 %v3700
      %v5262 = vunpack.c.l.b16 %v3701
      %v5263 = vunpack.c.l.b16 %v3702
      %v5264 = vunpack.c.l.b16 %v3703
      %v5265 = vunpack.c.l.b16 %v3704
      %v5266 = vunpack.c.l.b16 %v3705
      %v5267 = vunpack.c.l.b16 %v3706
      %v5268 = vunpack.c.l.b16 %v3707
      %v5269 = vpack.c.b16 %v5237, %v5236
      %v5270 = vpack.c.b16 %v5239, %v5238
      %v5271 = vpack.c.b16 %v5241, %v5240
      %v5272 = vpack.c.b16 %v5243, %v5242
      %v5273 = vpack.c.b16 %v5245, %v5244
      %v5274 = vpack.c.b16 %v5247, %v5246
      %v5275 = vpack.c.b16 %v5249, %v5248
      %v5276 = vpack.c.b16 %v5251, %v5250
      %v5277 = vpack.c.b16 %v5253, %v5252
      %v5278 = vpack.c.b16 %v5255, %v5254
      %v5279 = vpack.c.b16 %v5257, %v5256
      %v5280 = vpack.c.b16 %v5259, %v5258
      %v5281 = vpack.c.b16 %v5261, %v5260
      %v5282 = vpack.c.b16 %v5263, %v5262
      %v5283 = vpack.c.b16 %v5265, %v5264
      %v5284 = vpack.c.b16 %v5267, %v5266
      %v5285 = vpack.c.b16 %v5268, %v5268
      %v5287 = vshrl.u32 %v5269, 16
      %v5289 = vshll.u32 %v5269, 16
      %v5291 = vrot.slane %v5289, 1
      %v5292 = vor.u32 %v5287, %v5291
      %v5294 = vshll.u32 %v5270, 16
      %v5296 = vrot.slane %v5294, 1
      %v5297 = vsel %vm4353, %v5292, %v5296
      %v5298 = vshrl.u32 %v5270, 16
      %v5300 = vor.u32 %v5298, %v5296
      %v5302 = vshll.u32 %v5271, 16
      %v5304 = vrot.slane %v5302, 1
      %v5305 = vsel %vm4353, %v5300, %v5304
      %v5306 = vshrl.u32 %v5271, 16
      %v5308 = vor.u32 %v5306, %v5304
      %v5310 = vshll.u32 %v5272, 16
      %v5312 = vrot.slane %v5310, 1
      %v5313 = vsel %vm4353, %v5308, %v5312
      %v5314 = vshrl.u32 %v5272, 16
      %v5316 = vor.u32 %v5314, %v5312
      %v5318 = vshll.u32 %v5273, 16
      %v5320 = vrot.slane %v5318, 1
      %v5321 = vsel %vm4353, %v5316, %v5320
      %v5322 = vshrl.u32 %v5273, 16
      %v5324 = vor.u32 %v5322, %v5320
      %v5326 = vshll.u32 %v5274, 16
      %v5328 = vrot.slane %v5326, 1
      %v5329 = vsel %vm4353, %v5324, %v5328
      %v5330 = vshrl.u32 %v5274, 16
      %v5332 = vor.u32 %v5330, %v5328
      %v5334 = vshll.u32 %v5275, 16
      %v5336 = vrot.slane %v5334, 1
      %v5337 = vsel %vm4353, %v5332, %v5336
      %v5338 = vshrl.u32 %v5275, 16
      %v5340 = vor.u32 %v5338, %v5336
      %v5342 = vshll.u32 %v5276, 16
      %v5344 = vrot.slane %v5342, 1
      %v5345 = vsel %vm4353, %v5340, %v5344
      %v5346 = vshrl.u32 %v5276, 16
      %v5348 = vor.u32 %v5346, %v5344
      %v5350 = vshll.u32 %v5277, 16
      %v5352 = vrot.slane %v5350, 1
      %v5353 = vsel %vm4353, %v5348, %v5352
      %v5354 = vshrl.u32 %v5277, 16
      %v5356 = vor.u32 %v5354, %v5352
      %v5358 = vshll.u32 %v5278, 16
      %v5360 = vrot.slane %v5358, 1
      %v5361 = vsel %vm4353, %v5356, %v5360
      %v5362 = vshrl.u32 %v5278, 16
      %v5364 = vor.u32 %v5362, %v5360
      %v5366 = vshll.u32 %v5279, 16
      %v5368 = vrot.slane %v5366, 1
      %v5369 = vsel %vm4353, %v5364, %v5368
      %v5370 = vshrl.u32 %v5279, 16
      %v5372 = vor.u32 %v5370, %v5368
      %v5374 = vshll.u32 %v5280, 16
      %v5376 = vrot.slane %v5374, 1
      %v5377 = vsel %vm4353, %v5372, %v5376
      %v5378 = vshrl.u32 %v5280, 16
      %v5380 = vor.u32 %v5378, %v5376
      %v5382 = vshll.u32 %v5281, 16
      %v5384 = vrot.slane %v5382, 1
      %v5385 = vsel %vm4353, %v5380, %v5384
      %v5386 = vshrl.u32 %v5281, 16
      %v5388 = vor.u32 %v5386, %v5384
      %v5390 = vshll.u32 %v5282, 16
      %v5392 = vrot.slane %v5390, 1
      %v5393 = vsel %vm4353, %v5388, %v5392
      %v5394 = vshrl.u32 %v5282, 16
      %v5396 = vor.u32 %v5394, %v5392
      %v5398 = vshll.u32 %v5283, 16
      %v5400 = vrot.slane %v5398, 1
      %v5401 = vsel %vm4353, %v5396, %v5400
      %v5402 = vshrl.u32 %v5283, 16
      %v5404 = vor.u32 %v5402, %v5400
      %v5406 = vshll.u32 %v5284, 16
      %v5408 = vrot.slane %v5406, 1
      %v5409 = vsel %vm4353, %v5404, %v5408
      %v5410 = vshrl.u32 %v5284, 16
      %v5412 = vor.u32 %v5410, %v5408
      %v5414 = vshll.u32 %v5285, 16
      %v5416 = vrot.slane %v5414, 1
      %v5417 = vsel %vm4353, %v5412, %v5416
      %5418 = vrot.lane.b32.xlu0 %v5297, 56
      %v5419 = vpop.permute.xlu0 %5418
      %5420 = vrot.lane.b32.xlu0 %v5305, 56
      %v5421 = vpop.permute.xlu0 %5420
      %5422 = vrot.lane.b32.xlu0 %v5313, 56
      %v5423 = vpop.permute.xlu0 %5422
      %5424 = vrot.lane.b32.xlu0 %v5321, 56
      %v5425 = vpop.permute.xlu0 %5424
      %5426 = vrot.lane.b32.xlu0 %v5329, 56
      %v5427 = vpop.permute.xlu0 %5426
      %5428 = vrot.lane.b32.xlu0 %v5337, 56
      %v5429 = vpop.permute.xlu0 %5428
      %5430 = vrot.lane.b32.xlu0 %v5345, 56
      %v5431 = vpop.permute.xlu0 %5430
      %5432 = vrot.lane.b32.xlu0 %v5353, 56
      %v5433 = vpop.permute.xlu0 %5432
      %5434 = vrot.lane.b32.xlu0 %v5361, 56
      %v5435 = vpop.permute.xlu0 %5434
      %5436 = vrot.lane.b32.xlu0 %v5369, 56
      %v5437 = vpop.permute.xlu0 %5436
      %5438 = vrot.lane.b32.xlu0 %v5377, 56
      %v5439 = vpop.permute.xlu0 %5438
      %5440 = vrot.lane.b32.xlu0 %v5385, 56
      %v5441 = vpop.permute.xlu0 %5440
      %5442 = vrot.lane.b32.xlu0 %v5393, 56
      %v5443 = vpop.permute.xlu0 %5442
      %5444 = vrot.lane.b32.xlu0 %v5401, 56
      %v5445 = vpop.permute.xlu0 %5444
      %5446 = vrot.lane.b32.xlu0 %v5409, 56
      %v5447 = vpop.permute.xlu0 %5446
      %5448 = vrot.lane.b32.xlu0 %v5417, 56
      %v5449 = vpop.permute.xlu0 %5448
      %v5483 = vunpack.c.l.b16 %v4157
      %v5484 = vunpack.c.l.b16 %v4158
      %v5485 = vunpack.c.l.b16 %v4159
      %v5486 = vunpack.c.l.b16 %v4160
      %v5487 = vunpack.c.l.b16 %v4161
      %v5488 = vunpack.c.l.b16 %v4162
      %v5489 = vunpack.c.l.b16 %v4163
      %v5490 = vunpack.c.l.b16 %v4164
      %v5491 = vunpack.c.l.b16 %v4165
      %v5492 = vunpack.c.l.b16 %v4166
      %v5493 = vunpack.c.l.b16 %v4167
      %v5494 = vunpack.c.l.b16 %v4168
      %v5495 = vunpack.c.l.b16 %v4169
      %v5496 = vunpack.c.l.b16 %v4170
      %v5497 = vunpack.c.l.b16 %v4171
      %v5498 = vunpack.c.l.b16 %v4172
      %v5499 = vunpack.c.l.b16 %v4173
      %v5500 = vunpack.c.l.b16 %v4174
      %v5501 = vunpack.c.l.b16 %v4175
      %v5502 = vunpack.c.l.b16 %v4176
      %v5503 = vunpack.c.l.b16 %v4177
      %v5504 = vunpack.c.l.b16 %v4178
      %v5505 = vunpack.c.l.b16 %v4179
      %v5506 = vunpack.c.l.b16 %v4180
      %v5507 = vunpack.c.l.b16 %v4181
      %v5508 = vunpack.c.l.b16 %v4182
      %v5509 = vunpack.c.l.b16 %v4183
      %v5510 = vunpack.c.l.b16 %v4184
      %v5511 = vunpack.c.l.b16 %v4185
      %v5512 = vunpack.c.l.b16 %v4186
      %v5513 = vunpack.c.l.b16 %v4187
      %v5514 = vunpack.c.l.b16 %v4188
      %v5515 = vunpack.c.l.b16 %v4189
      %v5516 = vpack.c.b16 %v5484, %v5483
      %v5517 = vpack.c.b16 %v5486, %v5485
      %v5518 = vpack.c.b16 %v5488, %v5487
      %v5519 = vpack.c.b16 %v5490, %v5489
      %v5520 = vpack.c.b16 %v5492, %v5491
      %v5521 = vpack.c.b16 %v5494, %v5493
      %v5522 = vpack.c.b16 %v5496, %v5495
      %v5523 = vpack.c.b16 %v5498, %v5497
      %v5524 = vpack.c.b16 %v5500, %v5499
      %v5525 = vpack.c.b16 %v5502, %v5501
      %v5526 = vpack.c.b16 %v5504, %v5503
      %v5527 = vpack.c.b16 %v5506, %v5505
      %v5528 = vpack.c.b16 %v5508, %v5507
      %v5529 = vpack.c.b16 %v5510, %v5509
      %v5530 = vpack.c.b16 %v5512, %v5511
      %v5531 = vpack.c.b16 %v5514, %v5513
      %v5532 = vpack.c.b16 %v5515, %v5515
      %v5533 = vrot.slane %v5516, 1
      %v5534 = vrot.slane %v5517, 1
      %v5535 = vsel %vm4601, %v5533, %v5534
      %v5536 = vrot.slane %v5518, 1
      %v5537 = vsel %vm4601, %v5534, %v5536
      %v5538 = vrot.slane %v5519, 1
      %v5539 = vsel %vm4601, %v5536, %v5538
      %v5540 = vrot.slane %v5520, 1
      %v5541 = vsel %vm4601, %v5538, %v5540
      %v5542 = vrot.slane %v5521, 1
      %v5543 = vsel %vm4601, %v5540, %v5542
      %v5544 = vrot.slane %v5522, 1
      %v5545 = vsel %vm4601, %v5542, %v5544
      %v5546 = vrot.slane %v5523, 1
      %v5547 = vsel %vm4601, %v5544, %v5546
      %v5548 = vrot.slane %v5524, 1
      %v5549 = vsel %vm4601, %v5546, %v5548
      %v5550 = vrot.slane %v5525, 1
      %v5551 = vsel %vm4601, %v5548, %v5550
      %v5552 = vrot.slane %v5526, 1
      %v5553 = vsel %vm4601, %v5550, %v5552
      %v5554 = vrot.slane %v5527, 1
      %v5555 = vsel %vm4601, %v5552, %v5554
      %v5556 = vrot.slane %v5528, 1
      %v5557 = vsel %vm4601, %v5554, %v5556
      %v5558 = vrot.slane %v5529, 1
      %v5559 = vsel %vm4601, %v5556, %v5558
      %v5560 = vrot.slane %v5530, 1
      %v5561 = vsel %vm4601, %v5558, %v5560
      %v5562 = vrot.slane %v5531, 1
      %v5563 = vsel %vm4601, %v5560, %v5562
      %v5564 = vrot.slane %v5532, 1
      %v5565 = vsel %vm4601, %v5562, %v5564
      %5566 = vrot.lane.b32.xlu0 %v5535, 64
      %v5567 = vpop.permute.xlu0 %5566
      %5568 = vrot.lane.b32.xlu0 %v5537, 64
      %v5569 = vpop.permute.xlu0 %5568
      %5570 = vrot.lane.b32.xlu0 %v5539, 64
      %v5571 = vpop.permute.xlu0 %5570
      %5572 = vrot.lane.b32.xlu0 %v5541, 64
      %v5573 = vpop.permute.xlu0 %5572
      %5574 = vrot.lane.b32.xlu0 %v5543, 64
      %v5575 = vpop.permute.xlu0 %5574
      %5576 = vrot.lane.b32.xlu0 %v5545, 64
      %v5577 = vpop.permute.xlu0 %5576
      %5578 = vrot.lane.b32.xlu0 %v5547, 64
      %v5579 = vpop.permute.xlu0 %5578
      %5580 = vrot.lane.b32.xlu0 %v5549, 64
      %v5581 = vpop.permute.xlu0 %5580
      %5582 = vrot.lane.b32.xlu0 %v5551, 64
      %v5583 = vpop.permute.xlu0 %5582
      %5584 = vrot.lane.b32.xlu0 %v5553, 64
      %v5585 = vpop.permute.xlu0 %5584
      %5586 = vrot.lane.b32.xlu0 %v5555, 64
      %v5587 = vpop.permute.xlu0 %5586
      %5588 = vrot.lane.b32.xlu0 %v5557, 64
      %v5589 = vpop.permute.xlu0 %5588
      %5590 = vrot.lane.b32.xlu0 %v5559, 64
      %v5591 = vpop.permute.xlu0 %5590
      %5592 = vrot.lane.b32.xlu0 %v5561, 64
      %v5593 = vpop.permute.xlu0 %5592
      %5594 = vrot.lane.b32.xlu0 %v5563, 64
      %v5595 = vpop.permute.xlu0 %5594
      %5596 = vrot.lane.b32.xlu0 %v5565, 64
      %v5597 = vpop.permute.xlu0 %5596
      %vm5598 = vcmask 64512
      %v5601 = vsel %vm5598, %v4254, %v4487
      %v5604 = vsel %vm5598, %v4255, %v4489
      %v5607 = vsel %vm5598, %v4256, %v4491
      %v5610 = vsel %vm5598, %v4257, %v4493
      %v5613 = vsel %vm5598, %v4258, %v4495
      %v5616 = vsel %vm5598, %v4259, %v4497
      %v5619 = vsel %vm5598, %v4260, %v4499
      %v5622 = vsel %vm5598, %v4261, %v4501
      %v5625 = vsel %vm5598, %v4262, %v4503
      %v5628 = vsel %vm5598, %v4263, %v4505
      %v5631 = vsel %vm5598, %v4264, %v4507
      %v5634 = vsel %vm5598, %v4265, %v4509
      %v5637 = vsel %vm5598, %v4266, %v4511
      %v5640 = vsel %vm5598, %v4267, %v4513
      %v5643 = vsel %vm5598, %v4268, %v4515
      %v5646 = vsel %vm5598, %v4269, %v4517
      %vm5647 = vcmask 130048
      %v5649 = vsel %vm5647, %v5601, %v4636
      %v5651 = vsel %vm5647, %v5604, %v4638
      %v5653 = vsel %vm5647, %v5607, %v4640
      %v5655 = vsel %vm5647, %v5610, %v4642
      %v5657 = vsel %vm5647, %v5613, %v4644
      %v5659 = vsel %vm5647, %v5616, %v4646
      %v5661 = vsel %vm5647, %v5619, %v4648
      %v5663 = vsel %vm5647, %v5622, %v4650
      %v5665 = vsel %vm5647, %v5625, %v4652
      %v5667 = vsel %vm5647, %v5628, %v4654
      %v5669 = vsel %vm5647, %v5631, %v4656
      %v5671 = vsel %vm5647, %v5634, %v4658
      %v5673 = vsel %vm5647, %v5637, %v4660
      %v5675 = vsel %vm5647, %v5640, %v4662
      %v5677 = vsel %vm5647, %v5643, %v4664
      %v5679 = vsel %vm5647, %v5646, %v4666
      %vm5680 = vcmask 195584
      %v5682 = vsel %vm5680, %v5649, %v4748
      %v5684 = vsel %vm5680, %v5651, %v4750
      %v5686 = vsel %vm5680, %v5653, %v4752
      %v5688 = vsel %vm5680, %v5655, %v4754
      %v5690 = vsel %vm5680, %v5657, %v4756
      %v5692 = vsel %vm5680, %v5659, %v4758
      %v5694 = vsel %vm5680, %v5661, %v4760
      %v5696 = vsel %vm5680, %v5663, %v4762
      %v5698 = vsel %vm5680, %v5665, %v4764
      %v5700 = vsel %vm5680, %v5667, %v4766
      %v5702 = vsel %vm5680, %v5669, %v4768
      %v5704 = vsel %vm5680, %v5671, %v4770
      %v5706 = vsel %vm5680, %v5673, %v4772
      %v5708 = vsel %vm5680, %v5675, %v4774
      %v5710 = vsel %vm5680, %v5677, %v4776
      %v5712 = vsel %vm5680, %v5679, %v4778
      %vm5713 = vcmask 261120
      %v5715 = vsel %vm5713, %v5682, %v4912
      %v5717 = vsel %vm5713, %v5684, %v4914
      %v5719 = vsel %vm5713, %v5686, %v4916
      %v5721 = vsel %vm5713, %v5688, %v4918
      %v5723 = vsel %vm5713, %v5690, %v4920
      %v5725 = vsel %vm5713, %v5692, %v4922
      %v5727 = vsel %vm5713, %v5694, %v4924
      %v5729 = vsel %vm5713, %v5696, %v4926
      %v5731 = vsel %vm5713, %v5698, %v4928
      %v5733 = vsel %vm5713, %v5700, %v4930
      %v5735 = vsel %vm5713, %v5702, %v4932
      %v5737 = vsel %vm5713, %v5704, %v4934
      %v5739 = vsel %vm5713, %v5706, %v4936
      %v5741 = vsel %vm5713, %v5708, %v4938
      %v5743 = vsel %vm5713, %v5710, %v4940
      %v5745 = vsel %vm5713, %v5712, %v4942
      %vm5746 = vcmask 326656
      %v5748 = vsel %vm5746, %v5715, %v5060
      %v5750 = vsel %vm5746, %v5717, %v5062
      %v5752 = vsel %vm5746, %v5719, %v5064
      %v5754 = vsel %vm5746, %v5721, %v5066
      %v5756 = vsel %vm5746, %v5723, %v5068
      %v5758 = vsel %vm5746, %v5725, %v5070
      %v5760 = vsel %vm5746, %v5727, %v5072
      %v5762 = vsel %vm5746, %v5729, %v5074
      %v5764 = vsel %vm5746, %v5731, %v5076
      %v5766 = vsel %vm5746, %v5733, %v5078
      %v5768 = vsel %vm5746, %v5735, %v5080
      %v5770 = vsel %vm5746, %v5737, %v5082
      %v5772 = vsel %vm5746, %v5739, %v5084
      %v5774 = vsel %vm5746, %v5741, %v5086
      %v5776 = vsel %vm5746, %v5743, %v5088
      %v5778 = vsel %vm5746, %v5745, %v5090
      %vm5779 = vcmask 392192
      %v5781 = vsel %vm5779, %v5748, %v5172
      %v5783 = vsel %vm5779, %v5750, %v5174
      %v5785 = vsel %vm5779, %v5752, %v5176
      %v5787 = vsel %vm5779, %v5754, %v5178
      %v5789 = vsel %vm5779, %v5756, %v5180
      %v5791 = vsel %vm5779, %v5758, %v5182
      %v5793 = vsel %vm5779, %v5760, %v5184
      %v5795 = vsel %vm5779, %v5762, %v5186
      %v5797 = vsel %vm5779, %v5764, %v5188
      %v5799 = vsel %vm5779, %v5766, %v5190
      %v5801 = vsel %vm5779, %v5768, %v5192
      %v5803 = vsel %vm5779, %v5770, %v5194
      %v5805 = vsel %vm5779, %v5772, %v5196
      %v5807 = vsel %vm5779, %v5774, %v5198
      %v5809 = vsel %vm5779, %v5776, %v5200
      %v5811 = vsel %vm5779, %v5778, %v5202
      %vm5812 = vcmask 457728
      %v5814 = vsel %vm5812, %v5781, %v5419
      %v5816 = vsel %vm5812, %v5783, %v5421
      %v5818 = vsel %vm5812, %v5785, %v5423
      %v5820 = vsel %vm5812, %v5787, %v5425
      %v5822 = vsel %vm5812, %v5789, %v5427
      %v5824 = vsel %vm5812, %v5791, %v5429
      %v5826 = vsel %vm5812, %v5793, %v5431
      %v5828 = vsel %vm5812, %v5795, %v5433
      %v5830 = vsel %vm5812, %v5797, %v5435
      %v5832 = vsel %vm5812, %v5799, %v5437
      %v5834 = vsel %vm5812, %v5801, %v5439
      %v5836 = vsel %vm5812, %v5803, %v5441
      %v5838 = vsel %vm5812, %v5805, %v5443
      %v5840 = vsel %vm5812, %v5807, %v5445
      %v5842 = vsel %vm5812, %v5809, %v5447
      %v5844 = vsel %vm5812, %v5811, %v5449
      %vm5845 = vcmask 523264
      %v5847 = vsel %vm5845, %v5814, %v5567
      %v5849 = vsel %vm5845, %v5816, %v5569
      %v5851 = vsel %vm5845, %v5818, %v5571
      %v5853 = vsel %vm5845, %v5820, %v5573
      %v5855 = vsel %vm5845, %v5822, %v5575
      %v5857 = vsel %vm5845, %v5824, %v5577
      %v5859 = vsel %vm5845, %v5826, %v5579
      %v5861 = vsel %vm5845, %v5828, %v5581
      %v5863 = vsel %vm5845, %v5830, %v5583
      %v5865 = vsel %vm5845, %v5832, %v5585
      %v5867 = vsel %vm5845, %v5834, %v5587
      %v5869 = vsel %vm5845, %v5836, %v5589
      %v5871 = vsel %vm5845, %v5838, %v5591
      %v5873 = vsel %vm5845, %v5840, %v5593
      %v5875 = vsel %vm5845, %v5842, %v5595
      %v5877 = vsel %vm5845, %v5844, %v5597
      %v5878 = vld [vmem:[%s2] sm:$0xf]
      %v5879 = vld [vmem:[%s2 + $0x4] sm:$0xf]
      %v5880 = vld [vmem:[%s2 + $0x8] sm:$0xf]
      %v5881 = vld [vmem:[%s2 + $0xc] sm:$0xf]
      %v5882 = vld [vmem:[%s2 + $0x10] sm:$0xf]
      %v5883 = vld [vmem:[%s2 + $0x14] sm:$0xf]
      %v5884 = vld [vmem:[%s2 + $0x18] sm:$0xf]
      %v5885 = vld [vmem:[%s2 + $0x1c] sm:$0xf]
      %v5886 = vld [vmem:[%s2 + $0x20] sm:$0xf]
      %v5887 = vld [vmem:[%s3] sm:$0x1]
      %v5889 = vperm.slane %v5887, 0
      %v5900 = vunpack.c.l.b16 %v5878
      %v5901 = vunpack.c.l.b16 %v5879
      %v5902 = vunpack.c.l.b16 %v5880
      %v5903 = vunpack.c.l.b16 %v5881
      %v5904 = vunpack.c.l.b16 %v5882
      %v5905 = vunpack.c.l.b16 %v5883
      %v5906 = vunpack.c.l.b16 %v5884
      %v5907 = vunpack.c.l.b16 %v5885
      %v5908 = vunpack.c.l.b16 %v5886
      %v5909 = vpack.c.b16 %v5901, %v5900
      %v5910 = vpack.c.b16 %v5903, %v5902
      %v5911 = vpack.c.b16 %v5905, %v5904
      %v5912 = vpack.c.b16 %v5907, %v5906
      %v5913 = vpack.c.b16 %v5908, %v5908
      %vm5918 = vcmask 588800
      %v5919 = vsel %vm5918, %v5847, 0
      %v5921 = vsel %vm5918, %v5849, 0
      %v5923 = vsel %vm5918, %v5851, 0
      %v5925 = vsel %vm5918, %v5853, 0
      %v5927 = vsel %vm5918, %v5855, 0
      %v5929 = vsel %vm5918, %v5857, 0
      %v5931 = vsel %vm5918, %v5859, 0
      %v5933 = vsel %vm5918, %v5861, 0
      %v5935 = vsel %vm5918, %v5863, 0
      %v5937 = vsel %vm5918, %v5865, 0
      %v5939 = vsel %vm5918, %v5867, 0
      %v5941 = vsel %vm5918, %v5869, 0
      %v5943 = vsel %vm5918, %v5871, 0
      %v5945 = vsel %vm5918, %v5873, 0
      %v5947 = vsel %vm5918, %v5875, 0
      %v5949 = vsel %vm5918, %v5877, 0
      %vm5951 = vcmask 1043456
      %v5953 = vsel %vm5951, %v5913, 0
      %5955 = vmatpush.bf16.msra.mxu0 0
      %5956 = vmatpush.bf16.msra.mxu0 0
      %5957 = vmatpush.bf16.msra.mxu0 0
      %5958 = vmatpush.bf16.msra.mxu0 %v5953
      %5959 = vmatpush.bf16.msra.mxu0 %v5912
      %5960 = vmatpush.bf16.msra.mxu0 %v5911
      %5961 = vmatpush.bf16.msra.mxu0 %v5910
      %5962 = vmatpush.bf16.msra.mxu0 %v5909
      %5963 = vmatmul.bf16.gmra.mxu0 %v5919
      %v5964 = vpop.f32.mrf.mxu0
      %v5965 = vadd.f32 %v5889, %v5964
      %v5966 = vpop.f32.mrf.mxu0
      %v5967 = vadd.f32 %v5889, %v5966
      %5968 = vmatmul.bf16.gmra.mxu0 %v5921
      %v5969 = vpop.f32.mrf.mxu0
      %v5970 = vadd.f32 %v5889, %v5969
      %v5971 = vpop.f32.mrf.mxu0
      %v5972 = vadd.f32 %v5889, %v5971
      %5973 = vmatmul.bf16.gmra.mxu0 %v5923
      %v5974 = vpop.f32.mrf.mxu0
      %v5975 = vadd.f32 %v5889, %v5974
      %v5976 = vpop.f32.mrf.mxu0
      %v5977 = vadd.f32 %v5889, %v5976
      %5978 = vmatmul.bf16.gmra.mxu0 %v5925
      %v5979 = vpop.f32.mrf.mxu0
      %v5980 = vadd.f32 %v5889, %v5979
      %v5981 = vpop.f32.mrf.mxu0
      %v5982 = vadd.f32 %v5889, %v5981
      %5983 = vmatmul.bf16.gmra.mxu0 %v5927
      %v5984 = vpop.f32.mrf.mxu0
      %v5985 = vadd.f32 %v5889, %v5984
      %v5986 = vpop.f32.mrf.mxu0
      %v5987 = vadd.f32 %v5889, %v5986
      %5988 = vmatmul.bf16.gmra.mxu0 %v5929
      %v5989 = vpop.f32.mrf.mxu0
      %v5990 = vadd.f32 %v5889, %v5989
      %v5991 = vpop.f32.mrf.mxu0
      %v5992 = vadd.f32 %v5889, %v5991
      %5993 = vmatmul.bf16.gmra.mxu0 %v5931
      %v5994 = vpop.f32.mrf.mxu0
      %v5995 = vadd.f32 %v5889, %v5994
      %v5996 = vpop.f32.mrf.mxu0
      %v5997 = vadd.f32 %v5889, %v5996
      %5998 = vmatmul.bf16.gmra.mxu0 %v5933
      %v5999 = vpop.f32.mrf.mxu0
      %v6000 = vadd.f32 %v5889, %v5999
      %v6001 = vpop.f32.mrf.mxu0
      %v6002 = vadd.f32 %v5889, %v6001
      %6003 = vmatmul.bf16.gmra.mxu0 %v5935
      %v6004 = vpop.f32.mrf.mxu0
      %v6005 = vadd.f32 %v5889, %v6004
      %v6006 = vpop.f32.mrf.mxu0
      %v6007 = vadd.f32 %v5889, %v6006
      %6008 = vmatmul.bf16.gmra.mxu0 %v5937
      %v6009 = vpop.f32.mrf.mxu0
      %v6010 = vadd.f32 %v5889, %v6009
      %v6011 = vpop.f32.mrf.mxu0
      %v6012 = vadd.f32 %v5889, %v6011
      %6013 = vmatmul.bf16.gmra.mxu0 %v5939
      %v6014 = vpop.f32.mrf.mxu0
      %v6015 = vadd.f32 %v5889, %v6014
      %v6016 = vpop.f32.mrf.mxu0
      %v6017 = vadd.f32 %v5889, %v6016
      %6018 = vmatmul.bf16.gmra.mxu0 %v5941
      %v6019 = vpop.f32.mrf.mxu0
      %v6020 = vadd.f32 %v5889, %v6019
      %v6021 = vpop.f32.mrf.mxu0
      %v6022 = vadd.f32 %v5889, %v6021
      %6023 = vmatmul.bf16.gmra.mxu0 %v5943
      %v6024 = vpop.f32.mrf.mxu0
      %v6025 = vadd.f32 %v5889, %v6024
      %v6026 = vpop.f32.mrf.mxu0
      %v6027 = vadd.f32 %v5889, %v6026
      %6028 = vmatmul.bf16.gmra.mxu0 %v5945
      %v6029 = vpop.f32.mrf.mxu0
      %v6030 = vadd.f32 %v5889, %v6029
      %v6031 = vpop.f32.mrf.mxu0
      %v6032 = vadd.f32 %v5889, %v6031
      %6033 = vmatmul.bf16.gmra.mxu0 %v5947
      %v6034 = vpop.f32.mrf.mxu0
      %v6035 = vadd.f32 %v5889, %v6034
      %v6036 = vpop.f32.mrf.mxu0
      %v6037 = vadd.f32 %v5889, %v6036
      %6038 = vmatmul.bf16.gmra.mxu0 %v5949
      %v6039 = vpop.f32.mrf.mxu0
      %v6040 = vadd.f32 %v5889, %v6039
      %v6041 = vpop.f32.mrf.mxu0
      %v6042 = vadd.f32 %v5889, %v6041
      %6043 = vdwg.mxu0
      %v6044 = vmax.f32 %v5965, 0.0
      %v6045 = vmax.f32 %v5967, 0.0
      %v6046 = vmax.f32 %v5970, 0.0
      %v6047 = vmax.f32 %v5972, 0.0
      %v6048 = vmax.f32 %v5975, 0.0
      %v6049 = vmax.f32 %v5977, 0.0
      %v6050 = vmax.f32 %v5980, 0.0
      %v6051 = vmax.f32 %v5982, 0.0
      %v6052 = vmax.f32 %v5985, 0.0
      %v6053 = vmax.f32 %v5987, 0.0
      %v6054 = vmax.f32 %v5990, 0.0
      %v6055 = vmax.f32 %v5992, 0.0
      %v6056 = vmax.f32 %v5995, 0.0
      %v6057 = vmax.f32 %v5997, 0.0
      %v6058 = vmax.f32 %v6000, 0.0
      %v6059 = vmax.f32 %v6002, 0.0
      %v6060 = vmax.f32 %v6005, 0.0
      %v6061 = vmax.f32 %v6007, 0.0
      %v6062 = vmax.f32 %v6010, 0.0
      %v6063 = vmax.f32 %v6012, 0.0
      %v6064 = vmax.f32 %v6015, 0.0
      %v6065 = vmax.f32 %v6017, 0.0
      %v6066 = vmax.f32 %v6020, 0.0
      %v6067 = vmax.f32 %v6022, 0.0
      %v6068 = vmax.f32 %v6025, 0.0
      %v6069 = vmax.f32 %v6027, 0.0
      %v6070 = vmax.f32 %v6030, 0.0
      %v6071 = vmax.f32 %v6032, 0.0
      %v6072 = vmax.f32 %v6035, 0.0
      %v6073 = vmax.f32 %v6037, 0.0
      %v6074 = vmax.f32 %v6040, 0.0
      %v6075 = vmax.f32 %v6042, 0.0
      %v6076 = vpack.c.bf16 %v6044, %v6044
      %v6077 = vpack.c.bf16 %v6045, %v6045
      %v6078 = vpack.c.bf16 %v6046, %v6046
      %v6079 = vpack.c.bf16 %v6047, %v6047
      %v6080 = vpack.c.bf16 %v6048, %v6048
      %v6081 = vpack.c.bf16 %v6049, %v6049
      %v6082 = vpack.c.bf16 %v6050, %v6050
      %v6083 = vpack.c.bf16 %v6051, %v6051
      %v6084 = vpack.c.bf16 %v6052, %v6052
      %v6085 = vpack.c.bf16 %v6053, %v6053
      %v6086 = vpack.c.bf16 %v6054, %v6054
      %v6087 = vpack.c.bf16 %v6055, %v6055
      %v6088 = vpack.c.bf16 %v6056, %v6056
      %v6089 = vpack.c.bf16 %v6057, %v6057
      %v6090 = vpack.c.bf16 %v6058, %v6058
      %v6091 = vpack.c.bf16 %v6059, %v6059
      %v6092 = vpack.c.bf16 %v6060, %v6060
      %v6093 = vpack.c.bf16 %v6061, %v6061
      %v6094 = vpack.c.bf16 %v6062, %v6062
      %v6095 = vpack.c.bf16 %v6063, %v6063
      %v6096 = vpack.c.bf16 %v6064, %v6064
      %v6097 = vpack.c.bf16 %v6065, %v6065
      %v6098 = vpack.c.bf16 %v6066, %v6066
      %v6099 = vpack.c.bf16 %v6067, %v6067
      %v6100 = vpack.c.bf16 %v6068, %v6068
      %v6101 = vpack.c.bf16 %v6069, %v6069
      %v6102 = vpack.c.bf16 %v6070, %v6070
      %v6103 = vpack.c.bf16 %v6071, %v6071
      %v6104 = vpack.c.bf16 %v6072, %v6072
      %v6105 = vpack.c.bf16 %v6073, %v6073
      %v6106 = vpack.c.bf16 %v6074, %v6074
      %v6107 = vpack.c.bf16 %v6075, %v6075
      %v6140 = vunpack.c.l.b16 %v6076
      %v6141 = vunpack.c.l.b16 %v6077
      %v6142 = vunpack.c.l.b16 %v6078
      %v6143 = vunpack.c.l.b16 %v6079
      %v6144 = vunpack.c.l.b16 %v6080
      %v6145 = vunpack.c.l.b16 %v6081
      %v6146 = vunpack.c.l.b16 %v6082
      %v6147 = vunpack.c.l.b16 %v6083
      %v6148 = vunpack.c.l.b16 %v6084
      %v6149 = vunpack.c.l.b16 %v6085
      %v6150 = vunpack.c.l.b16 %v6086
      %v6151 = vunpack.c.l.b16 %v6087
      %v6152 = vunpack.c.l.b16 %v6088
      %v6153 = vunpack.c.l.b16 %v6089
      %v6154 = vunpack.c.l.b16 %v6090
      %v6155 = vunpack.c.l.b16 %v6091
      %v6156 = vunpack.c.l.b16 %v6092
      %v6157 = vunpack.c.l.b16 %v6093
      %v6158 = vunpack.c.l.b16 %v6094
      %v6159 = vunpack.c.l.b16 %v6095
      %v6160 = vunpack.c.l.b16 %v6096
      %v6161 = vunpack.c.l.b16 %v6097
      %v6162 = vunpack.c.l.b16 %v6098
      %v6163 = vunpack.c.l.b16 %v6099
      %v6164 = vunpack.c.l.b16 %v6100
      %v6165 = vunpack.c.l.b16 %v6101
      %v6166 = vunpack.c.l.b16 %v6102
      %v6167 = vunpack.c.l.b16 %v6103
      %v6168 = vunpack.c.l.b16 %v6104
      %v6169 = vunpack.c.l.b16 %v6105
      %v6170 = vunpack.c.l.b16 %v6106
      %v6171 = vunpack.c.l.b16 %v6107
      %v6172 = vpack.c.b16 %v6141, %v6140
      %v6173 = vpack.c.b16 %v6143, %v6142
      %v6174 = vpack.c.b16 %v6145, %v6144
      %v6175 = vpack.c.b16 %v6147, %v6146
      %v6176 = vpack.c.b16 %v6149, %v6148
      %v6177 = vpack.c.b16 %v6151, %v6150
      %v6178 = vpack.c.b16 %v6153, %v6152
      %v6179 = vpack.c.b16 %v6155, %v6154
      %v6180 = vpack.c.b16 %v6157, %v6156
      %v6181 = vpack.c.b16 %v6159, %v6158
      %v6182 = vpack.c.b16 %v6161, %v6160
      %v6183 = vpack.c.b16 %v6163, %v6162
      %v6184 = vpack.c.b16 %v6165, %v6164
      %v6185 = vpack.c.b16 %v6167, %v6166
      %v6186 = vpack.c.b16 %v6169, %v6168
      %v6187 = vpack.c.b16 %v6171, %v6170
      %v6189 = vshrl.u32 %v6172, 16
      %v6191 = vrot.slane %v6189, 7
      %v6192 = vshll.u32 %v6172, 16
      %v6194 = vor.u32 %v6191, %v6192
      %v6196 = vshrl.u32 %v6173, 16
      %v6198 = vrot.slane %v6196, 7
      %v6199 = vshll.u32 %v6173, 16
      %v6201 = vor.u32 %v6198, %v6199
      %v6202 = vsel %vm505, %v6191, %v6201
      %v6204 = vshrl.u32 %v6174, 16
      %v6206 = vrot.slane %v6204, 7
      %v6207 = vshll.u32 %v6174, 16
      %v6209 = vor.u32 %v6206, %v6207
      %v6210 = vsel %vm505, %v6198, %v6209
      %v6212 = vshrl.u32 %v6175, 16
      %v6214 = vrot.slane %v6212, 7
      %v6215 = vshll.u32 %v6175, 16
      %v6217 = vor.u32 %v6214, %v6215
      %v6218 = vsel %vm505, %v6206, %v6217
      %v6220 = vshrl.u32 %v6176, 16
      %v6222 = vrot.slane %v6220, 7
      %v6223 = vshll.u32 %v6176, 16
      %v6225 = vor.u32 %v6222, %v6223
      %v6226 = vsel %vm505, %v6214, %v6225
      %v6228 = vshrl.u32 %v6177, 16
      %v6230 = vrot.slane %v6228, 7
      %v6231 = vshll.u32 %v6177, 16
      %v6233 = vor.u32 %v6230, %v6231
      %v6234 = vsel %vm505, %v6222, %v6233
      %v6236 = vshrl.u32 %v6178, 16
      %v6238 = vrot.slane %v6236, 7
      %v6239 = vshll.u32 %v6178, 16
      %v6241 = vor.u32 %v6238, %v6239
      %v6242 = vsel %vm505, %v6230, %v6241
      %v6244 = vshrl.u32 %v6179, 16
      %v6246 = vrot.slane %v6244, 7
      %v6247 = vshll.u32 %v6179, 16
      %v6249 = vor.u32 %v6246, %v6247
      %v6250 = vsel %vm505, %v6238, %v6249
      %v6252 = vshrl.u32 %v6180, 16
      %v6254 = vrot.slane %v6252, 7
      %v6255 = vshll.u32 %v6180, 16
      %v6257 = vor.u32 %v6254, %v6255
      %v6258 = vsel %vm505, %v6246, %v6257
      %v6260 = vshrl.u32 %v6181, 16
      %v6262 = vrot.slane %v6260, 7
      %v6263 = vshll.u32 %v6181, 16
      %v6265 = vor.u32 %v6262, %v6263
      %v6266 = vsel %vm505, %v6254, %v6265
      %v6268 = vshrl.u32 %v6182, 16
      %v6270 = vrot.slane %v6268, 7
      %v6271 = vshll.u32 %v6182, 16
      %v6273 = vor.u32 %v6270, %v6271
      %v6274 = vsel %vm505, %v6262, %v6273
      %v6276 = vshrl.u32 %v6183, 16
      %v6278 = vrot.slane %v6276, 7
      %v6279 = vshll.u32 %v6183, 16
      %v6281 = vor.u32 %v6278, %v6279
      %v6282 = vsel %vm505, %v6270, %v6281
      %v6284 = vshrl.u32 %v6184, 16
      %v6286 = vrot.slane %v6284, 7
      %v6287 = vshll.u32 %v6184, 16
      %v6289 = vor.u32 %v6286, %v6287
      %v6290 = vsel %vm505, %v6278, %v6289
      %v6292 = vshrl.u32 %v6185, 16
      %v6294 = vrot.slane %v6292, 7
      %v6295 = vshll.u32 %v6185, 16
      %v6297 = vor.u32 %v6294, %v6295
      %v6298 = vsel %vm505, %v6286, %v6297
      %v6300 = vshrl.u32 %v6186, 16
      %v6302 = vrot.slane %v6300, 7
      %v6303 = vshll.u32 %v6186, 16
      %v6305 = vor.u32 %v6302, %v6303
      %v6306 = vsel %vm505, %v6294, %v6305
      %v6308 = vshrl.u32 %v6187, 16
      %v6310 = vrot.slane %v6308, 7
      %v6311 = vshll.u32 %v6187, 16
      %v6313 = vor.u32 %v6310, %v6311
      %v6314 = vsel %vm505, %v6302, %v6313
      %v6332 = vsel %vm651, 0, %v6194
      %v6333 = vsel %vm651, %v6310, 0
      %v6334 = vunpack.c.l.bf16 %v6332
      %v6335 = vunpack.c.h.bf16 %v6332
      %v6336 = vunpack.c.l.bf16 %v6202
      %v6337 = vunpack.c.h.bf16 %v6202
      %v6338 = vunpack.c.l.bf16 %v6210
      %v6339 = vunpack.c.h.bf16 %v6210
      %v6340 = vunpack.c.l.bf16 %v6218
      %v6341 = vunpack.c.h.bf16 %v6218
      %v6342 = vunpack.c.l.bf16 %v6226
      %v6343 = vunpack.c.h.bf16 %v6226
      %v6344 = vunpack.c.l.bf16 %v6234
      %v6345 = vunpack.c.h.bf16 %v6234
      %v6346 = vunpack.c.l.bf16 %v6242
      %v6347 = vunpack.c.h.bf16 %v6242
      %v6348 = vunpack.c.l.bf16 %v6250
      %v6349 = vunpack.c.h.bf16 %v6250
      %v6350 = vunpack.c.l.bf16 %v6258
      %v6351 = vunpack.c.h.bf16 %v6258
      %v6352 = vunpack.c.l.bf16 %v6266
      %v6353 = vunpack.c.h.bf16 %v6266
      %v6354 = vunpack.c.l.bf16 %v6274
      %v6355 = vunpack.c.h.bf16 %v6274
      %v6356 = vunpack.c.l.bf16 %v6282
      %v6357 = vunpack.c.h.bf16 %v6282
      %v6358 = vunpack.c.l.bf16 %v6290
      %v6359 = vunpack.c.h.bf16 %v6290
      %v6360 = vunpack.c.l.bf16 %v6298
      %v6361 = vunpack.c.h.bf16 %v6298
      %v6362 = vunpack.c.l.bf16 %v6306
      %v6363 = vunpack.c.h.bf16 %v6306
      %v6364 = vmul.f32 %v6334, %v976
      %v6365 = vmul.f32 %v6335, %v977
      %v6366 = vmul.f32 %v6336, %v978
      %v6367 = vmul.f32 %v6337, %v979
      %v6368 = vmul.f32 %v6338, %v980
      %v6369 = vmul.f32 %v6339, %v981
      %v6370 = vmul.f32 %v6340, %v982
      %v6371 = vmul.f32 %v6341, %v983
      %v6372 = vmul.f32 %v6342, %v984
      %v6373 = vmul.f32 %v6343, %v985
      %v6374 = vmul.f32 %v6344, %v986
      %v6375 = vmul.f32 %v6345, %v987
      %v6376 = vmul.f32 %v6346, %v988
      %v6377 = vmul.f32 %v6347, %v989
      %v6378 = vmul.f32 %v6348, %v990
      %v6379 = vmul.f32 %v6349, %v991
      %v6380 = vmul.f32 %v6350, %v992
      %v6381 = vmul.f32 %v6351, %v993
      %v6382 = vmul.f32 %v6352, %v994
      %v6383 = vmul.f32 %v6353, %v995
      %v6384 = vmul.f32 %v6354, %v996
      %v6385 = vmul.f32 %v6355, %v997
      %v6386 = vmul.f32 %v6356, %v998
      %v6387 = vmul.f32 %v6357, %v999
      %v6388 = vmul.f32 %v6358, %v1000
      %v6389 = vmul.f32 %v6359, %v1001
      %v6390 = vmul.f32 %v6360, %v1002
      %v6391 = vmul.f32 %v6361, %v1003
      %v6392 = vmul.f32 %v6362, %v1004
      %v6393 = vmul.f32 %v6363, %v1005
      %v6394 = vpack.c.bf16 %v6364, %v6364
      %v6395 = vpack.c.bf16 %v6365, %v6365
      %v6396 = vpack.c.bf16 %v6366, %v6366
      %v6397 = vpack.c.bf16 %v6367, %v6367
      %v6398 = vpack.c.bf16 %v6368, %v6368
      %v6399 = vpack.c.bf16 %v6369, %v6369
      %v6400 = vpack.c.bf16 %v6370, %v6370
      %v6401 = vpack.c.bf16 %v6371, %v6371
      %v6402 = vpack.c.bf16 %v6372, %v6372
      %v6403 = vpack.c.bf16 %v6373, %v6373
      %v6404 = vpack.c.bf16 %v6374, %v6374
      %v6405 = vpack.c.bf16 %v6375, %v6375
      %v6406 = vpack.c.bf16 %v6376, %v6376
      %v6407 = vpack.c.bf16 %v6377, %v6377
      %v6408 = vpack.c.bf16 %v6378, %v6378
      %v6409 = vpack.c.bf16 %v6379, %v6379
      %v6410 = vpack.c.bf16 %v6380, %v6380
      %v6411 = vpack.c.bf16 %v6381, %v6381
      %v6412 = vpack.c.bf16 %v6382, %v6382
      %v6413 = vpack.c.bf16 %v6383, %v6383
      %v6414 = vpack.c.bf16 %v6384, %v6384
      %v6415 = vpack.c.bf16 %v6385, %v6385
      %v6416 = vpack.c.bf16 %v6386, %v6386
      %v6417 = vpack.c.bf16 %v6387, %v6387
      %v6418 = vpack.c.bf16 %v6388, %v6388
      %v6419 = vpack.c.bf16 %v6389, %v6389
      %v6420 = vpack.c.bf16 %v6390, %v6390
      %v6421 = vpack.c.bf16 %v6391, %v6391
      %v6422 = vpack.c.bf16 %v6392, %v6392
      %v6423 = vpack.c.bf16 %v6393, %v6393
      %v6424 = vunpack.c.l.bf16 %v6314
      %v6425 = vmul.f32 %v6334, %v1396
      %v6426 = vmul.f32 %v6335, %v1398
      %v6427 = vmul.f32 %v6336, %v1400
      %v6428 = vmul.f32 %v6337, %v1402
      %v6429 = vmul.f32 %v6338, %v1404
      %v6430 = vmul.f32 %v6339, %v1406
      %v6431 = vmul.f32 %v6340, %v1408
      %v6432 = vmul.f32 %v6341, %v1410
      %v6433 = vmul.f32 %v6342, %v1412
      %v6434 = vmul.f32 %v6343, %v1414
      %v6435 = vmul.f32 %v6344, %v1416
      %v6436 = vmul.f32 %v6345, %v1418
      %v6437 = vmul.f32 %v6346, %v1420
      %v6438 = vmul.f32 %v6347, %v1422
      %v6439 = vmul.f32 %v6348, %v1424
      %v6440 = vmul.f32 %v6349, %v1426
      %v6441 = vmul.f32 %v6350, %v1428
      %v6442 = vmul.f32 %v6351, %v1430
      %v6443 = vmul.f32 %v6352, %v1432
      %v6444 = vmul.f32 %v6353, %v1434
      %v6445 = vmul.f32 %v6354, %v1436
      %v6446 = vmul.f32 %v6355, %v1438
      %v6447 = vmul.f32 %v6356, %v1440
      %v6448 = vmul.f32 %v6357, %v1442
      %v6449 = vmul.f32 %v6358, %v1444
      %v6450 = vmul.f32 %v6359, %v1446
      %v6451 = vmul.f32 %v6360, %v1448
      %v6452 = vmul.f32 %v6361, %v1450
      %v6453 = vmul.f32 %v6362, %v1452
      %v6454 = vmul.f32 %v6363, %v1454
      %v6455 = vmul.f32 %v6424, %v1453
      %v6456 = vpack.c.bf16 %v6425, %v6425
      %v6457 = vpack.c.bf16 %v6426, %v6426
      %v6458 = vpack.c.bf16 %v6427, %v6427
      %v6459 = vpack.c.bf16 %v6428, %v6428
      %v6460 = vpack.c.bf16 %v6429, %v6429
      %v6461 = vpack.c.bf16 %v6430, %v6430
      %v6462 = vpack.c.bf16 %v6431, %v6431
      %v6463 = vpack.c.bf16 %v6432, %v6432
      %v6464 = vpack.c.bf16 %v6433, %v6433
      %v6465 = vpack.c.bf16 %v6434, %v6434
      %v6466 = vpack.c.bf16 %v6435, %v6435
      %v6467 = vpack.c.bf16 %v6436, %v6436
      %v6468 = vpack.c.bf16 %v6437, %v6437
      %v6469 = vpack.c.bf16 %v6438, %v6438
      %v6470 = vpack.c.bf16 %v6439, %v6439
      %v6471 = vpack.c.bf16 %v6440, %v6440
      %v6472 = vpack.c.bf16 %v6441, %v6441
      %v6473 = vpack.c.bf16 %v6442, %v6442
      %v6474 = vpack.c.bf16 %v6443, %v6443
      %v6475 = vpack.c.bf16 %v6444, %v6444
      %v6476 = vpack.c.bf16 %v6445, %v6445
      %v6477 = vpack.c.bf16 %v6446, %v6446
      %v6478 = vpack.c.bf16 %v6447, %v6447
      %v6479 = vpack.c.bf16 %v6448, %v6448
      %v6480 = vpack.c.bf16 %v6449, %v6449
      %v6481 = vpack.c.bf16 %v6450, %v6450
      %v6482 = vpack.c.bf16 %v6451, %v6451
      %v6483 = vpack.c.bf16 %v6452, %v6452
      %v6484 = vpack.c.bf16 %v6453, %v6453
      %v6485 = vpack.c.bf16 %v6454, %v6454
      %v6486 = vpack.c.bf16 %v6455, %v6455
      %v6487 = vmul.f32 %v6334, %v1879
      %v6488 = vmul.f32 %v6335, %v1881
      %v6489 = vmul.f32 %v6336, %v1883
      %v6490 = vmul.f32 %v6337, %v1885
      %v6491 = vmul.f32 %v6338, %v1887
      %v6492 = vmul.f32 %v6339, %v1889
      %v6493 = vmul.f32 %v6340, %v1891
      %v6494 = vmul.f32 %v6341, %v1893
      %v6495 = vmul.f32 %v6342, %v1895
      %v6496 = vmul.f32 %v6343, %v1897
      %v6497 = vmul.f32 %v6344, %v1899
      %v6498 = vmul.f32 %v6345, %v1901
      %v6499 = vmul.f32 %v6346, %v1903
      %v6500 = vmul.f32 %v6347, %v1905
      %v6501 = vmul.f32 %v6348, %v1907
      %v6502 = vmul.f32 %v6349, %v1909
      %v6503 = vmul.f32 %v6350, %v1911
      %v6504 = vmul.f32 %v6351, %v1913
      %v6505 = vmul.f32 %v6352, %v1915
      %v6506 = vmul.f32 %v6353, %v1917
      %v6507 = vmul.f32 %v6354, %v1919
      %v6508 = vmul.f32 %v6355, %v1921
      %v6509 = vmul.f32 %v6356, %v1923
      %v6510 = vmul.f32 %v6357, %v1925
      %v6511 = vmul.f32 %v6358, %v1927
      %v6512 = vmul.f32 %v6359, %v1929
      %v6513 = vmul.f32 %v6360, %v1931
      %v6514 = vmul.f32 %v6361, %v1933
      %v6515 = vmul.f32 %v6362, %v1935
      %v6516 = vmul.f32 %v6363, %v1937
      %v6517 = vmul.f32 %v6424, %v1936
      %v6518 = vpack.c.bf16 %v6487, %v6487
      %v6519 = vpack.c.bf16 %v6488, %v6488
      %v6520 = vpack.c.bf16 %v6489, %v6489
      %v6521 = vpack.c.bf16 %v6490, %v6490
      %v6522 = vpack.c.bf16 %v6491, %v6491
      %v6523 = vpack.c.bf16 %v6492, %v6492
      %v6524 = vpack.c.bf16 %v6493, %v6493
      %v6525 = vpack.c.bf16 %v6494, %v6494
      %v6526 = vpack.c.bf16 %v6495, %v6495
      %v6527 = vpack.c.bf16 %v6496, %v6496
      %v6528 = vpack.c.bf16 %v6497, %v6497
      %v6529 = vpack.c.bf16 %v6498, %v6498
      %v6530 = vpack.c.bf16 %v6499, %v6499
      %v6531 = vpack.c.bf16 %v6500, %v6500
      %v6532 = vpack.c.bf16 %v6501, %v6501
      %v6533 = vpack.c.bf16 %v6502, %v6502
      %v6534 = vpack.c.bf16 %v6503, %v6503
      %v6535 = vpack.c.bf16 %v6504, %v6504
      %v6536 = vpack.c.bf16 %v6505, %v6505
      %v6537 = vpack.c.bf16 %v6506, %v6506
      %v6538 = vpack.c.bf16 %v6507, %v6507
      %v6539 = vpack.c.bf16 %v6508, %v6508
      %v6540 = vpack.c.bf16 %v6509, %v6509
      %v6541 = vpack.c.bf16 %v6510, %v6510
      %v6542 = vpack.c.bf16 %v6511, %v6511
      %v6543 = vpack.c.bf16 %v6512, %v6512
      %v6544 = vpack.c.bf16 %v6513, %v6513
      %v6545 = vpack.c.bf16 %v6514, %v6514
      %v6546 = vpack.c.bf16 %v6515, %v6515
      %v6547 = vpack.c.bf16 %v6516, %v6516
      %v6548 = vpack.c.bf16 %v6517, %v6517
      %v6549 = vunpack.c.h.bf16 %v6314
      %v6550 = vmul.f32 %v6334, %v2294
      %v6551 = vmul.f32 %v6335, %v2295
      %v6552 = vmul.f32 %v6336, %v2296
      %v6553 = vmul.f32 %v6337, %v2297
      %v6554 = vmul.f32 %v6338, %v2298
      %v6555 = vmul.f32 %v6339, %v2299
      %v6556 = vmul.f32 %v6340, %v2300
      %v6557 = vmul.f32 %v6341, %v2301
      %v6558 = vmul.f32 %v6342, %v2302
      %v6559 = vmul.f32 %v6343, %v2303
      %v6560 = vmul.f32 %v6344, %v2304
      %v6561 = vmul.f32 %v6345, %v2305
      %v6562 = vmul.f32 %v6346, %v2306
      %v6563 = vmul.f32 %v6347, %v2307
      %v6564 = vmul.f32 %v6348, %v2308
      %v6565 = vmul.f32 %v6349, %v2309
      %v6566 = vmul.f32 %v6350, %v2310
      %v6567 = vmul.f32 %v6351, %v2311
      %v6568 = vmul.f32 %v6352, %v2312
      %v6569 = vmul.f32 %v6353, %v2313
      %v6570 = vmul.f32 %v6354, %v2314
      %v6571 = vmul.f32 %v6355, %v2315
      %v6572 = vmul.f32 %v6356, %v2316
      %v6573 = vmul.f32 %v6357, %v2317
      %v6574 = vmul.f32 %v6358, %v2318
      %v6575 = vmul.f32 %v6359, %v2319
      %v6576 = vmul.f32 %v6360, %v2320
      %v6577 = vmul.f32 %v6361, %v2321
      %v6578 = vmul.f32 %v6362, %v2322
      %v6579 = vmul.f32 %v6363, %v2323
      %v6580 = vmul.f32 %v6424, %v2324
      %v6581 = vmul.f32 %v6549, %v2325
      %v6582 = vpack.c.bf16 %v6550, %v6550
      %v6583 = vpack.c.bf16 %v6551, %v6551
      %v6584 = vpack.c.bf16 %v6552, %v6552
      %v6585 = vpack.c.bf16 %v6553, %v6553
      %v6586 = vpack.c.bf16 %v6554, %v6554
      %v6587 = vpack.c.bf16 %v6555, %v6555
      %v6588 = vpack.c.bf16 %v6556, %v6556
      %v6589 = vpack.c.bf16 %v6557, %v6557
      %v6590 = vpack.c.bf16 %v6558, %v6558
      %v6591 = vpack.c.bf16 %v6559, %v6559
      %v6592 = vpack.c.bf16 %v6560, %v6560
      %v6593 = vpack.c.bf16 %v6561, %v6561
      %v6594 = vpack.c.bf16 %v6562, %v6562
      %v6595 = vpack.c.bf16 %v6563, %v6563
      %v6596 = vpack.c.bf16 %v6564, %v6564
      %v6597 = vpack.c.bf16 %v6565, %v6565
      %v6598 = vpack.c.bf16 %v6566, %v6566
      %v6599 = vpack.c.bf16 %v6567, %v6567
      %v6600 = vpack.c.bf16 %v6568, %v6568
      %v6601 = vpack.c.bf16 %v6569, %v6569
      %v6602 = vpack.c.bf16 %v6570, %v6570
      %v6603 = vpack.c.bf16 %v6571, %v6571
      %v6604 = vpack.c.bf16 %v6572, %v6572
      %v6605 = vpack.c.bf16 %v6573, %v6573
      %v6606 = vpack.c.bf16 %v6574, %v6574
      %v6607 = vpack.c.bf16 %v6575, %v6575
      %v6608 = vpack.c.bf16 %v6576, %v6576
      %v6609 = vpack.c.bf16 %v6577, %v6577
      %v6610 = vpack.c.bf16 %v6578, %v6578
      %v6611 = vpack.c.bf16 %v6579, %v6579
      %v6612 = vpack.c.bf16 %v6580, %v6580
      %v6613 = vpack.c.bf16 %v6581, %v6581
      %v6614 = vunpack.c.l.bf16 %v6333
      %v6615 = vmul.f32 %v6334, %v2711
      %v6616 = vmul.f32 %v6335, %v2713
      %v6617 = vmul.f32 %v6336, %v2715
      %v6618 = vmul.f32 %v6337, %v2717
      %v6619 = vmul.f32 %v6338, %v2719
      %v6620 = vmul.f32 %v6339, %v2721
      %v6621 = vmul.f32 %v6340, %v2723
      %v6622 = vmul.f32 %v6341, %v2725
      %v6623 = vmul.f32 %v6342, %v2727
      %v6624 = vmul.f32 %v6343, %v2729
      %v6625 = vmul.f32 %v6344, %v2731
      %v6626 = vmul.f32 %v6345, %v2733
      %v6627 = vmul.f32 %v6346, %v2735
      %v6628 = vmul.f32 %v6347, %v2737
      %v6629 = vmul.f32 %v6348, %v2739
      %v6630 = vmul.f32 %v6349, %v2741
      %v6631 = vmul.f32 %v6350, %v2743
      %v6632 = vmul.f32 %v6351, %v2745
      %v6633 = vmul.f32 %v6352, %v2747
      %v6634 = vmul.f32 %v6353, %v2749
      %v6635 = vmul.f32 %v6354, %v2751
      %v6636 = vmul.f32 %v6355, %v2753
      %v6637 = vmul.f32 %v6356, %v2755
      %v6638 = vmul.f32 %v6357, %v2757
      %v6639 = vmul.f32 %v6358, %v2759
      %v6640 = vmul.f32 %v6359, %v2761
      %v6641 = vmul.f32 %v6360, %v2763
      %v6642 = vmul.f32 %v6361, %v2765
      %v6643 = vmul.f32 %v6362, %v2767
      %v6644 = vmul.f32 %v6363, %v2769
      %v6645 = vmul.f32 %v6424, %v2771
      %v6646 = vmul.f32 %v6549, %v2773
      %v6647 = vmul.f32 %v6614, %v2772
      %v6648 = vpack.c.bf16 %v6615, %v6615
      %v6649 = vpack.c.bf16 %v6616, %v6616
      %v6650 = vpack.c.bf16 %v6617, %v6617
      %v6651 = vpack.c.bf16 %v6618, %v6618
      %v6652 = vpack.c.bf16 %v6619, %v6619
      %v6653 = vpack.c.bf16 %v6620, %v6620
      %v6654 = vpack.c.bf16 %v6621, %v6621
      %v6655 = vpack.c.bf16 %v6622, %v6622
      %v6656 = vpack.c.bf16 %v6623, %v6623
      %v6657 = vpack.c.bf16 %v6624, %v6624
      %v6658 = vpack.c.bf16 %v6625, %v6625
      %v6659 = vpack.c.bf16 %v6626, %v6626
      %v6660 = vpack.c.bf16 %v6627, %v6627
      %v6661 = vpack.c.bf16 %v6628, %v6628
      %v6662 = vpack.c.bf16 %v6629, %v6629
      %v6663 = vpack.c.bf16 %v6630, %v6630
      %v6664 = vpack.c.bf16 %v6631, %v6631
      %v6665 = vpack.c.bf16 %v6632, %v6632
      %v6666 = vpack.c.bf16 %v6633, %v6633
      %v6667 = vpack.c.bf16 %v6634, %v6634
      %v6668 = vpack.c.bf16 %v6635, %v6635
      %v6669 = vpack.c.bf16 %v6636, %v6636
      %v6670 = vpack.c.bf16 %v6637, %v6637
      %v6671 = vpack.c.bf16 %v6638, %v6638
      %v6672 = vpack.c.bf16 %v6639, %v6639
      %v6673 = vpack.c.bf16 %v6640, %v6640
      %v6674 = vpack.c.bf16 %v6641, %v6641
      %v6675 = vpack.c.bf16 %v6642, %v6642
      %v6676 = vpack.c.bf16 %v6643, %v6643
      %v6677 = vpack.c.bf16 %v6644, %v6644
      %v6678 = vpack.c.bf16 %v6645, %v6645
      %v6679 = vpack.c.bf16 %v6646, %v6646
      %v6680 = vpack.c.bf16 %v6647, %v6647
      %v6681 = vunpack.c.h.bf16 %v6333
      %v6682 = vmul.f32 %v6336, %v3130
      %v6683 = vmul.f32 %v6337, %v3131
      %v6684 = vmul.f32 %v6338, %v3132
      %v6685 = vmul.f32 %v6339, %v3133
      %v6686 = vmul.f32 %v6340, %v3134
      %v6687 = vmul.f32 %v6341, %v3135
      %v6688 = vmul.f32 %v6342, %v3136
      %v6689 = vmul.f32 %v6343, %v3137
      %v6690 = vmul.f32 %v6344, %v3138
      %v6691 = vmul.f32 %v6345, %v3139
      %v6692 = vmul.f32 %v6346, %v3140
      %v6693 = vmul.f32 %v6347, %v3141
      %v6694 = vmul.f32 %v6348, %v3142
      %v6695 = vmul.f32 %v6349, %v3143
      %v6696 = vmul.f32 %v6350, %v3144
      %v6697 = vmul.f32 %v6351, %v3145
      %v6698 = vmul.f32 %v6352, %v3146
      %v6699 = vmul.f32 %v6353, %v3147
      %v6700 = vmul.f32 %v6354, %v3148
      %v6701 = vmul.f32 %v6355, %v3149
      %v6702 = vmul.f32 %v6356, %v3150
      %v6703 = vmul.f32 %v6357, %v3151
      %v6704 = vmul.f32 %v6358, %v3152
      %v6705 = vmul.f32 %v6359, %v3153
      %v6706 = vmul.f32 %v6360, %v3154
      %v6707 = vmul.f32 %v6361, %v3155
      %v6708 = vmul.f32 %v6362, %v3156
      %v6709 = vmul.f32 %v6363, %v3157
      %v6710 = vmul.f32 %v6424, %v3158
      %v6711 = vmul.f32 %v6549, %v3159
      %v6712 = vmul.f32 %v6614, %v3160
      %v6713 = vmul.f32 %v6681, %v3161
      %v6714 = vpack.c.bf16 %v6682, %v6682
      %v6715 = vpack.c.bf16 %v6683, %v6683
      %v6716 = vpack.c.bf16 %v6684, %v6684
      %v6717 = vpack.c.bf16 %v6685, %v6685
      %v6718 = vpack.c.bf16 %v6686, %v6686
      %v6719 = vpack.c.bf16 %v6687, %v6687
      %v6720 = vpack.c.bf16 %v6688, %v6688
      %v6721 = vpack.c.bf16 %v6689, %v6689
      %v6722 = vpack.c.bf16 %v6690, %v6690
      %v6723 = vpack.c.bf16 %v6691, %v6691
      %v6724 = vpack.c.bf16 %v6692, %v6692
      %v6725 = vpack.c.bf16 %v6693, %v6693
      %v6726 = vpack.c.bf16 %v6694, %v6694
      %v6727 = vpack.c.bf16 %v6695, %v6695
      %v6728 = vpack.c.bf16 %v6696, %v6696
      %v6729 = vpack.c.bf16 %v6697, %v6697
      %v6730 = vpack.c.bf16 %v6698, %v6698
      %v6731 = vpack.c.bf16 %v6699, %v6699
      %v6732 = vpack.c.bf16 %v6700, %v6700
      %v6733 = vpack.c.bf16 %v6701, %v6701
      %v6734 = vpack.c.bf16 %v6702, %v6702
      %v6735 = vpack.c.bf16 %v6703, %v6703
      %v6736 = vpack.c.bf16 %v6704, %v6704
      %v6737 = vpack.c.bf16 %v6705, %v6705
      %v6738 = vpack.c.bf16 %v6706, %v6706
      %v6739 = vpack.c.bf16 %v6707, %v6707
      %v6740 = vpack.c.bf16 %v6708, %v6708
      %v6741 = vpack.c.bf16 %v6709, %v6709
      %v6742 = vpack.c.bf16 %v6710, %v6710
      %v6743 = vpack.c.bf16 %v6711, %v6711
      %v6744 = vpack.c.bf16 %v6712, %v6712
      %v6745 = vpack.c.bf16 %v6713, %v6713
      %v6746 = vmul.f32 %v6336, %v3546
      %v6747 = vmul.f32 %v6337, %v3548
      %v6748 = vmul.f32 %v6338, %v3550
      %v6749 = vmul.f32 %v6339, %v3552
      %v6750 = vmul.f32 %v6340, %v3554
      %v6751 = vmul.f32 %v6341, %v3556
      %v6752 = vmul.f32 %v6342, %v3558
      %v6753 = vmul.f32 %v6343, %v3560
      %v6754 = vmul.f32 %v6344, %v3562
      %v6755 = vmul.f32 %v6345, %v3564
      %v6756 = vmul.f32 %v6346, %v3566
      %v6757 = vmul.f32 %v6347, %v3568
      %v6758 = vmul.f32 %v6348, %v3570
      %v6759 = vmul.f32 %v6349, %v3572
      %v6760 = vmul.f32 %v6350, %v3574
      %v6761 = vmul.f32 %v6351, %v3576
      %v6762 = vmul.f32 %v6352, %v3578
      %v6763 = vmul.f32 %v6353, %v3580
      %v6764 = vmul.f32 %v6354, %v3582
      %v6765 = vmul.f32 %v6355, %v3584
      %v6766 = vmul.f32 %v6356, %v3586
      %v6767 = vmul.f32 %v6357, %v3588
      %v6768 = vmul.f32 %v6358, %v3590
      %v6769 = vmul.f32 %v6359, %v3592
      %v6770 = vmul.f32 %v6360, %v3594
      %v6771 = vmul.f32 %v6361, %v3596
      %v6772 = vmul.f32 %v6362, %v3598
      %v6773 = vmul.f32 %v6363, %v3600
      %v6774 = vmul.f32 %v6424, %v3602
      %v6775 = vmul.f32 %v6549, %v3604
      %v6776 = vmul.f32 %v6614, %v3606
      %v6777 = vmul.f32 %v6681, %v3608
      %v6778 = vpack.c.bf16 %v6746, %v6746
      %v6779 = vpack.c.bf16 %v6747, %v6747
      %v6780 = vpack.c.bf16 %v6748, %v6748
      %v6781 = vpack.c.bf16 %v6749, %v6749
      %v6782 = vpack.c.bf16 %v6750, %v6750
      %v6783 = vpack.c.bf16 %v6751, %v6751
      %v6784 = vpack.c.bf16 %v6752, %v6752
      %v6785 = vpack.c.bf16 %v6753, %v6753
      %v6786 = vpack.c.bf16 %v6754, %v6754
      %v6787 = vpack.c.bf16 %v6755, %v6755
      %v6788 = vpack.c.bf16 %v6756, %v6756
      %v6789 = vpack.c.bf16 %v6757, %v6757
      %v6790 = vpack.c.bf16 %v6758, %v6758
      %v6791 = vpack.c.bf16 %v6759, %v6759
      %v6792 = vpack.c.bf16 %v6760, %v6760
      %v6793 = vpack.c.bf16 %v6761, %v6761
      %v6794 = vpack.c.bf16 %v6762, %v6762
      %v6795 = vpack.c.bf16 %v6763, %v6763
      %v6796 = vpack.c.bf16 %v6764, %v6764
      %v6797 = vpack.c.bf16 %v6765, %v6765
      %v6798 = vpack.c.bf16 %v6766, %v6766
      %v6799 = vpack.c.bf16 %v6767, %v6767
      %v6800 = vpack.c.bf16 %v6768, %v6768
      %v6801 = vpack.c.bf16 %v6769, %v6769
      %v6802 = vpack.c.bf16 %v6770, %v6770
      %v6803 = vpack.c.bf16 %v6771, %v6771
      %v6804 = vpack.c.bf16 %v6772, %v6772
      %v6805 = vpack.c.bf16 %v6773, %v6773
      %v6806 = vpack.c.bf16 %v6774, %v6774
      %v6807 = vpack.c.bf16 %v6775, %v6775
      %v6808 = vpack.c.bf16 %v6776, %v6776
      %v6809 = vpack.c.bf16 %v6777, %v6777
      %v6810 = vmul.f32 %v6336, %v4028
      %v6811 = vmul.f32 %v6337, %v4030
      %v6812 = vmul.f32 %v6338, %v4032
      %v6813 = vmul.f32 %v6339, %v4034
      %v6814 = vmul.f32 %v6340, %v4036
      %v6815 = vmul.f32 %v6341, %v4038
      %v6816 = vmul.f32 %v6342, %v4040
      %v6817 = vmul.f32 %v6343, %v4042
      %v6818 = vmul.f32 %v6344, %v4044
      %v6819 = vmul.f32 %v6345, %v4046
      %v6820 = vmul.f32 %v6346, %v4048
      %v6821 = vmul.f32 %v6347, %v4050
      %v6822 = vmul.f32 %v6348, %v4052
      %v6823 = vmul.f32 %v6349, %v4054
      %v6824 = vmul.f32 %v6350, %v4056
      %v6825 = vmul.f32 %v6351, %v4058
      %v6826 = vmul.f32 %v6352, %v4060
      %v6827 = vmul.f32 %v6353, %v4062
      %v6828 = vmul.f32 %v6354, %v4064
      %v6829 = vmul.f32 %v6355, %v4066
      %v6830 = vmul.f32 %v6356, %v4068
      %v6831 = vmul.f32 %v6357, %v4070
      %v6832 = vmul.f32 %v6358, %v4072
      %v6833 = vmul.f32 %v6359, %v4074
      %v6834 = vmul.f32 %v6360, %v4076
      %v6835 = vmul.f32 %v6361, %v4078
      %v6836 = vmul.f32 %v6362, %v4080
      %v6837 = vmul.f32 %v6363, %v4082
      %v6838 = vmul.f32 %v6424, %v4084
      %v6839 = vmul.f32 %v6549, %v4086
      %v6840 = vmul.f32 %v6614, %v4088
      %v6841 = vmul.f32 %v6681, %v4090
      %v6842 = vpack.c.bf16 %v6810, %v6810
      %v6843 = vpack.c.bf16 %v6811, %v6811
      %v6844 = vpack.c.bf16 %v6812, %v6812
      %v6845 = vpack.c.bf16 %v6813, %v6813
      %v6846 = vpack.c.bf16 %v6814, %v6814
      %v6847 = vpack.c.bf16 %v6815, %v6815
      %v6848 = vpack.c.bf16 %v6816, %v6816
      %v6849 = vpack.c.bf16 %v6817, %v6817
      %v6850 = vpack.c.bf16 %v6818, %v6818
      %v6851 = vpack.c.bf16 %v6819, %v6819
      %v6852 = vpack.c.bf16 %v6820, %v6820
      %v6853 = vpack.c.bf16 %v6821, %v6821
      %v6854 = vpack.c.bf16 %v6822, %v6822
      %v6855 = vpack.c.bf16 %v6823, %v6823
      %v6856 = vpack.c.bf16 %v6824, %v6824
      %v6857 = vpack.c.bf16 %v6825, %v6825
      %v6858 = vpack.c.bf16 %v6826, %v6826
      %v6859 = vpack.c.bf16 %v6827, %v6827
      %v6860 = vpack.c.bf16 %v6828, %v6828
      %v6861 = vpack.c.bf16 %v6829, %v6829
      %v6862 = vpack.c.bf16 %v6830, %v6830
      %v6863 = vpack.c.bf16 %v6831, %v6831
      %v6864 = vpack.c.bf16 %v6832, %v6832
      %v6865 = vpack.c.bf16 %v6833, %v6833
      %v6866 = vpack.c.bf16 %v6834, %v6834
      %v6867 = vpack.c.bf16 %v6835, %v6835
      %v6868 = vpack.c.bf16 %v6836, %v6836
      %v6869 = vpack.c.bf16 %v6837, %v6837
      %v6870 = vpack.c.bf16 %v6838, %v6838
      %v6871 = vpack.c.bf16 %v6839, %v6839
      %v6872 = vpack.c.bf16 %v6840, %v6840
      %v6873 = vpack.c.bf16 %v6841, %v6841
      %v6904 = vunpack.c.l.b16 %v6394
      %v6905 = vunpack.c.l.b16 %v6395
      %v6906 = vunpack.c.l.b16 %v6396
      %v6907 = vunpack.c.l.b16 %v6397
      %v6908 = vunpack.c.l.b16 %v6398
      %v6909 = vunpack.c.l.b16 %v6399
      %v6910 = vunpack.c.l.b16 %v6400
      %v6911 = vunpack.c.l.b16 %v6401
      %v6912 = vunpack.c.l.b16 %v6402
      %v6913 = vunpack.c.l.b16 %v6403
      %v6914 = vunpack.c.l.b16 %v6404
      %v6915 = vunpack.c.l.b16 %v6405
      %v6916 = vunpack.c.l.b16 %v6406
      %v6917 = vunpack.c.l.b16 %v6407
      %v6918 = vunpack.c.l.b16 %v6408
      %v6919 = vunpack.c.l.b16 %v6409
      %v6920 = vunpack.c.l.b16 %v6410
      %v6921 = vunpack.c.l.b16 %v6411
      %v6922 = vunpack.c.l.b16 %v6412
      %v6923 = vunpack.c.l.b16 %v6413
      %v6924 = vunpack.c.l.b16 %v6414
      %v6925 = vunpack.c.l.b16 %v6415
      %v6926 = vunpack.c.l.b16 %v6416
      %v6927 = vunpack.c.l.b16 %v6417
      %v6928 = vunpack.c.l.b16 %v6418
      %v6929 = vunpack.c.l.b16 %v6419
      %v6930 = vunpack.c.l.b16 %v6420
      %v6931 = vunpack.c.l.b16 %v6421
      %v6932 = vunpack.c.l.b16 %v6422
      %v6933 = vunpack.c.l.b16 %v6423
      %v6934 = vpack.c.b16 %v6905, %v6904
      %v6935 = vpack.c.b16 %v6907, %v6906
      %v6936 = vpack.c.b16 %v6909, %v6908
      %v6937 = vpack.c.b16 %v6911, %v6910
      %v6938 = vpack.c.b16 %v6913, %v6912
      %v6939 = vpack.c.b16 %v6915, %v6914
      %v6940 = vpack.c.b16 %v6917, %v6916
      %v6941 = vpack.c.b16 %v6919, %v6918
      %v6942 = vpack.c.b16 %v6921, %v6920
      %v6943 = vpack.c.b16 %v6923, %v6922
      %v6944 = vpack.c.b16 %v6925, %v6924
      %v6945 = vpack.c.b16 %v6927, %v6926
      %v6946 = vpack.c.b16 %v6929, %v6928
      %v6947 = vpack.c.b16 %v6931, %v6930
      %v6948 = vpack.c.b16 %v6933, %v6932
      %v6980 = vunpack.c.l.b16 %v6456
      %v6981 = vunpack.c.l.b16 %v6457
      %v6982 = vunpack.c.l.b16 %v6458
      %v6983 = vunpack.c.l.b16 %v6459
      %v6984 = vunpack.c.l.b16 %v6460
      %v6985 = vunpack.c.l.b16 %v6461
      %v6986 = vunpack.c.l.b16 %v6462
      %v6987 = vunpack.c.l.b16 %v6463
      %v6988 = vunpack.c.l.b16 %v6464
      %v6989 = vunpack.c.l.b16 %v6465
      %v6990 = vunpack.c.l.b16 %v6466
      %v6991 = vunpack.c.l.b16 %v6467
      %v6992 = vunpack.c.l.b16 %v6468
      %v6993 = vunpack.c.l.b16 %v6469
      %v6994 = vunpack.c.l.b16 %v6470
      %v6995 = vunpack.c.l.b16 %v6471
      %v6996 = vunpack.c.l.b16 %v6472
      %v6997 = vunpack.c.l.b16 %v6473
      %v6998 = vunpack.c.l.b16 %v6474
      %v6999 = vunpack.c.l.b16 %v6475
      %v7000 = vunpack.c.l.b16 %v6476
      %v7001 = vunpack.c.l.b16 %v6477
      %v7002 = vunpack.c.l.b16 %v6478
      %v7003 = vunpack.c.l.b16 %v6479
      %v7004 = vunpack.c.l.b16 %v6480
      %v7005 = vunpack.c.l.b16 %v6481
      %v7006 = vunpack.c.l.b16 %v6482
      %v7007 = vunpack.c.l.b16 %v6483
      %v7008 = vunpack.c.l.b16 %v6484
      %v7009 = vunpack.c.l.b16 %v6485
      %v7010 = vunpack.c.l.b16 %v6486
      %v7011 = vpack.c.b16 %v6981, %v6980
      %v7012 = vpack.c.b16 %v6983, %v6982
      %v7013 = vpack.c.b16 %v6985, %v6984
      %v7014 = vpack.c.b16 %v6987, %v6986
      %v7015 = vpack.c.b16 %v6989, %v6988
      %v7016 = vpack.c.b16 %v6991, %v6990
      %v7017 = vpack.c.b16 %v6993, %v6992
      %v7018 = vpack.c.b16 %v6995, %v6994
      %v7019 = vpack.c.b16 %v6997, %v6996
      %v7020 = vpack.c.b16 %v6999, %v6998
      %v7021 = vpack.c.b16 %v7001, %v7000
      %v7022 = vpack.c.b16 %v7003, %v7002
      %v7023 = vpack.c.b16 %v7005, %v7004
      %v7024 = vpack.c.b16 %v7007, %v7006
      %v7025 = vpack.c.b16 %v7009, %v7008
      %v7026 = vpack.c.b16 %v7010, %v7010
      %v7028 = vshll.u32 %v7011, 16
      %v7030 = vrot.slane %v7028, 1
      %v7031 = vsel %vm4353, %v4360, %v7030
      %v7032 = vshrl.u32 %v7011, 16
      %v7034 = vor.u32 %v7032, %v7030
      %v7036 = vshll.u32 %v7012, 16
      %v7038 = vrot.slane %v7036, 1
      %v7039 = vsel %vm4353, %v7034, %v7038
      %v7040 = vshrl.u32 %v7012, 16
      %v7042 = vor.u32 %v7040, %v7038
      %v7044 = vshll.u32 %v7013, 16
      %v7046 = vrot.slane %v7044, 1
      %v7047 = vsel %vm4353, %v7042, %v7046
      %v7048 = vshrl.u32 %v7013, 16
      %v7050 = vor.u32 %v7048, %v7046
      %v7052 = vshll.u32 %v7014, 16
      %v7054 = vrot.slane %v7052, 1
      %v7055 = vsel %vm4353, %v7050, %v7054
      %v7056 = vshrl.u32 %v7014, 16
      %v7058 = vor.u32 %v7056, %v7054
      %v7060 = vshll.u32 %v7015, 16
      %v7062 = vrot.slane %v7060, 1
      %v7063 = vsel %vm4353, %v7058, %v7062
      %v7064 = vshrl.u32 %v7015, 16
      %v7066 = vor.u32 %v7064, %v7062
      %v7068 = vshll.u32 %v7016, 16
      %v7070 = vrot.slane %v7068, 1
      %v7071 = vsel %vm4353, %v7066, %v7070
      %v7072 = vshrl.u32 %v7016, 16
      %v7074 = vor.u32 %v7072, %v7070
      %v7076 = vshll.u32 %v7017, 16
      %v7078 = vrot.slane %v7076, 1
      %v7079 = vsel %vm4353, %v7074, %v7078
      %v7080 = vshrl.u32 %v7017, 16
      %v7082 = vor.u32 %v7080, %v7078
      %v7084 = vshll.u32 %v7018, 16
      %v7086 = vrot.slane %v7084, 1
      %v7087 = vsel %vm4353, %v7082, %v7086
      %v7088 = vshrl.u32 %v7018, 16
      %v7090 = vor.u32 %v7088, %v7086
      %v7092 = vshll.u32 %v7019, 16
      %v7094 = vrot.slane %v7092, 1
      %v7095 = vsel %vm4353, %v7090, %v7094
      %v7096 = vshrl.u32 %v7019, 16
      %v7098 = vor.u32 %v7096, %v7094
      %v7100 = vshll.u32 %v7020, 16
      %v7102 = vrot.slane %v7100, 1
      %v7103 = vsel %vm4353, %v7098, %v7102
      %v7104 = vshrl.u32 %v7020, 16
      %v7106 = vor.u32 %v7104, %v7102
      %v7108 = vshll.u32 %v7021, 16
      %v7110 = vrot.slane %v7108, 1
      %v7111 = vsel %vm4353, %v7106, %v7110
      %v7112 = vshrl.u32 %v7021, 16
      %v7114 = vor.u32 %v7112, %v7110
      %v7116 = vshll.u32 %v7022, 16
      %v7118 = vrot.slane %v7116, 1
      %v7119 = vsel %vm4353, %v7114, %v7118
      %v7120 = vshrl.u32 %v7022, 16
      %v7122 = vor.u32 %v7120, %v7118
      %v7124 = vshll.u32 %v7023, 16
      %v7126 = vrot.slane %v7124, 1
      %v7127 = vsel %vm4353, %v7122, %v7126
      %v7128 = vshrl.u32 %v7023, 16
      %v7130 = vor.u32 %v7128, %v7126
      %v7132 = vshll.u32 %v7024, 16
      %v7134 = vrot.slane %v7132, 1
      %v7135 = vsel %vm4353, %v7130, %v7134
      %v7136 = vshrl.u32 %v7024, 16
      %v7138 = vor.u32 %v7136, %v7134
      %v7140 = vshll.u32 %v7025, 16
      %v7142 = vrot.slane %v7140, 1
      %v7143 = vsel %vm4353, %v7138, %v7142
      %v7144 = vshrl.u32 %v7025, 16
      %v7146 = vor.u32 %v7144, %v7142
      %v7148 = vshll.u32 %v7026, 16
      %v7150 = vrot.slane %v7148, 1
      %v7151 = vsel %vm4353, %v7146, %v7150
      %7152 = vrot.lane.b32.xlu0 %v7031, 16
      %v7153 = vpop.permute.xlu0 %7152
      %7154 = vrot.lane.b32.xlu0 %v7039, 16
      %v7155 = vpop.permute.xlu0 %7154
      %7156 = vrot.lane.b32.xlu0 %v7047, 16
      %v7157 = vpop.permute.xlu0 %7156
      %7158 = vrot.lane.b32.xlu0 %v7055, 16
      %v7159 = vpop.permute.xlu0 %7158
      %7160 = vrot.lane.b32.xlu0 %v7063, 16
      %v7161 = vpop.permute.xlu0 %7160
      %7162 = vrot.lane.b32.xlu0 %v7071, 16
      %v7163 = vpop.permute.xlu0 %7162
      %7164 = vrot.lane.b32.xlu0 %v7079, 16
      %v7165 = vpop.permute.xlu0 %7164
      %7166 = vrot.lane.b32.xlu0 %v7087, 16
      %v7167 = vpop.permute.xlu0 %7166
      %7168 = vrot.lane.b32.xlu0 %v7095, 16
      %v7169 = vpop.permute.xlu0 %7168
      %7170 = vrot.lane.b32.xlu0 %v7103, 16
      %v7171 = vpop.permute.xlu0 %7170
      %7172 = vrot.lane.b32.xlu0 %v7111, 16
      %v7173 = vpop.permute.xlu0 %7172
      %7174 = vrot.lane.b32.xlu0 %v7119, 16
      %v7175 = vpop.permute.xlu0 %7174
      %7176 = vrot.lane.b32.xlu0 %v7127, 16
      %v7177 = vpop.permute.xlu0 %7176
      %7178 = vrot.lane.b32.xlu0 %v7135, 16
      %v7179 = vpop.permute.xlu0 %7178
      %7180 = vrot.lane.b32.xlu0 %v7143, 16
      %v7181 = vpop.permute.xlu0 %7180
      %7182 = vrot.lane.b32.xlu0 %v7151, 16
      %v7183 = vpop.permute.xlu0 %7182
      %v7215 = vunpack.c.l.b16 %v6518
      %v7216 = vunpack.c.l.b16 %v6519
      %v7217 = vunpack.c.l.b16 %v6520
      %v7218 = vunpack.c.l.b16 %v6521
      %v7219 = vunpack.c.l.b16 %v6522
      %v7220 = vunpack.c.l.b16 %v6523
      %v7221 = vunpack.c.l.b16 %v6524
      %v7222 = vunpack.c.l.b16 %v6525
      %v7223 = vunpack.c.l.b16 %v6526
      %v7224 = vunpack.c.l.b16 %v6527
      %v7225 = vunpack.c.l.b16 %v6528
      %v7226 = vunpack.c.l.b16 %v6529
      %v7227 = vunpack.c.l.b16 %v6530
      %v7228 = vunpack.c.l.b16 %v6531
      %v7229 = vunpack.c.l.b16 %v6532
      %v7230 = vunpack.c.l.b16 %v6533
      %v7231 = vunpack.c.l.b16 %v6534
      %v7232 = vunpack.c.l.b16 %v6535
      %v7233 = vunpack.c.l.b16 %v6536
      %v7234 = vunpack.c.l.b16 %v6537
      %v7235 = vunpack.c.l.b16 %v6538
      %v7236 = vunpack.c.l.b16 %v6539
      %v7237 = vunpack.c.l.b16 %v6540
      %v7238 = vunpack.c.l.b16 %v6541
      %v7239 = vunpack.c.l.b16 %v6542
      %v7240 = vunpack.c.l.b16 %v6543
      %v7241 = vunpack.c.l.b16 %v6544
      %v7242 = vunpack.c.l.b16 %v6545
      %v7243 = vunpack.c.l.b16 %v6546
      %v7244 = vunpack.c.l.b16 %v6547
      %v7245 = vunpack.c.l.b16 %v6548
      %v7246 = vpack.c.b16 %v7216, %v7215
      %v7247 = vpack.c.b16 %v7218, %v7217
      %v7248 = vpack.c.b16 %v7220, %v7219
      %v7249 = vpack.c.b16 %v7222, %v7221
      %v7250 = vpack.c.b16 %v7224, %v7223
      %v7251 = vpack.c.b16 %v7226, %v7225
      %v7252 = vpack.c.b16 %v7228, %v7227
      %v7253 = vpack.c.b16 %v7230, %v7229
      %v7254 = vpack.c.b16 %v7232, %v7231
      %v7255 = vpack.c.b16 %v7234, %v7233
      %v7256 = vpack.c.b16 %v7236, %v7235
      %v7257 = vpack.c.b16 %v7238, %v7237
      %v7258 = vpack.c.b16 %v7240, %v7239
      %v7259 = vpack.c.b16 %v7242, %v7241
      %v7260 = vpack.c.b16 %v7244, %v7243
      %v7261 = vpack.c.b16 %v7245, %v7245
      %v7262 = vrot.slane %v7246, 1
      %v7263 = vsel %vm4601, %v4602, %v7262
      %v7264 = vrot.slane %v7247, 1
      %v7265 = vsel %vm4601, %v7262, %v7264
      %v7266 = vrot.slane %v7248, 1
      %v7267 = vsel %vm4601, %v7264, %v7266
      %v7268 = vrot.slane %v7249, 1
      %v7269 = vsel %vm4601, %v7266, %v7268
      %v7270 = vrot.slane %v7250, 1
      %v7271 = vsel %vm4601, %v7268, %v7270
      %v7272 = vrot.slane %v7251, 1
      %v7273 = vsel %vm4601, %v7270, %v7272
      %v7274 = vrot.slane %v7252, 1
      %v7275 = vsel %vm4601, %v7272, %v7274
      %v7276 = vrot.slane %v7253, 1
      %v7277 = vsel %vm4601, %v7274, %v7276
      %v7278 = vrot.slane %v7254, 1
      %v7279 = vsel %vm4601, %v7276, %v7278
      %v7280 = vrot.slane %v7255, 1
      %v7281 = vsel %vm4601, %v7278, %v7280
      %v7282 = vrot.slane %v7256, 1
      %v7283 = vsel %vm4601, %v7280, %v7282
      %v7284 = vrot.slane %v7257, 1
      %v7285 = vsel %vm4601, %v7282, %v7284
      %v7286 = vrot.slane %v7258, 1
      %v7287 = vsel %vm4601, %v7284, %v7286
      %v7288 = vrot.slane %v7259, 1
      %v7289 = vsel %vm4601, %v7286, %v7288
      %v7290 = vrot.slane %v7260, 1
      %v7291 = vsel %vm4601, %v7288, %v7290
      %v7292 = vrot.slane %v7261, 1
      %v7293 = vsel %vm4601, %v7290, %v7292
      %7294 = vrot.lane.b32.xlu0 %v7263, 32
      %v7295 = vpop.permute.xlu0 %7294
      %7296 = vrot.lane.b32.xlu0 %v7265, 32
      %v7297 = vpop.permute.xlu0 %7296
      %7298 = vrot.lane.b32.xlu0 %v7267, 32
      %v7299 = vpop.permute.xlu0 %7298
      %7300 = vrot.lane.b32.xlu0 %v7269, 32
      %v7301 = vpop.permute.xlu0 %7300
      %7302 = vrot.lane.b32.xlu0 %v7271, 32
      %v7303 = vpop.permute.xlu0 %7302
      %7304 = vrot.lane.b32.xlu0 %v7273, 32
      %v7305 = vpop.permute.xlu0 %7304
      %7306 = vrot.lane.b32.xlu0 %v7275, 32
      %v7307 = vpop.permute.xlu0 %7306
      %7308 = vrot.lane.b32.xlu0 %v7277, 32
      %v7309 = vpop.permute.xlu0 %7308
      %7310 = vrot.lane.b32.xlu0 %v7279, 32
      %v7311 = vpop.permute.xlu0 %7310
      %7312 = vrot.lane.b32.xlu0 %v7281, 32
      %v7313 = vpop.permute.xlu0 %7312
      %7314 = vrot.lane.b32.xlu0 %v7283, 32
      %v7315 = vpop.permute.xlu0 %7314
      %7316 = vrot.lane.b32.xlu0 %v7285, 32
      %v7317 = vpop.permute.xlu0 %7316
      %7318 = vrot.lane.b32.xlu0 %v7287, 32
      %v7319 = vpop.permute.xlu0 %7318
      %7320 = vrot.lane.b32.xlu0 %v7289, 32
      %v7321 = vpop.permute.xlu0 %7320
      %7322 = vrot.lane.b32.xlu0 %v7291, 32
      %v7323 = vpop.permute.xlu0 %7322
      %7324 = vrot.lane.b32.xlu0 %v7293, 32
      %v7325 = vpop.permute.xlu0 %7324
      %v7358 = vunpack.c.l.b16 %v6582
      %v7359 = vunpack.c.l.b16 %v6583
      %v7360 = vunpack.c.l.b16 %v6584
      %v7361 = vunpack.c.l.b16 %v6585
      %v7362 = vunpack.c.l.b16 %v6586
      %v7363 = vunpack.c.l.b16 %v6587
      %v7364 = vunpack.c.l.b16 %v6588
      %v7365 = vunpack.c.l.b16 %v6589
      %v7366 = vunpack.c.l.b16 %v6590
      %v7367 = vunpack.c.l.b16 %v6591
      %v7368 = vunpack.c.l.b16 %v6592
      %v7369 = vunpack.c.l.b16 %v6593
      %v7370 = vunpack.c.l.b16 %v6594
      %v7371 = vunpack.c.l.b16 %v6595
      %v7372 = vunpack.c.l.b16 %v6596
      %v7373 = vunpack.c.l.b16 %v6597
      %v7374 = vunpack.c.l.b16 %v6598
      %v7375 = vunpack.c.l.b16 %v6599
      %v7376 = vunpack.c.l.b16 %v6600
      %v7377 = vunpack.c.l.b16 %v6601
      %v7378 = vunpack.c.l.b16 %v6602
      %v7379 = vunpack.c.l.b16 %v6603
      %v7380 = vunpack.c.l.b16 %v6604
      %v7381 = vunpack.c.l.b16 %v6605
      %v7382 = vunpack.c.l.b16 %v6606
      %v7383 = vunpack.c.l.b16 %v6607
      %v7384 = vunpack.c.l.b16 %v6608
      %v7385 = vunpack.c.l.b16 %v6609
      %v7386 = vunpack.c.l.b16 %v6610
      %v7387 = vunpack.c.l.b16 %v6611
      %v7388 = vunpack.c.l.b16 %v6612
      %v7389 = vunpack.c.l.b16 %v6613
      %v7390 = vpack.c.b16 %v7359, %v7358
      %v7391 = vpack.c.b16 %v7361, %v7360
      %v7392 = vpack.c.b16 %v7363, %v7362
      %v7393 = vpack.c.b16 %v7365, %v7364
      %v7394 = vpack.c.b16 %v7367, %v7366
      %v7395 = vpack.c.b16 %v7369, %v7368
      %v7396 = vpack.c.b16 %v7371, %v7370
      %v7397 = vpack.c.b16 %v7373, %v7372
      %v7398 = vpack.c.b16 %v7375, %v7374
      %v7399 = vpack.c.b16 %v7377, %v7376
      %v7400 = vpack.c.b16 %v7379, %v7378
      %v7401 = vpack.c.b16 %v7381, %v7380
      %v7402 = vpack.c.b16 %v7383, %v7382
      %v7403 = vpack.c.b16 %v7385, %v7384
      %v7404 = vpack.c.b16 %v7387, %v7386
      %v7405 = vpack.c.b16 %v7389, %v7388
      %7406 = vrot.lane.b32.xlu0 %v7390, 48
      %v7407 = vpop.permute.xlu0 %7406
      %7408 = vrot.lane.b32.xlu0 %v7391, 48
      %v7409 = vpop.permute.xlu0 %7408
      %7410 = vrot.lane.b32.xlu0 %v7392, 48
      %v7411 = vpop.permute.xlu0 %7410
      %7412 = vrot.lane.b32.xlu0 %v7393, 48
      %v7413 = vpop.permute.xlu0 %7412
      %7414 = vrot.lane.b32.xlu0 %v7394, 48
      %v7415 = vpop.permute.xlu0 %7414
      %7416 = vrot.lane.b32.xlu0 %v7395, 48
      %v7417 = vpop.permute.xlu0 %7416
      %7418 = vrot.lane.b32.xlu0 %v7396, 48
      %v7419 = vpop.permute.xlu0 %7418
      %7420 = vrot.lane.b32.xlu0 %v7397, 48
      %v7421 = vpop.permute.xlu0 %7420
      %7422 = vrot.lane.b32.xlu0 %v7398, 48
      %v7423 = vpop.permute.xlu0 %7422
      %7424 = vrot.lane.b32.xlu0 %v7399, 48
      %v7425 = vpop.permute.xlu0 %7424
      %7426 = vrot.lane.b32.xlu0 %v7400, 48
      %v7427 = vpop.permute.xlu0 %7426
      %7428 = vrot.lane.b32.xlu0 %v7401, 48
      %v7429 = vpop.permute.xlu0 %7428
      %7430 = vrot.lane.b32.xlu0 %v7402, 48
      %v7431 = vpop.permute.xlu0 %7430
      %7432 = vrot.lane.b32.xlu0 %v7403, 48
      %v7433 = vpop.permute.xlu0 %7432
      %7434 = vrot.lane.b32.xlu0 %v7404, 48
      %v7435 = vpop.permute.xlu0 %7434
      %7436 = vrot.lane.b32.xlu0 %v7405, 48
      %v7437 = vpop.permute.xlu0 %7436
      %v7439 = vshrl.u32 %v6332, 16
      %v7441 = vshll.u32 %v6332, 16
      %v7443 = vrot.slane %v7441, 1
      %v7444 = vor.u32 %v7439, %v7443
      %v7446 = vshll.u32 %v6202, 16
      %v7448 = vrot.slane %v7446, 1
      %v7449 = vsel %vm4353, %v7444, %v7448
      %v7450 = vshrl.u32 %v6202, 16
      %v7452 = vor.u32 %v7450, %v7448
      %v7454 = vshll.u32 %v6210, 16
      %v7456 = vrot.slane %v7454, 1
      %v7457 = vsel %vm4353, %v7452, %v7456
      %v7458 = vshrl.u32 %v6210, 16
      %v7460 = vor.u32 %v7458, %v7456
      %v7462 = vshll.u32 %v6218, 16
      %v7464 = vrot.slane %v7462, 1
      %v7465 = vsel %vm4353, %v7460, %v7464
      %v7466 = vshrl.u32 %v6218, 16
      %v7468 = vor.u32 %v7466, %v7464
      %v7470 = vshll.u32 %v6226, 16
      %v7472 = vrot.slane %v7470, 1
      %v7473 = vsel %vm4353, %v7468, %v7472
      %v7474 = vshrl.u32 %v6226, 16
      %v7476 = vor.u32 %v7474, %v7472
      %v7478 = vshll.u32 %v6234, 16
      %v7480 = vrot.slane %v7478, 1
      %v7481 = vsel %vm4353, %v7476, %v7480
      %v7482 = vshrl.u32 %v6234, 16
      %v7484 = vor.u32 %v7482, %v7480
      %v7486 = vshll.u32 %v6242, 16
      %v7488 = vrot.slane %v7486, 1
      %v7489 = vsel %vm4353, %v7484, %v7488
      %v7490 = vshrl.u32 %v6242, 16
      %v7492 = vor.u32 %v7490, %v7488
      %v7494 = vshll.u32 %v6250, 16
      %v7496 = vrot.slane %v7494, 1
      %v7497 = vsel %vm4353, %v7492, %v7496
      %v7498 = vshrl.u32 %v6250, 16
      %v7500 = vor.u32 %v7498, %v7496
      %v7502 = vshll.u32 %v6258, 16
      %v7504 = vrot.slane %v7502, 1
      %v7505 = vsel %vm4353, %v7500, %v7504
      %v7506 = vshrl.u32 %v6258, 16
      %v7508 = vor.u32 %v7506, %v7504
      %v7510 = vshll.u32 %v6266, 16
      %v7512 = vrot.slane %v7510, 1
      %v7513 = vsel %vm4353, %v7508, %v7512
      %v7514 = vshrl.u32 %v6266, 16
      %v7516 = vor.u32 %v7514, %v7512
      %v7518 = vshll.u32 %v6274, 16
      %v7520 = vrot.slane %v7518, 1
      %v7521 = vsel %vm4353, %v7516, %v7520
      %v7522 = vshrl.u32 %v6274, 16
      %v7524 = vor.u32 %v7522, %v7520
      %v7526 = vshll.u32 %v6282, 16
      %v7528 = vrot.slane %v7526, 1
      %v7529 = vsel %vm4353, %v7524, %v7528
      %v7530 = vshrl.u32 %v6282, 16
      %v7532 = vor.u32 %v7530, %v7528
      %v7534 = vshll.u32 %v6290, 16
      %v7536 = vrot.slane %v7534, 1
      %v7537 = vsel %vm4353, %v7532, %v7536
      %v7538 = vshrl.u32 %v6290, 16
      %v7540 = vor.u32 %v7538, %v7536
      %v7542 = vshll.u32 %v6298, 16
      %v7544 = vrot.slane %v7542, 1
      %v7545 = vsel %vm4353, %v7540, %v7544
      %v7546 = vshrl.u32 %v6298, 16
      %v7548 = vor.u32 %v7546, %v7544
      %v7550 = vshll.u32 %v6306, 16
      %v7552 = vrot.slane %v7550, 1
      %v7553 = vsel %vm4353, %v7548, %v7552
      %v7554 = vshrl.u32 %v6306, 16
      %v7556 = vor.u32 %v7554, %v7552
      %v7558 = vshll.u32 %v6314, 16
      %v7560 = vrot.slane %v7558, 1
      %v7561 = vsel %vm4353, %v7556, %v7560
      %v7562 = vshrl.u32 %v6314, 16
      %v7564 = vor.u32 %v7562, %v7560
      %v7566 = vshll.u32 %v6333, 16
      %v7568 = vrot.slane %v7566, 1
      %v7569 = vsel %vm4353, %v7564, %v7568
      %7570 = vrot.lane.b32.xlu0 %v7449, 64
      %v7571 = vpop.permute.xlu0 %7570
      %7572 = vrot.lane.b32.xlu0 %v7457, 64
      %v7573 = vpop.permute.xlu0 %7572
      %7574 = vrot.lane.b32.xlu0 %v7465, 64
      %v7575 = vpop.permute.xlu0 %7574
      %7576 = vrot.lane.b32.xlu0 %v7473, 64
      %v7577 = vpop.permute.xlu0 %7576
      %7578 = vrot.lane.b32.xlu0 %v7481, 64
      %v7579 = vpop.permute.xlu0 %7578
      %7580 = vrot.lane.b32.xlu0 %v7489, 64
      %v7581 = vpop.permute.xlu0 %7580
      %7582 = vrot.lane.b32.xlu0 %v7497, 64
      %v7583 = vpop.permute.xlu0 %7582
      %7584 = vrot.lane.b32.xlu0 %v7505, 64
      %v7585 = vpop.permute.xlu0 %7584
      %7586 = vrot.lane.b32.xlu0 %v7513, 64
      %v7587 = vpop.permute.xlu0 %7586
      %7588 = vrot.lane.b32.xlu0 %v7521, 64
      %v7589 = vpop.permute.xlu0 %7588
      %7590 = vrot.lane.b32.xlu0 %v7529, 64
      %v7591 = vpop.permute.xlu0 %7590
      %7592 = vrot.lane.b32.xlu0 %v7537, 64
      %v7593 = vpop.permute.xlu0 %7592
      %7594 = vrot.lane.b32.xlu0 %v7545, 64
      %v7595 = vpop.permute.xlu0 %7594
      %7596 = vrot.lane.b32.xlu0 %v7553, 64
      %v7597 = vpop.permute.xlu0 %7596
      %7598 = vrot.lane.b32.xlu0 %v7561, 64
      %v7599 = vpop.permute.xlu0 %7598
      %7600 = vrot.lane.b32.xlu0 %v7569, 64
      %v7601 = vpop.permute.xlu0 %7600
      %v7635 = vunpack.c.l.b16 %v6648
      %v7636 = vunpack.c.l.b16 %v6649
      %v7637 = vunpack.c.l.b16 %v6650
      %v7638 = vunpack.c.l.b16 %v6651
      %v7639 = vunpack.c.l.b16 %v6652
      %v7640 = vunpack.c.l.b16 %v6653
      %v7641 = vunpack.c.l.b16 %v6654
      %v7642 = vunpack.c.l.b16 %v6655
      %v7643 = vunpack.c.l.b16 %v6656
      %v7644 = vunpack.c.l.b16 %v6657
      %v7645 = vunpack.c.l.b16 %v6658
      %v7646 = vunpack.c.l.b16 %v6659
      %v7647 = vunpack.c.l.b16 %v6660
      %v7648 = vunpack.c.l.b16 %v6661
      %v7649 = vunpack.c.l.b16 %v6662
      %v7650 = vunpack.c.l.b16 %v6663
      %v7651 = vunpack.c.l.b16 %v6664
      %v7652 = vunpack.c.l.b16 %v6665
      %v7653 = vunpack.c.l.b16 %v6666
      %v7654 = vunpack.c.l.b16 %v6667
      %v7655 = vunpack.c.l.b16 %v6668
      %v7656 = vunpack.c.l.b16 %v6669
      %v7657 = vunpack.c.l.b16 %v6670
      %v7658 = vunpack.c.l.b16 %v6671
      %v7659 = vunpack.c.l.b16 %v6672
      %v7660 = vunpack.c.l.b16 %v6673
      %v7661 = vunpack.c.l.b16 %v6674
      %v7662 = vunpack.c.l.b16 %v6675
      %v7663 = vunpack.c.l.b16 %v6676
      %v7664 = vunpack.c.l.b16 %v6677
      %v7665 = vunpack.c.l.b16 %v6678
      %v7666 = vunpack.c.l.b16 %v6679
      %v7667 = vunpack.c.l.b16 %v6680
      %v7668 = vpack.c.b16 %v7636, %v7635
      %v7669 = vpack.c.b16 %v7638, %v7637
      %v7670 = vpack.c.b16 %v7640, %v7639
      %v7671 = vpack.c.b16 %v7642, %v7641
      %v7672 = vpack.c.b16 %v7644, %v7643
      %v7673 = vpack.c.b16 %v7646, %v7645
      %v7674 = vpack.c.b16 %v7648, %v7647
      %v7675 = vpack.c.b16 %v7650, %v7649
      %v7676 = vpack.c.b16 %v7652, %v7651
      %v7677 = vpack.c.b16 %v7654, %v7653
      %v7678 = vpack.c.b16 %v7656, %v7655
      %v7679 = vpack.c.b16 %v7658, %v7657
      %v7680 = vpack.c.b16 %v7660, %v7659
      %v7681 = vpack.c.b16 %v7662, %v7661
      %v7682 = vpack.c.b16 %v7664, %v7663
      %v7683 = vpack.c.b16 %v7666, %v7665
      %v7684 = vpack.c.b16 %v7667, %v7667
      %v7685 = vrot.slane %v7668, 1
      %v7686 = vrot.slane %v7669, 1
      %v7687 = vsel %vm4601, %v7685, %v7686
      %v7688 = vrot.slane %v7670, 1
      %v7689 = vsel %vm4601, %v7686, %v7688
      %v7690 = vrot.slane %v7671, 1
      %v7691 = vsel %vm4601, %v7688, %v7690
      %v7692 = vrot.slane %v7672, 1
      %v7693 = vsel %vm4601, %v7690, %v7692
      %v7694 = vrot.slane %v7673, 1
      %v7695 = vsel %vm4601, %v7692, %v7694
      %v7696 = vrot.slane %v7674, 1
      %v7697 = vsel %vm4601, %v7694, %v7696
      %v7698 = vrot.slane %v7675, 1
      %v7699 = vsel %vm4601, %v7696, %v7698
      %v7700 = vrot.slane %v7676, 1
      %v7701 = vsel %vm4601, %v7698, %v7700
      %v7702 = vrot.slane %v7677, 1
      %v7703 = vsel %vm4601, %v7700, %v7702
      %v7704 = vrot.slane %v7678, 1
      %v7705 = vsel %vm4601, %v7702, %v7704
      %v7706 = vrot.slane %v7679, 1
      %v7707 = vsel %vm4601, %v7704, %v7706
      %v7708 = vrot.slane %v7680, 1
      %v7709 = vsel %vm4601, %v7706, %v7708
      %v7710 = vrot.slane %v7681, 1
      %v7711 = vsel %vm4601, %v7708, %v7710
      %v7712 = vrot.slane %v7682, 1
      %v7713 = vsel %vm4601, %v7710, %v7712
      %v7714 = vrot.slane %v7683, 1
      %v7715 = vsel %vm4601, %v7712, %v7714
      %v7716 = vrot.slane %v7684, 1
      %v7717 = vsel %vm4601, %v7714, %v7716
      %7718 = vrot.lane.b32.xlu0 %v7687, 80
      %v7719 = vpop.permute.xlu0 %7718
      %7720 = vrot.lane.b32.xlu0 %v7689, 80
      %v7721 = vpop.permute.xlu0 %7720
      %7722 = vrot.lane.b32.xlu0 %v7691, 80
      %v7723 = vpop.permute.xlu0 %7722
      %7724 = vrot.lane.b32.xlu0 %v7693, 80
      %v7725 = vpop.permute.xlu0 %7724
      %7726 = vrot.lane.b32.xlu0 %v7695, 80
      %v7727 = vpop.permute.xlu0 %7726
      %7728 = vrot.lane.b32.xlu0 %v7697, 80
      %v7729 = vpop.permute.xlu0 %7728
      %7730 = vrot.lane.b32.xlu0 %v7699, 80
      %v7731 = vpop.permute.xlu0 %7730
      %7732 = vrot.lane.b32.xlu0 %v7701, 80
      %v7733 = vpop.permute.xlu0 %7732
      %7734 = vrot.lane.b32.xlu0 %v7703, 80
      %v7735 = vpop.permute.xlu0 %7734
      %7736 = vrot.lane.b32.xlu0 %v7705, 80
      %v7737 = vpop.permute.xlu0 %7736
      %7738 = vrot.lane.b32.xlu0 %v7707, 80
      %v7739 = vpop.permute.xlu0 %7738
      %7740 = vrot.lane.b32.xlu0 %v7709, 80
      %v7741 = vpop.permute.xlu0 %7740
      %7742 = vrot.lane.b32.xlu0 %v7711, 80
      %v7743 = vpop.permute.xlu0 %7742
      %7744 = vrot.lane.b32.xlu0 %v7713, 80
      %v7745 = vpop.permute.xlu0 %7744
      %7746 = vrot.lane.b32.xlu0 %v7715, 80
      %v7747 = vpop.permute.xlu0 %7746
      %7748 = vrot.lane.b32.xlu0 %v7717, 80
      %v7749 = vpop.permute.xlu0 %7748
      %v7782 = vunpack.c.l.b16 %v6714
      %v7783 = vunpack.c.l.b16 %v6715
      %v7784 = vunpack.c.l.b16 %v6716
      %v7785 = vunpack.c.l.b16 %v6717
      %v7786 = vunpack.c.l.b16 %v6718
      %v7787 = vunpack.c.l.b16 %v6719
      %v7788 = vunpack.c.l.b16 %v6720
      %v7789 = vunpack.c.l.b16 %v6721
      %v7790 = vunpack.c.l.b16 %v6722
      %v7791 = vunpack.c.l.b16 %v6723
      %v7792 = vunpack.c.l.b16 %v6724
      %v7793 = vunpack.c.l.b16 %v6725
      %v7794 = vunpack.c.l.b16 %v6726
      %v7795 = vunpack.c.l.b16 %v6727
      %v7796 = vunpack.c.l.b16 %v6728
      %v7797 = vunpack.c.l.b16 %v6729
      %v7798 = vunpack.c.l.b16 %v6730
      %v7799 = vunpack.c.l.b16 %v6731
      %v7800 = vunpack.c.l.b16 %v6732
      %v7801 = vunpack.c.l.b16 %v6733
      %v7802 = vunpack.c.l.b16 %v6734
      %v7803 = vunpack.c.l.b16 %v6735
      %v7804 = vunpack.c.l.b16 %v6736
      %v7805 = vunpack.c.l.b16 %v6737
      %v7806 = vunpack.c.l.b16 %v6738
      %v7807 = vunpack.c.l.b16 %v6739
      %v7808 = vunpack.c.l.b16 %v6740
      %v7809 = vunpack.c.l.b16 %v6741
      %v7810 = vunpack.c.l.b16 %v6742
      %v7811 = vunpack.c.l.b16 %v6743
      %v7812 = vunpack.c.l.b16 %v6744
      %v7813 = vunpack.c.l.b16 %v6745
      %v7814 = vpack.c.b16 %v7783, %v7782
      %v7815 = vpack.c.b16 %v7785, %v7784
      %v7816 = vpack.c.b16 %v7787, %v7786
      %v7817 = vpack.c.b16 %v7789, %v7788
      %v7818 = vpack.c.b16 %v7791, %v7790
      %v7819 = vpack.c.b16 %v7793, %v7792
      %v7820 = vpack.c.b16 %v7795, %v7794
      %v7821 = vpack.c.b16 %v7797, %v7796
      %v7822 = vpack.c.b16 %v7799, %v7798
      %v7823 = vpack.c.b16 %v7801, %v7800
      %v7824 = vpack.c.b16 %v7803, %v7802
      %v7825 = vpack.c.b16 %v7805, %v7804
      %v7826 = vpack.c.b16 %v7807, %v7806
      %v7827 = vpack.c.b16 %v7809, %v7808
      %v7828 = vpack.c.b16 %v7811, %v7810
      %v7829 = vpack.c.b16 %v7813, %v7812
      %7830 = vrot.lane.b32.xlu0 %v7814, 96
      %v7831 = vpop.permute.xlu0 %7830
      %7832 = vrot.lane.b32.xlu0 %v7815, 96
      %v7833 = vpop.permute.xlu0 %7832
      %7834 = vrot.lane.b32.xlu0 %v7816, 96
      %v7835 = vpop.permute.xlu0 %7834
      %7836 = vrot.lane.b32.xlu0 %v7817, 96
      %v7837 = vpop.permute.xlu0 %7836
      %7838 = vrot.lane.b32.xlu0 %v7818, 96
      %v7839 = vpop.permute.xlu0 %7838
      %7840 = vrot.lane.b32.xlu0 %v7819, 96
      %v7841 = vpop.permute.xlu0 %7840
      %7842 = vrot.lane.b32.xlu0 %v7820, 96
      %v7843 = vpop.permute.xlu0 %7842
      %7844 = vrot.lane.b32.xlu0 %v7821, 96
      %v7845 = vpop.permute.xlu0 %7844
      %7846 = vrot.lane.b32.xlu0 %v7822, 96
      %v7847 = vpop.permute.xlu0 %7846
      %7848 = vrot.lane.b32.xlu0 %v7823, 96
      %v7849 = vpop.permute.xlu0 %7848
      %7850 = vrot.lane.b32.xlu0 %v7824, 96
      %v7851 = vpop.permute.xlu0 %7850
      %7852 = vrot.lane.b32.xlu0 %v7825, 96
      %v7853 = vpop.permute.xlu0 %7852
      %7854 = vrot.lane.b32.xlu0 %v7826, 96
      %v7855 = vpop.permute.xlu0 %7854
      %7856 = vrot.lane.b32.xlu0 %v7827, 96
      %v7857 = vpop.permute.xlu0 %7856
      %7858 = vrot.lane.b32.xlu0 %v7828, 96
      %v7859 = vpop.permute.xlu0 %7858
      %7860 = vrot.lane.b32.xlu0 %v7829, 96
      %v7861 = vpop.permute.xlu0 %7860
      %v7894 = vunpack.c.l.b16 %v6778
      %v7895 = vunpack.c.l.b16 %v6779
      %v7896 = vunpack.c.l.b16 %v6780
      %v7897 = vunpack.c.l.b16 %v6781
      %v7898 = vunpack.c.l.b16 %v6782
      %v7899 = vunpack.c.l.b16 %v6783
      %v7900 = vunpack.c.l.b16 %v6784
      %v7901 = vunpack.c.l.b16 %v6785
      %v7902 = vunpack.c.l.b16 %v6786
      %v7903 = vunpack.c.l.b16 %v6787
      %v7904 = vunpack.c.l.b16 %v6788
      %v7905 = vunpack.c.l.b16 %v6789
      %v7906 = vunpack.c.l.b16 %v6790
      %v7907 = vunpack.c.l.b16 %v6791
      %v7908 = vunpack.c.l.b16 %v6792
      %v7909 = vunpack.c.l.b16 %v6793
      %v7910 = vunpack.c.l.b16 %v6794
      %v7911 = vunpack.c.l.b16 %v6795
      %v7912 = vunpack.c.l.b16 %v6796
      %v7913 = vunpack.c.l.b16 %v6797
      %v7914 = vunpack.c.l.b16 %v6798
      %v7915 = vunpack.c.l.b16 %v6799
      %v7916 = vunpack.c.l.b16 %v6800
      %v7917 = vunpack.c.l.b16 %v6801
      %v7918 = vunpack.c.l.b16 %v6802
      %v7919 = vunpack.c.l.b16 %v6803
      %v7920 = vunpack.c.l.b16 %v6804
      %v7921 = vunpack.c.l.b16 %v6805
      %v7922 = vunpack.c.l.b16 %v6806
      %v7923 = vunpack.c.l.b16 %v6807
      %v7924 = vunpack.c.l.b16 %v6808
      %v7925 = vunpack.c.l.b16 %v6809
      %v7926 = vpack.c.b16 %v7895, %v7894
      %v7927 = vpack.c.b16 %v7897, %v7896
      %v7928 = vpack.c.b16 %v7899, %v7898
      %v7929 = vpack.c.b16 %v7901, %v7900
      %v7930 = vpack.c.b16 %v7903, %v7902
      %v7931 = vpack.c.b16 %v7905, %v7904
      %v7932 = vpack.c.b16 %v7907, %v7906
      %v7933 = vpack.c.b16 %v7909, %v7908
      %v7934 = vpack.c.b16 %v7911, %v7910
      %v7935 = vpack.c.b16 %v7913, %v7912
      %v7936 = vpack.c.b16 %v7915, %v7914
      %v7937 = vpack.c.b16 %v7917, %v7916
      %v7938 = vpack.c.b16 %v7919, %v7918
      %v7939 = vpack.c.b16 %v7921, %v7920
      %v7940 = vpack.c.b16 %v7923, %v7922
      %v7941 = vpack.c.b16 %v7925, %v7924
      %v7943 = vshrl.u32 %v7926, 16
      %v7945 = vshll.u32 %v7926, 16
      %v7947 = vrot.slane %v7945, 1
      %v7948 = vor.u32 %v7943, %v7947
      %v7950 = vshll.u32 %v7927, 16
      %v7952 = vrot.slane %v7950, 1
      %v7953 = vsel %vm4353, %v7948, %v7952
      %v7954 = vshrl.u32 %v7927, 16
      %v7956 = vor.u32 %v7954, %v7952
      %v7958 = vshll.u32 %v7928, 16
      %v7960 = vrot.slane %v7958, 1
      %v7961 = vsel %vm4353, %v7956, %v7960
      %v7962 = vshrl.u32 %v7928, 16
      %v7964 = vor.u32 %v7962, %v7960
      %v7966 = vshll.u32 %v7929, 16
      %v7968 = vrot.slane %v7966, 1
      %v7969 = vsel %vm4353, %v7964, %v7968
      %v7970 = vshrl.u32 %v7929, 16
      %v7972 = vor.u32 %v7970, %v7968
      %v7974 = vshll.u32 %v7930, 16
      %v7976 = vrot.slane %v7974, 1
      %v7977 = vsel %vm4353, %v7972, %v7976
      %v7978 = vshrl.u32 %v7930, 16
      %v7980 = vor.u32 %v7978, %v7976
      %v7982 = vshll.u32 %v7931, 16
      %v7984 = vrot.slane %v7982, 1
      %v7985 = vsel %vm4353, %v7980, %v7984
      %v7986 = vshrl.u32 %v7931, 16
      %v7988 = vor.u32 %v7986, %v7984
      %v7990 = vshll.u32 %v7932, 16
      %v7992 = vrot.slane %v7990, 1
      %v7993 = vsel %vm4353, %v7988, %v7992
      %v7994 = vshrl.u32 %v7932, 16
      %v7996 = vor.u32 %v7994, %v7992
      %v7998 = vshll.u32 %v7933, 16
      %v8000 = vrot.slane %v7998, 1
      %v8001 = vsel %vm4353, %v7996, %v8000
      %v8002 = vshrl.u32 %v7933, 16
      %v8004 = vor.u32 %v8002, %v8000
      %v8006 = vshll.u32 %v7934, 16
      %v8008 = vrot.slane %v8006, 1
      %v8009 = vsel %vm4353, %v8004, %v8008
      %v8010 = vshrl.u32 %v7934, 16
      %v8012 = vor.u32 %v8010, %v8008
      %v8014 = vshll.u32 %v7935, 16
      %v8016 = vrot.slane %v8014, 1
      %v8017 = vsel %vm4353, %v8012, %v8016
      %v8018 = vshrl.u32 %v7935, 16
      %v8020 = vor.u32 %v8018, %v8016
      %v8022 = vshll.u32 %v7936, 16
      %v8024 = vrot.slane %v8022, 1
      %v8025 = vsel %vm4353, %v8020, %v8024
      %v8026 = vshrl.u32 %v7936, 16
      %v8028 = vor.u32 %v8026, %v8024
      %v8030 = vshll.u32 %v7937, 16
      %v8032 = vrot.slane %v8030, 1
      %v8033 = vsel %vm4353, %v8028, %v8032
      %v8034 = vshrl.u32 %v7937, 16
      %v8036 = vor.u32 %v8034, %v8032
      %v8038 = vshll.u32 %v7938, 16
      %v8040 = vrot.slane %v8038, 1
      %v8041 = vsel %vm4353, %v8036, %v8040
      %v8042 = vshrl.u32 %v7938, 16
      %v8044 = vor.u32 %v8042, %v8040
      %v8046 = vshll.u32 %v7939, 16
      %v8048 = vrot.slane %v8046, 1
      %v8049 = vsel %vm4353, %v8044, %v8048
      %v8050 = vshrl.u32 %v7939, 16
      %v8052 = vor.u32 %v8050, %v8048
      %v8054 = vshll.u32 %v7940, 16
      %v8056 = vrot.slane %v8054, 1
      %v8057 = vsel %vm4353, %v8052, %v8056
      %v8058 = vshrl.u32 %v7940, 16
      %v8060 = vor.u32 %v8058, %v8056
      %v8062 = vshll.u32 %v7941, 16
      %v8064 = vrot.slane %v8062, 1
      %v8065 = vsel %vm4353, %v8060, %v8064
      %v8066 = vshrl.u32 %v7941, 16
      %v8068 = vor.u32 %v8066, %v8064
      %v8069 = vsel %vm4353, %v8068, %v5416
      %8070 = vrot.lane.b32.xlu0 %v7953, 112
      %v8071 = vpop.permute.xlu0 %8070
      %8072 = vrot.lane.b32.xlu0 %v7961, 112
      %v8073 = vpop.permute.xlu0 %8072
      %8074 = vrot.lane.b32.xlu0 %v7969, 112
      %v8075 = vpop.permute.xlu0 %8074
      %8076 = vrot.lane.b32.xlu0 %v7977, 112
      %v8077 = vpop.permute.xlu0 %8076
      %8078 = vrot.lane.b32.xlu0 %v7985, 112
      %v8079 = vpop.permute.xlu0 %8078
      %8080 = vrot.lane.b32.xlu0 %v7993, 112
      %v8081 = vpop.permute.xlu0 %8080
      %8082 = vrot.lane.b32.xlu0 %v8001, 112
      %v8083 = vpop.permute.xlu0 %8082
      %8084 = vrot.lane.b32.xlu0 %v8009, 112
      %v8085 = vpop.permute.xlu0 %8084
      %8086 = vrot.lane.b32.xlu0 %v8017, 112
      %v8087 = vpop.permute.xlu0 %8086
      %8088 = vrot.lane.b32.xlu0 %v8025, 112
      %v8089 = vpop.permute.xlu0 %8088
      %8090 = vrot.lane.b32.xlu0 %v8033, 112
      %v8091 = vpop.permute.xlu0 %8090
      %8092 = vrot.lane.b32.xlu0 %v8041, 112
      %v8093 = vpop.permute.xlu0 %8092
      %8094 = vrot.lane.b32.xlu0 %v8049, 112
      %v8095 = vpop.permute.xlu0 %8094
      %8096 = vrot.lane.b32.xlu0 %v8057, 112
      %v8097 = vpop.permute.xlu0 %8096
      %8098 = vrot.lane.b32.xlu0 %v8065, 112
      %v8099 = vpop.permute.xlu0 %8098
      %8100 = vrot.lane.b32.xlu0 %v8069, 112
      %v8101 = vpop.permute.xlu0 %8100
      %v8134 = vunpack.c.l.b16 %v6842
      %v8135 = vunpack.c.l.b16 %v6843
      %v8136 = vunpack.c.l.b16 %v6844
      %v8137 = vunpack.c.l.b16 %v6845
      %v8138 = vunpack.c.l.b16 %v6846
      %v8139 = vunpack.c.l.b16 %v6847
      %v8140 = vunpack.c.l.b16 %v6848
      %v8141 = vunpack.c.l.b16 %v6849
      %v8142 = vunpack.c.l.b16 %v6850
      %v8143 = vunpack.c.l.b16 %v6851
      %v8144 = vunpack.c.l.b16 %v6852
      %v8145 = vunpack.c.l.b16 %v6853
      %v8146 = vunpack.c.l.b16 %v6854
      %v8147 = vunpack.c.l.b16 %v6855
      %v8148 = vunpack.c.l.b16 %v6856
      %v8149 = vunpack.c.l.b16 %v6857
      %v8150 = vunpack.c.l.b16 %v6858
      %v8151 = vunpack.c.l.b16 %v6859
      %v8152 = vunpack.c.l.b16 %v6860
      %v8153 = vunpack.c.l.b16 %v6861
      %v8154 = vunpack.c.l.b16 %v6862
      %v8155 = vunpack.c.l.b16 %v6863
      %v8156 = vunpack.c.l.b16 %v6864
      %v8157 = vunpack.c.l.b16 %v6865
      %v8158 = vunpack.c.l.b16 %v6866
      %v8159 = vunpack.c.l.b16 %v6867
      %v8160 = vunpack.c.l.b16 %v6868
      %v8161 = vunpack.c.l.b16 %v6869
      %v8162 = vunpack.c.l.b16 %v6870
      %v8163 = vunpack.c.l.b16 %v6871
      %v8164 = vunpack.c.l.b16 %v6872
      %v8165 = vunpack.c.l.b16 %v6873
      %v8166 = vpack.c.b16 %v8135, %v8134
      %v8167 = vpack.c.b16 %v8137, %v8136
      %v8168 = vpack.c.b16 %v8139, %v8138
      %v8169 = vpack.c.b16 %v8141, %v8140
      %v8170 = vpack.c.b16 %v8143, %v8142
      %v8171 = vpack.c.b16 %v8145, %v8144
      %v8172 = vpack.c.b16 %v8147, %v8146
      %v8173 = vpack.c.b16 %v8149, %v8148
      %v8174 = vpack.c.b16 %v8151, %v8150
      %v8175 = vpack.c.b16 %v8153, %v8152
      %v8176 = vpack.c.b16 %v8155, %v8154
      %v8177 = vpack.c.b16 %v8157, %v8156
      %v8178 = vpack.c.b16 %v8159, %v8158
      %v8179 = vpack.c.b16 %v8161, %v8160
      %v8180 = vpack.c.b16 %v8163, %v8162
      %v8181 = vpack.c.b16 %v8165, %v8164
      %v8182 = vrot.slane %v8166, 1
      %v8183 = vrot.slane %v8167, 1
      %v8184 = vsel %vm4601, %v8182, %v8183
      %v8185 = vrot.slane %v8168, 1
      %v8186 = vsel %vm4601, %v8183, %v8185
      %v8187 = vrot.slane %v8169, 1
      %v8188 = vsel %vm4601, %v8185, %v8187
      %v8189 = vrot.slane %v8170, 1
      %v8190 = vsel %vm4601, %v8187, %v8189
      %v8191 = vrot.slane %v8171, 1
      %v8192 = vsel %vm4601, %v8189, %v8191
      %v8193 = vrot.slane %v8172, 1
      %v8194 = vsel %vm4601, %v8191, %v8193
      %v8195 = vrot.slane %v8173, 1
      %v8196 = vsel %vm4601, %v8193, %v8195
      %v8197 = vrot.slane %v8174, 1
      %v8198 = vsel %vm4601, %v8195, %v8197
      %v8199 = vrot.slane %v8175, 1
      %v8200 = vsel %vm4601, %v8197, %v8199
      %v8201 = vrot.slane %v8176, 1
      %v8202 = vsel %vm4601, %v8199, %v8201
      %v8203 = vrot.slane %v8177, 1
      %v8204 = vsel %vm4601, %v8201, %v8203
      %v8205 = vrot.slane %v8178, 1
      %v8206 = vsel %vm4601, %v8203, %v8205
      %v8207 = vrot.slane %v8179, 1
      %v8208 = vsel %vm4601, %v8205, %v8207
      %v8209 = vrot.slane %v8180, 1
      %v8210 = vsel %vm4601, %v8207, %v8209
      %v8211 = vrot.slane %v8181, 1
      %v8212 = vsel %vm4601, %v8209, %v8211
      %v8213 = vsel %vm4601, %v8211, %v5564
      %v8215 = vsel %vm5647, %v4254, %v7153
      %v8218 = vsel %vm5647, %v6934, %v7155
      %v8221 = vsel %vm5647, %v6935, %v7157
      %v8224 = vsel %vm5647, %v6936, %v7159
      %v8227 = vsel %vm5647, %v6937, %v7161
      %v8230 = vsel %vm5647, %v6938, %v7163
      %v8233 = vsel %vm5647, %v6939, %v7165
      %v8236 = vsel %vm5647, %v6940, %v7167
      %v8239 = vsel %vm5647, %v6941, %v7169
      %v8242 = vsel %vm5647, %v6942, %v7171
      %v8245 = vsel %vm5647, %v6943, %v7173
      %v8248 = vsel %vm5647, %v6944, %v7175
      %v8251 = vsel %vm5647, %v6945, %v7177
      %v8254 = vsel %vm5647, %v6946, %v7179
      %v8257 = vsel %vm5647, %v6947, %v7181
      %v8260 = vsel %vm5647, %v6948, %v7183
      %v8262 = vsel %vm5713, %v8215, %v7295
      %v8264 = vsel %vm5713, %v8218, %v7297
      %v8266 = vsel %vm5713, %v8221, %v7299
      %v8268 = vsel %vm5713, %v8224, %v7301
      %v8270 = vsel %vm5713, %v8227, %v7303
      %v8272 = vsel %vm5713, %v8230, %v7305
      %v8274 = vsel %vm5713, %v8233, %v7307
      %v8276 = vsel %vm5713, %v8236, %v7309
      %v8278 = vsel %vm5713, %v8239, %v7311
      %v8280 = vsel %vm5713, %v8242, %v7313
      %v8282 = vsel %vm5713, %v8245, %v7315
      %v8284 = vsel %vm5713, %v8248, %v7317
      %v8286 = vsel %vm5713, %v8251, %v7319
      %v8288 = vsel %vm5713, %v8254, %v7321
      %v8290 = vsel %vm5713, %v8257, %v7323
      %v8292 = vsel %vm5713, %v8260, %v7325
      %v8294 = vsel %vm5779, %v8262, %v7407
      %v8296 = vsel %vm5779, %v8264, %v7409
      %v8298 = vsel %vm5779, %v8266, %v7411
      %v8300 = vsel %vm5779, %v8268, %v7413
      %v8302 = vsel %vm5779, %v8270, %v7415
      %v8304 = vsel %vm5779, %v8272, %v7417
      %v8306 = vsel %vm5779, %v8274, %v7419
      %v8308 = vsel %vm5779, %v8276, %v7421
      %v8310 = vsel %vm5779, %v8278, %v7423
      %v8312 = vsel %vm5779, %v8280, %v7425
      %v8314 = vsel %vm5779, %v8282, %v7427
      %v8316 = vsel %vm5779, %v8284, %v7429
      %v8318 = vsel %vm5779, %v8286, %v7431
      %v8320 = vsel %vm5779, %v8288, %v7433
      %v8322 = vsel %vm5779, %v8290, %v7435
      %v8324 = vsel %vm5779, %v8292, %v7437
      %v8326 = vsel %vm5845, %v8294, %v7571
      %v8328 = vsel %vm5845, %v8296, %v7573
      %v8330 = vsel %vm5845, %v8298, %v7575
      %v8332 = vsel %vm5845, %v8300, %v7577
      %v8334 = vsel %vm5845, %v8302, %v7579
      %v8336 = vsel %vm5845, %v8304, %v7581
      %v8338 = vsel %vm5845, %v8306, %v7583
      %v8340 = vsel %vm5845, %v8308, %v7585
      %v8342 = vsel %vm5845, %v8310, %v7587
      %v8344 = vsel %vm5845, %v8312, %v7589
      %v8346 = vsel %vm5845, %v8314, %v7591
      %v8348 = vsel %vm5845, %v8316, %v7593
      %v8350 = vsel %vm5845, %v8318, %v7595
      %v8352 = vsel %vm5845, %v8320, %v7597
      %v8354 = vsel %vm5845, %v8322, %v7599
      %v8356 = vsel %vm5845, %v8324, %v7601
      %vm8357 = vcmask 654336
      %v8359 = vsel %vm8357, %v8326, %v7719
      %v8361 = vsel %vm8357, %v8328, %v7721
      %v8363 = vsel %vm8357, %v8330, %v7723
      %v8365 = vsel %vm8357, %v8332, %v7725
      %v8367 = vsel %vm8357, %v8334, %v7727
      %v8369 = vsel %vm8357, %v8336, %v7729
      %v8371 = vsel %vm8357, %v8338, %v7731
      %v8373 = vsel %vm8357, %v8340, %v7733
      %v8375 = vsel %vm8357, %v8342, %v7735
      %v8377 = vsel %vm8357, %v8344, %v7737
      %v8379 = vsel %vm8357, %v8346, %v7739
      %v8381 = vsel %vm8357, %v8348, %v7741
      %v8383 = vsel %vm8357, %v8350, %v7743
      %v8385 = vsel %vm8357, %v8352, %v7745
      %v8387 = vsel %vm8357, %v8354, %v7747
      %v8389 = vsel %vm8357, %v8356, %v7749
      %vm8390 = vcmask 785408
      %v8392 = vsel %vm8390, %v8359, %v7831
      %v8394 = vsel %vm8390, %v8361, %v7833
      %v8396 = vsel %vm8390, %v8363, %v7835
      %v8398 = vsel %vm8390, %v8365, %v7837
      %v8400 = vsel %vm8390, %v8367, %v7839
      %v8402 = vsel %vm8390, %v8369, %v7841
      %v8404 = vsel %vm8390, %v8371, %v7843
      %v8406 = vsel %vm8390, %v8373, %v7845
      %v8408 = vsel %vm8390, %v8375, %v7847
      %v8410 = vsel %vm8390, %v8377, %v7849
      %v8412 = vsel %vm8390, %v8379, %v7851
      %v8414 = vsel %vm8390, %v8381, %v7853
      %v8416 = vsel %vm8390, %v8383, %v7855
      %v8418 = vsel %vm8390, %v8385, %v7857
      %v8420 = vsel %vm8390, %v8387, %v7859
      %v8422 = vsel %vm8390, %v8389, %v7861
      %vm8423 = vcmask 916480
      %v8425 = vsel %vm8423, %v8392, %v8071
      %v8428 = vsel %vm8423, %v8394, %v8073
      %v8431 = vsel %vm8423, %v8396, %v8075
      %v8434 = vsel %vm8423, %v8398, %v8077
      %v8437 = vsel %vm8423, %v8400, %v8079
      %v8440 = vsel %vm8423, %v8402, %v8081
      %v8443 = vsel %vm8423, %v8404, %v8083
      %v8446 = vsel %vm8423, %v8406, %v8085
      %v8449 = vsel %vm8423, %v8408, %v8087
      %v8452 = vsel %vm8423, %v8410, %v8089
      %v8455 = vsel %vm8423, %v8412, %v8091
      %v8458 = vsel %vm8423, %v8414, %v8093
      %v8461 = vsel %vm8423, %v8416, %v8095
      %v8464 = vsel %vm8423, %v8418, %v8097
      %v8467 = vsel %vm8423, %v8420, %v8099
      %v8470 = vsel %vm8423, %v8422, %v8101
      %v8472 = vld [vmem:[%s4] sm:$0xf]
      %v8473 = vld [vmem:[%s4 + $0x4] sm:$0xf]
      %v8474 = vld [vmem:[%s4 + $0x8] sm:$0xf]
      %v8475 = vld [vmem:[%s4 + $0xc] sm:$0xf]
      %v8476 = vld [vmem:[%s4 + $0x10] sm:$0xf]
      %v8477 = vld [vmem:[%s4 + $0x14] sm:$0xf]
      %v8478 = vld [vmem:[%s4 + $0x18] sm:$0xf]
      %v8479 = vld [vmem:[%s4 + $0x1c] sm:$0xf]
      %v8480 = vld [vmem:[%s4 + $0x20] sm:$0xf]
      %v8481 = vld [vmem:[%s4 + $0x24] sm:$0xf]
      %v8482 = vld [vmem:[%s4 + $0x28] sm:$0xf]
      %v8483 = vld [vmem:[%s4 + $0x2c] sm:$0xf]
      %v8484 = vld [vmem:[%s4 + $0x30] sm:$0xf]
      %v8485 = vld [vmem:[%s4 + $0x34] sm:$0xf]
      %v8486 = vld [vmem:[%s4 + $0x38] sm:$0xf]
      %v8487 = vld [vmem:[%s4 + $0x3c] sm:$0xf]
      %v8488 = vld [vmem:[%s4 + $0x40] sm:$0xf]
      %v8489 = vld [vmem:[%s4 + $0x44] sm:$0xf]
      %v8490 = vld [vmem:[%s5] sm:$0x1]
      %v8492 = vperm.slane %v8490, 0
      %v8512 = vunpack.c.l.b16 %v8472
      %v8513 = vunpack.c.l.b16 %v8473
      %v8514 = vunpack.c.l.b16 %v8474
      %v8515 = vunpack.c.l.b16 %v8475
      %v8516 = vunpack.c.l.b16 %v8476
      %v8517 = vunpack.c.l.b16 %v8477
      %v8518 = vunpack.c.l.b16 %v8478
      %v8519 = vunpack.c.l.b16 %v8479
      %v8520 = vunpack.c.l.b16 %v8480
      %v8521 = vunpack.c.l.b16 %v8481
      %v8522 = vunpack.c.l.b16 %v8482
      %v8523 = vunpack.c.l.b16 %v8483
      %v8524 = vunpack.c.l.b16 %v8484
      %v8525 = vunpack.c.l.b16 %v8485
      %v8526 = vunpack.c.l.b16 %v8486
      %v8527 = vunpack.c.l.b16 %v8487
      %v8528 = vunpack.c.l.b16 %v8488
      %v8529 = vunpack.c.l.b16 %v8489
      %v8530 = vpack.c.b16 %v8513, %v8512
      %v8531 = vpack.c.b16 %v8515, %v8514
      %v8532 = vpack.c.b16 %v8517, %v8516
      %v8533 = vpack.c.b16 %v8519, %v8518
      %v8534 = vpack.c.b16 %v8521, %v8520
      %v8535 = vpack.c.b16 %v8523, %v8522
      %v8536 = vpack.c.b16 %v8525, %v8524
      %v8537 = vpack.c.b16 %v8527, %v8526
      %v8538 = vpack.c.b16 %v8529, %v8528
      %v8549 = vsel %vm5647, %v8184, 0
      %v8552 = vsel %vm5647, %v8186, 0
      %v8555 = vsel %vm5647, %v8188, 0
      %v8558 = vsel %vm5647, %v8190, 0
      %v8561 = vsel %vm5647, %v8192, 0
      %v8564 = vsel %vm5647, %v8194, 0
      %v8567 = vsel %vm5647, %v8196, 0
      %v8570 = vsel %vm5647, %v8198, 0
      %v8573 = vsel %vm5647, %v8200, 0
      %v8576 = vsel %vm5647, %v8202, 0
      %v8579 = vsel %vm5647, %v8204, 0
      %v8582 = vsel %vm5647, %v8206, 0
      %v8585 = vsel %vm5647, %v8208, 0
      %v8588 = vsel %vm5647, %v8210, 0
      %v8591 = vsel %vm5647, %v8212, 0
      %v8594 = vsel %vm5647, %v8213, 0
      %8596 = vmatpush.bf16.msra.mxu0 %v8537
      %8597 = vmatpush.bf16.msra.mxu0 %v8536
      %8598 = vmatpush.bf16.msra.mxu0 %v8535
      %8599 = vmatpush.bf16.msra.mxu0 %v8534
      %8600 = vmatpush.bf16.msra.mxu0 %v8533
      %8601 = vmatpush.bf16.msra.mxu0 %v8532
      %8602 = vmatpush.bf16.msra.mxu0 %v8531
      %8603 = vmatpush.bf16.msra.mxu0 %v8530
      %8604 = vmatmul.bf16.gmra.mxu0 %v8425
      %v8605 = vpop.f32.mrf.mxu0
      %v8606 = vadd.f32 %v8492, %v8605
      %v8607 = vpop.f32.mrf.mxu0
      %v8608 = vadd.f32 %v8492, %v8607
      %8609 = vmatmul.bf16.gmra.mxu0 %v8428
      %v8610 = vpop.f32.mrf.mxu0
      %v8611 = vadd.f32 %v8492, %v8610
      %v8612 = vpop.f32.mrf.mxu0
      %v8613 = vadd.f32 %v8492, %v8612
      %8614 = vmatmul.bf16.gmra.mxu0 %v8431
      %v8615 = vpop.f32.mrf.mxu0
      %v8616 = vadd.f32 %v8492, %v8615
      %v8617 = vpop.f32.mrf.mxu0
      %v8618 = vadd.f32 %v8492, %v8617
      %8619 = vmatmul.bf16.gmra.mxu0 %v8434
      %v8620 = vpop.f32.mrf.mxu0
      %v8621 = vadd.f32 %v8492, %v8620
      %v8622 = vpop.f32.mrf.mxu0
      %v8623 = vadd.f32 %v8492, %v8622
      %8624 = vmatmul.bf16.gmra.mxu0 %v8437
      %v8625 = vpop.f32.mrf.mxu0
      %v8626 = vadd.f32 %v8492, %v8625
      %v8627 = vpop.f32.mrf.mxu0
      %v8628 = vadd.f32 %v8492, %v8627
      %8629 = vmatmul.bf16.gmra.mxu0 %v8440
      %v8630 = vpop.f32.mrf.mxu0
      %v8631 = vadd.f32 %v8492, %v8630
      %v8632 = vpop.f32.mrf.mxu0
      %v8633 = vadd.f32 %v8492, %v8632
      %8634 = vmatmul.bf16.gmra.mxu0 %v8443
      %v8635 = vpop.f32.mrf.mxu0
      %v8636 = vadd.f32 %v8492, %v8635
      %v8637 = vpop.f32.mrf.mxu0
      %v8638 = vadd.f32 %v8492, %v8637
      %8639 = vmatmul.bf16.gmra.mxu0 %v8446
      %v8640 = vpop.f32.mrf.mxu0
      %v8641 = vadd.f32 %v8492, %v8640
      %v8642 = vpop.f32.mrf.mxu0
      %v8643 = vadd.f32 %v8492, %v8642
      %8644 = vmatmul.bf16.gmra.mxu0 %v8449
      %v8645 = vpop.f32.mrf.mxu0
      %v8646 = vadd.f32 %v8492, %v8645
      %v8647 = vpop.f32.mrf.mxu0
      %v8648 = vadd.f32 %v8492, %v8647
      %8649 = vmatmul.bf16.gmra.mxu0 %v8452
      %v8650 = vpop.f32.mrf.mxu0
      %v8651 = vadd.f32 %v8492, %v8650
      %v8652 = vpop.f32.mrf.mxu0
      %v8653 = vadd.f32 %v8492, %v8652
      %8654 = vmatmul.bf16.gmra.mxu0 %v8455
      %v8655 = vpop.f32.mrf.mxu0
      %v8656 = vadd.f32 %v8492, %v8655
      %v8657 = vpop.f32.mrf.mxu0
      %v8658 = vadd.f32 %v8492, %v8657
      %8659 = vmatmul.bf16.gmra.mxu0 %v8458
      %v8660 = vpop.f32.mrf.mxu0
      %v8661 = vadd.f32 %v8492, %v8660
      %v8662 = vpop.f32.mrf.mxu0
      %v8663 = vadd.f32 %v8492, %v8662
      %8664 = vmatmul.bf16.gmra.mxu0 %v8461
      %v8665 = vpop.f32.mrf.mxu0
      %v8666 = vadd.f32 %v8492, %v8665
      %v8667 = vpop.f32.mrf.mxu0
      %v8668 = vadd.f32 %v8492, %v8667
      %8669 = vmatmul.bf16.gmra.mxu0 %v8464
      %v8670 = vpop.f32.mrf.mxu0
      %v8671 = vadd.f32 %v8492, %v8670
      %v8672 = vpop.f32.mrf.mxu0
      %v8673 = vadd.f32 %v8492, %v8672
      %8674 = vmatmul.bf16.gmra.mxu0 %v8467
      %v8675 = vpop.f32.mrf.mxu0
      %v8676 = vadd.f32 %v8492, %v8675
      %v8677 = vpop.f32.mrf.mxu0
      %v8678 = vadd.f32 %v8492, %v8677
      %8679 = vmatmul.bf16.gmra.mxu0 %v8470
      %v8680 = vpop.f32.mrf.mxu0
      %v8681 = vadd.f32 %v8492, %v8680
      %v8682 = vpop.f32.mrf.mxu0
      %v8683 = vadd.f32 %v8492, %v8682
      %8684 = vdwg.mxu0
      %8685 = vmatpush.bf16.msra.mxu0 0
      %8686 = vmatpush.bf16.msra.mxu0 0
      %8687 = vmatpush.bf16.msra.mxu0 0
      %8688 = vmatpush.bf16.msra.mxu0 0
      %8689 = vmatpush.bf16.msra.mxu0 0
      %8690 = vmatpush.bf16.msra.mxu0 0
      %8691 = vmatpush.bf16.msra.mxu0 0
      %8692 = vmatpush.bf16.msra.mxu0 %v8538
      %8693 = vmatmul.bf16.gmra.mxu0 %v8549
      %v8694 = vpop.f32.mrf.mxu0
      %v8695 = vadd.f32 %v8606, %v8694
      %v8696 = vpop.f32.mrf.mxu0
      %v8697 = vadd.f32 %v8608, %v8696
      %8698 = vmatmul.bf16.gmra.mxu0 %v8552
      %v8699 = vpop.f32.mrf.mxu0
      %v8700 = vadd.f32 %v8611, %v8699
      %v8701 = vpop.f32.mrf.mxu0
      %v8702 = vadd.f32 %v8613, %v8701
      %8703 = vmatmul.bf16.gmra.mxu0 %v8555
      %v8704 = vpop.f32.mrf.mxu0
      %v8705 = vadd.f32 %v8616, %v8704
      %v8706 = vpop.f32.mrf.mxu0
      %v8707 = vadd.f32 %v8618, %v8706
      %8708 = vmatmul.bf16.gmra.mxu0 %v8558
      %v8709 = vpop.f32.mrf.mxu0
      %v8710 = vadd.f32 %v8621, %v8709
      %v8711 = vpop.f32.mrf.mxu0
      %v8712 = vadd.f32 %v8623, %v8711
      %8713 = vmatmul.bf16.gmra.mxu0 %v8561
      %v8714 = vpop.f32.mrf.mxu0
      %v8715 = vadd.f32 %v8626, %v8714
      %v8716 = vpop.f32.mrf.mxu0
      %v8717 = vadd.f32 %v8628, %v8716
      %8718 = vmatmul.bf16.gmra.mxu0 %v8564
      %v8719 = vpop.f32.mrf.mxu0
      %v8720 = vadd.f32 %v8631, %v8719
      %v8721 = vpop.f32.mrf.mxu0
      %v8722 = vadd.f32 %v8633, %v8721
      %8723 = vmatmul.bf16.gmra.mxu0 %v8567
      %v8724 = vpop.f32.mrf.mxu0
      %v8725 = vadd.f32 %v8636, %v8724
      %v8726 = vpop.f32.mrf.mxu0
      %v8727 = vadd.f32 %v8638, %v8726
      %8728 = vmatmul.bf16.gmra.mxu0 %v8570
      %v8729 = vpop.f32.mrf.mxu0
      %v8730 = vadd.f32 %v8641, %v8729
      %v8731 = vpop.f32.mrf.mxu0
      %v8732 = vadd.f32 %v8643, %v8731
      %8733 = vmatmul.bf16.gmra.mxu0 %v8573
      %v8734 = vpop.f32.mrf.mxu0
      %v8735 = vadd.f32 %v8646, %v8734
      %v8736 = vpop.f32.mrf.mxu0
      %v8737 = vadd.f32 %v8648, %v8736
      %8738 = vmatmul.bf16.gmra.mxu0 %v8576
      %v8739 = vpop.f32.mrf.mxu0
      %v8740 = vadd.f32 %v8651, %v8739
      %v8741 = vpop.f32.mrf.mxu0
      %v8742 = vadd.f32 %v8653, %v8741
      %8743 = vmatmul.bf16.gmra.mxu0 %v8579
      %v8744 = vpop.f32.mrf.mxu0
      %v8745 = vadd.f32 %v8656, %v8744
      %v8746 = vpop.f32.mrf.mxu0
      %v8747 = vadd.f32 %v8658, %v8746
      %8748 = vmatmul.bf16.gmra.mxu0 %v8582
      %v8749 = vpop.f32.mrf.mxu0
      %v8750 = vadd.f32 %v8661, %v8749
      %v8751 = vpop.f32.mrf.mxu0
      %v8752 = vadd.f32 %v8663, %v8751
      %8753 = vmatmul.bf16.gmra.mxu0 %v8585
      %v8754 = vpop.f32.mrf.mxu0
      %v8755 = vadd.f32 %v8666, %v8754
      %v8756 = vpop.f32.mrf.mxu0
      %v8757 = vadd.f32 %v8668, %v8756
      %8758 = vmatmul.bf16.gmra.mxu0 %v8588
      %v8759 = vpop.f32.mrf.mxu0
      %v8760 = vadd.f32 %v8671, %v8759
      %v8761 = vpop.f32.mrf.mxu0
      %v8762 = vadd.f32 %v8673, %v8761
      %8763 = vmatmul.bf16.gmra.mxu0 %v8591
      %v8764 = vpop.f32.mrf.mxu0
      %v8765 = vadd.f32 %v8676, %v8764
      %v8766 = vpop.f32.mrf.mxu0
      %v8767 = vadd.f32 %v8678, %v8766
      %8768 = vmatmul.bf16.gmra.mxu0 %v8594
      %v8769 = vpop.f32.mrf.mxu0
      %v8770 = vadd.f32 %v8681, %v8769
      %v8771 = vpop.f32.mrf.mxu0
      %v8772 = vadd.f32 %v8683, %v8771
      %8773 = vdwg.mxu0
      %v8774 = vmax.f32 %v8695, 0.0
      %v8775 = vmax.f32 %v8697, 0.0
      %v8776 = vmax.f32 %v8700, 0.0
      %v8777 = vmax.f32 %v8702, 0.0
      %v8778 = vmax.f32 %v8705, 0.0
      %v8779 = vmax.f32 %v8707, 0.0
      %v8780 = vmax.f32 %v8710, 0.0
      %v8781 = vmax.f32 %v8712, 0.0
      %v8782 = vmax.f32 %v8715, 0.0
      %v8783 = vmax.f32 %v8717, 0.0
      %v8784 = vmax.f32 %v8720, 0.0
      %v8785 = vmax.f32 %v8722, 0.0
      %v8786 = vmax.f32 %v8725, 0.0
      %v8787 = vmax.f32 %v8727, 0.0
      %v8788 = vmax.f32 %v8730, 0.0
      %v8789 = vmax.f32 %v8732, 0.0
      %v8790 = vmax.f32 %v8735, 0.0
      %v8791 = vmax.f32 %v8737, 0.0
      %v8792 = vmax.f32 %v8740, 0.0
      %v8793 = vmax.f32 %v8742, 0.0
      %v8794 = vmax.f32 %v8745, 0.0
      %v8795 = vmax.f32 %v8747, 0.0
      %v8796 = vmax.f32 %v8750, 0.0
      %v8797 = vmax.f32 %v8752, 0.0
      %v8798 = vmax.f32 %v8755, 0.0
      %v8799 = vmax.f32 %v8757, 0.0
      %v8800 = vmax.f32 %v8760, 0.0
      %v8801 = vmax.f32 %v8762, 0.0
      %v8802 = vmax.f32 %v8765, 0.0
      %v8803 = vmax.f32 %v8767, 0.0
      %v8804 = vmax.f32 %v8770, 0.0
      %v8805 = vmax.f32 %v8772, 0.0
      %v8806 = vsel %vm5713, %v8774, 0.0
      %v8807 = vsel %vm5713, %v8775, 0.0
      %v8808 = vadd.f32 %v8806, %v8807
      %v8809 = vrot.slane %v8808, 4
      %v8810 = vadd.f32 %v8808, %v8809
      %v8811 = vrot.slane %v8810, 2
      %v8812 = vadd.f32 %v8810, %v8811
      %v8813 = vrot.slane %v8812, 1
      %v8814 = vadd.f32 %v8812, %v8813
      %v8815 = vsel %vm5713, %v8776, 0.0
      %v8816 = vsel %vm5713, %v8777, 0.0
      %v8817 = vadd.f32 %v8815, %v8816
      %v8818 = vrot.slane %v8817, 4
      %v8819 = vadd.f32 %v8817, %v8818
      %v8820 = vrot.slane %v8819, 2
      %v8821 = vadd.f32 %v8819, %v8820
      %v8822 = vrot.slane %v8821, 1
      %v8823 = vadd.f32 %v8821, %v8822
      %v8824 = vsel %vm5713, %v8778, 0.0
      %v8825 = vsel %vm5713, %v8779, 0.0
      %v8826 = vadd.f32 %v8824, %v8825
      %v8827 = vrot.slane %v8826, 4
      %v8828 = vadd.f32 %v8826, %v8827
      %v8829 = vrot.slane %v8828, 2
      %v8830 = vadd.f32 %v8828, %v8829
      %v8831 = vrot.slane %v8830, 1
      %v8832 = vadd.f32 %v8830, %v8831
      %v8833 = vsel %vm5713, %v8780, 0.0
      %v8834 = vsel %vm5713, %v8781, 0.0
      %v8835 = vadd.f32 %v8833, %v8834
      %v8836 = vrot.slane %v8835, 4
      %v8837 = vadd.f32 %v8835, %v8836
      %v8838 = vrot.slane %v8837, 2
      %v8839 = vadd.f32 %v8837, %v8838
      %v8840 = vrot.slane %v8839, 1
      %v8841 = vadd.f32 %v8839, %v8840
      %v8842 = vsel %vm5713, %v8782, 0.0
      %v8843 = vsel %vm5713, %v8783, 0.0
      %v8844 = vadd.f32 %v8842, %v8843
      %v8845 = vrot.slane %v8844, 4
      %v8846 = vadd.f32 %v8844, %v8845
      %v8847 = vrot.slane %v8846, 2
      %v8848 = vadd.f32 %v8846, %v8847
      %v8849 = vrot.slane %v8848, 1
      %v8850 = vadd.f32 %v8848, %v8849
      %v8851 = vsel %vm5713, %v8784, 0.0
      %v8852 = vsel %vm5713, %v8785, 0.0
      %v8853 = vadd.f32 %v8851, %v8852
      %v8854 = vrot.slane %v8853, 4
      %v8855 = vadd.f32 %v8853, %v8854
      %v8856 = vrot.slane %v8855, 2
      %v8857 = vadd.f32 %v8855, %v8856
      %v8858 = vrot.slane %v8857, 1
      %v8859 = vadd.f32 %v8857, %v8858
      %v8860 = vsel %vm5713, %v8786, 0.0
      %v8861 = vsel %vm5713, %v8787, 0.0
      %v8862 = vadd.f32 %v8860, %v8861
      %v8863 = vrot.slane %v8862, 4
      %v8864 = vadd.f32 %v8862, %v8863
      %v8865 = vrot.slane %v8864, 2
      %v8866 = vadd.f32 %v8864, %v8865
      %v8867 = vrot.slane %v8866, 1
      %v8868 = vadd.f32 %v8866, %v8867
      %v8869 = vsel %vm5713, %v8788, 0.0
      %v8870 = vsel %vm5713, %v8789, 0.0
      %v8871 = vadd.f32 %v8869, %v8870
      %v8872 = vrot.slane %v8871, 4
      %v8873 = vadd.f32 %v8871, %v8872
      %v8874 = vrot.slane %v8873, 2
      %v8875 = vadd.f32 %v8873, %v8874
      %v8876 = vrot.slane %v8875, 1
      %v8877 = vadd.f32 %v8875, %v8876
      %v8878 = vsel %vm5713, %v8790, 0.0
      %v8879 = vsel %vm5713, %v8791, 0.0
      %v8880 = vadd.f32 %v8878, %v8879
      %v8881 = vrot.slane %v8880, 4
      %v8882 = vadd.f32 %v8880, %v8881
      %v8883 = vrot.slane %v8882, 2
      %v8884 = vadd.f32 %v8882, %v8883
      %v8885 = vrot.slane %v8884, 1
      %v8886 = vadd.f32 %v8884, %v8885
      %v8887 = vsel %vm5713, %v8792, 0.0
      %v8888 = vsel %vm5713, %v8793, 0.0
      %v8889 = vadd.f32 %v8887, %v8888
      %v8890 = vrot.slane %v8889, 4
      %v8891 = vadd.f32 %v8889, %v8890
      %v8892 = vrot.slane %v8891, 2
      %v8893 = vadd.f32 %v8891, %v8892
      %v8894 = vrot.slane %v8893, 1
      %v8895 = vadd.f32 %v8893, %v8894
      %v8896 = vsel %vm5713, %v8794, 0.0
      %v8897 = vsel %vm5713, %v8795, 0.0
      %v8898 = vadd.f32 %v8896, %v8897
      %v8899 = vrot.slane %v8898, 4
      %v8900 = vadd.f32 %v8898, %v8899
      %v8901 = vrot.slane %v8900, 2
      %v8902 = vadd.f32 %v8900, %v8901
      %v8903 = vrot.slane %v8902, 1
      %v8904 = vadd.f32 %v8902, %v8903
      %v8905 = vsel %vm5713, %v8796, 0.0
      %v8906 = vsel %vm5713, %v8797, 0.0
      %v8907 = vadd.f32 %v8905, %v8906
      %v8908 = vrot.slane %v8907, 4
      %v8909 = vadd.f32 %v8907, %v8908
      %v8910 = vrot.slane %v8909, 2
      %v8911 = vadd.f32 %v8909, %v8910
      %v8912 = vrot.slane %v8911, 1
      %v8913 = vadd.f32 %v8911, %v8912
      %v8914 = vsel %vm5713, %v8798, 0.0
      %v8915 = vsel %vm5713, %v8799, 0.0
      %v8916 = vadd.f32 %v8914, %v8915
      %v8917 = vrot.slane %v8916, 4
      %v8918 = vadd.f32 %v8916, %v8917
      %v8919 = vrot.slane %v8918, 2
      %v8920 = vadd.f32 %v8918, %v8919
      %v8921 = vrot.slane %v8920, 1
      %v8922 = vadd.f32 %v8920, %v8921
      %v8923 = vsel %vm5713, %v8800, 0.0
      %v8924 = vsel %vm5713, %v8801, 0.0
      %v8925 = vadd.f32 %v8923, %v8924
      %v8926 = vrot.slane %v8925, 4
      %v8927 = vadd.f32 %v8925, %v8926
      %v8928 = vrot.slane %v8927, 2
      %v8929 = vadd.f32 %v8927, %v8928
      %v8930 = vrot.slane %v8929, 1
      %v8931 = vadd.f32 %v8929, %v8930
      %v8932 = vsel %vm5713, %v8802, 0.0
      %v8933 = vsel %vm5713, %v8803, 0.0
      %v8934 = vadd.f32 %v8932, %v8933
      %v8935 = vrot.slane %v8934, 4
      %v8936 = vadd.f32 %v8934, %v8935
      %v8937 = vrot.slane %v8936, 2
      %v8938 = vadd.f32 %v8936, %v8937
      %v8939 = vrot.slane %v8938, 1
      %v8940 = vadd.f32 %v8938, %v8939
      %v8941 = vsel %vm5713, %v8804, 0.0
      %v8942 = vsel %vm5713, %v8805, 0.0
      %v8943 = vadd.f32 %v8941, %v8942
      %v8944 = vrot.slane %v8943, 4
      %v8945 = vadd.f32 %v8943, %v8944
      %v8946 = vrot.slane %v8945, 2
      %v8947 = vadd.f32 %v8945, %v8946
      %v8948 = vrot.slane %v8947, 1
      %v8949 = vadd.f32 %v8947, %v8948
      %v8950 = vrcp.pop 16.0
      %v8951 = vmul.f32 16.0, %v8950
      %v8952 = vsub.f32 1.0, %v8951
      %v8953 = vmul.f32 %v8950, %v8952
      %v8954 = vadd.f32 %v8950, %v8953
      %vm8955 = vweird.f32 %v8950
      %v8956 = vsel %vm8955, %v8950, %v8954
      %v8957 = vmul.f32 %v8814, %v8956
      %v8958 = vmul.f32 %v8823, %v8956
      %v8959 = vmul.f32 %v8832, %v8956
      %v8960 = vmul.f32 %v8841, %v8956
      %v8961 = vmul.f32 %v8850, %v8956
      %v8962 = vmul.f32 %v8859, %v8956
      %v8963 = vmul.f32 %v8868, %v8956
      %v8964 = vmul.f32 %v8877, %v8956
      %v8965 = vmul.f32 %v8886, %v8956
      %v8966 = vmul.f32 %v8895, %v8956
      %v8967 = vmul.f32 %v8904, %v8956
      %v8968 = vmul.f32 %v8913, %v8956
      %v8969 = vmul.f32 %v8922, %v8956
      %v8970 = vmul.f32 %v8931, %v8956
      %v8971 = vmul.f32 %v8940, %v8956
      %v8972 = vmul.f32 %v8949, %v8956
      %v8973 = vpack.c.bf16 %v8957, %v8957
      %v8974 = vpack.c.bf16 %v8958, %v8958
      %v8975 = vpack.c.bf16 %v8959, %v8959
      %v8976 = vpack.c.bf16 %v8960, %v8960
      %v8977 = vpack.c.bf16 %v8961, %v8961
      %v8978 = vpack.c.bf16 %v8962, %v8962
      %v8979 = vpack.c.bf16 %v8963, %v8963
      %v8980 = vpack.c.bf16 %v8964, %v8964
      %v8981 = vpack.c.bf16 %v8965, %v8965
      %v8982 = vpack.c.bf16 %v8966, %v8966
      %v8983 = vpack.c.bf16 %v8967, %v8967
      %v8984 = vpack.c.bf16 %v8968, %v8968
      %v8985 = vpack.c.bf16 %v8969, %v8969
      %v8986 = vpack.c.bf16 %v8970, %v8970
      %v8987 = vpack.c.bf16 %v8971, %v8971
      %v8988 = vpack.c.bf16 %v8972, %v8972
      %v8989 = vld [vmem:[%s6] sm:$0xf]
      %v8990 = vld [vmem:[%s6 + $0x4] sm:$0xf]
      %v8991 = vld [vmem:[%s6 + $0x8] sm:$0xf]
      %v8992 = vld [vmem:[%s6 + $0xc] sm:$0xf]
      %v8993 = vld [vmem:[%s7] sm:$0x1]
      %v8995 = vperm.slane %v8993, 0
      %v9013 = vunpack.c.l.b16 %v8973
      %v9014 = vunpack.c.l.b16 %v8974
      %v9015 = vunpack.c.l.b16 %v8975
      %v9016 = vunpack.c.l.b16 %v8976
      %v9017 = vunpack.c.l.b16 %v8977
      %v9018 = vunpack.c.l.b16 %v8978
      %v9019 = vunpack.c.l.b16 %v8979
      %v9020 = vunpack.c.l.b16 %v8980
      %v9021 = vunpack.c.l.b16 %v8981
      %v9022 = vunpack.c.l.b16 %v8982
      %v9023 = vunpack.c.l.b16 %v8983
      %v9024 = vunpack.c.l.b16 %v8984
      %v9025 = vunpack.c.l.b16 %v8985
      %v9026 = vunpack.c.l.b16 %v8986
      %v9027 = vunpack.c.l.b16 %v8987
      %v9028 = vunpack.c.l.b16 %v8988
      %vm9029 = vcmask 1041409
      %v9030 = vsel %vm9029, %v9014, %v9013
      %vm9031 = vcmask 1042434
      %v9032 = vsel %vm9031, %v9015, %v9030
      %vm9033 = vcmask 1043459
      %v9034 = vsel %vm9033, %v9016, %v9032
      %vm9035 = vcmask 1044484
      %v9036 = vsel %vm9035, %v9017, %v9034
      %vm9037 = vcmask 1045509
      %v9038 = vsel %vm9037, %v9018, %v9036
      %vm9039 = vcmask 1046534
      %v9040 = vsel %vm9039, %v9019, %v9038
      %vm9041 = vcmask 1047559
      %v9042 = vsel %vm9041, %v9020, %v9040
      %v9043 = vsel %vm9029, %v9022, %v9021
      %v9044 = vsel %vm9031, %v9023, %v9043
      %v9045 = vsel %vm9033, %v9024, %v9044
      %v9046 = vsel %vm9035, %v9025, %v9045
      %v9047 = vsel %vm9037, %v9026, %v9046
      %v9048 = vsel %vm9039, %v9027, %v9047
      %v9049 = vsel %vm9041, %v9028, %v9048
      %v9050 = vpack.c.b16 %v9049, %v9042
      %v9055 = vunpack.c.l.b16 %v8989
      %v9056 = vunpack.c.l.b16 %v8990
      %v9057 = vunpack.c.l.b16 %v8991
      %v9058 = vunpack.c.l.b16 %v8992
      %v9059 = vpack.c.b16 %v9056, %v9055
      %v9060 = vpack.c.b16 %v9058, %v9057
      %v9064 = vsel %vm5713, %v9050, 0
      %9066 = vmatpush.bf16.msra.mxu0 0
      %9067 = vmatpush.bf16.msra.mxu0 0
      %9068 = vmatpush.bf16.msra.mxu0 0
      %9069 = vmatpush.bf16.msra.mxu0 0
      %9070 = vmatpush.bf16.msra.mxu0 0
      %9071 = vmatpush.bf16.msra.mxu0 0
      %9072 = vmatpush.bf16.msra.mxu0 %v9060
      %9073 = vmatpush.bf16.msra.mxu0 %v9059
      %9074 = vmatmul.bf16.gmra.mxu0 %v9064
      %v9075 = vpop.f32.mrf.mxu0
      %v9076 = vadd.f32 %v8995, %v9075
      %v9077 = vpop.f32.mrf.mxu0
      %v9078 = vadd.f32 %v8995, %v9077
      %9079 = vdwg.mxu0
      %v9080 = vld [vmem:[%s8] sm:$0x1]
      %v9081 = vtanh.pop %v9076
      %v9082 = vtanh.pop %v9078
      %v9084 = vperm.slane %v9080, 0
      %v9086 = vmul.f32 %v9084, %v9081
      %v9087 = vmul.f32 %v9084, %v9082
      %v9088 = vld [vmem:[%s9] sm:$0x1]
      %v9090 = vperm.slane %v9088, 0
      %v9092 = vadd.f32 %v9086, %v9090
      %v9093 = vadd.f32 %v9087, %v9090
      %9094 = vst [vmem:[%s359] sm:$0xff] %v9092
      %9095 = vst [vmem:[%s359 + $0x8] sm:$0xff] %v9093
      %p9096 = scmp.lt.s32.totalorder %s21, 1
      %s9097 = scalar_select %p9096, %s21, 1
      %s9098 = smul.addr %s9097, 2
      %s9099 = smul.addr %s9098, 8
      %s9100 = scalar_lea.vmem %s10, %s9099
      // Predicated region
      $region61: #{tau_nigens_forward.1} parent=59 // pred_check
        %p9101 = pneg %p254
      $region62: #{tau_nigens_forward.1} parent=59 // pred_check_branch
        %9103 = sbr.rel (%p9101) target = $region64
      $region63: #{tau_nigens_forward.1} parent=59 // pred_region
        _
      $region64: #{tau_nigens_forward.1} parent=59 // pred_fallthru
        _
    $region60: #{tau_nigens_forward.1} parent=5 // pred_fallthru
      _
    %p9104 = scmp.le.s32.totalorder 2, %s16
    // Predicated region
    $region65: #{tau_nigens_forward.1} parent=5 // pred_check
      %p9105 = pneg %p9104
    $region66: #{tau_nigens_forward.1} parent=5 // pred_check_branch
      %9107 = sbr.rel (%p9105) target = $region68
    $region67: #{tau_nigens_forward.1} parent=5 // pred_region
      %s9108 = ssub.s32 %s16, 2
      // Predicated region
      $region69: #{tau_nigens_forward.1} parent=67 // pred_check
        %p9109 = pneg %p260
      $region70: #{tau_nigens_forward.1} parent=67 // pred_check_branch
        %9111 = sbr.rel (%p9109) target = $region72
      $region71: #{tau_nigens_forward.1} parent=67 // pred_region
        %p9112 = scmp.lt.s32.totalorder %s22, 1
        %s9113 = scalar_select %p9112, %s22, 1
        %s9114 = smul.addr %s9113, 2
        %s9115 = smul.addr %s9114, 8
        %s9116 = scalar_lea.vmem %s10, %s9115
      $region72: #{tau_nigens_forward.1} parent=67 // pred_fallthru
        _
    $region68: #{tau_nigens_forward.1} parent=5 // pred_fallthru
      _
  $region6: #{tau_nigens_forward.1} parent=0 // loop_footer
    %s20 = sadd.s32 1, %s16
  $region7: #{tau_nigens_forward.1} parent=0 // loop_footer_branch
    %15 = sbr.rel target = $region3
  $region8: #{tau_nigens_forward.1} parent=0 // loop_exit
    _

</llo_original>
